<compile_context>
chip_gen: v6e
topology: v6e:2x2x1
jax: 0.10.0
libtpu: 0.0.40
codegen_flags: <defaults>
</compile_context>

<pallas_src>
import functools
import math

import jax
import jax.numpy as jnp
from jax import lax
from jax.experimental import pallas as pl
from jax.experimental.pallas import tpu as pltpu


# ----------------------------- in-kernel helpers -----------------------------

def _ln(x, g, b, eps):
    mu = jnp.mean(x, axis=-1, keepdims=True)
    xc = x - mu
    var = jnp.mean(xc * xc, axis=-1, keepdims=True)
    return xc * lax.rsqrt(var + eps) * g + b


def _gelu(x):
    # exact erf-based GELU, matching the reference `gelu`
    return x * 0.5 * (1.0 + lax.erf(x * (1.0 / math.sqrt(2.0))))


def _attend(q_all, k_all, v_all, cb, H, hd, scale):
    """Per-sample, per-head softmax attention.

    q_all: (cb*Nq, H*hd) f32, k_all/v_all: (cb*Nk, H*hd) f32, head-minor lane
    layout (head h occupies lanes [h*hd, (h+1)*hd)).  Returns (cb*Nq, H*hd).
    """
    Nq = q_all.shape[0] // cb
    Nk = k_all.shape[0] // cb
    samples = []
    for b in range(cb):
        qb = q_all[b * Nq:(b + 1) * Nq]
        kb = k_all[b * Nk:(b + 1) * Nk]
        vb = v_all[b * Nk:(b + 1) * Nk]
        heads = []
        for h in range(H):
            qh = qb[:, h * hd:(h + 1) * hd]
            kh = kb[:, h * hd:(h + 1) * hd]
            vh = vb[:, h * hd:(h + 1) * hd]
            # contract the hd axis of q and k directly (no k transpose/relayout)
            s = lax.dot_general(qh, kh, (((1,), (1,)), ((), ())),
                                preferred_element_type=jnp.float32) * scale  # (Nq, Nk)
            m = jnp.max(s, axis=-1, keepdims=True)
            p = jnp.exp(s - m)
            p = p * pl.reciprocal(jnp.sum(p, axis=-1, keepdims=True), approx=True)
            heads.append(jnp.dot(p, vh, preferred_element_type=jnp.float32))  # (Nq, hd)
        samples.append(jnp.concatenate(heads, axis=-1))                       # (Nq, H*hd)
    return samples[0] if cb == 1 else jnp.concatenate(samples, axis=0)


def _self_attn(xn, w_qkv, w_proj, proj_b, cb, H, hd, scale):
    """xn (M,C) f32, fused QKV (C,3C) bf16, proj (C,C) bf16, proj_b (1,C) f32."""
    C = xn.shape[-1]
    qkv = jnp.dot(xn.astype(jnp.bfloat16), w_qkv,
                  preferred_element_type=jnp.float32)                 # (M, 3C)
    o = _attend(qkv[:, 0:C], qkv[:, C:2 * C], qkv[:, 2 * C:3 * C],
                cb, H, hd, scale)                                     # (M, C)
    return jnp.dot(o.astype(jnp.bfloat16), w_proj,
                   preferred_element_type=jnp.float32) + proj_b


def _cross_attn(qn, kvn, w_q, w_kv, w_proj, proj_b, cb, H, hd, scale):
    """qn (M,C): decoder stream; kvn (M,C): encoder output; fused KV (C,2C)."""
    C = qn.shape[-1]
    q = jnp.dot(qn.astype(jnp.bfloat16), w_q,
                preferred_element_type=jnp.float32)                   # (M, C)
    kv = jnp.dot(kvn.astype(jnp.bfloat16), w_kv,
                 preferred_element_type=jnp.float32)                  # (M, 2C)
    o = _attend(q, kv[:, 0:C], kv[:, C:2 * C], cb, H, hd, scale)
    return jnp.dot(o.astype(jnp.bfloat16), w_proj,
                   preferred_element_type=jnp.float32) + proj_b


def _mlp(xn, w1, b1, w2, b2):
    h = jnp.dot(xn.astype(jnp.bfloat16), w1,
                preferred_element_type=jnp.float32) + b1
    h = _gelu(h)
    return jnp.dot(h.astype(jnp.bfloat16), w2,
                   preferred_element_type=jnp.float32) + b2


# ------------------------------ fused forward kernel ------------------------------

def _full_forward_kernel(wt_smem_ref,                    # scalar prefetch (index_map only)
                         fmap_ref,                       # (cb, T, TD) bf16
                         l1w_ref, l1b_ref,               # (TD, E) bf16, (1, E) f32
                         cls_ref, pos_ref,               # (1, E), (T+1, E) f32
                         oe_ref,                         # (1, T+1, E) f32 (task-selected)
                         e_qkv_ref, e_pj_ref, e_w1_ref, e_w2_ref, e_vec_ref, e_b1_ref,
                         d_sqkv_ref, d_spj_ref, d_ckv_ref, d_cq_ref, d_cpj_ref,
                         d_w1_ref, d_w2_ref, d_vec_ref, d_b1_ref,
                         hw_ref,                         # (E, HP) bf16 (merged, lane-padded head)
                         o_ref,                          # (cb, T+1, HP) f32
                         *, cb, T, E, H, n_enc, n_dec, scale, eps):
    del wt_smem_ref  # consumed by the out_embed BlockSpec index_map only
    T1 = T + 1
    hd = E // H

    # ---- stem: l1 linear, [cls | tokens], + pos_embed (per sample of this chunk) ----
    l1w = l1w_ref[...]
    l1b = l1b_ref[...]
    cls = cls_ref[...]
    pos = pos_ref[...]
    xs = []
    for b in range(cb):
        sb = jnp.dot(fmap_ref[b], l1w, preferred_element_type=jnp.float32) + l1b  # (T, E)
        xs.append(jnp.concatenate([cls, sb], axis=0) + pos)                       # (T1, E)
    x = xs[0] if cb == 1 else jnp.concatenate(xs, axis=0)                         # (M, E) f32

    # ---- encoder blocks (activations stay in VMEM) ----
    # enc_vec rows: 0 n1_g, 1 n1_b, 2 n2_g, 3 n2_b, 4 proj_b, 5 fc2_b
    for l in range(n_enc):
        vec = e_vec_ref[l]                                                        # (6, E) f32
        xn = _ln(x, vec[0:1], vec[1:2], eps)
        x = x + _self_attn(xn, e_qkv_ref[l], e_pj_ref[l], vec[4:5], cb, H, hd, scale)
        xn = _ln(x, vec[2:3], vec[3:4], eps)
        x = x + _mlp(xn, e_w1_ref[l], e_b1_ref[l], e_w2_ref[l], vec[5:6])

    # ---- decoder: query stream starts from the task embedding (same rows per sample) ----
    oe = oe_ref[0]                                                                # (T1, E) f32
    y = oe if cb == 1 else jnp.concatenate([oe] * cb, axis=0)                     # (M, E)

    # dec_vec rows: 0 nx_g, 1 nx_b, 2 nkv_g, 3 nkv_b, 4 nq_g, 5 nq_b,
    #               6 nmlp_g, 7 nmlp_b, 8 self_proj_b, 9 cross_proj_b, 10 fc2_b
    for l in range(n_dec):
        vec = d_vec_ref[l]                                                        # (11, E) f32
        yn = _ln(y, vec[0:1], vec[1:2], eps)
        y = y + _self_attn(yn, d_sqkv_ref[l], d_spj_ref[l], vec[8:9], cb, H, hd, scale)
        kvn = _ln(x, vec[2:3], vec[3:4], eps)
        qn = _ln(y, vec[4:5], vec[5:6], eps)
        y = y + _cross_attn(qn, kvn, d_cq_ref[l], d_ckv_ref[l], d_cpj_ref[l],
                            vec[9:10], cb, H, hd, scale)
        yn = _ln(y, vec[6:7], vec[7:8], eps)
        y = y + _mlp(yn, d_w1_ref[l], d_b1_ref[l], d_w2_ref[l], vec[10:11])

    # ---- merged output head [l2 | l3 | l4 | 0-pad] -> lane-dense (M, HP) store ----
    out = jnp.dot(y.astype(jnp.bfloat16), hw_ref[...],
                  preferred_element_type=jnp.float32)                             # (M, HP)
    for b in range(cb):
        o_ref[b] = out[b * T1:(b + 1) * T1]


# ----------------------------------- forward -----------------------------------

def full_transformer_forward(packed, fmap, which_task, cfg, epoch=0, batch_chunks=None):
    # epoch unused: is_mask=False in FullTransformer -> banded masks never applied;
    # all dropout / drop_path rates are 0.0 (identity).
    del epoch
    E = cfg["embed_dim"]
    T = cfg["input_tokens"]
    H = cfg["num_heads"]
    n_cls = cfg["n_cls"]
    n_enc = cfg["encoder_depth"]
    n_dec = cfg["decoder_depth"]
    TD = cfg["token_dim"]
    T1 = T + 1
    Hd = packed["enc_fc1"].shape[-1]
    HP = packed["head_w"].shape[1]
    ntask = packed["out_embed"].shape[0]
    scale = (E // H) ** -0.5
    bs = fmap.shape[0]

    # Batch chunking: 2 chunks lets v7x's two TensorCores split the work
    # ("parallel" grid axis); on v5e/v6e the extra grid step is negligible
    # because the constant-index weight blocks are not re-DMA'd.  Use 1 to fold
    # the whole batch into one step on single-TC chips.
    if batch_chunks is None:
        batch_chunks = 2 if (bs % 2 == 0 and bs >= 2) else 1
    assert bs % batch_chunks == 0
    cb = bs // batch_chunks

    wt = jnp.reshape(jnp.asarray(which_task, dtype=jnp.int32), (1,))

    def cmap(shape):
        n = len(shape)
        return pl.BlockSpec(shape, lambda i, wt, _n=n: (0,) * _n)

    in_specs = [
        pl.BlockSpec((cb, T, TD), lambda i, wt: (i, 0, 0)),       # fmap chunk
        cmap((TD, E)), cmap((1, E)),                              # l1_w, l1_b
        cmap((1, E)), cmap((T1, E)),                              # cls, pos
        pl.BlockSpec((1, T1, E), lambda i, wt: (wt[0], 0, 0)),    # out_embed[which_task]
        cmap((n_enc, E, 3 * E)), cmap((n_enc, E, E)),             # enc qkv, proj
        cmap((n_enc, E, Hd)), cmap((n_enc, Hd, E)),               # enc fc1, fc2
        cmap((n_enc, 6, E)), cmap((n_enc, 1, Hd)),                # enc packed vecs, fc1_b
        cmap((n_dec, E, 3 * E)), cmap((n_dec, E, E)),             # dec self qkv, proj
        cmap((n_dec, E, 2 * E)), cmap((n_dec, E, E)),             # dec cross kv, q
        cmap((n_dec, E, E)),                                      # dec cross proj
        cmap((n_dec, E, Hd)), cmap((n_dec, Hd, E)),               # dec fc1, fc2
        cmap((n_dec, 11, E)), cmap((n_dec, 1, Hd)),               # dec packed vecs, fc1_b
        cmap((E, HP)),                                            # merged head (lane padded)
    ]

    out = pl.pallas_call(
        functools.partial(_full_forward_kernel, cb=cb, T=T, E=E, H=H,
                          n_enc=n_enc, n_dec=n_dec, scale=scale, eps=1e-5),
        out_shape=jax.ShapeDtypeStruct((bs, T1, HP), jnp.float32),
        grid_spec=pltpu.PrefetchScalarGridSpec(
            num_scalar_prefetch=1,
            grid=(batch_chunks,),
            in_specs=in_specs,
            out_specs=pl.BlockSpec((cb, T1, HP), lambda i, wt: (i, 0, 0)),
        ),
        compiler_params=pltpu.CompilerParams(
            dimension_semantics=("parallel",),
            vmem_limit_bytes=32 * 1024 * 1024,
        ),
    )(
        wt, fmap.astype(jnp.bfloat16),
        packed["l1_w"], packed["l1_b"], packed["cls"], packed["pos"], packed["out_embed"],
        packed["enc_qkv"], packed["enc_proj"], packed["enc_fc1"], packed["enc_fc2"],
        packed["enc_vec"], packed["enc_fc1b"],
        packed["dec_sqkv"], packed["dec_sproj"], packed["dec_ckv"], packed["dec_cq"],
        packed["dec_cproj"], packed["dec_fc1"], packed["dec_fc2"],
        packed["dec_vec"], packed["dec_fc1b"],
        packed["head_w"],
    )
    del ntask

    res_m = out[:, 0, 0:1]                                        # (bs, 1)         -> l2
    res_d = out[:, 0, 1:1 + n_cls]                                # (bs, n_cls)     -> l3
    res_s = out[:, 1:, 1 + n_cls:2 + n_cls].reshape(bs, T, 1, 1)  # (bs, T, 1, 1)   -> l4
    return res_m, res_d, res_s


# -------------------------------- parameter init --------------------------------

def init_params(key, cfg):
    """Module-shaped parameters (weights stored x @ W, i.e. transposed vs torch)."""
    E = cfg["embed_dim"]
    T = cfg["input_tokens"]
    TD = cfg["token_dim"]
    Hd = int(E * cfg["mlp_ratio"])
    n_cls = cfg["n_cls"]
    keys = iter(jax.random.split(key, 1024))
    nk = lambda: next(keys)
    dense = lambda fi, fo, std=0.02: std * jax.random.normal(nk(), (fi, fo), jnp.float32)
    ones = lambda: jnp.ones((E,), jnp.float32)
    zeros = lambda n=E: jnp.zeros((n,), jnp.float32)

    def enc_block():
        return dict(n1_g=ones(), n1_b=zeros(), n2_g=ones(), n2_b=zeros(),
                    qkv_w=dense(E, 3 * E), proj_w=dense(E, E), proj_b=zeros(),
                    fc1_w=dense(E, Hd), fc1_b=zeros(Hd),
                    fc2_w=dense(Hd, E), fc2_b=zeros())

    def dec_block():
        return dict(nx_g=ones(), nx_b=zeros(), nkv_g=ones(), nkv_b=zeros(),
                    nq_g=ones(), nq_b=zeros(), nmlp_g=ones(), nmlp_b=zeros(),
                    s_qkv_w=dense(E, 3 * E), s_proj_w=dense(E, E), s_proj_b=zeros(),
                    c_kv_w=dense(E, 2 * E), c_q_w=dense(E, E),
                    c_proj_w=dense(E, E), c_proj_b=zeros(),
                    fc1_w=dense(E, Hd), fc1_b=zeros(Hd),
                    fc2_w=dense(Hd, E), fc2_b=zeros())

    return dict(
        l1_w=dense(TD, E), l1_b=zeros(),
        # trunc_normal_(std=1.0) approximated with normal for pos/out embeds,
        # std=0.02 for cls embed (init-time only).
        pos_embed=jax.random.normal(nk(), (1, T + 1, E), jnp.float32),
        out_embed=jax.random.normal(nk(), (cfg["task_nums"], T + 1, E), jnp.float32),
        cls_embed=0.02 * jax.random.normal(nk(), (1, 1, E), jnp.float32),
        enc_blocks=[enc_block() for _ in range(cfg["encoder_depth"])],
        dec_blocks=[dec_block() for _ in range(cfg["decoder_depth"])],
        l2_w=dense(E, 1), l3_w=dense(E, n_cls), l4_w=dense(E, 1),
    )


def pack_params(params, cfg):
    """Kernel-ready packing: stacked layer axes, bf16 weights, packed LN/bias vecs,
    merged + lane-padded output head."""
    E = cfg["embed_dim"]
    T = cfg["input_tokens"]
    Hd = int(E * cfg["mlp_ratio"])
    wdt = jnp.bfloat16
    enc = params["enc_blocks"]
    dec = params["dec_blocks"]

    def st(blocks, key_):
        return jnp.stack([b[key_] for b in blocks]).astype(wdt)

    head = jnp.concatenate([params["l2_w"], params["l3_w"], params["l4_w"]], axis=1)
    HP = ((head.shape[1] + 127) // 128) * 128
    head = jnp.pad(head, ((0, 0), (0, HP - head.shape[1])))

    return dict(
        l1_w=params["l1_w"].astype(wdt),
        l1_b=params["l1_b"].reshape(1, E).astype(jnp.float32),
        cls=params["cls_embed"].reshape(1, E).astype(jnp.float32),
        pos=params["pos_embed"].reshape(T + 1, E).astype(jnp.float32),
        out_embed=params["out_embed"].astype(jnp.float32),
        enc_qkv=st(enc, "qkv_w"), enc_proj=st(enc, "proj_w"),
        enc_fc1=st(enc, "fc1_w"), enc_fc2=st(enc, "fc2_w"),
        enc_vec=jnp.stack([jnp.stack([b["n1_g"], b["n1_b"], b["n2_g"], b["n2_b"],
                                      b["proj_b"], b["fc2_b"]])
                           for b in enc]).astype(jnp.float32),
        enc_fc1b=jnp.stack([b["fc1_b"] for b in enc]).reshape(len(enc), 1, Hd)
                    .astype(jnp.float32),
        dec_sqkv=st(dec, "s_qkv_w"), dec_sproj=st(dec, "s_proj_w"),
        dec_ckv=st(dec, "c_kv_w"), dec_cq=st(dec, "c_q_w"), dec_cproj=st(dec, "c_proj_w"),
        dec_fc1=st(dec, "fc1_w"), dec_fc2=st(dec, "fc2_w"),
        dec_vec=jnp.stack([jnp.stack([b["nx_g"], b["nx_b"], b["nkv_g"], b["nkv_b"],
                                      b["nq_g"], b["nq_b"], b["nmlp_g"], b["nmlp_b"],
                                      b["s_proj_b"], b["c_proj_b"], b["fc2_b"]])
                           for b in dec]).astype(jnp.float32),
        dec_fc1b=jnp.stack([b["fc1_b"] for b in dec]).reshape(len(dec), 1, Hd)
                    .astype(jnp.float32),
        head_w=head.astype(wdt),
    )


# ------------------------------------- main -------------------------------------

if __name__ == "__main__":
    cfg = dict(input_tokens=8, token_dim=32, embed_dim=32,
               encoder_depth=2, decoder_depth=2,
               n_cls=5, num_heads=4, mlp_ratio=4.0, task_nums=3)

    key = jax.random.PRNGKey(0)
    k_params, k_fmap = jax.random.split(key)
    params = init_params(k_params, cfg)
    packed = pack_params(params, cfg)

    bs = 2
    fmap = jax.random.normal(
        k_fmap, (bs, cfg["input_tokens"], cfg["token_dim"]), jnp.float32)
    which_task = 1

    fwd = jax.jit(functools.partial(full_transformer_forward, cfg=cfg))
    res_m, res_d, res_s = fwd(packed, fmap, which_task)
    jax.block_until_ready((res_m, res_d, res_s))

    assert res_m.shape == (bs, 1)
    assert res_d.shape == (bs, cfg["n_cls"])
    assert res_s.shape == (bs, cfg["input_tokens"], 1, 1)
    assert bool(jnp.all(jnp.isfinite(res_m)))
    assert bool(jnp.all(jnp.isfinite(res_d)))
    assert bool(jnp.all(jnp.isfinite(res_s)))
    print("KERNEL_OK")
</pallas_src>

<mosaic_0001>
module attributes {stable_mosaic.version = 11 : i64} {
  func.func @_full_forward_kernel(%arg0: i32, %arg1: memref<1xi32, #tpu.memory_space<smem>>, %arg2: memref<1x8x32xbf16, #tpu.memory_space<vmem>>, %arg3: memref<32x32xbf16, #tpu.memory_space<vmem>>, %arg4: memref<1x32xf32, #tpu.memory_space<vmem>>, %arg5: memref<1x32xf32, #tpu.memory_space<vmem>>, %arg6: memref<9x32xf32, #tpu.memory_space<vmem>>, %arg7: memref<1x9x32xf32, #tpu.memory_space<vmem>>, %arg8: memref<2x32x96xbf16, #tpu.memory_space<vmem>>, %arg9: memref<2x32x32xbf16, #tpu.memory_space<vmem>>, %arg10: memref<2x32x128xbf16, #tpu.memory_space<vmem>>, %arg11: memref<2x128x32xbf16, #tpu.memory_space<vmem>>, %arg12: memref<2x6x32xf32, #tpu.memory_space<vmem>>, %arg13: memref<2x1x128xf32, #tpu.memory_space<vmem>>, %arg14: memref<2x32x96xbf16, #tpu.memory_space<vmem>>, %arg15: memref<2x32x32xbf16, #tpu.memory_space<vmem>>, %arg16: memref<2x32x64xbf16, #tpu.memory_space<vmem>>, %arg17: memref<2x32x32xbf16, #tpu.memory_space<vmem>>, %arg18: memref<2x32x32xbf16, #tpu.memory_space<vmem>>, %arg19: memref<2x32x128xbf16, #tpu.memory_space<vmem>>, %arg20: memref<2x128x32xbf16, #tpu.memory_space<vmem>>, %arg21: memref<2x11x32xf32, #tpu.memory_space<vmem>>, %arg22: memref<2x1x128xf32, #tpu.memory_space<vmem>>, %arg23: memref<32x128xbf16, #tpu.memory_space<vmem>>, %arg24: memref<1x9x128xf32, #tpu.memory_space<vmem>>) attributes {dimension_semantics = [#tpu.dimension_semantics<parallel>], iteration_bounds = array<i64: 2>, scalar_prefetch = 1 : i64, scratch_operands = 0 : i64, tpu.core_type = #tpu.core_type<tc>, window_params = [{transform_indices = @transform_0, window_bounds = array<i64: 1, 8, 32>}, {pipeline_mode = #tpu.pipeline_mode<synchronous>, transform_indices = @transform_1, window_bounds = array<i64: 32, 32>}, {pipeline_mode = #tpu.pipeline_mode<synchronous>, transform_indices = @transform_2, window_bounds = array<i64: 1, 32>}, {pipeline_mode = #tpu.pipeline_mode<synchronous>, transform_indices = @transform_3, window_bounds = array<i64: 1, 32>}, {pipeline_mode = #tpu.pipeline_mode<synchronous>, transform_indices = @transform_4, window_bounds = array<i64: 9, 32>}, {transform_indices = @transform_5, window_bounds = array<i64: 1, 9, 32>}, {pipeline_mode = #tpu.pipeline_mode<synchronous>, transform_indices = @transform_6, window_bounds = array<i64: 2, 32, 96>}, {pipeline_mode = #tpu.pipeline_mode<synchronous>, transform_indices = @transform_7, window_bounds = array<i64: 2, 32, 32>}, {pipeline_mode = #tpu.pipeline_mode<synchronous>, transform_indices = @transform_8, window_bounds = array<i64: 2, 32, 128>}, {pipeline_mode = #tpu.pipeline_mode<synchronous>, transform_indices = @transform_9, window_bounds = array<i64: 2, 128, 32>}, {pipeline_mode = #tpu.pipeline_mode<synchronous>, transform_indices = @transform_10, window_bounds = array<i64: 2, 6, 32>}, {pipeline_mode = #tpu.pipeline_mode<synchronous>, transform_indices = @transform_11, window_bounds = array<i64: 2, 1, 128>}, {pipeline_mode = #tpu.pipeline_mode<synchronous>, transform_indices = @transform_12, window_bounds = array<i64: 2, 32, 96>}, {pipeline_mode = #tpu.pipeline_mode<synchronous>, transform_indices = @transform_13, window_bounds = array<i64: 2, 32, 32>}, {pipeline_mode = #tpu.pipeline_mode<synchronous>, transform_indices = @transform_14, window_bounds = array<i64: 2, 32, 64>}, {pipeline_mode = #tpu.pipeline_mode<synchronous>, transform_indices = @transform_15, window_bounds = array<i64: 2, 32, 32>}, {pipeline_mode = #tpu.pipeline_mode<synchronous>, transform_indices = @transform_16, window_bounds = array<i64: 2, 32, 32>}, {pipeline_mode = #tpu.pipeline_mode<synchronous>, transform_indices = @transform_17, window_bounds = array<i64: 2, 32, 128>}, {pipeline_mode = #tpu.pipeline_mode<synchronous>, transform_indices = @transform_18, window_bounds = array<i64: 2, 128, 32>}, {pipeline_mode = #tpu.pipeline_mode<synchronous>, transform_indices = @transform_19, window_bounds = array<i64: 2, 11, 32>}, {pipeline_mode = #tpu.pipeline_mode<synchronous>, transform_indices = @transform_20, window_bounds = array<i64: 2, 1, 128>}, {pipeline_mode = #tpu.pipeline_mode<synchronous>, transform_indices = @transform_21, window_bounds = array<i64: 32, 128>}, {transform_indices = @transform_22, window_bounds = array<i64: 1, 9, 128>}]} {
    %c0 = arith.constant 0 : index
    %c0_0 = arith.constant 0 : index
    %0 = vector.load %arg3[%c0, %c0_0] : memref<32x32xbf16, #tpu.memory_space<vmem>>, vector<32x32xbf16>
    %c0_1 = arith.constant 0 : index
    %c0_2 = arith.constant 0 : index
    %1 = vector.load %arg4[%c0_1, %c0_2] : memref<1x32xf32, #tpu.memory_space<vmem>>, vector<1x32xf32>
    %c0_3 = arith.constant 0 : index
    %c0_4 = arith.constant 0 : index
    %2 = vector.load %arg5[%c0_3, %c0_4] : memref<1x32xf32, #tpu.memory_space<vmem>>, vector<1x32xf32>
    %c0_5 = arith.constant 0 : index
    %c0_6 = arith.constant 0 : index
    %3 = vector.load %arg6[%c0_5, %c0_6] : memref<9x32xf32, #tpu.memory_space<vmem>>, vector<9x32xf32>
    %c0_7 = arith.constant 0 : index
    %c0_8 = arith.constant 0 : index
    %c0_9 = arith.constant 0 : index
    %4 = vector.load %arg2[%c0_7, %c0_8, %c0_9] : memref<1x8x32xbf16, #tpu.memory_space<vmem>>, vector<1x8x32xbf16>
    %5 = vector.shape_cast %4 : vector<1x8x32xbf16> to vector<8x32xbf16>
    %cst = arith.constant dense<0.000000e+00> : vector<8x32xf32>
    %6 = tpu.matmul %5, %0, %cst {dimension_numbers = #tpu.dot_dimension_numbers<[1], [0], [0], [1], [0, 0, 1, 1], [], []>} : vector<8x32xbf16>, vector<32x32xbf16>, vector<8x32xf32> -> vector<8x32xf32>
    %7 = vector.broadcast %1 : vector<1x32xf32> to vector<8x32xf32>
    %8 = arith.addf %6, %7 : vector<8x32xf32>
    %9 = tpu.concatenate %2, %8 in 0 : vector<1x32xf32>, vector<8x32xf32> -> vector<9x32xf32>
    %10 = arith.addf %9, %3 : vector<9x32xf32>
    %c0_10 = arith.constant 0 : index
    %c0_11 = arith.constant 0 : index
    %c0_12 = arith.constant 0 : index
    %11 = vector.load %arg12[%c0_10, %c0_11, %c0_12] : memref<2x6x32xf32, #tpu.memory_space<vmem>>, vector<1x6x32xf32>
    %12 = vector.shape_cast %11 : vector<1x6x32xf32> to vector<6x32xf32>
    %13 = vector.extract_strided_slice %12 {offsets = [0, 0], sizes = [1, 32], strides = [1, 1]} : vector<6x32xf32> to vector<1x32xf32>
    %14 = vector.extract_strided_slice %12 {offsets = [1, 0], sizes = [1, 32], strides = [1, 1]} : vector<6x32xf32> to vector<1x32xf32>
    %cst_13 = arith.constant dense<0.000000e+00> : vector<9xf32>
    %15 = vector.multi_reduction <add>, %10, %cst_13 [1] : vector<9x32xf32> to vector<9xf32>
    %16 = vector.shape_cast %15 : vector<9xf32> to vector<9x1xf32>
    %cst_14 = arith.constant 3.200000e+01 : f32
    %17 = vector.broadcast %cst_14 : f32 to vector<9x1xf32>
    %18 = arith.divf %16, %17 : vector<9x1xf32>
    %19 = vector.broadcast %18 : vector<9x1xf32> to vector<9x32xf32>
    %20 = arith.subf %10, %19 : vector<9x32xf32>
    %21 = arith.mulf %20, %20 : vector<9x32xf32>
    %cst_15 = arith.constant dense<0.000000e+00> : vector<9xf32>
    %22 = vector.multi_reduction <add>, %21, %cst_15 [1] : vector<9x32xf32> to vector<9xf32>
    %23 = vector.shape_cast %22 : vector<9xf32> to vector<9x1xf32>
    %cst_16 = arith.constant 3.200000e+01 : f32
    %24 = vector.broadcast %cst_16 : f32 to vector<9x1xf32>
    %25 = arith.divf %23, %24 : vector<9x1xf32>
    %cst_17 = arith.constant 9.99999974E-6 : f32
    %26 = vector.broadcast %cst_17 : f32 to vector<9x1xf32>
    %27 = arith.addf %25, %26 : vector<9x1xf32>
    %28 = math.rsqrt %27 : vector<9x1xf32>
    %29 = vector.broadcast %28 : vector<9x1xf32> to vector<9x32xf32>
    %30 = arith.mulf %20, %29 : vector<9x32xf32>
    %31 = vector.broadcast %13 : vector<1x32xf32> to vector<9x32xf32>
    %32 = arith.mulf %30, %31 : vector<9x32xf32>
    %33 = vector.broadcast %14 : vector<1x32xf32> to vector<9x32xf32>
    %34 = arith.addf %32, %33 : vector<9x32xf32>
    %c0_18 = arith.constant 0 : index
    %c0_19 = arith.constant 0 : index
    %c0_20 = arith.constant 0 : index
    %35 = vector.load %arg8[%c0_18, %c0_19, %c0_20] : memref<2x32x96xbf16, #tpu.memory_space<vmem>>, vector<1x32x96xbf16>
    %36 = vector.shape_cast %35 : vector<1x32x96xbf16> to vector<32x96xbf16>
    %c0_21 = arith.constant 0 : index
    %c0_22 = arith.constant 0 : index
    %c0_23 = arith.constant 0 : index
    %37 = vector.load %arg9[%c0_21, %c0_22, %c0_23] : memref<2x32x32xbf16, #tpu.memory_space<vmem>>, vector<1x32x32xbf16>
    %38 = vector.shape_cast %37 : vector<1x32x32xbf16> to vector<32x32xbf16>
    %39 = vector.extract_strided_slice %12 {offsets = [4, 0], sizes = [1, 32], strides = [1, 1]} : vector<6x32xf32> to vector<1x32xf32>
    %40 = arith.truncf %34 : vector<9x32xf32> to vector<9x32xbf16>
    %cst_24 = arith.constant dense<0.000000e+00> : vector<9x96xf32>
    %41 = tpu.matmul %40, %36, %cst_24 {dimension_numbers = #tpu.dot_dimension_numbers<[1], [0], [0], [1], [0, 0, 1, 1], [], []>} : vector<9x32xbf16>, vector<32x96xbf16>, vector<9x96xf32> -> vector<9x96xf32>
    %42 = vector.extract_strided_slice %41 {offsets = [0, 0], sizes = [9, 32], strides = [1, 1]} : vector<9x96xf32> to vector<9x32xf32>
    %43 = vector.extract_strided_slice %41 {offsets = [0, 32], sizes = [9, 32], strides = [1, 1]} : vector<9x96xf32> to vector<9x32xf32>
    %44 = vector.extract_strided_slice %41 {offsets = [0, 64], sizes = [9, 32], strides = [1, 1]} : vector<9x96xf32> to vector<9x32xf32>
    %45 = vector.extract_strided_slice %42 {offsets = [0, 0], sizes = [9, 8], strides = [1, 1]} : vector<9x32xf32> to vector<9x8xf32>
    %46 = vector.extract_strided_slice %43 {offsets = [0, 0], sizes = [9, 8], strides = [1, 1]} : vector<9x32xf32> to vector<9x8xf32>
    %47 = vector.extract_strided_slice %44 {offsets = [0, 0], sizes = [9, 8], strides = [1, 1]} : vector<9x32xf32> to vector<9x8xf32>
    %cst_25 = arith.constant dense<0.000000e+00> : vector<9x9xf32>
    %48 = tpu.matmul %45, %46, %cst_25 {dimension_numbers = #tpu.dot_dimension_numbers<[1], [1], [0], [0], [0, 0, 1, 0], [], []>} : vector<9x8xf32>, vector<9x8xf32>, vector<9x9xf32> -> vector<9x9xf32>
    %cst_26 = arith.constant 0.353553385 : f32
    %49 = vector.broadcast %cst_26 : f32 to vector<9x9xf32>
    %50 = arith.mulf %48, %49 : vector<9x9xf32>
    %cst_27 = arith.constant dense<0xFF800000> : vector<9xf32>
    %51 = vector.multi_reduction <maximumf>, %50, %cst_27 [1] : vector<9x9xf32> to vector<9xf32>
    %52 = vector.shape_cast %51 : vector<9xf32> to vector<9x1xf32>
    %53 = vector.broadcast %52 : vector<9x1xf32> to vector<9x9xf32>
    %54 = arith.subf %50, %53 : vector<9x9xf32>
    %55 = math.exp %54 : vector<9x9xf32>
    %cst_28 = arith.constant dense<0.000000e+00> : vector<9xf32>
    %56 = vector.multi_reduction <add>, %55, %cst_28 [1] : vector<9x9xf32> to vector<9xf32>
    %57 = vector.shape_cast %56 : vector<9xf32> to vector<9x1xf32>
    %58 = tpu.reciprocal %57 {approx = true} : vector<9x1xf32> -> vector<9x1xf32>
    %59 = vector.broadcast %58 : vector<9x1xf32> to vector<9x9xf32>
    %60 = arith.mulf %55, %59 : vector<9x9xf32>
    %cst_29 = arith.constant dense<0.000000e+00> : vector<9x8xf32>
    %61 = tpu.matmul %60, %47, %cst_29 {dimension_numbers = #tpu.dot_dimension_numbers<[1], [0], [0], [1], [0, 0, 1, 1], [], []>} : vector<9x9xf32>, vector<9x8xf32>, vector<9x8xf32> -> vector<9x8xf32>
    %62 = vector.extract_strided_slice %42 {offsets = [0, 8], sizes = [9, 8], strides = [1, 1]} : vector<9x32xf32> to vector<9x8xf32>
    %63 = vector.extract_strided_slice %43 {offsets = [0, 8], sizes = [9, 8], strides = [1, 1]} : vector<9x32xf32> to vector<9x8xf32>
    %64 = vector.extract_strided_slice %44 {offsets = [0, 8], sizes = [9, 8], strides = [1, 1]} : vector<9x32xf32> to vector<9x8xf32>
    %cst_30 = arith.constant dense<0.000000e+00> : vector<9x9xf32>
    %65 = tpu.matmul %62, %63, %cst_30 {dimension_numbers = #tpu.dot_dimension_numbers<[1], [1], [0], [0], [0, 0, 1, 0], [], []>} : vector<9x8xf32>, vector<9x8xf32>, vector<9x9xf32> -> vector<9x9xf32>
    %cst_31 = arith.constant 0.353553385 : f32
    %66 = vector.broadcast %cst_31 : f32 to vector<9x9xf32>
    %67 = arith.mulf %65, %66 : vector<9x9xf32>
    %cst_32 = arith.constant dense<0xFF800000> : vector<9xf32>
    %68 = vector.multi_reduction <maximumf>, %67, %cst_32 [1] : vector<9x9xf32> to vector<9xf32>
    %69 = vector.shape_cast %68 : vector<9xf32> to vector<9x1xf32>
    %70 = vector.broadcast %69 : vector<9x1xf32> to vector<9x9xf32>
    %71 = arith.subf %67, %70 : vector<9x9xf32>
    %72 = math.exp %71 : vector<9x9xf32>
    %cst_33 = arith.constant dense<0.000000e+00> : vector<9xf32>
    %73 = vector.multi_reduction <add>, %72, %cst_33 [1] : vector<9x9xf32> to vector<9xf32>
    %74 = vector.shape_cast %73 : vector<9xf32> to vector<9x1xf32>
    %75 = tpu.reciprocal %74 {approx = true} : vector<9x1xf32> -> vector<9x1xf32>
    %76 = vector.broadcast %75 : vector<9x1xf32> to vector<9x9xf32>
    %77 = arith.mulf %72, %76 : vector<9x9xf32>
    %cst_34 = arith.constant dense<0.000000e+00> : vector<9x8xf32>
    %78 = tpu.matmul %77, %64, %cst_34 {dimension_numbers = #tpu.dot_dimension_numbers<[1], [0], [0], [1], [0, 0, 1, 1], [], []>} : vector<9x9xf32>, vector<9x8xf32>, vector<9x8xf32> -> vector<9x8xf32>
    %79 = vector.extract_strided_slice %42 {offsets = [0, 16], sizes = [9, 8], strides = [1, 1]} : vector<9x32xf32> to vector<9x8xf32>
    %80 = vector.extract_strided_slice %43 {offsets = [0, 16], sizes = [9, 8], strides = [1, 1]} : vector<9x32xf32> to vector<9x8xf32>
    %81 = vector.extract_strided_slice %44 {offsets = [0, 16], sizes = [9, 8], strides = [1, 1]} : vector<9x32xf32> to vector<9x8xf32>
    %cst_35 = arith.constant dense<0.000000e+00> : vector<9x9xf32>
    %82 = tpu.matmul %79, %80, %cst_35 {dimension_numbers = #tpu.dot_dimension_numbers<[1], [1], [0], [0], [0, 0, 1, 0], [], []>} : vector<9x8xf32>, vector<9x8xf32>, vector<9x9xf32> -> vector<9x9xf32>
    %cst_36 = arith.constant 0.353553385 : f32
    %83 = vector.broadcast %cst_36 : f32 to vector<9x9xf32>
    %84 = arith.mulf %82, %83 : vector<9x9xf32>
    %cst_37 = arith.constant dense<0xFF800000> : vector<9xf32>
    %85 = vector.multi_reduction <maximumf>, %84, %cst_37 [1] : vector<9x9xf32> to vector<9xf32>
    %86 = vector.shape_cast %85 : vector<9xf32> to vector<9x1xf32>
    %87 = vector.broadcast %86 : vector<9x1xf32> to vector<9x9xf32>
    %88 = arith.subf %84, %87 : vector<9x9xf32>
    %89 = math.exp %88 : vector<9x9xf32>
    %cst_38 = arith.constant dense<0.000000e+00> : vector<9xf32>
    %90 = vector.multi_reduction <add>, %89, %cst_38 [1] : vector<9x9xf32> to vector<9xf32>
    %91 = vector.shape_cast %90 : vector<9xf32> to vector<9x1xf32>
    %92 = tpu.reciprocal %91 {approx = true} : vector<9x1xf32> -> vector<9x1xf32>
    %93 = vector.broadcast %92 : vector<9x1xf32> to vector<9x9xf32>
    %94 = arith.mulf %89, %93 : vector<9x9xf32>
    %cst_39 = arith.constant dense<0.000000e+00> : vector<9x8xf32>
    %95 = tpu.matmul %94, %81, %cst_39 {dimension_numbers = #tpu.dot_dimension_numbers<[1], [0], [0], [1], [0, 0, 1, 1], [], []>} : vector<9x9xf32>, vector<9x8xf32>, vector<9x8xf32> -> vector<9x8xf32>
    %96 = vector.extract_strided_slice %42 {offsets = [0, 24], sizes = [9, 8], strides = [1, 1]} : vector<9x32xf32> to vector<9x8xf32>
    %97 = vector.extract_strided_slice %43 {offsets = [0, 24], sizes = [9, 8], strides = [1, 1]} : vector<9x32xf32> to vector<9x8xf32>
    %98 = vector.extract_strided_slice %44 {offsets = [0, 24], sizes = [9, 8], strides = [1, 1]} : vector<9x32xf32> to vector<9x8xf32>
    %cst_40 = arith.constant dense<0.000000e+00> : vector<9x9xf32>
    %99 = tpu.matmul %96, %97, %cst_40 {dimension_numbers = #tpu.dot_dimension_numbers<[1], [1], [0], [0], [0, 0, 1, 0], [], []>} : vector<9x8xf32>, vector<9x8xf32>, vector<9x9xf32> -> vector<9x9xf32>
    %cst_41 = arith.constant 0.353553385 : f32
    %100 = vector.broadcast %cst_41 : f32 to vector<9x9xf32>
    %101 = arith.mulf %99, %100 : vector<9x9xf32>
    %cst_42 = arith.constant dense<0xFF800000> : vector<9xf32>
    %102 = vector.multi_reduction <maximumf>, %101, %cst_42 [1] : vector<9x9xf32> to vector<9xf32>
    %103 = vector.shape_cast %102 : vector<9xf32> to vector<9x1xf32>
    %104 = vector.broadcast %103 : vector<9x1xf32> to vector<9x9xf32>
    %105 = arith.subf %101, %104 : vector<9x9xf32>
    %106 = math.exp %105 : vector<9x9xf32>
    %cst_43 = arith.constant dense<0.000000e+00> : vector<9xf32>
    %107 = vector.multi_reduction <add>, %106, %cst_43 [1] : vector<9x9xf32> to vector<9xf32>
    %108 = vector.shape_cast %107 : vector<9xf32> to vector<9x1xf32>
    %109 = tpu.reciprocal %108 {approx = true} : vector<9x1xf32> -> vector<9x1xf32>
    %110 = vector.broadcast %109 : vector<9x1xf32> to vector<9x9xf32>
    %111 = arith.mulf %106, %110 : vector<9x9xf32>
    %cst_44 = arith.constant dense<0.000000e+00> : vector<9x8xf32>
    %112 = tpu.matmul %111, %98, %cst_44 {dimension_numbers = #tpu.dot_dimension_numbers<[1], [0], [0], [1], [0, 0, 1, 1], [], []>} : vector<9x9xf32>, vector<9x8xf32>, vector<9x8xf32> -> vector<9x8xf32>
    %113 = tpu.concatenate %61, %78, %95, %112 in 1 : vector<9x8xf32>, vector<9x8xf32>, vector<9x8xf32>, vector<9x8xf32> -> vector<9x32xf32>
    %114 = arith.truncf %113 : vector<9x32xf32> to vector<9x32xbf16>
    %cst_45 = arith.constant dense<0.000000e+00> : vector<9x32xf32>
    %115 = tpu.matmul %114, %38, %cst_45 {dimension_numbers = #tpu.dot_dimension_numbers<[1], [0], [0], [1], [0, 0, 1, 1], [], []>} : vector<9x32xbf16>, vector<32x32xbf16>, vector<9x32xf32> -> vector<9x32xf32>
    %116 = vector.broadcast %39 : vector<1x32xf32> to vector<9x32xf32>
    %117 = arith.addf %115, %116 : vector<9x32xf32>
    %118 = arith.addf %10, %117 : vector<9x32xf32>
    %119 = vector.extract_strided_slice %12 {offsets = [2, 0], sizes = [1, 32], strides = [1, 1]} : vector<6x32xf32> to vector<1x32xf32>
    %120 = vector.extract_strided_slice %12 {offsets = [3, 0], sizes = [1, 32], strides = [1, 1]} : vector<6x32xf32> to vector<1x32xf32>
    %cst_46 = arith.constant dense<0.000000e+00> : vector<9xf32>
    %121 = vector.multi_reduction <add>, %118, %cst_46 [1] : vector<9x32xf32> to vector<9xf32>
    %122 = vector.shape_cast %121 : vector<9xf32> to vector<9x1xf32>
    %cst_47 = arith.constant 3.200000e+01 : f32
    %123 = vector.broadcast %cst_47 : f32 to vector<9x1xf32>
    %124 = arith.divf %122, %123 : vector<9x1xf32>
    %125 = vector.broadcast %124 : vector<9x1xf32> to vector<9x32xf32>
    %126 = arith.subf %118, %125 : vector<9x32xf32>
    %127 = arith.mulf %126, %126 : vector<9x32xf32>
    %cst_48 = arith.constant dense<0.000000e+00> : vector<9xf32>
    %128 = vector.multi_reduction <add>, %127, %cst_48 [1] : vector<9x32xf32> to vector<9xf32>
    %129 = vector.shape_cast %128 : vector<9xf32> to vector<9x1xf32>
    %cst_49 = arith.constant 3.200000e+01 : f32
    %130 = vector.broadcast %cst_49 : f32 to vector<9x1xf32>
    %131 = arith.divf %129, %130 : vector<9x1xf32>
    %cst_50 = arith.constant 9.99999974E-6 : f32
    %132 = vector.broadcast %cst_50 : f32 to vector<9x1xf32>
    %133 = arith.addf %131, %132 : vector<9x1xf32>
    %134 = math.rsqrt %133 : vector<9x1xf32>
    %135 = vector.broadcast %134 : vector<9x1xf32> to vector<9x32xf32>
    %136 = arith.mulf %126, %135 : vector<9x32xf32>
    %137 = vector.broadcast %119 : vector<1x32xf32> to vector<9x32xf32>
    %138 = arith.mulf %136, %137 : vector<9x32xf32>
    %139 = vector.broadcast %120 : vector<1x32xf32> to vector<9x32xf32>
    %140 = arith.addf %138, %139 : vector<9x32xf32>
    %c0_51 = arith.constant 0 : index
    %c0_52 = arith.constant 0 : index
    %c0_53 = arith.constant 0 : index
    %141 = vector.load %arg10[%c0_51, %c0_52, %c0_53] : memref<2x32x128xbf16, #tpu.memory_space<vmem>>, vector<1x32x128xbf16>
    %142 = vector.shape_cast %141 : vector<1x32x128xbf16> to vector<32x128xbf16>
    %c0_54 = arith.constant 0 : index
    %c0_55 = arith.constant 0 : index
    %c0_56 = arith.constant 0 : index
    %143 = vector.load %arg13[%c0_54, %c0_55, %c0_56] : memref<2x1x128xf32, #tpu.memory_space<vmem>>, vector<1x1x128xf32>
    %144 = vector.shape_cast %143 : vector<1x1x128xf32> to vector<1x128xf32>
    %c0_57 = arith.constant 0 : index
    %c0_58 = arith.constant 0 : index
    %c0_59 = arith.constant 0 : index
    %145 = vector.load %arg11[%c0_57, %c0_58, %c0_59] : memref<2x128x32xbf16, #tpu.memory_space<vmem>>, vector<1x128x32xbf16>
    %146 = vector.shape_cast %145 : vector<1x128x32xbf16> to vector<128x32xbf16>
    %147 = vector.extract_strided_slice %12 {offsets = [5, 0], sizes = [1, 32], strides = [1, 1]} : vector<6x32xf32> to vector<1x32xf32>
    %148 = arith.truncf %140 : vector<9x32xf32> to vector<9x32xbf16>
    %cst_60 = arith.constant dense<0.000000e+00> : vector<9x128xf32>
    %149 = tpu.matmul %148, %142, %cst_60 {dimension_numbers = #tpu.dot_dimension_numbers<[1], [0], [0], [1], [0, 0, 1, 1], [], []>} : vector<9x32xbf16>, vector<32x128xbf16>, vector<9x128xf32> -> vector<9x128xf32>
    %150 = vector.broadcast %144 : vector<1x128xf32> to vector<9x128xf32>
    %151 = arith.addf %149, %150 : vector<9x128xf32>
    %cst_61 = arith.constant 5.000000e-01 : f32
    %152 = vector.broadcast %cst_61 : f32 to vector<9x128xf32>
    %153 = arith.mulf %151, %152 : vector<9x128xf32>
    %cst_62 = arith.constant 0.707106769 : f32
    %154 = vector.broadcast %cst_62 : f32 to vector<9x128xf32>
    %155 = arith.mulf %151, %154 : vector<9x128xf32>
    %156 = math.erf %155 : vector<9x128xf32>
    %cst_63 = arith.constant 1.000000e+00 : f32
    %157 = vector.broadcast %cst_63 : f32 to vector<9x128xf32>
    %158 = arith.addf %157, %156 : vector<9x128xf32>
    %159 = arith.mulf %153, %158 : vector<9x128xf32>
    %160 = arith.truncf %159 : vector<9x128xf32> to vector<9x128xbf16>
    %cst_64 = arith.constant dense<0.000000e+00> : vector<9x32xf32>
    %161 = tpu.matmul %160, %146, %cst_64 {dimension_numbers = #tpu.dot_dimension_numbers<[1], [0], [0], [1], [0, 0, 1, 1], [], []>} : vector<9x128xbf16>, vector<128x32xbf16>, vector<9x32xf32> -> vector<9x32xf32>
    %162 = vector.broadcast %147 : vector<1x32xf32> to vector<9x32xf32>
    %163 = arith.addf %161, %162 : vector<9x32xf32>
    %164 = arith.addf %118, %163 : vector<9x32xf32>
    %c1 = arith.constant 1 : index
    %c0_65 = arith.constant 0 : index
    %c0_66 = arith.constant 0 : index
    %165 = vector.load %arg12[%c1, %c0_65, %c0_66] : memref<2x6x32xf32, #tpu.memory_space<vmem>>, vector<1x6x32xf32>
    %166 = vector.shape_cast %165 : vector<1x6x32xf32> to vector<6x32xf32>
    %167 = vector.extract_strided_slice %166 {offsets = [0, 0], sizes = [1, 32], strides = [1, 1]} : vector<6x32xf32> to vector<1x32xf32>
    %168 = vector.extract_strided_slice %166 {offsets = [1, 0], sizes = [1, 32], strides = [1, 1]} : vector<6x32xf32> to vector<1x32xf32>
    %cst_67 = arith.constant dense<0.000000e+00> : vector<9xf32>
    %169 = vector.multi_reduction <add>, %164, %cst_67 [1] : vector<9x32xf32> to vector<9xf32>
    %170 = vector.shape_cast %169 : vector<9xf32> to vector<9x1xf32>
    %cst_68 = arith.constant 3.200000e+01 : f32
    %171 = vector.broadcast %cst_68 : f32 to vector<9x1xf32>
    %172 = arith.divf %170, %171 : vector<9x1xf32>
    %173 = vector.broadcast %172 : vector<9x1xf32> to vector<9x32xf32>
    %174 = arith.subf %164, %173 : vector<9x32xf32>
    %175 = arith.mulf %174, %174 : vector<9x32xf32>
    %cst_69 = arith.constant dense<0.000000e+00> : vector<9xf32>
    %176 = vector.multi_reduction <add>, %175, %cst_69 [1] : vector<9x32xf32> to vector<9xf32>
    %177 = vector.shape_cast %176 : vector<9xf32> to vector<9x1xf32>
    %cst_70 = arith.constant 3.200000e+01 : f32
    %178 = vector.broadcast %cst_70 : f32 to vector<9x1xf32>
    %179 = arith.divf %177, %178 : vector<9x1xf32>
    %cst_71 = arith.constant 9.99999974E-6 : f32
    %180 = vector.broadcast %cst_71 : f32 to vector<9x1xf32>
    %181 = arith.addf %179, %180 : vector<9x1xf32>
    %182 = math.rsqrt %181 : vector<9x1xf32>
    %183 = vector.broadcast %182 : vector<9x1xf32> to vector<9x32xf32>
    %184 = arith.mulf %174, %183 : vector<9x32xf32>
    %185 = vector.broadcast %167 : vector<1x32xf32> to vector<9x32xf32>
    %186 = arith.mulf %184, %185 : vector<9x32xf32>
    %187 = vector.broadcast %168 : vector<1x32xf32> to vector<9x32xf32>
    %188 = arith.addf %186, %187 : vector<9x32xf32>
    %c1_72 = arith.constant 1 : index
    %c0_73 = arith.constant 0 : index
    %c0_74 = arith.constant 0 : index
    %189 = vector.load %arg8[%c1_72, %c0_73, %c0_74] : memref<2x32x96xbf16, #tpu.memory_space<vmem>>, vector<1x32x96xbf16>
    %190 = vector.shape_cast %189 : vector<1x32x96xbf16> to vector<32x96xbf16>
    %c1_75 = arith.constant 1 : index
    %c0_76 = arith.constant 0 : index
    %c0_77 = arith.constant 0 : index
    %191 = vector.load %arg9[%c1_75, %c0_76, %c0_77] : memref<2x32x32xbf16, #tpu.memory_space<vmem>>, vector<1x32x32xbf16>
    %192 = vector.shape_cast %191 : vector<1x32x32xbf16> to vector<32x32xbf16>
    %193 = vector.extract_strided_slice %166 {offsets = [4, 0], sizes = [1, 32], strides = [1, 1]} : vector<6x32xf32> to vector<1x32xf32>
    %194 = arith.truncf %188 : vector<9x32xf32> to vector<9x32xbf16>
    %cst_78 = arith.constant dense<0.000000e+00> : vector<9x96xf32>
    %195 = tpu.matmul %194, %190, %cst_78 {dimension_numbers = #tpu.dot_dimension_numbers<[1], [0], [0], [1], [0, 0, 1, 1], [], []>} : vector<9x32xbf16>, vector<32x96xbf16>, vector<9x96xf32> -> vector<9x96xf32>
    %196 = vector.extract_strided_slice %195 {offsets = [0, 0], sizes = [9, 32], strides = [1, 1]} : vector<9x96xf32> to vector<9x32xf32>
    %197 = vector.extract_strided_slice %195 {offsets = [0, 32], sizes = [9, 32], strides = [1, 1]} : vector<9x96xf32> to vector<9x32xf32>
    %198 = vector.extract_strided_slice %195 {offsets = [0, 64], sizes = [9, 32], strides = [1, 1]} : vector<9x96xf32> to vector<9x32xf32>
    %199 = vector.extract_strided_slice %196 {offsets = [0, 0], sizes = [9, 8], strides = [1, 1]} : vector<9x32xf32> to vector<9x8xf32>
    %200 = vector.extract_strided_slice %197 {offsets = [0, 0], sizes = [9, 8], strides = [1, 1]} : vector<9x32xf32> to vector<9x8xf32>
    %201 = vector.extract_strided_slice %198 {offsets = [0, 0], sizes = [9, 8], strides = [1, 1]} : vector<9x32xf32> to vector<9x8xf32>
    %cst_79 = arith.constant dense<0.000000e+00> : vector<9x9xf32>
    %202 = tpu.matmul %199, %200, %cst_79 {dimension_numbers = #tpu.dot_dimension_numbers<[1], [1], [0], [0], [0, 0, 1, 0], [], []>} : vector<9x8xf32>, vector<9x8xf32>, vector<9x9xf32> -> vector<9x9xf32>
    %cst_80 = arith.constant 0.353553385 : f32
    %203 = vector.broadcast %cst_80 : f32 to vector<9x9xf32>
    %204 = arith.mulf %202, %203 : vector<9x9xf32>
    %cst_81 = arith.constant dense<0xFF800000> : vector<9xf32>
    %205 = vector.multi_reduction <maximumf>, %204, %cst_81 [1] : vector<9x9xf32> to vector<9xf32>
    %206 = vector.shape_cast %205 : vector<9xf32> to vector<9x1xf32>
    %207 = vector.broadcast %206 : vector<9x1xf32> to vector<9x9xf32>
    %208 = arith.subf %204, %207 : vector<9x9xf32>
    %209 = math.exp %208 : vector<9x9xf32>
    %cst_82 = arith.constant dense<0.000000e+00> : vector<9xf32>
    %210 = vector.multi_reduction <add>, %209, %cst_82 [1] : vector<9x9xf32> to vector<9xf32>
    %211 = vector.shape_cast %210 : vector<9xf32> to vector<9x1xf32>
    %212 = tpu.reciprocal %211 {approx = true} : vector<9x1xf32> -> vector<9x1xf32>
    %213 = vector.broadcast %212 : vector<9x1xf32> to vector<9x9xf32>
    %214 = arith.mulf %209, %213 : vector<9x9xf32>
    %cst_83 = arith.constant dense<0.000000e+00> : vector<9x8xf32>
    %215 = tpu.matmul %214, %201, %cst_83 {dimension_numbers = #tpu.dot_dimension_numbers<[1], [0], [0], [1], [0, 0, 1, 1], [], []>} : vector<9x9xf32>, vector<9x8xf32>, vector<9x8xf32> -> vector<9x8xf32>
    %216 = vector.extract_strided_slice %196 {offsets = [0, 8], sizes = [9, 8], strides = [1, 1]} : vector<9x32xf32> to vector<9x8xf32>
    %217 = vector.extract_strided_slice %197 {offsets = [0, 8], sizes = [9, 8], strides = [1, 1]} : vector<9x32xf32> to vector<9x8xf32>
    %218 = vector.extract_strided_slice %198 {offsets = [0, 8], sizes = [9, 8], strides = [1, 1]} : vector<9x32xf32> to vector<9x8xf32>
    %cst_84 = arith.constant dense<0.000000e+00> : vector<9x9xf32>
    %219 = tpu.matmul %216, %217, %cst_84 {dimension_numbers = #tpu.dot_dimension_numbers<[1], [1], [0], [0], [0, 0, 1, 0], [], []>} : vector<9x8xf32>, vector<9x8xf32>, vector<9x9xf32> -> vector<9x9xf32>
    %cst_85 = arith.constant 0.353553385 : f32
    %220 = vector.broadcast %cst_85 : f32 to vector<9x9xf32>
    %221 = arith.mulf %219, %220 : vector<9x9xf32>
    %cst_86 = arith.constant dense<0xFF800000> : vector<9xf32>
    %222 = vector.multi_reduction <maximumf>, %221, %cst_86 [1] : vector<9x9xf32> to vector<9xf32>
    %223 = vector.shape_cast %222 : vector<9xf32> to vector<9x1xf32>
    %224 = vector.broadcast %223 : vector<9x1xf32> to vector<9x9xf32>
    %225 = arith.subf %221, %224 : vector<9x9xf32>
    %226 = math.exp %225 : vector<9x9xf32>
    %cst_87 = arith.constant dense<0.000000e+00> : vector<9xf32>
    %227 = vector.multi_reduction <add>, %226, %cst_87 [1] : vector<9x9xf32> to vector<9xf32>
    %228 = vector.shape_cast %227 : vector<9xf32> to vector<9x1xf32>
    %229 = tpu.reciprocal %228 {approx = true} : vector<9x1xf32> -> vector<9x1xf32>
    %230 = vector.broadcast %229 : vector<9x1xf32> to vector<9x9xf32>
    %231 = arith.mulf %226, %230 : vector<9x9xf32>
    %cst_88 = arith.constant dense<0.000000e+00> : vector<9x8xf32>
    %232 = tpu.matmul %231, %218, %cst_88 {dimension_numbers = #tpu.dot_dimension_numbers<[1], [0], [0], [1], [0, 0, 1, 1], [], []>} : vector<9x9xf32>, vector<9x8xf32>, vector<9x8xf32> -> vector<9x8xf32>
    %233 = vector.extract_strided_slice %196 {offsets = [0, 16], sizes = [9, 8], strides = [1, 1]} : vector<9x32xf32> to vector<9x8xf32>
    %234 = vector.extract_strided_slice %197 {offsets = [0, 16], sizes = [9, 8], strides = [1, 1]} : vector<9x32xf32> to vector<9x8xf32>
    %235 = vector.extract_strided_slice %198 {offsets = [0, 16], sizes = [9, 8], strides = [1, 1]} : vector<9x32xf32> to vector<9x8xf32>
    %cst_89 = arith.constant dense<0.000000e+00> : vector<9x9xf32>
    %236 = tpu.matmul %233, %234, %cst_89 {dimension_numbers = #tpu.dot_dimension_numbers<[1], [1], [0], [0], [0, 0, 1, 0], [], []>} : vector<9x8xf32>, vector<9x8xf32>, vector<9x9xf32> -> vector<9x9xf32>
    %cst_90 = arith.constant 0.353553385 : f32
    %237 = vector.broadcast %cst_90 : f32 to vector<9x9xf32>
    %238 = arith.mulf %236, %237 : vector<9x9xf32>
    %cst_91 = arith.constant dense<0xFF800000> : vector<9xf32>
    %239 = vector.multi_reduction <maximumf>, %238, %cst_91 [1] : vector<9x9xf32> to vector<9xf32>
    %240 = vector.shape_cast %239 : vector<9xf32> to vector<9x1xf32>
    %241 = vector.broadcast %240 : vector<9x1xf32> to vector<9x9xf32>
    %242 = arith.subf %238, %241 : vector<9x9xf32>
    %243 = math.exp %242 : vector<9x9xf32>
    %cst_92 = arith.constant dense<0.000000e+00> : vector<9xf32>
    %244 = vector.multi_reduction <add>, %243, %cst_92 [1] : vector<9x9xf32> to vector<9xf32>
    %245 = vector.shape_cast %244 : vector<9xf32> to vector<9x1xf32>
    %246 = tpu.reciprocal %245 {approx = true} : vector<9x1xf32> -> vector<9x1xf32>
    %247 = vector.broadcast %246 : vector<9x1xf32> to vector<9x9xf32>
    %248 = arith.mulf %243, %247 : vector<9x9xf32>
    %cst_93 = arith.constant dense<0.000000e+00> : vector<9x8xf32>
    %249 = tpu.matmul %248, %235, %cst_93 {dimension_numbers = #tpu.dot_dimension_numbers<[1], [0], [0], [1], [0, 0, 1, 1], [], []>} : vector<9x9xf32>, vector<9x8xf32>, vector<9x8xf32> -> vector<9x8xf32>
    %250 = vector.extract_strided_slice %196 {offsets = [0, 24], sizes = [9, 8], strides = [1, 1]} : vector<9x32xf32> to vector<9x8xf32>
    %251 = vector.extract_strided_slice %197 {offsets = [0, 24], sizes = [9, 8], strides = [1, 1]} : vector<9x32xf32> to vector<9x8xf32>
    %252 = vector.extract_strided_slice %198 {offsets = [0, 24], sizes = [9, 8], strides = [1, 1]} : vector<9x32xf32> to vector<9x8xf32>
    %cst_94 = arith.constant dense<0.000000e+00> : vector<9x9xf32>
    %253 = tpu.matmul %250, %251, %cst_94 {dimension_numbers = #tpu.dot_dimension_numbers<[1], [1], [0], [0], [0, 0, 1, 0], [], []>} : vector<9x8xf32>, vector<9x8xf32>, vector<9x9xf32> -> vector<9x9xf32>
    %cst_95 = arith.constant 0.353553385 : f32
    %254 = vector.broadcast %cst_95 : f32 to vector<9x9xf32>
    %255 = arith.mulf %253, %254 : vector<9x9xf32>
    %cst_96 = arith.constant dense<0xFF800000> : vector<9xf32>
    %256 = vector.multi_reduction <maximumf>, %255, %cst_96 [1] : vector<9x9xf32> to vector<9xf32>
    %257 = vector.shape_cast %256 : vector<9xf32> to vector<9x1xf32>
    %258 = vector.broadcast %257 : vector<9x1xf32> to vector<9x9xf32>
    %259 = arith.subf %255, %258 : vector<9x9xf32>
    %260 = math.exp %259 : vector<9x9xf32>
    %cst_97 = arith.constant dense<0.000000e+00> : vector<9xf32>
    %261 = vector.multi_reduction <add>, %260, %cst_97 [1] : vector<9x9xf32> to vector<9xf32>
    %262 = vector.shape_cast %261 : vector<9xf32> to vector<9x1xf32>
    %263 = tpu.reciprocal %262 {approx = true} : vector<9x1xf32> -> vector<9x1xf32>
    %264 = vector.broadcast %263 : vector<9x1xf32> to vector<9x9xf32>
    %265 = arith.mulf %260, %264 : vector<9x9xf32>
    %cst_98 = arith.constant dense<0.000000e+00> : vector<9x8xf32>
    %266 = tpu.matmul %265, %252, %cst_98 {dimension_numbers = #tpu.dot_dimension_numbers<[1], [0], [0], [1], [0, 0, 1, 1], [], []>} : vector<9x9xf32>, vector<9x8xf32>, vector<9x8xf32> -> vector<9x8xf32>
    %267 = tpu.concatenate %215, %232, %249, %266 in 1 : vector<9x8xf32>, vector<9x8xf32>, vector<9x8xf32>, vector<9x8xf32> -> vector<9x32xf32>
    %268 = arith.truncf %267 : vector<9x32xf32> to vector<9x32xbf16>
    %cst_99 = arith.constant dense<0.000000e+00> : vector<9x32xf32>
    %269 = tpu.matmul %268, %192, %cst_99 {dimension_numbers = #tpu.dot_dimension_numbers<[1], [0], [0], [1], [0, 0, 1, 1], [], []>} : vector<9x32xbf16>, vector<32x32xbf16>, vector<9x32xf32> -> vector<9x32xf32>
    %270 = vector.broadcast %193 : vector<1x32xf32> to vector<9x32xf32>
    %271 = arith.addf %269, %270 : vector<9x32xf32>
    %272 = arith.addf %164, %271 : vector<9x32xf32>
    %273 = vector.extract_strided_slice %166 {offsets = [2, 0], sizes = [1, 32], strides = [1, 1]} : vector<6x32xf32> to vector<1x32xf32>
    %274 = vector.extract_strided_slice %166 {offsets = [3, 0], sizes = [1, 32], strides = [1, 1]} : vector<6x32xf32> to vector<1x32xf32>
    %cst_100 = arith.constant dense<0.000000e+00> : vector<9xf32>
    %275 = vector.multi_reduction <add>, %272, %cst_100 [1] : vector<9x32xf32> to vector<9xf32>
    %276 = vector.shape_cast %275 : vector<9xf32> to vector<9x1xf32>
    %cst_101 = arith.constant 3.200000e+01 : f32
    %277 = vector.broadcast %cst_101 : f32 to vector<9x1xf32>
    %278 = arith.divf %276, %277 : vector<9x1xf32>
    %279 = vector.broadcast %278 : vector<9x1xf32> to vector<9x32xf32>
    %280 = arith.subf %272, %279 : vector<9x32xf32>
    %281 = arith.mulf %280, %280 : vector<9x32xf32>
    %cst_102 = arith.constant dense<0.000000e+00> : vector<9xf32>
    %282 = vector.multi_reduction <add>, %281, %cst_102 [1] : vector<9x32xf32> to vector<9xf32>
    %283 = vector.shape_cast %282 : vector<9xf32> to vector<9x1xf32>
    %cst_103 = arith.constant 3.200000e+01 : f32
    %284 = vector.broadcast %cst_103 : f32 to vector<9x1xf32>
    %285 = arith.divf %283, %284 : vector<9x1xf32>
    %cst_104 = arith.constant 9.99999974E-6 : f32
    %286 = vector.broadcast %cst_104 : f32 to vector<9x1xf32>
    %287 = arith.addf %285, %286 : vector<9x1xf32>
    %288 = math.rsqrt %287 : vector<9x1xf32>
    %289 = vector.broadcast %288 : vector<9x1xf32> to vector<9x32xf32>
    %290 = arith.mulf %280, %289 : vector<9x32xf32>
    %291 = vector.broadcast %273 : vector<1x32xf32> to vector<9x32xf32>
    %292 = arith.mulf %290, %291 : vector<9x32xf32>
    %293 = vector.broadcast %274 : vector<1x32xf32> to vector<9x32xf32>
    %294 = arith.addf %292, %293 : vector<9x32xf32>
    %c1_105 = arith.constant 1 : index
    %c0_106 = arith.constant 0 : index
    %c0_107 = arith.constant 0 : index
    %295 = vector.load %arg10[%c1_105, %c0_106, %c0_107] : memref<2x32x128xbf16, #tpu.memory_space<vmem>>, vector<1x32x128xbf16>
    %296 = vector.shape_cast %295 : vector<1x32x128xbf16> to vector<32x128xbf16>
    %c1_108 = arith.constant 1 : index
    %c0_109 = arith.constant 0 : index
    %c0_110 = arith.constant 0 : index
    %297 = vector.load %arg13[%c1_108, %c0_109, %c0_110] : memref<2x1x128xf32, #tpu.memory_space<vmem>>, vector<1x1x128xf32>
    %298 = vector.shape_cast %297 : vector<1x1x128xf32> to vector<1x128xf32>
    %c1_111 = arith.constant 1 : index
    %c0_112 = arith.constant 0 : index
    %c0_113 = arith.constant 0 : index
    %299 = vector.load %arg11[%c1_111, %c0_112, %c0_113] : memref<2x128x32xbf16, #tpu.memory_space<vmem>>, vector<1x128x32xbf16>
    %300 = vector.shape_cast %299 : vector<1x128x32xbf16> to vector<128x32xbf16>
    %301 = vector.extract_strided_slice %166 {offsets = [5, 0], sizes = [1, 32], strides = [1, 1]} : vector<6x32xf32> to vector<1x32xf32>
    %302 = arith.truncf %294 : vector<9x32xf32> to vector<9x32xbf16>
    %cst_114 = arith.constant dense<0.000000e+00> : vector<9x128xf32>
    %303 = tpu.matmul %302, %296, %cst_114 {dimension_numbers = #tpu.dot_dimension_numbers<[1], [0], [0], [1], [0, 0, 1, 1], [], []>} : vector<9x32xbf16>, vector<32x128xbf16>, vector<9x128xf32> -> vector<9x128xf32>
    %304 = vector.broadcast %298 : vector<1x128xf32> to vector<9x128xf32>
    %305 = arith.addf %303, %304 : vector<9x128xf32>
    %cst_115 = arith.constant 5.000000e-01 : f32
    %306 = vector.broadcast %cst_115 : f32 to vector<9x128xf32>
    %307 = arith.mulf %305, %306 : vector<9x128xf32>
    %cst_116 = arith.constant 0.707106769 : f32
    %308 = vector.broadcast %cst_116 : f32 to vector<9x128xf32>
    %309 = arith.mulf %305, %308 : vector<9x128xf32>
    %310 = math.erf %309 : vector<9x128xf32>
    %cst_117 = arith.constant 1.000000e+00 : f32
    %311 = vector.broadcast %cst_117 : f32 to vector<9x128xf32>
    %312 = arith.addf %311, %310 : vector<9x128xf32>
    %313 = arith.mulf %307, %312 : vector<9x128xf32>
    %314 = arith.truncf %313 : vector<9x128xf32> to vector<9x128xbf16>
    %cst_118 = arith.constant dense<0.000000e+00> : vector<9x32xf32>
    %315 = tpu.matmul %314, %300, %cst_118 {dimension_numbers = #tpu.dot_dimension_numbers<[1], [0], [0], [1], [0, 0, 1, 1], [], []>} : vector<9x128xbf16>, vector<128x32xbf16>, vector<9x32xf32> -> vector<9x32xf32>
    %316 = vector.broadcast %301 : vector<1x32xf32> to vector<9x32xf32>
    %317 = arith.addf %315, %316 : vector<9x32xf32>
    %318 = arith.addf %272, %317 : vector<9x32xf32>
    %c0_119 = arith.constant 0 : index
    %c0_120 = arith.constant 0 : index
    %c0_121 = arith.constant 0 : index
    %319 = vector.load %arg7[%c0_119, %c0_120, %c0_121] : memref<1x9x32xf32, #tpu.memory_space<vmem>>, vector<1x9x32xf32>
    %320 = vector.shape_cast %319 : vector<1x9x32xf32> to vector<9x32xf32>
    %c0_122 = arith.constant 0 : index
    %c0_123 = arith.constant 0 : index
    %c0_124 = arith.constant 0 : index
    %321 = vector.load %arg21[%c0_122, %c0_123, %c0_124] : memref<2x11x32xf32, #tpu.memory_space<vmem>>, vector<1x11x32xf32>
    %322 = vector.shape_cast %321 : vector<1x11x32xf32> to vector<11x32xf32>
    %323 = vector.extract_strided_slice %322 {offsets = [0, 0], sizes = [1, 32], strides = [1, 1]} : vector<11x32xf32> to vector<1x32xf32>
    %324 = vector.extract_strided_slice %322 {offsets = [1, 0], sizes = [1, 32], strides = [1, 1]} : vector<11x32xf32> to vector<1x32xf32>
    %cst_125 = arith.constant dense<0.000000e+00> : vector<9xf32>
    %325 = vector.multi_reduction <add>, %320, %cst_125 [1] : vector<9x32xf32> to vector<9xf32>
    %326 = vector.shape_cast %325 : vector<9xf32> to vector<9x1xf32>
    %cst_126 = arith.constant 3.200000e+01 : f32
    %327 = vector.broadcast %cst_126 : f32 to vector<9x1xf32>
    %328 = arith.divf %326, %327 : vector<9x1xf32>
    %329 = vector.broadcast %328 : vector<9x1xf32> to vector<9x32xf32>
    %330 = arith.subf %320, %329 : vector<9x32xf32>
    %331 = arith.mulf %330, %330 : vector<9x32xf32>
    %cst_127 = arith.constant dense<0.000000e+00> : vector<9xf32>
    %332 = vector.multi_reduction <add>, %331, %cst_127 [1] : vector<9x32xf32> to vector<9xf32>
    %333 = vector.shape_cast %332 : vector<9xf32> to vector<9x1xf32>
    %cst_128 = arith.constant 3.200000e+01 : f32
    %334 = vector.broadcast %cst_128 : f32 to vector<9x1xf32>
    %335 = arith.divf %333, %334 : vector<9x1xf32>
    %cst_129 = arith.constant 9.99999974E-6 : f32
    %336 = vector.broadcast %cst_129 : f32 to vector<9x1xf32>
    %337 = arith.addf %335, %336 : vector<9x1xf32>
    %338 = math.rsqrt %337 : vector<9x1xf32>
    %339 = vector.broadcast %338 : vector<9x1xf32> to vector<9x32xf32>
    %340 = arith.mulf %330, %339 : vector<9x32xf32>
    %341 = vector.broadcast %323 : vector<1x32xf32> to vector<9x32xf32>
    %342 = arith.mulf %340, %341 : vector<9x32xf32>
    %343 = vector.broadcast %324 : vector<1x32xf32> to vector<9x32xf32>
    %344 = arith.addf %342, %343 : vector<9x32xf32>
    %c0_130 = arith.constant 0 : index
    %c0_131 = arith.constant 0 : index
    %c0_132 = arith.constant 0 : index
    %345 = vector.load %arg14[%c0_130, %c0_131, %c0_132] : memref<2x32x96xbf16, #tpu.memory_space<vmem>>, vector<1x32x96xbf16>
    %346 = vector.shape_cast %345 : vector<1x32x96xbf16> to vector<32x96xbf16>
    %c0_133 = arith.constant 0 : index
    %c0_134 = arith.constant 0 : index
    %c0_135 = arith.constant 0 : index
    %347 = vector.load %arg15[%c0_133, %c0_134, %c0_135] : memref<2x32x32xbf16, #tpu.memory_space<vmem>>, vector<1x32x32xbf16>
    %348 = vector.shape_cast %347 : vector<1x32x32xbf16> to vector<32x32xbf16>
    %349 = vector.extract_strided_slice %322 {offsets = [8, 0], sizes = [1, 32], strides = [1, 1]} : vector<11x32xf32> to vector<1x32xf32>
    %350 = arith.truncf %344 : vector<9x32xf32> to vector<9x32xbf16>
    %cst_136 = arith.constant dense<0.000000e+00> : vector<9x96xf32>
    %351 = tpu.matmul %350, %346, %cst_136 {dimension_numbers = #tpu.dot_dimension_numbers<[1], [0], [0], [1], [0, 0, 1, 1], [], []>} : vector<9x32xbf16>, vector<32x96xbf16>, vector<9x96xf32> -> vector<9x96xf32>
    %352 = vector.extract_strided_slice %351 {offsets = [0, 0], sizes = [9, 32], strides = [1, 1]} : vector<9x96xf32> to vector<9x32xf32>
    %353 = vector.extract_strided_slice %351 {offsets = [0, 32], sizes = [9, 32], strides = [1, 1]} : vector<9x96xf32> to vector<9x32xf32>
    %354 = vector.extract_strided_slice %351 {offsets = [0, 64], sizes = [9, 32], strides = [1, 1]} : vector<9x96xf32> to vector<9x32xf32>
    %355 = vector.extract_strided_slice %352 {offsets = [0, 0], sizes = [9, 8], strides = [1, 1]} : vector<9x32xf32> to vector<9x8xf32>
    %356 = vector.extract_strided_slice %353 {offsets = [0, 0], sizes = [9, 8], strides = [1, 1]} : vector<9x32xf32> to vector<9x8xf32>
    %357 = vector.extract_strided_slice %354 {offsets = [0, 0], sizes = [9, 8], strides = [1, 1]} : vector<9x32xf32> to vector<9x8xf32>
    %cst_137 = arith.constant dense<0.000000e+00> : vector<9x9xf32>
    %358 = tpu.matmul %355, %356, %cst_137 {dimension_numbers = #tpu.dot_dimension_numbers<[1], [1], [0], [0], [0, 0, 1, 0], [], []>} : vector<9x8xf32>, vector<9x8xf32>, vector<9x9xf32> -> vector<9x9xf32>
    %cst_138 = arith.constant 0.353553385 : f32
    %359 = vector.broadcast %cst_138 : f32 to vector<9x9xf32>
    %360 = arith.mulf %358, %359 : vector<9x9xf32>
    %cst_139 = arith.constant dense<0xFF800000> : vector<9xf32>
    %361 = vector.multi_reduction <maximumf>, %360, %cst_139 [1] : vector<9x9xf32> to vector<9xf32>
    %362 = vector.shape_cast %361 : vector<9xf32> to vector<9x1xf32>
    %363 = vector.broadcast %362 : vector<9x1xf32> to vector<9x9xf32>
    %364 = arith.subf %360, %363 : vector<9x9xf32>
    %365 = math.exp %364 : vector<9x9xf32>
    %cst_140 = arith.constant dense<0.000000e+00> : vector<9xf32>
    %366 = vector.multi_reduction <add>, %365, %cst_140 [1] : vector<9x9xf32> to vector<9xf32>
    %367 = vector.shape_cast %366 : vector<9xf32> to vector<9x1xf32>
    %368 = tpu.reciprocal %367 {approx = true} : vector<9x1xf32> -> vector<9x1xf32>
    %369 = vector.broadcast %368 : vector<9x1xf32> to vector<9x9xf32>
    %370 = arith.mulf %365, %369 : vector<9x9xf32>
    %cst_141 = arith.constant dense<0.000000e+00> : vector<9x8xf32>
    %371 = tpu.matmul %370, %357, %cst_141 {dimension_numbers = #tpu.dot_dimension_numbers<[1], [0], [0], [1], [0, 0, 1, 1], [], []>} : vector<9x9xf32>, vector<9x8xf32>, vector<9x8xf32> -> vector<9x8xf32>
    %372 = vector.extract_strided_slice %352 {offsets = [0, 8], sizes = [9, 8], strides = [1, 1]} : vector<9x32xf32> to vector<9x8xf32>
    %373 = vector.extract_strided_slice %353 {offsets = [0, 8], sizes = [9, 8], strides = [1, 1]} : vector<9x32xf32> to vector<9x8xf32>
    %374 = vector.extract_strided_slice %354 {offsets = [0, 8], sizes = [9, 8], strides = [1, 1]} : vector<9x32xf32> to vector<9x8xf32>
    %cst_142 = arith.constant dense<0.000000e+00> : vector<9x9xf32>
    %375 = tpu.matmul %372, %373, %cst_142 {dimension_numbers = #tpu.dot_dimension_numbers<[1], [1], [0], [0], [0, 0, 1, 0], [], []>} : vector<9x8xf32>, vector<9x8xf32>, vector<9x9xf32> -> vector<9x9xf32>
    %cst_143 = arith.constant 0.353553385 : f32
    %376 = vector.broadcast %cst_143 : f32 to vector<9x9xf32>
    %377 = arith.mulf %375, %376 : vector<9x9xf32>
    %cst_144 = arith.constant dense<0xFF800000> : vector<9xf32>
    %378 = vector.multi_reduction <maximumf>, %377, %cst_144 [1] : vector<9x9xf32> to vector<9xf32>
    %379 = vector.shape_cast %378 : vector<9xf32> to vector<9x1xf32>
    %380 = vector.broadcast %379 : vector<9x1xf32> to vector<9x9xf32>
    %381 = arith.subf %377, %380 : vector<9x9xf32>
    %382 = math.exp %381 : vector<9x9xf32>
    %cst_145 = arith.constant dense<0.000000e+00> : vector<9xf32>
    %383 = vector.multi_reduction <add>, %382, %cst_145 [1] : vector<9x9xf32> to vector<9xf32>
    %384 = vector.shape_cast %383 : vector<9xf32> to vector<9x1xf32>
    %385 = tpu.reciprocal %384 {approx = true} : vector<9x1xf32> -> vector<9x1xf32>
    %386 = vector.broadcast %385 : vector<9x1xf32> to vector<9x9xf32>
    %387 = arith.mulf %382, %386 : vector<9x9xf32>
    %cst_146 = arith.constant dense<0.000000e+00> : vector<9x8xf32>
    %388 = tpu.matmul %387, %374, %cst_146 {dimension_numbers = #tpu.dot_dimension_numbers<[1], [0], [0], [1], [0, 0, 1, 1], [], []>} : vector<9x9xf32>, vector<9x8xf32>, vector<9x8xf32> -> vector<9x8xf32>
    %389 = vector.extract_strided_slice %352 {offsets = [0, 16], sizes = [9, 8], strides = [1, 1]} : vector<9x32xf32> to vector<9x8xf32>
    %390 = vector.extract_strided_slice %353 {offsets = [0, 16], sizes = [9, 8], strides = [1, 1]} : vector<9x32xf32> to vector<9x8xf32>
    %391 = vector.extract_strided_slice %354 {offsets = [0, 16], sizes = [9, 8], strides = [1, 1]} : vector<9x32xf32> to vector<9x8xf32>
    %cst_147 = arith.constant dense<0.000000e+00> : vector<9x9xf32>
    %392 = tpu.matmul %389, %390, %cst_147 {dimension_numbers = #tpu.dot_dimension_numbers<[1], [1], [0], [0], [0, 0, 1, 0], [], []>} : vector<9x8xf32>, vector<9x8xf32>, vector<9x9xf32> -> vector<9x9xf32>
    %cst_148 = arith.constant 0.353553385 : f32
    %393 = vector.broadcast %cst_148 : f32 to vector<9x9xf32>
    %394 = arith.mulf %392, %393 : vector<9x9xf32>
    %cst_149 = arith.constant dense<0xFF800000> : vector<9xf32>
    %395 = vector.multi_reduction <maximumf>, %394, %cst_149 [1] : vector<9x9xf32> to vector<9xf32>
    %396 = vector.shape_cast %395 : vector<9xf32> to vector<9x1xf32>
    %397 = vector.broadcast %396 : vector<9x1xf32> to vector<9x9xf32>
    %398 = arith.subf %394, %397 : vector<9x9xf32>
    %399 = math.exp %398 : vector<9x9xf32>
    %cst_150 = arith.constant dense<0.000000e+00> : vector<9xf32>
    %400 = vector.multi_reduction <add>, %399, %cst_150 [1] : vector<9x9xf32> to vector<9xf32>
    %401 = vector.shape_cast %400 : vector<9xf32> to vector<9x1xf32>
    %402 = tpu.reciprocal %401 {approx = true} : vector<9x1xf32> -> vector<9x1xf32>
    %403 = vector.broadcast %402 : vector<9x1xf32> to vector<9x9xf32>
    %404 = arith.mulf %399, %403 : vector<9x9xf32>
    %cst_151 = arith.constant dense<0.000000e+00> : vector<9x8xf32>
    %405 = tpu.matmul %404, %391, %cst_151 {dimension_numbers = #tpu.dot_dimension_numbers<[1], [0], [0], [1], [0, 0, 1, 1], [], []>} : vector<9x9xf32>, vector<9x8xf32>, vector<9x8xf32> -> vector<9x8xf32>
    %406 = vector.extract_strided_slice %352 {offsets = [0, 24], sizes = [9, 8], strides = [1, 1]} : vector<9x32xf32> to vector<9x8xf32>
    %407 = vector.extract_strided_slice %353 {offsets = [0, 24], sizes = [9, 8], strides = [1, 1]} : vector<9x32xf32> to vector<9x8xf32>
    %408 = vector.extract_strided_slice %354 {offsets = [0, 24], sizes = [9, 8], strides = [1, 1]} : vector<9x32xf32> to vector<9x8xf32>
    %cst_152 = arith.constant dense<0.000000e+00> : vector<9x9xf32>
    %409 = tpu.matmul %406, %407, %cst_152 {dimension_numbers = #tpu.dot_dimension_numbers<[1], [1], [0], [0], [0, 0, 1, 0], [], []>} : vector<9x8xf32>, vector<9x8xf32>, vector<9x9xf32> -> vector<9x9xf32>
    %cst_153 = arith.constant 0.353553385 : f32
    %410 = vector.broadcast %cst_153 : f32 to vector<9x9xf32>
    %411 = arith.mulf %409, %410 : vector<9x9xf32>
    %cst_154 = arith.constant dense<0xFF800000> : vector<9xf32>
    %412 = vector.multi_reduction <maximumf>, %411, %cst_154 [1] : vector<9x9xf32> to vector<9xf32>
    %413 = vector.shape_cast %412 : vector<9xf32> to vector<9x1xf32>
    %414 = vector.broadcast %413 : vector<9x1xf32> to vector<9x9xf32>
    %415 = arith.subf %411, %414 : vector<9x9xf32>
    %416 = math.exp %415 : vector<9x9xf32>
    %cst_155 = arith.constant dense<0.000000e+00> : vector<9xf32>
    %417 = vector.multi_reduction <add>, %416, %cst_155 [1] : vector<9x9xf32> to vector<9xf32>
    %418 = vector.shape_cast %417 : vector<9xf32> to vector<9x1xf32>
    %419 = tpu.reciprocal %418 {approx = true} : vector<9x1xf32> -> vector<9x1xf32>
    %420 = vector.broadcast %419 : vector<9x1xf32> to vector<9x9xf32>
    %421 = arith.mulf %416, %420 : vector<9x9xf32>
    %cst_156 = arith.constant dense<0.000000e+00> : vector<9x8xf32>
    %422 = tpu.matmul %421, %408, %cst_156 {dimension_numbers = #tpu.dot_dimension_numbers<[1], [0], [0], [1], [0, 0, 1, 1], [], []>} : vector<9x9xf32>, vector<9x8xf32>, vector<9x8xf32> -> vector<9x8xf32>
    %423 = tpu.concatenate %371, %388, %405, %422 in 1 : vector<9x8xf32>, vector<9x8xf32>, vector<9x8xf32>, vector<9x8xf32> -> vector<9x32xf32>
    %424 = arith.truncf %423 : vector<9x32xf32> to vector<9x32xbf16>
    %cst_157 = arith.constant dense<0.000000e+00> : vector<9x32xf32>
    %425 = tpu.matmul %424, %348, %cst_157 {dimension_numbers = #tpu.dot_dimension_numbers<[1], [0], [0], [1], [0, 0, 1, 1], [], []>} : vector<9x32xbf16>, vector<32x32xbf16>, vector<9x32xf32> -> vector<9x32xf32>
    %426 = vector.broadcast %349 : vector<1x32xf32> to vector<9x32xf32>
    %427 = arith.addf %425, %426 : vector<9x32xf32>
    %428 = arith.addf %320, %427 : vector<9x32xf32>
    %429 = vector.extract_strided_slice %322 {offsets = [2, 0], sizes = [1, 32], strides = [1, 1]} : vector<11x32xf32> to vector<1x32xf32>
    %430 = vector.extract_strided_slice %322 {offsets = [3, 0], sizes = [1, 32], strides = [1, 1]} : vector<11x32xf32> to vector<1x32xf32>
    %cst_158 = arith.constant dense<0.000000e+00> : vector<9xf32>
    %431 = vector.multi_reduction <add>, %318, %cst_158 [1] : vector<9x32xf32> to vector<9xf32>
    %432 = vector.shape_cast %431 : vector<9xf32> to vector<9x1xf32>
    %cst_159 = arith.constant 3.200000e+01 : f32
    %433 = vector.broadcast %cst_159 : f32 to vector<9x1xf32>
    %434 = arith.divf %432, %433 : vector<9x1xf32>
    %435 = vector.broadcast %434 : vector<9x1xf32> to vector<9x32xf32>
    %436 = arith.subf %318, %435 : vector<9x32xf32>
    %437 = arith.mulf %436, %436 : vector<9x32xf32>
    %cst_160 = arith.constant dense<0.000000e+00> : vector<9xf32>
    %438 = vector.multi_reduction <add>, %437, %cst_160 [1] : vector<9x32xf32> to vector<9xf32>
    %439 = vector.shape_cast %438 : vector<9xf32> to vector<9x1xf32>
    %cst_161 = arith.constant 3.200000e+01 : f32
    %440 = vector.broadcast %cst_161 : f32 to vector<9x1xf32>
    %441 = arith.divf %439, %440 : vector<9x1xf32>
    %cst_162 = arith.constant 9.99999974E-6 : f32
    %442 = vector.broadcast %cst_162 : f32 to vector<9x1xf32>
    %443 = arith.addf %441, %442 : vector<9x1xf32>
    %444 = math.rsqrt %443 : vector<9x1xf32>
    %445 = vector.broadcast %444 : vector<9x1xf32> to vector<9x32xf32>
    %446 = arith.mulf %436, %445 : vector<9x32xf32>
    %447 = vector.broadcast %429 : vector<1x32xf32> to vector<9x32xf32>
    %448 = arith.mulf %446, %447 : vector<9x32xf32>
    %449 = vector.broadcast %430 : vector<1x32xf32> to vector<9x32xf32>
    %450 = arith.addf %448, %449 : vector<9x32xf32>
    %451 = vector.extract_strided_slice %322 {offsets = [4, 0], sizes = [1, 32], strides = [1, 1]} : vector<11x32xf32> to vector<1x32xf32>
    %452 = vector.extract_strided_slice %322 {offsets = [5, 0], sizes = [1, 32], strides = [1, 1]} : vector<11x32xf32> to vector<1x32xf32>
    %cst_163 = arith.constant dense<0.000000e+00> : vector<9xf32>
    %453 = vector.multi_reduction <add>, %428, %cst_163 [1] : vector<9x32xf32> to vector<9xf32>
    %454 = vector.shape_cast %453 : vector<9xf32> to vector<9x1xf32>
    %cst_164 = arith.constant 3.200000e+01 : f32
    %455 = vector.broadcast %cst_164 : f32 to vector<9x1xf32>
    %456 = arith.divf %454, %455 : vector<9x1xf32>
    %457 = vector.broadcast %456 : vector<9x1xf32> to vector<9x32xf32>
    %458 = arith.subf %428, %457 : vector<9x32xf32>
    %459 = arith.mulf %458, %458 : vector<9x32xf32>
    %cst_165 = arith.constant dense<0.000000e+00> : vector<9xf32>
    %460 = vector.multi_reduction <add>, %459, %cst_165 [1] : vector<9x32xf32> to vector<9xf32>
    %461 = vector.shape_cast %460 : vector<9xf32> to vector<9x1xf32>
    %cst_166 = arith.constant 3.200000e+01 : f32
    %462 = vector.broadcast %cst_166 : f32 to vector<9x1xf32>
    %463 = arith.divf %461, %462 : vector<9x1xf32>
    %cst_167 = arith.constant 9.99999974E-6 : f32
    %464 = vector.broadcast %cst_167 : f32 to vector<9x1xf32>
    %465 = arith.addf %463, %464 : vector<9x1xf32>
    %466 = math.rsqrt %465 : vector<9x1xf32>
    %467 = vector.broadcast %466 : vector<9x1xf32> to vector<9x32xf32>
    %468 = arith.mulf %458, %467 : vector<9x32xf32>
    %469 = vector.broadcast %451 : vector<1x32xf32> to vector<9x32xf32>
    %470 = arith.mulf %468, %469 : vector<9x32xf32>
    %471 = vector.broadcast %452 : vector<1x32xf32> to vector<9x32xf32>
    %472 = arith.addf %470, %471 : vector<9x32xf32>
    %c0_168 = arith.constant 0 : index
    %c0_169 = arith.constant 0 : index
    %c0_170 = arith.constant 0 : index
    %473 = vector.load %arg17[%c0_168, %c0_169, %c0_170] : memref<2x32x32xbf16, #tpu.memory_space<vmem>>, vector<1x32x32xbf16>
    %474 = vector.shape_cast %473 : vector<1x32x32xbf16> to vector<32x32xbf16>
    %c0_171 = arith.constant 0 : index
    %c0_172 = arith.constant 0 : index
    %c0_173 = arith.constant 0 : index
    %475 = vector.load %arg16[%c0_171, %c0_172, %c0_173] : memref<2x32x64xbf16, #tpu.memory_space<vmem>>, vector<1x32x64xbf16>
    %476 = vector.shape_cast %475 : vector<1x32x64xbf16> to vector<32x64xbf16>
    %c0_174 = arith.constant 0 : index
    %c0_175 = arith.constant 0 : index
    %c0_176 = arith.constant 0 : index
    %477 = vector.load %arg18[%c0_174, %c0_175, %c0_176] : memref<2x32x32xbf16, #tpu.memory_space<vmem>>, vector<1x32x32xbf16>
    %478 = vector.shape_cast %477 : vector<1x32x32xbf16> to vector<32x32xbf16>
    %479 = vector.extract_strided_slice %322 {offsets = [9, 0], sizes = [1, 32], strides = [1, 1]} : vector<11x32xf32> to vector<1x32xf32>
    %480 = arith.truncf %472 : vector<9x32xf32> to vector<9x32xbf16>
    %cst_177 = arith.constant dense<0.000000e+00> : vector<9x32xf32>
    %481 = tpu.matmul %480, %474, %cst_177 {dimension_numbers = #tpu.dot_dimension_numbers<[1], [0], [0], [1], [0, 0, 1, 1], [], []>} : vector<9x32xbf16>, vector<32x32xbf16>, vector<9x32xf32> -> vector<9x32xf32>
    %482 = arith.truncf %450 : vector<9x32xf32> to vector<9x32xbf16>
    %cst_178 = arith.constant dense<0.000000e+00> : vector<9x64xf32>
    %483 = tpu.matmul %482, %476, %cst_178 {dimension_numbers = #tpu.dot_dimension_numbers<[1], [0], [0], [1], [0, 0, 1, 1], [], []>} : vector<9x32xbf16>, vector<32x64xbf16>, vector<9x64xf32> -> vector<9x64xf32>
    %484 = vector.extract_strided_slice %483 {offsets = [0, 0], sizes = [9, 32], strides = [1, 1]} : vector<9x64xf32> to vector<9x32xf32>
    %485 = vector.extract_strided_slice %483 {offsets = [0, 32], sizes = [9, 32], strides = [1, 1]} : vector<9x64xf32> to vector<9x32xf32>
    %486 = vector.extract_strided_slice %481 {offsets = [0, 0], sizes = [9, 8], strides = [1, 1]} : vector<9x32xf32> to vector<9x8xf32>
    %487 = vector.extract_strided_slice %484 {offsets = [0, 0], sizes = [9, 8], strides = [1, 1]} : vector<9x32xf32> to vector<9x8xf32>
    %488 = vector.extract_strided_slice %485 {offsets = [0, 0], sizes = [9, 8], strides = [1, 1]} : vector<9x32xf32> to vector<9x8xf32>
    %cst_179 = arith.constant dense<0.000000e+00> : vector<9x9xf32>
    %489 = tpu.matmul %486, %487, %cst_179 {dimension_numbers = #tpu.dot_dimension_numbers<[1], [1], [0], [0], [0, 0, 1, 0], [], []>} : vector<9x8xf32>, vector<9x8xf32>, vector<9x9xf32> -> vector<9x9xf32>
    %cst_180 = arith.constant 0.353553385 : f32
    %490 = vector.broadcast %cst_180 : f32 to vector<9x9xf32>
    %491 = arith.mulf %489, %490 : vector<9x9xf32>
    %cst_181 = arith.constant dense<0xFF800000> : vector<9xf32>
    %492 = vector.multi_reduction <maximumf>, %491, %cst_181 [1] : vector<9x9xf32> to vector<9xf32>
    %493 = vector.shape_cast %492 : vector<9xf32> to vector<9x1xf32>
    %494 = vector.broadcast %493 : vector<9x1xf32> to vector<9x9xf32>
    %495 = arith.subf %491, %494 : vector<9x9xf32>
    %496 = math.exp %495 : vector<9x9xf32>
    %cst_182 = arith.constant dense<0.000000e+00> : vector<9xf32>
    %497 = vector.multi_reduction <add>, %496, %cst_182 [1] : vector<9x9xf32> to vector<9xf32>
    %498 = vector.shape_cast %497 : vector<9xf32> to vector<9x1xf32>
    %499 = tpu.reciprocal %498 {approx = true} : vector<9x1xf32> -> vector<9x1xf32>
    %500 = vector.broadcast %499 : vector<9x1xf32> to vector<9x9xf32>
    %501 = arith.mulf %496, %500 : vector<9x9xf32>
    %cst_183 = arith.constant dense<0.000000e+00> : vector<9x8xf32>
    %502 = tpu.matmul %501, %488, %cst_183 {dimension_numbers = #tpu.dot_dimension_numbers<[1], [0], [0], [1], [0, 0, 1, 1], [], []>} : vector<9x9xf32>, vector<9x8xf32>, vector<9x8xf32> -> vector<9x8xf32>
    %503 = vector.extract_strided_slice %481 {offsets = [0, 8], sizes = [9, 8], strides = [1, 1]} : vector<9x32xf32> to vector<9x8xf32>
    %504 = vector.extract_strided_slice %484 {offsets = [0, 8], sizes = [9, 8], strides = [1, 1]} : vector<9x32xf32> to vector<9x8xf32>
    %505 = vector.extract_strided_slice %485 {offsets = [0, 8], sizes = [9, 8], strides = [1, 1]} : vector<9x32xf32> to vector<9x8xf32>
    %cst_184 = arith.constant dense<0.000000e+00> : vector<9x9xf32>
    %506 = tpu.matmul %503, %504, %cst_184 {dimension_numbers = #tpu.dot_dimension_numbers<[1], [1], [0], [0], [0, 0, 1, 0], [], []>} : vector<9x8xf32>, vector<9x8xf32>, vector<9x9xf32> -> vector<9x9xf32>
    %cst_185 = arith.constant 0.353553385 : f32
    %507 = vector.broadcast %cst_185 : f32 to vector<9x9xf32>
    %508 = arith.mulf %506, %507 : vector<9x9xf32>
    %cst_186 = arith.constant dense<0xFF800000> : vector<9xf32>
    %509 = vector.multi_reduction <maximumf>, %508, %cst_186 [1] : vector<9x9xf32> to vector<9xf32>
    %510 = vector.shape_cast %509 : vector<9xf32> to vector<9x1xf32>
    %511 = vector.broadcast %510 : vector<9x1xf32> to vector<9x9xf32>
    %512 = arith.subf %508, %511 : vector<9x9xf32>
    %513 = math.exp %512 : vector<9x9xf32>
    %cst_187 = arith.constant dense<0.000000e+00> : vector<9xf32>
    %514 = vector.multi_reduction <add>, %513, %cst_187 [1] : vector<9x9xf32> to vector<9xf32>
    %515 = vector.shape_cast %514 : vector<9xf32> to vector<9x1xf32>
    %516 = tpu.reciprocal %515 {approx = true} : vector<9x1xf32> -> vector<9x1xf32>
    %517 = vector.broadcast %516 : vector<9x1xf32> to vector<9x9xf32>
    %518 = arith.mulf %513, %517 : vector<9x9xf32>
    %cst_188 = arith.constant dense<0.000000e+00> : vector<9x8xf32>
    %519 = tpu.matmul %518, %505, %cst_188 {dimension_numbers = #tpu.dot_dimension_numbers<[1], [0], [0], [1], [0, 0, 1, 1], [], []>} : vector<9x9xf32>, vector<9x8xf32>, vector<9x8xf32> -> vector<9x8xf32>
    %520 = vector.extract_strided_slice %481 {offsets = [0, 16], sizes = [9, 8], strides = [1, 1]} : vector<9x32xf32> to vector<9x8xf32>
    %521 = vector.extract_strided_slice %484 {offsets = [0, 16], sizes = [9, 8], strides = [1, 1]} : vector<9x32xf32> to vector<9x8xf32>
    %522 = vector.extract_strided_slice %485 {offsets = [0, 16], sizes = [9, 8], strides = [1, 1]} : vector<9x32xf32> to vector<9x8xf32>
    %cst_189 = arith.constant dense<0.000000e+00> : vector<9x9xf32>
    %523 = tpu.matmul %520, %521, %cst_189 {dimension_numbers = #tpu.dot_dimension_numbers<[1], [1], [0], [0], [0, 0, 1, 0], [], []>} : vector<9x8xf32>, vector<9x8xf32>, vector<9x9xf32> -> vector<9x9xf32>
    %cst_190 = arith.constant 0.353553385 : f32
    %524 = vector.broadcast %cst_190 : f32 to vector<9x9xf32>
    %525 = arith.mulf %523, %524 : vector<9x9xf32>
    %cst_191 = arith.constant dense<0xFF800000> : vector<9xf32>
    %526 = vector.multi_reduction <maximumf>, %525, %cst_191 [1] : vector<9x9xf32> to vector<9xf32>
    %527 = vector.shape_cast %526 : vector<9xf32> to vector<9x1xf32>
    %528 = vector.broadcast %527 : vector<9x1xf32> to vector<9x9xf32>
    %529 = arith.subf %525, %528 : vector<9x9xf32>
    %530 = math.exp %529 : vector<9x9xf32>
    %cst_192 = arith.constant dense<0.000000e+00> : vector<9xf32>
    %531 = vector.multi_reduction <add>, %530, %cst_192 [1] : vector<9x9xf32> to vector<9xf32>
    %532 = vector.shape_cast %531 : vector<9xf32> to vector<9x1xf32>
    %533 = tpu.reciprocal %532 {approx = true} : vector<9x1xf32> -> vector<9x1xf32>
    %534 = vector.broadcast %533 : vector<9x1xf32> to vector<9x9xf32>
    %535 = arith.mulf %530, %534 : vector<9x9xf32>
    %cst_193 = arith.constant dense<0.000000e+00> : vector<9x8xf32>
    %536 = tpu.matmul %535, %522, %cst_193 {dimension_numbers = #tpu.dot_dimension_numbers<[1], [0], [0], [1], [0, 0, 1, 1], [], []>} : vector<9x9xf32>, vector<9x8xf32>, vector<9x8xf32> -> vector<9x8xf32>
    %537 = vector.extract_strided_slice %481 {offsets = [0, 24], sizes = [9, 8], strides = [1, 1]} : vector<9x32xf32> to vector<9x8xf32>
    %538 = vector.extract_strided_slice %484 {offsets = [0, 24], sizes = [9, 8], strides = [1, 1]} : vector<9x32xf32> to vector<9x8xf32>
    %539 = vector.extract_strided_slice %485 {offsets = [0, 24], sizes = [9, 8], strides = [1, 1]} : vector<9x32xf32> to vector<9x8xf32>
    %cst_194 = arith.constant dense<0.000000e+00> : vector<9x9xf32>
    %540 = tpu.matmul %537, %538, %cst_194 {dimension_numbers = #tpu.dot_dimension_numbers<[1], [1], [0], [0], [0, 0, 1, 0], [], []>} : vector<9x8xf32>, vector<9x8xf32>, vector<9x9xf32> -> vector<9x9xf32>
    %cst_195 = arith.constant 0.353553385 : f32
    %541 = vector.broadcast %cst_195 : f32 to vector<9x9xf32>
    %542 = arith.mulf %540, %541 : vector<9x9xf32>
    %cst_196 = arith.constant dense<0xFF800000> : vector<9xf32>
    %543 = vector.multi_reduction <maximumf>, %542, %cst_196 [1] : vector<9x9xf32> to vector<9xf32>
    %544 = vector.shape_cast %543 : vector<9xf32> to vector<9x1xf32>
    %545 = vector.broadcast %544 : vector<9x1xf32> to vector<9x9xf32>
    %546 = arith.subf %542, %545 : vector<9x9xf32>
    %547 = math.exp %546 : vector<9x9xf32>
    %cst_197 = arith.constant dense<0.000000e+00> : vector<9xf32>
    %548 = vector.multi_reduction <add>, %547, %cst_197 [1] : vector<9x9xf32> to vector<9xf32>
    %549 = vector.shape_cast %548 : vector<9xf32> to vector<9x1xf32>
    %550 = tpu.reciprocal %549 {approx = true} : vector<9x1xf32> -> vector<9x1xf32>
    %551 = vector.broadcast %550 : vector<9x1xf32> to vector<9x9xf32>
    %552 = arith.mulf %547, %551 : vector<9x9xf32>
    %cst_198 = arith.constant dense<0.000000e+00> : vector<9x8xf32>
    %553 = tpu.matmul %552, %539, %cst_198 {dimension_numbers = #tpu.dot_dimension_numbers<[1], [0], [0], [1], [0, 0, 1, 1], [], []>} : vector<9x9xf32>, vector<9x8xf32>, vector<9x8xf32> -> vector<9x8xf32>
    %554 = tpu.concatenate %502, %519, %536, %553 in 1 : vector<9x8xf32>, vector<9x8xf32>, vector<9x8xf32>, vector<9x8xf32> -> vector<9x32xf32>
    %555 = arith.truncf %554 : vector<9x32xf32> to vector<9x32xbf16>
    %cst_199 = arith.constant dense<0.000000e+00> : vector<9x32xf32>
    %556 = tpu.matmul %555, %478, %cst_199 {dimension_numbers = #tpu.dot_dimension_numbers<[1], [0], [0], [1], [0, 0, 1, 1], [], []>} : vector<9x32xbf16>, vector<32x32xbf16>, vector<9x32xf32> -> vector<9x32xf32>
    %557 = vector.broadcast %479 : vector<1x32xf32> to vector<9x32xf32>
    %558 = arith.addf %556, %557 : vector<9x32xf32>
    %559 = arith.addf %428, %558 : vector<9x32xf32>
    %560 = vector.extract_strided_slice %322 {offsets = [6, 0], sizes = [1, 32], strides = [1, 1]} : vector<11x32xf32> to vector<1x32xf32>
    %561 = vector.extract_strided_slice %322 {offsets = [7, 0], sizes = [1, 32], strides = [1, 1]} : vector<11x32xf32> to vector<1x32xf32>
    %cst_200 = arith.constant dense<0.000000e+00> : vector<9xf32>
    %562 = vector.multi_reduction <add>, %559, %cst_200 [1] : vector<9x32xf32> to vector<9xf32>
    %563 = vector.shape_cast %562 : vector<9xf32> to vector<9x1xf32>
    %cst_201 = arith.constant 3.200000e+01 : f32
    %564 = vector.broadcast %cst_201 : f32 to vector<9x1xf32>
    %565 = arith.divf %563, %564 : vector<9x1xf32>
    %566 = vector.broadcast %565 : vector<9x1xf32> to vector<9x32xf32>
    %567 = arith.subf %559, %566 : vector<9x32xf32>
    %568 = arith.mulf %567, %567 : vector<9x32xf32>
    %cst_202 = arith.constant dense<0.000000e+00> : vector<9xf32>
    %569 = vector.multi_reduction <add>, %568, %cst_202 [1] : vector<9x32xf32> to vector<9xf32>
    %570 = vector.shape_cast %569 : vector<9xf32> to vector<9x1xf32>
    %cst_203 = arith.constant 3.200000e+01 : f32
    %571 = vector.broadcast %cst_203 : f32 to vector<9x1xf32>
    %572 = arith.divf %570, %571 : vector<9x1xf32>
    %cst_204 = arith.constant 9.99999974E-6 : f32
    %573 = vector.broadcast %cst_204 : f32 to vector<9x1xf32>
    %574 = arith.addf %572, %573 : vector<9x1xf32>
    %575 = math.rsqrt %574 : vector<9x1xf32>
    %576 = vector.broadcast %575 : vector<9x1xf32> to vector<9x32xf32>
    %577 = arith.mulf %567, %576 : vector<9x32xf32>
    %578 = vector.broadcast %560 : vector<1x32xf32> to vector<9x32xf32>
    %579 = arith.mulf %577, %578 : vector<9x32xf32>
    %580 = vector.broadcast %561 : vector<1x32xf32> to vector<9x32xf32>
    %581 = arith.addf %579, %580 : vector<9x32xf32>
    %c0_205 = arith.constant 0 : index
    %c0_206 = arith.constant 0 : index
    %c0_207 = arith.constant 0 : index
    %582 = vector.load %arg19[%c0_205, %c0_206, %c0_207] : memref<2x32x128xbf16, #tpu.memory_space<vmem>>, vector<1x32x128xbf16>
    %583 = vector.shape_cast %582 : vector<1x32x128xbf16> to vector<32x128xbf16>
    %c0_208 = arith.constant 0 : index
    %c0_209 = arith.constant 0 : index
    %c0_210 = arith.constant 0 : index
    %584 = vector.load %arg22[%c0_208, %c0_209, %c0_210] : memref<2x1x128xf32, #tpu.memory_space<vmem>>, vector<1x1x128xf32>
    %585 = vector.shape_cast %584 : vector<1x1x128xf32> to vector<1x128xf32>
    %c0_211 = arith.constant 0 : index
    %c0_212 = arith.constant 0 : index
    %c0_213 = arith.constant 0 : index
    %586 = vector.load %arg20[%c0_211, %c0_212, %c0_213] : memref<2x128x32xbf16, #tpu.memory_space<vmem>>, vector<1x128x32xbf16>
    %587 = vector.shape_cast %586 : vector<1x128x32xbf16> to vector<128x32xbf16>
    %588 = vector.extract_strided_slice %322 {offsets = [10, 0], sizes = [1, 32], strides = [1, 1]} : vector<11x32xf32> to vector<1x32xf32>
    %589 = arith.truncf %581 : vector<9x32xf32> to vector<9x32xbf16>
    %cst_214 = arith.constant dense<0.000000e+00> : vector<9x128xf32>
    %590 = tpu.matmul %589, %583, %cst_214 {dimension_numbers = #tpu.dot_dimension_numbers<[1], [0], [0], [1], [0, 0, 1, 1], [], []>} : vector<9x32xbf16>, vector<32x128xbf16>, vector<9x128xf32> -> vector<9x128xf32>
    %591 = vector.broadcast %585 : vector<1x128xf32> to vector<9x128xf32>
    %592 = arith.addf %590, %591 : vector<9x128xf32>
    %cst_215 = arith.constant 5.000000e-01 : f32
    %593 = vector.broadcast %cst_215 : f32 to vector<9x128xf32>
    %594 = arith.mulf %592, %593 : vector<9x128xf32>
    %cst_216 = arith.constant 0.707106769 : f32
    %595 = vector.broadcast %cst_216 : f32 to vector<9x128xf32>
    %596 = arith.mulf %592, %595 : vector<9x128xf32>
    %597 = math.erf %596 : vector<9x128xf32>
    %cst_217 = arith.constant 1.000000e+00 : f32
    %598 = vector.broadcast %cst_217 : f32 to vector<9x128xf32>
    %599 = arith.addf %598, %597 : vector<9x128xf32>
    %600 = arith.mulf %594, %599 : vector<9x128xf32>
    %601 = arith.truncf %600 : vector<9x128xf32> to vector<9x128xbf16>
    %cst_218 = arith.constant dense<0.000000e+00> : vector<9x32xf32>
    %602 = tpu.matmul %601, %587, %cst_218 {dimension_numbers = #tpu.dot_dimension_numbers<[1], [0], [0], [1], [0, 0, 1, 1], [], []>} : vector<9x128xbf16>, vector<128x32xbf16>, vector<9x32xf32> -> vector<9x32xf32>
    %603 = vector.broadcast %588 : vector<1x32xf32> to vector<9x32xf32>
    %604 = arith.addf %602, %603 : vector<9x32xf32>
    %605 = arith.addf %559, %604 : vector<9x32xf32>
    %c1_219 = arith.constant 1 : index
    %c0_220 = arith.constant 0 : index
    %c0_221 = arith.constant 0 : index
    %606 = vector.load %arg21[%c1_219, %c0_220, %c0_221] : memref<2x11x32xf32, #tpu.memory_space<vmem>>, vector<1x11x32xf32>
    %607 = vector.shape_cast %606 : vector<1x11x32xf32> to vector<11x32xf32>
    %608 = vector.extract_strided_slice %607 {offsets = [0, 0], sizes = [1, 32], strides = [1, 1]} : vector<11x32xf32> to vector<1x32xf32>
    %609 = vector.extract_strided_slice %607 {offsets = [1, 0], sizes = [1, 32], strides = [1, 1]} : vector<11x32xf32> to vector<1x32xf32>
    %cst_222 = arith.constant dense<0.000000e+00> : vector<9xf32>
    %610 = vector.multi_reduction <add>, %605, %cst_222 [1] : vector<9x32xf32> to vector<9xf32>
    %611 = vector.shape_cast %610 : vector<9xf32> to vector<9x1xf32>
    %cst_223 = arith.constant 3.200000e+01 : f32
    %612 = vector.broadcast %cst_223 : f32 to vector<9x1xf32>
    %613 = arith.divf %611, %612 : vector<9x1xf32>
    %614 = vector.broadcast %613 : vector<9x1xf32> to vector<9x32xf32>
    %615 = arith.subf %605, %614 : vector<9x32xf32>
    %616 = arith.mulf %615, %615 : vector<9x32xf32>
    %cst_224 = arith.constant dense<0.000000e+00> : vector<9xf32>
    %617 = vector.multi_reduction <add>, %616, %cst_224 [1] : vector<9x32xf32> to vector<9xf32>
    %618 = vector.shape_cast %617 : vector<9xf32> to vector<9x1xf32>
    %cst_225 = arith.constant 3.200000e+01 : f32
    %619 = vector.broadcast %cst_225 : f32 to vector<9x1xf32>
    %620 = arith.divf %618, %619 : vector<9x1xf32>
    %cst_226 = arith.constant 9.99999974E-6 : f32
    %621 = vector.broadcast %cst_226 : f32 to vector<9x1xf32>
    %622 = arith.addf %620, %621 : vector<9x1xf32>
    %623 = math.rsqrt %622 : vector<9x1xf32>
    %624 = vector.broadcast %623 : vector<9x1xf32> to vector<9x32xf32>
    %625 = arith.mulf %615, %624 : vector<9x32xf32>
    %626 = vector.broadcast %608 : vector<1x32xf32> to vector<9x32xf32>
    %627 = arith.mulf %625, %626 : vector<9x32xf32>
    %628 = vector.broadcast %609 : vector<1x32xf32> to vector<9x32xf32>
    %629 = arith.addf %627, %628 : vector<9x32xf32>
    %c1_227 = arith.constant 1 : index
    %c0_228 = arith.constant 0 : index
    %c0_229 = arith.constant 0 : index
    %630 = vector.load %arg14[%c1_227, %c0_228, %c0_229] : memref<2x32x96xbf16, #tpu.memory_space<vmem>>, vector<1x32x96xbf16>
    %631 = vector.shape_cast %630 : vector<1x32x96xbf16> to vector<32x96xbf16>
    %c1_230 = arith.constant 1 : index
    %c0_231 = arith.constant 0 : index
    %c0_232 = arith.constant 0 : index
    %632 = vector.load %arg15[%c1_230, %c0_231, %c0_232] : memref<2x32x32xbf16, #tpu.memory_space<vmem>>, vector<1x32x32xbf16>
    %633 = vector.shape_cast %632 : vector<1x32x32xbf16> to vector<32x32xbf16>
    %634 = vector.extract_strided_slice %607 {offsets = [8, 0], sizes = [1, 32], strides = [1, 1]} : vector<11x32xf32> to vector<1x32xf32>
    %635 = arith.truncf %629 : vector<9x32xf32> to vector<9x32xbf16>
    %cst_233 = arith.constant dense<0.000000e+00> : vector<9x96xf32>
    %636 = tpu.matmul %635, %631, %cst_233 {dimension_numbers = #tpu.dot_dimension_numbers<[1], [0], [0], [1], [0, 0, 1, 1], [], []>} : vector<9x32xbf16>, vector<32x96xbf16>, vector<9x96xf32> -> vector<9x96xf32>
    %637 = vector.extract_strided_slice %636 {offsets = [0, 0], sizes = [9, 32], strides = [1, 1]} : vector<9x96xf32> to vector<9x32xf32>
    %638 = vector.extract_strided_slice %636 {offsets = [0, 32], sizes = [9, 32], strides = [1, 1]} : vector<9x96xf32> to vector<9x32xf32>
    %639 = vector.extract_strided_slice %636 {offsets = [0, 64], sizes = [9, 32], strides = [1, 1]} : vector<9x96xf32> to vector<9x32xf32>
    %640 = vector.extract_strided_slice %637 {offsets = [0, 0], sizes = [9, 8], strides = [1, 1]} : vector<9x32xf32> to vector<9x8xf32>
    %641 = vector.extract_strided_slice %638 {offsets = [0, 0], sizes = [9, 8], strides = [1, 1]} : vector<9x32xf32> to vector<9x8xf32>
    %642 = vector.extract_strided_slice %639 {offsets = [0, 0], sizes = [9, 8], strides = [1, 1]} : vector<9x32xf32> to vector<9x8xf32>
    %cst_234 = arith.constant dense<0.000000e+00> : vector<9x9xf32>
    %643 = tpu.matmul %640, %641, %cst_234 {dimension_numbers = #tpu.dot_dimension_numbers<[1], [1], [0], [0], [0, 0, 1, 0], [], []>} : vector<9x8xf32>, vector<9x8xf32>, vector<9x9xf32> -> vector<9x9xf32>
    %cst_235 = arith.constant 0.353553385 : f32
    %644 = vector.broadcast %cst_235 : f32 to vector<9x9xf32>
    %645 = arith.mulf %643, %644 : vector<9x9xf32>
    %cst_236 = arith.constant dense<0xFF800000> : vector<9xf32>
    %646 = vector.multi_reduction <maximumf>, %645, %cst_236 [1] : vector<9x9xf32> to vector<9xf32>
    %647 = vector.shape_cast %646 : vector<9xf32> to vector<9x1xf32>
    %648 = vector.broadcast %647 : vector<9x1xf32> to vector<9x9xf32>
    %649 = arith.subf %645, %648 : vector<9x9xf32>
    %650 = math.exp %649 : vector<9x9xf32>
    %cst_237 = arith.constant dense<0.000000e+00> : vector<9xf32>
    %651 = vector.multi_reduction <add>, %650, %cst_237 [1] : vector<9x9xf32> to vector<9xf32>
    %652 = vector.shape_cast %651 : vector<9xf32> to vector<9x1xf32>
    %653 = tpu.reciprocal %652 {approx = true} : vector<9x1xf32> -> vector<9x1xf32>
    %654 = vector.broadcast %653 : vector<9x1xf32> to vector<9x9xf32>
    %655 = arith.mulf %650, %654 : vector<9x9xf32>
    %cst_238 = arith.constant dense<0.000000e+00> : vector<9x8xf32>
    %656 = tpu.matmul %655, %642, %cst_238 {dimension_numbers = #tpu.dot_dimension_numbers<[1], [0], [0], [1], [0, 0, 1, 1], [], []>} : vector<9x9xf32>, vector<9x8xf32>, vector<9x8xf32> -> vector<9x8xf32>
    %657 = vector.extract_strided_slice %637 {offsets = [0, 8], sizes = [9, 8], strides = [1, 1]} : vector<9x32xf32> to vector<9x8xf32>
    %658 = vector.extract_strided_slice %638 {offsets = [0, 8], sizes = [9, 8], strides = [1, 1]} : vector<9x32xf32> to vector<9x8xf32>
    %659 = vector.extract_strided_slice %639 {offsets = [0, 8], sizes = [9, 8], strides = [1, 1]} : vector<9x32xf32> to vector<9x8xf32>
    %cst_239 = arith.constant dense<0.000000e+00> : vector<9x9xf32>
    %660 = tpu.matmul %657, %658, %cst_239 {dimension_numbers = #tpu.dot_dimension_numbers<[1], [1], [0], [0], [0, 0, 1, 0], [], []>} : vector<9x8xf32>, vector<9x8xf32>, vector<9x9xf32> -> vector<9x9xf32>
    %cst_240 = arith.constant 0.353553385 : f32
    %661 = vector.broadcast %cst_240 : f32 to vector<9x9xf32>
    %662 = arith.mulf %660, %661 : vector<9x9xf32>
    %cst_241 = arith.constant dense<0xFF800000> : vector<9xf32>
    %663 = vector.multi_reduction <maximumf>, %662, %cst_241 [1] : vector<9x9xf32> to vector<9xf32>
    %664 = vector.shape_cast %663 : vector<9xf32> to vector<9x1xf32>
    %665 = vector.broadcast %664 : vector<9x1xf32> to vector<9x9xf32>
    %666 = arith.subf %662, %665 : vector<9x9xf32>
    %667 = math.exp %666 : vector<9x9xf32>
    %cst_242 = arith.constant dense<0.000000e+00> : vector<9xf32>
    %668 = vector.multi_reduction <add>, %667, %cst_242 [1] : vector<9x9xf32> to vector<9xf32>
    %669 = vector.shape_cast %668 : vector<9xf32> to vector<9x1xf32>
    %670 = tpu.reciprocal %669 {approx = true} : vector<9x1xf32> -> vector<9x1xf32>
    %671 = vector.broadcast %670 : vector<9x1xf32> to vector<9x9xf32>
    %672 = arith.mulf %667, %671 : vector<9x9xf32>
    %cst_243 = arith.constant dense<0.000000e+00> : vector<9x8xf32>
    %673 = tpu.matmul %672, %659, %cst_243 {dimension_numbers = #tpu.dot_dimension_numbers<[1], [0], [0], [1], [0, 0, 1, 1], [], []>} : vector<9x9xf32>, vector<9x8xf32>, vector<9x8xf32> -> vector<9x8xf32>
    %674 = vector.extract_strided_slice %637 {offsets = [0, 16], sizes = [9, 8], strides = [1, 1]} : vector<9x32xf32> to vector<9x8xf32>
    %675 = vector.extract_strided_slice %638 {offsets = [0, 16], sizes = [9, 8], strides = [1, 1]} : vector<9x32xf32> to vector<9x8xf32>
    %676 = vector.extract_strided_slice %639 {offsets = [0, 16], sizes = [9, 8], strides = [1, 1]} : vector<9x32xf32> to vector<9x8xf32>
    %cst_244 = arith.constant dense<0.000000e+00> : vector<9x9xf32>
    %677 = tpu.matmul %674, %675, %cst_244 {dimension_numbers = #tpu.dot_dimension_numbers<[1], [1], [0], [0], [0, 0, 1, 0], [], []>} : vector<9x8xf32>, vector<9x8xf32>, vector<9x9xf32> -> vector<9x9xf32>
    %cst_245 = arith.constant 0.353553385 : f32
    %678 = vector.broadcast %cst_245 : f32 to vector<9x9xf32>
    %679 = arith.mulf %677, %678 : vector<9x9xf32>
    %cst_246 = arith.constant dense<0xFF800000> : vector<9xf32>
    %680 = vector.multi_reduction <maximumf>, %679, %cst_246 [1] : vector<9x9xf32> to vector<9xf32>
    %681 = vector.shape_cast %680 : vector<9xf32> to vector<9x1xf32>
    %682 = vector.broadcast %681 : vector<9x1xf32> to vector<9x9xf32>
    %683 = arith.subf %679, %682 : vector<9x9xf32>
    %684 = math.exp %683 : vector<9x9xf32>
    %cst_247 = arith.constant dense<0.000000e+00> : vector<9xf32>
    %685 = vector.multi_reduction <add>, %684, %cst_247 [1] : vector<9x9xf32> to vector<9xf32>
    %686 = vector.shape_cast %685 : vector<9xf32> to vector<9x1xf32>
    %687 = tpu.reciprocal %686 {approx = true} : vector<9x1xf32> -> vector<9x1xf32>
    %688 = vector.broadcast %687 : vector<9x1xf32> to vector<9x9xf32>
    %689 = arith.mulf %684, %688 : vector<9x9xf32>
    %cst_248 = arith.constant dense<0.000000e+00> : vector<9x8xf32>
    %690 = tpu.matmul %689, %676, %cst_248 {dimension_numbers = #tpu.dot_dimension_numbers<[1], [0], [0], [1], [0, 0, 1, 1], [], []>} : vector<9x9xf32>, vector<9x8xf32>, vector<9x8xf32> -> vector<9x8xf32>
    %691 = vector.extract_strided_slice %637 {offsets = [0, 24], sizes = [9, 8], strides = [1, 1]} : vector<9x32xf32> to vector<9x8xf32>
    %692 = vector.extract_strided_slice %638 {offsets = [0, 24], sizes = [9, 8], strides = [1, 1]} : vector<9x32xf32> to vector<9x8xf32>
    %693 = vector.extract_strided_slice %639 {offsets = [0, 24], sizes = [9, 8], strides = [1, 1]} : vector<9x32xf32> to vector<9x8xf32>
    %cst_249 = arith.constant dense<0.000000e+00> : vector<9x9xf32>
    %694 = tpu.matmul %691, %692, %cst_249 {dimension_numbers = #tpu.dot_dimension_numbers<[1], [1], [0], [0], [0, 0, 1, 0], [], []>} : vector<9x8xf32>, vector<9x8xf32>, vector<9x9xf32> -> vector<9x9xf32>
    %cst_250 = arith.constant 0.353553385 : f32
    %695 = vector.broadcast %cst_250 : f32 to vector<9x9xf32>
    %696 = arith.mulf %694, %695 : vector<9x9xf32>
    %cst_251 = arith.constant dense<0xFF800000> : vector<9xf32>
    %697 = vector.multi_reduction <maximumf>, %696, %cst_251 [1] : vector<9x9xf32> to vector<9xf32>
    %698 = vector.shape_cast %697 : vector<9xf32> to vector<9x1xf32>
    %699 = vector.broadcast %698 : vector<9x1xf32> to vector<9x9xf32>
    %700 = arith.subf %696, %699 : vector<9x9xf32>
    %701 = math.exp %700 : vector<9x9xf32>
    %cst_252 = arith.constant dense<0.000000e+00> : vector<9xf32>
    %702 = vector.multi_reduction <add>, %701, %cst_252 [1] : vector<9x9xf32> to vector<9xf32>
    %703 = vector.shape_cast %702 : vector<9xf32> to vector<9x1xf32>
    %704 = tpu.reciprocal %703 {approx = true} : vector<9x1xf32> -> vector<9x1xf32>
    %705 = vector.broadcast %704 : vector<9x1xf32> to vector<9x9xf32>
    %706 = arith.mulf %701, %705 : vector<9x9xf32>
    %cst_253 = arith.constant dense<0.000000e+00> : vector<9x8xf32>
    %707 = tpu.matmul %706, %693, %cst_253 {dimension_numbers = #tpu.dot_dimension_numbers<[1], [0], [0], [1], [0, 0, 1, 1], [], []>} : vector<9x9xf32>, vector<9x8xf32>, vector<9x8xf32> -> vector<9x8xf32>
    %708 = tpu.concatenate %656, %673, %690, %707 in 1 : vector<9x8xf32>, vector<9x8xf32>, vector<9x8xf32>, vector<9x8xf32> -> vector<9x32xf32>
    %709 = arith.truncf %708 : vector<9x32xf32> to vector<9x32xbf16>
    %cst_254 = arith.constant dense<0.000000e+00> : vector<9x32xf32>
    %710 = tpu.matmul %709, %633, %cst_254 {dimension_numbers = #tpu.dot_dimension_numbers<[1], [0], [0], [1], [0, 0, 1, 1], [], []>} : vector<9x32xbf16>, vector<32x32xbf16>, vector<9x32xf32> -> vector<9x32xf32>
    %711 = vector.broadcast %634 : vector<1x32xf32> to vector<9x32xf32>
    %712 = arith.addf %710, %711 : vector<9x32xf32>
    %713 = arith.addf %605, %712 : vector<9x32xf32>
    %714 = vector.extract_strided_slice %607 {offsets = [2, 0], sizes = [1, 32], strides = [1, 1]} : vector<11x32xf32> to vector<1x32xf32>
    %715 = vector.extract_strided_slice %607 {offsets = [3, 0], sizes = [1, 32], strides = [1, 1]} : vector<11x32xf32> to vector<1x32xf32>
    %cst_255 = arith.constant dense<0.000000e+00> : vector<9xf32>
    %716 = vector.multi_reduction <add>, %318, %cst_255 [1] : vector<9x32xf32> to vector<9xf32>
    %717 = vector.shape_cast %716 : vector<9xf32> to vector<9x1xf32>
    %cst_256 = arith.constant 3.200000e+01 : f32
    %718 = vector.broadcast %cst_256 : f32 to vector<9x1xf32>
    %719 = arith.divf %717, %718 : vector<9x1xf32>
    %720 = vector.broadcast %719 : vector<9x1xf32> to vector<9x32xf32>
    %721 = arith.subf %318, %720 : vector<9x32xf32>
    %722 = arith.mulf %721, %721 : vector<9x32xf32>
    %cst_257 = arith.constant dense<0.000000e+00> : vector<9xf32>
    %723 = vector.multi_reduction <add>, %722, %cst_257 [1] : vector<9x32xf32> to vector<9xf32>
    %724 = vector.shape_cast %723 : vector<9xf32> to vector<9x1xf32>
    %cst_258 = arith.constant 3.200000e+01 : f32
    %725 = vector.broadcast %cst_258 : f32 to vector<9x1xf32>
    %726 = arith.divf %724, %725 : vector<9x1xf32>
    %cst_259 = arith.constant 9.99999974E-6 : f32
    %727 = vector.broadcast %cst_259 : f32 to vector<9x1xf32>
    %728 = arith.addf %726, %727 : vector<9x1xf32>
    %729 = math.rsqrt %728 : vector<9x1xf32>
    %730 = vector.broadcast %729 : vector<9x1xf32> to vector<9x32xf32>
    %731 = arith.mulf %721, %730 : vector<9x32xf32>
    %732 = vector.broadcast %714 : vector<1x32xf32> to vector<9x32xf32>
    %733 = arith.mulf %731, %732 : vector<9x32xf32>
    %734 = vector.broadcast %715 : vector<1x32xf32> to vector<9x32xf32>
    %735 = arith.addf %733, %734 : vector<9x32xf32>
    %736 = vector.extract_strided_slice %607 {offsets = [4, 0], sizes = [1, 32], strides = [1, 1]} : vector<11x32xf32> to vector<1x32xf32>
    %737 = vector.extract_strided_slice %607 {offsets = [5, 0], sizes = [1, 32], strides = [1, 1]} : vector<11x32xf32> to vector<1x32xf32>
    %cst_260 = arith.constant dense<0.000000e+00> : vector<9xf32>
    %738 = vector.multi_reduction <add>, %713, %cst_260 [1] : vector<9x32xf32> to vector<9xf32>
    %739 = vector.shape_cast %738 : vector<9xf32> to vector<9x1xf32>
    %cst_261 = arith.constant 3.200000e+01 : f32
    %740 = vector.broadcast %cst_261 : f32 to vector<9x1xf32>
    %741 = arith.divf %739, %740 : vector<9x1xf32>
    %742 = vector.broadcast %741 : vector<9x1xf32> to vector<9x32xf32>
    %743 = arith.subf %713, %742 : vector<9x32xf32>
    %744 = arith.mulf %743, %743 : vector<9x32xf32>
    %cst_262 = arith.constant dense<0.000000e+00> : vector<9xf32>
    %745 = vector.multi_reduction <add>, %744, %cst_262 [1] : vector<9x32xf32> to vector<9xf32>
    %746 = vector.shape_cast %745 : vector<9xf32> to vector<9x1xf32>
    %cst_263 = arith.constant 3.200000e+01 : f32
    %747 = vector.broadcast %cst_263 : f32 to vector<9x1xf32>
    %748 = arith.divf %746, %747 : vector<9x1xf32>
    %cst_264 = arith.constant 9.99999974E-6 : f32
    %749 = vector.broadcast %cst_264 : f32 to vector<9x1xf32>
    %750 = arith.addf %748, %749 : vector<9x1xf32>
    %751 = math.rsqrt %750 : vector<9x1xf32>
    %752 = vector.broadcast %751 : vector<9x1xf32> to vector<9x32xf32>
    %753 = arith.mulf %743, %752 : vector<9x32xf32>
    %754 = vector.broadcast %736 : vector<1x32xf32> to vector<9x32xf32>
    %755 = arith.mulf %753, %754 : vector<9x32xf32>
    %756 = vector.broadcast %737 : vector<1x32xf32> to vector<9x32xf32>
    %757 = arith.addf %755, %756 : vector<9x32xf32>
    %c1_265 = arith.constant 1 : index
    %c0_266 = arith.constant 0 : index
    %c0_267 = arith.constant 0 : index
    %758 = vector.load %arg17[%c1_265, %c0_266, %c0_267] : memref<2x32x32xbf16, #tpu.memory_space<vmem>>, vector<1x32x32xbf16>
    %759 = vector.shape_cast %758 : vector<1x32x32xbf16> to vector<32x32xbf16>
    %c1_268 = arith.constant 1 : index
    %c0_269 = arith.constant 0 : index
    %c0_270 = arith.constant 0 : index
    %760 = vector.load %arg16[%c1_268, %c0_269, %c0_270] : memref<2x32x64xbf16, #tpu.memory_space<vmem>>, vector<1x32x64xbf16>
    %761 = vector.shape_cast %760 : vector<1x32x64xbf16> to vector<32x64xbf16>
    %c1_271 = arith.constant 1 : index
    %c0_272 = arith.constant 0 : index
    %c0_273 = arith.constant 0 : index
    %762 = vector.load %arg18[%c1_271, %c0_272, %c0_273] : memref<2x32x32xbf16, #tpu.memory_space<vmem>>, vector<1x32x32xbf16>
    %763 = vector.shape_cast %762 : vector<1x32x32xbf16> to vector<32x32xbf16>
    %764 = vector.extract_strided_slice %607 {offsets = [9, 0], sizes = [1, 32], strides = [1, 1]} : vector<11x32xf32> to vector<1x32xf32>
    %765 = arith.truncf %757 : vector<9x32xf32> to vector<9x32xbf16>
    %cst_274 = arith.constant dense<0.000000e+00> : vector<9x32xf32>
    %766 = tpu.matmul %765, %759, %cst_274 {dimension_numbers = #tpu.dot_dimension_numbers<[1], [0], [0], [1], [0, 0, 1, 1], [], []>} : vector<9x32xbf16>, vector<32x32xbf16>, vector<9x32xf32> -> vector<9x32xf32>
    %767 = arith.truncf %735 : vector<9x32xf32> to vector<9x32xbf16>
    %cst_275 = arith.constant dense<0.000000e+00> : vector<9x64xf32>
    %768 = tpu.matmul %767, %761, %cst_275 {dimension_numbers = #tpu.dot_dimension_numbers<[1], [0], [0], [1], [0, 0, 1, 1], [], []>} : vector<9x32xbf16>, vector<32x64xbf16>, vector<9x64xf32> -> vector<9x64xf32>
    %769 = vector.extract_strided_slice %768 {offsets = [0, 0], sizes = [9, 32], strides = [1, 1]} : vector<9x64xf32> to vector<9x32xf32>
    %770 = vector.extract_strided_slice %768 {offsets = [0, 32], sizes = [9, 32], strides = [1, 1]} : vector<9x64xf32> to vector<9x32xf32>
    %771 = vector.extract_strided_slice %766 {offsets = [0, 0], sizes = [9, 8], strides = [1, 1]} : vector<9x32xf32> to vector<9x8xf32>
    %772 = vector.extract_strided_slice %769 {offsets = [0, 0], sizes = [9, 8], strides = [1, 1]} : vector<9x32xf32> to vector<9x8xf32>
    %773 = vector.extract_strided_slice %770 {offsets = [0, 0], sizes = [9, 8], strides = [1, 1]} : vector<9x32xf32> to vector<9x8xf32>
    %cst_276 = arith.constant dense<0.000000e+00> : vector<9x9xf32>
    %774 = tpu.matmul %771, %772, %cst_276 {dimension_numbers = #tpu.dot_dimension_numbers<[1], [1], [0], [0], [0, 0, 1, 0], [], []>} : vector<9x8xf32>, vector<9x8xf32>, vector<9x9xf32> -> vector<9x9xf32>
    %cst_277 = arith.constant 0.353553385 : f32
    %775 = vector.broadcast %cst_277 : f32 to vector<9x9xf32>
    %776 = arith.mulf %774, %775 : vector<9x9xf32>
    %cst_278 = arith.constant dense<0xFF800000> : vector<9xf32>
    %777 = vector.multi_reduction <maximumf>, %776, %cst_278 [1] : vector<9x9xf32> to vector<9xf32>
    %778 = vector.shape_cast %777 : vector<9xf32> to vector<9x1xf32>
    %779 = vector.broadcast %778 : vector<9x1xf32> to vector<9x9xf32>
    %780 = arith.subf %776, %779 : vector<9x9xf32>
    %781 = math.exp %780 : vector<9x9xf32>
    %cst_279 = arith.constant dense<0.000000e+00> : vector<9xf32>
    %782 = vector.multi_reduction <add>, %781, %cst_279 [1] : vector<9x9xf32> to vector<9xf32>
    %783 = vector.shape_cast %782 : vector<9xf32> to vector<9x1xf32>
    %784 = tpu.reciprocal %783 {approx = true} : vector<9x1xf32> -> vector<9x1xf32>
    %785 = vector.broadcast %784 : vector<9x1xf32> to vector<9x9xf32>
    %786 = arith.mulf %781, %785 : vector<9x9xf32>
    %cst_280 = arith.constant dense<0.000000e+00> : vector<9x8xf32>
    %787 = tpu.matmul %786, %773, %cst_280 {dimension_numbers = #tpu.dot_dimension_numbers<[1], [0], [0], [1], [0, 0, 1, 1], [], []>} : vector<9x9xf32>, vector<9x8xf32>, vector<9x8xf32> -> vector<9x8xf32>
    %788 = vector.extract_strided_slice %766 {offsets = [0, 8], sizes = [9, 8], strides = [1, 1]} : vector<9x32xf32> to vector<9x8xf32>
    %789 = vector.extract_strided_slice %769 {offsets = [0, 8], sizes = [9, 8], strides = [1, 1]} : vector<9x32xf32> to vector<9x8xf32>
    %790 = vector.extract_strided_slice %770 {offsets = [0, 8], sizes = [9, 8], strides = [1, 1]} : vector<9x32xf32> to vector<9x8xf32>
    %cst_281 = arith.constant dense<0.000000e+00> : vector<9x9xf32>
    %791 = tpu.matmul %788, %789, %cst_281 {dimension_numbers = #tpu.dot_dimension_numbers<[1], [1], [0], [0], [0, 0, 1, 0], [], []>} : vector<9x8xf32>, vector<9x8xf32>, vector<9x9xf32> -> vector<9x9xf32>
    %cst_282 = arith.constant 0.353553385 : f32
    %792 = vector.broadcast %cst_282 : f32 to vector<9x9xf32>
    %793 = arith.mulf %791, %792 : vector<9x9xf32>
    %cst_283 = arith.constant dense<0xFF800000> : vector<9xf32>
    %794 = vector.multi_reduction <maximumf>, %793, %cst_283 [1] : vector<9x9xf32> to vector<9xf32>
    %795 = vector.shape_cast %794 : vector<9xf32> to vector<9x1xf32>
    %796 = vector.broadcast %795 : vector<9x1xf32> to vector<9x9xf32>
    %797 = arith.subf %793, %796 : vector<9x9xf32>
    %798 = math.exp %797 : vector<9x9xf32>
    %cst_284 = arith.constant dense<0.000000e+00> : vector<9xf32>
    %799 = vector.multi_reduction <add>, %798, %cst_284 [1] : vector<9x9xf32> to vector<9xf32>
    %800 = vector.shape_cast %799 : vector<9xf32> to vector<9x1xf32>
    %801 = tpu.reciprocal %800 {approx = true} : vector<9x1xf32> -> vector<9x1xf32>
    %802 = vector.broadcast %801 : vector<9x1xf32> to vector<9x9xf32>
    %803 = arith.mulf %798, %802 : vector<9x9xf32>
    %cst_285 = arith.constant dense<0.000000e+00> : vector<9x8xf32>
    %804 = tpu.matmul %803, %790, %cst_285 {dimension_numbers = #tpu.dot_dimension_numbers<[1], [0], [0], [1], [0, 0, 1, 1], [], []>} : vector<9x9xf32>, vector<9x8xf32>, vector<9x8xf32> -> vector<9x8xf32>
    %805 = vector.extract_strided_slice %766 {offsets = [0, 16], sizes = [9, 8], strides = [1, 1]} : vector<9x32xf32> to vector<9x8xf32>
    %806 = vector.extract_strided_slice %769 {offsets = [0, 16], sizes = [9, 8], strides = [1, 1]} : vector<9x32xf32> to vector<9x8xf32>
    %807 = vector.extract_strided_slice %770 {offsets = [0, 16], sizes = [9, 8], strides = [1, 1]} : vector<9x32xf32> to vector<9x8xf32>
    %cst_286 = arith.constant dense<0.000000e+00> : vector<9x9xf32>
    %808 = tpu.matmul %805, %806, %cst_286 {dimension_numbers = #tpu.dot_dimension_numbers<[1], [1], [0], [0], [0, 0, 1, 0], [], []>} : vector<9x8xf32>, vector<9x8xf32>, vector<9x9xf32> -> vector<9x9xf32>
    %cst_287 = arith.constant 0.353553385 : f32
    %809 = vector.broadcast %cst_287 : f32 to vector<9x9xf32>
    %810 = arith.mulf %808, %809 : vector<9x9xf32>
    %cst_288 = arith.constant dense<0xFF800000> : vector<9xf32>
    %811 = vector.multi_reduction <maximumf>, %810, %cst_288 [1] : vector<9x9xf32> to vector<9xf32>
    %812 = vector.shape_cast %811 : vector<9xf32> to vector<9x1xf32>
    %813 = vector.broadcast %812 : vector<9x1xf32> to vector<9x9xf32>
    %814 = arith.subf %810, %813 : vector<9x9xf32>
    %815 = math.exp %814 : vector<9x9xf32>
    %cst_289 = arith.constant dense<0.000000e+00> : vector<9xf32>
    %816 = vector.multi_reduction <add>, %815, %cst_289 [1] : vector<9x9xf32> to vector<9xf32>
    %817 = vector.shape_cast %816 : vector<9xf32> to vector<9x1xf32>
    %818 = tpu.reciprocal %817 {approx = true} : vector<9x1xf32> -> vector<9x1xf32>
    %819 = vector.broadcast %818 : vector<9x1xf32> to vector<9x9xf32>
    %820 = arith.mulf %815, %819 : vector<9x9xf32>
    %cst_290 = arith.constant dense<0.000000e+00> : vector<9x8xf32>
    %821 = tpu.matmul %820, %807, %cst_290 {dimension_numbers = #tpu.dot_dimension_numbers<[1], [0], [0], [1], [0, 0, 1, 1], [], []>} : vector<9x9xf32>, vector<9x8xf32>, vector<9x8xf32> -> vector<9x8xf32>
    %822 = vector.extract_strided_slice %766 {offsets = [0, 24], sizes = [9, 8], strides = [1, 1]} : vector<9x32xf32> to vector<9x8xf32>
    %823 = vector.extract_strided_slice %769 {offsets = [0, 24], sizes = [9, 8], strides = [1, 1]} : vector<9x32xf32> to vector<9x8xf32>
    %824 = vector.extract_strided_slice %770 {offsets = [0, 24], sizes = [9, 8], strides = [1, 1]} : vector<9x32xf32> to vector<9x8xf32>
    %cst_291 = arith.constant dense<0.000000e+00> : vector<9x9xf32>
    %825 = tpu.matmul %822, %823, %cst_291 {dimension_numbers = #tpu.dot_dimension_numbers<[1], [1], [0], [0], [0, 0, 1, 0], [], []>} : vector<9x8xf32>, vector<9x8xf32>, vector<9x9xf32> -> vector<9x9xf32>
    %cst_292 = arith.constant 0.353553385 : f32
    %826 = vector.broadcast %cst_292 : f32 to vector<9x9xf32>
    %827 = arith.mulf %825, %826 : vector<9x9xf32>
    %cst_293 = arith.constant dense<0xFF800000> : vector<9xf32>
    %828 = vector.multi_reduction <maximumf>, %827, %cst_293 [1] : vector<9x9xf32> to vector<9xf32>
    %829 = vector.shape_cast %828 : vector<9xf32> to vector<9x1xf32>
    %830 = vector.broadcast %829 : vector<9x1xf32> to vector<9x9xf32>
    %831 = arith.subf %827, %830 : vector<9x9xf32>
    %832 = math.exp %831 : vector<9x9xf32>
    %cst_294 = arith.constant dense<0.000000e+00> : vector<9xf32>
    %833 = vector.multi_reduction <add>, %832, %cst_294 [1] : vector<9x9xf32> to vector<9xf32>
    %834 = vector.shape_cast %833 : vector<9xf32> to vector<9x1xf32>
    %835 = tpu.reciprocal %834 {approx = true} : vector<9x1xf32> -> vector<9x1xf32>
    %836 = vector.broadcast %835 : vector<9x1xf32> to vector<9x9xf32>
    %837 = arith.mulf %832, %836 : vector<9x9xf32>
    %cst_295 = arith.constant dense<0.000000e+00> : vector<9x8xf32>
    %838 = tpu.matmul %837, %824, %cst_295 {dimension_numbers = #tpu.dot_dimension_numbers<[1], [0], [0], [1], [0, 0, 1, 1], [], []>} : vector<9x9xf32>, vector<9x8xf32>, vector<9x8xf32> -> vector<9x8xf32>
    %839 = tpu.concatenate %787, %804, %821, %838 in 1 : vector<9x8xf32>, vector<9x8xf32>, vector<9x8xf32>, vector<9x8xf32> -> vector<9x32xf32>
    %840 = arith.truncf %839 : vector<9x32xf32> to vector<9x32xbf16>
    %cst_296 = arith.constant dense<0.000000e+00> : vector<9x32xf32>
    %841 = tpu.matmul %840, %763, %cst_296 {dimension_numbers = #tpu.dot_dimension_numbers<[1], [0], [0], [1], [0, 0, 1, 1], [], []>} : vector<9x32xbf16>, vector<32x32xbf16>, vector<9x32xf32> -> vector<9x32xf32>
    %842 = vector.broadcast %764 : vector<1x32xf32> to vector<9x32xf32>
    %843 = arith.addf %841, %842 : vector<9x32xf32>
    %844 = arith.addf %713, %843 : vector<9x32xf32>
    %845 = vector.extract_strided_slice %607 {offsets = [6, 0], sizes = [1, 32], strides = [1, 1]} : vector<11x32xf32> to vector<1x32xf32>
    %846 = vector.extract_strided_slice %607 {offsets = [7, 0], sizes = [1, 32], strides = [1, 1]} : vector<11x32xf32> to vector<1x32xf32>
    %cst_297 = arith.constant dense<0.000000e+00> : vector<9xf32>
    %847 = vector.multi_reduction <add>, %844, %cst_297 [1] : vector<9x32xf32> to vector<9xf32>
    %848 = vector.shape_cast %847 : vector<9xf32> to vector<9x1xf32>
    %cst_298 = arith.constant 3.200000e+01 : f32
    %849 = vector.broadcast %cst_298 : f32 to vector<9x1xf32>
    %850 = arith.divf %848, %849 : vector<9x1xf32>
    %851 = vector.broadcast %850 : vector<9x1xf32> to vector<9x32xf32>
    %852 = arith.subf %844, %851 : vector<9x32xf32>
    %853 = arith.mulf %852, %852 : vector<9x32xf32>
    %cst_299 = arith.constant dense<0.000000e+00> : vector<9xf32>
    %854 = vector.multi_reduction <add>, %853, %cst_299 [1] : vector<9x32xf32> to vector<9xf32>
    %855 = vector.shape_cast %854 : vector<9xf32> to vector<9x1xf32>
    %cst_300 = arith.constant 3.200000e+01 : f32
    %856 = vector.broadcast %cst_300 : f32 to vector<9x1xf32>
    %857 = arith.divf %855, %856 : vector<9x1xf32>
    %cst_301 = arith.constant 9.99999974E-6 : f32
    %858 = vector.broadcast %cst_301 : f32 to vector<9x1xf32>
    %859 = arith.addf %857, %858 : vector<9x1xf32>
    %860 = math.rsqrt %859 : vector<9x1xf32>
    %861 = vector.broadcast %860 : vector<9x1xf32> to vector<9x32xf32>
    %862 = arith.mulf %852, %861 : vector<9x32xf32>
    %863 = vector.broadcast %845 : vector<1x32xf32> to vector<9x32xf32>
    %864 = arith.mulf %862, %863 : vector<9x32xf32>
    %865 = vector.broadcast %846 : vector<1x32xf32> to vector<9x32xf32>
    %866 = arith.addf %864, %865 : vector<9x32xf32>
    %c1_302 = arith.constant 1 : index
    %c0_303 = arith.constant 0 : index
    %c0_304 = arith.constant 0 : index
    %867 = vector.load %arg19[%c1_302, %c0_303, %c0_304] : memref<2x32x128xbf16, #tpu.memory_space<vmem>>, vector<1x32x128xbf16>
    %868 = vector.shape_cast %867 : vector<1x32x128xbf16> to vector<32x128xbf16>
    %c1_305 = arith.constant 1 : index
    %c0_306 = arith.constant 0 : index
    %c0_307 = arith.constant 0 : index
    %869 = vector.load %arg22[%c1_305, %c0_306, %c0_307] : memref<2x1x128xf32, #tpu.memory_space<vmem>>, vector<1x1x128xf32>
    %870 = vector.shape_cast %869 : vector<1x1x128xf32> to vector<1x128xf32>
    %c1_308 = arith.constant 1 : index
    %c0_309 = arith.constant 0 : index
    %c0_310 = arith.constant 0 : index
    %871 = vector.load %arg20[%c1_308, %c0_309, %c0_310] : memref<2x128x32xbf16, #tpu.memory_space<vmem>>, vector<1x128x32xbf16>
    %872 = vector.shape_cast %871 : vector<1x128x32xbf16> to vector<128x32xbf16>
    %873 = vector.extract_strided_slice %607 {offsets = [10, 0], sizes = [1, 32], strides = [1, 1]} : vector<11x32xf32> to vector<1x32xf32>
    %874 = arith.truncf %866 : vector<9x32xf32> to vector<9x32xbf16>
    %cst_311 = arith.constant dense<0.000000e+00> : vector<9x128xf32>
    %875 = tpu.matmul %874, %868, %cst_311 {dimension_numbers = #tpu.dot_dimension_numbers<[1], [0], [0], [1], [0, 0, 1, 1], [], []>} : vector<9x32xbf16>, vector<32x128xbf16>, vector<9x128xf32> -> vector<9x128xf32>
    %876 = vector.broadcast %870 : vector<1x128xf32> to vector<9x128xf32>
    %877 = arith.addf %875, %876 : vector<9x128xf32>
    %cst_312 = arith.constant 5.000000e-01 : f32
    %878 = vector.broadcast %cst_312 : f32 to vector<9x128xf32>
    %879 = arith.mulf %877, %878 : vector<9x128xf32>
    %cst_313 = arith.constant 0.707106769 : f32
    %880 = vector.broadcast %cst_313 : f32 to vector<9x128xf32>
    %881 = arith.mulf %877, %880 : vector<9x128xf32>
    %882 = math.erf %881 : vector<9x128xf32>
    %cst_314 = arith.constant 1.000000e+00 : f32
    %883 = vector.broadcast %cst_314 : f32 to vector<9x128xf32>
    %884 = arith.addf %883, %882 : vector<9x128xf32>
    %885 = arith.mulf %879, %884 : vector<9x128xf32>
    %886 = arith.truncf %885 : vector<9x128xf32> to vector<9x128xbf16>
    %cst_315 = arith.constant dense<0.000000e+00> : vector<9x32xf32>
    %887 = tpu.matmul %886, %872, %cst_315 {dimension_numbers = #tpu.dot_dimension_numbers<[1], [0], [0], [1], [0, 0, 1, 1], [], []>} : vector<9x128xbf16>, vector<128x32xbf16>, vector<9x32xf32> -> vector<9x32xf32>
    %888 = vector.broadcast %873 : vector<1x32xf32> to vector<9x32xf32>
    %889 = arith.addf %887, %888 : vector<9x32xf32>
    %890 = arith.addf %844, %889 : vector<9x32xf32>
    %891 = arith.truncf %890 : vector<9x32xf32> to vector<9x32xbf16>
    %c0_316 = arith.constant 0 : index
    %c0_317 = arith.constant 0 : index
    %892 = vector.load %arg23[%c0_316, %c0_317] : memref<32x128xbf16, #tpu.memory_space<vmem>>, vector<32x128xbf16>
    %cst_318 = arith.constant dense<0.000000e+00> : vector<9x128xf32>
    %893 = tpu.matmul %891, %892, %cst_318 {dimension_numbers = #tpu.dot_dimension_numbers<[1], [0], [0], [1], [0, 0, 1, 1], [], []>} : vector<9x32xbf16>, vector<32x128xbf16>, vector<9x128xf32> -> vector<9x128xf32>
    %c0_319 = arith.constant 0 : index
    %c0_320 = arith.constant 0 : index
    %c0_321 = arith.constant 0 : index
    %894 = vector.load %arg24[%c0_319, %c0_320, %c0_321] : memref<1x9x128xf32, #tpu.memory_space<vmem>>, vector<1x9x128xf32>
    %895 = vector.shape_cast %894 : vector<1x9x128xf32> to vector<9x128xf32>
    %896 = vector.shape_cast %893 : vector<9x128xf32> to vector<1x9x128xf32>
    tpu.vector_store %arg24[%c0_319, %c0_320, %c0_321], %896 {strides = array<i32>} : memref<1x9x128xf32, #tpu.memory_space<vmem>>, vector<1x9x128xf32>,
    return
  }
  func.func @transform_0(%arg0: i32, %arg1: memref<1xi32, #tpu.memory_space<smem>>) -> (i32, i32, i32) {
    %c0_i32 = arith.constant 0 : i32
    %c0_i32_0 = arith.constant 0 : i32
    %c0_i32_1 = arith.constant 0 : i32
    return %arg0, %c0_i32, %c0_i32_0 : i32, i32, i32
  }
  func.func @transform_1(%arg0: i32, %arg1: memref<1xi32, #tpu.memory_space<smem>>) -> (i32, i32) {
    %c0_i32 = arith.constant 0 : i32
    %c0_i32_0 = arith.constant 0 : i32
    %c0_i32_1 = arith.constant 0 : i32
    return %c0_i32, %c0_i32_0 : i32, i32
  }
  func.func @transform_2(%arg0: i32, %arg1: memref<1xi32, #tpu.memory_space<smem>>) -> (i32, i32) {
    %c0_i32 = arith.constant 0 : i32
    %c0_i32_0 = arith.constant 0 : i32
    %c0_i32_1 = arith.constant 0 : i32
    return %c0_i32, %c0_i32_0 : i32, i32
  }
  func.func @transform_3(%arg0: i32, %arg1: memref<1xi32, #tpu.memory_space<smem>>) -> (i32, i32) {
    %c0_i32 = arith.constant 0 : i32
    %c0_i32_0 = arith.constant 0 : i32
    %c0_i32_1 = arith.constant 0 : i32
    return %c0_i32, %c0_i32_0 : i32, i32
  }
  func.func @transform_4(%arg0: i32, %arg1: memref<1xi32, #tpu.memory_space<smem>>) -> (i32, i32) {
    %c0_i32 = arith.constant 0 : i32
    %c0_i32_0 = arith.constant 0 : i32
    %c0_i32_1 = arith.constant 0 : i32
    return %c0_i32, %c0_i32_0 : i32, i32
  }
  func.func @transform_5(%arg0: i32, %arg1: memref<1xi32, #tpu.memory_space<smem>>) -> (i32, i32, i32) {
    %c0 = arith.constant 0 : index
    %0 = memref.load %arg1[%c0] : memref<1xi32, #tpu.memory_space<smem>>
    %c0_i32 = arith.constant 0 : i32
    %c0_i32_0 = arith.constant 0 : i32
    %c0_i32_1 = arith.constant 0 : i32
    return %0, %c0_i32, %c0_i32_0 : i32, i32, i32
  }
  func.func @transform_6(%arg0: i32, %arg1: memref<1xi32, #tpu.memory_space<smem>>) -> (i32, i32, i32) {
    %c0_i32 = arith.constant 0 : i32
    %c0_i32_0 = arith.constant 0 : i32
    %c0_i32_1 = arith.constant 0 : i32
    %c0_i32_2 = arith.constant 0 : i32
    return %c0_i32, %c0_i32_0, %c0_i32_1 : i32, i32, i32
  }
  func.func @transform_7(%arg0: i32, %arg1: memref<1xi32, #tpu.memory_space<smem>>) -> (i32, i32, i32) {
    %c0_i32 = arith.constant 0 : i32
    %c0_i32_0 = arith.constant 0 : i32
    %c0_i32_1 = arith.constant 0 : i32
    %c0_i32_2 = arith.constant 0 : i32
    return %c0_i32, %c0_i32_0, %c0_i32_1 : i32, i32, i32
  }
  func.func @transform_8(%arg0: i32, %arg1: memref<1xi32, #tpu.memory_space<smem>>) -> (i32, i32, i32) {
    %c0_i32 = arith.constant 0 : i32
    %c0_i32_0 = arith.constant 0 : i32
    %c0_i32_1 = arith.constant 0 : i32
    %c0_i32_2 = arith.constant 0 : i32
    return %c0_i32, %c0_i32_0, %c0_i32_1 : i32, i32, i32
  }
  func.func @transform_9(%arg0: i32, %arg1: memref<1xi32, #tpu.memory_space<smem>>) -> (i32, i32, i32) {
    %c0_i32 = arith.constant 0 : i32
    %c0_i32_0 = arith.constant 0 : i32
    %c0_i32_1 = arith.constant 0 : i32
    %c0_i32_2 = arith.constant 0 : i32
    return %c0_i32, %c0_i32_0, %c0_i32_1 : i32, i32, i32
  }
  func.func @transform_10(%arg0: i32, %arg1: memref<1xi32, #tpu.memory_space<smem>>) -> (i32, i32, i32) {
    %c0_i32 = arith.constant 0 : i32
    %c0_i32_0 = arith.constant 0 : i32
    %c0_i32_1 = arith.constant 0 : i32
    %c0_i32_2 = arith.constant 0 : i32
    return %c0_i32, %c0_i32_0, %c0_i32_1 : i32, i32, i32
  }
  func.func @transform_11(%arg0: i32, %arg1: memref<1xi32, #tpu.memory_space<smem>>) -> (i32, i32, i32) {
    %c0_i32 = arith.constant 0 : i32
    %c0_i32_0 = arith.constant 0 : i32
    %c0_i32_1 = arith.constant 0 : i32
    %c0_i32_2 = arith.constant 0 : i32
    return %c0_i32, %c0_i32_0, %c0_i32_1 : i32, i32, i32
  }
  func.func @transform_12(%arg0: i32, %arg1: memref<1xi32, #tpu.memory_space<smem>>) -> (i32, i32, i32) {
    %c0_i32 = arith.constant 0 : i32
    %c0_i32_0 = arith.constant 0 : i32
    %c0_i32_1 = arith.constant 0 : i32
    %c0_i32_2 = arith.constant 0 : i32
    return %c0_i32, %c0_i32_0, %c0_i32_1 : i32, i32, i32
  }
  func.func @transform_13(%arg0: i32, %arg1: memref<1xi32, #tpu.memory_space<smem>>) -> (i32, i32, i32) {
    %c0_i32 = arith.constant 0 : i32
    %c0_i32_0 = arith.constant 0 : i32
    %c0_i32_1 = arith.constant 0 : i32
    %c0_i32_2 = arith.constant 0 : i32
    return %c0_i32, %c0_i32_0, %c0_i32_1 : i32, i32, i32
  }
  func.func @transform_14(%arg0: i32, %arg1: memref<1xi32, #tpu.memory_space<smem>>) -> (i32, i32, i32) {
    %c0_i32 = arith.constant 0 : i32
    %c0_i32_0 = arith.constant 0 : i32
    %c0_i32_1 = arith.constant 0 : i32
    %c0_i32_2 = arith.constant 0 : i32
    return %c0_i32, %c0_i32_0, %c0_i32_1 : i32, i32, i32
  }
  func.func @transform_15(%arg0: i32, %arg1: memref<1xi32, #tpu.memory_space<smem>>) -> (i32, i32, i32) {
    %c0_i32 = arith.constant 0 : i32
    %c0_i32_0 = arith.constant 0 : i32
    %c0_i32_1 = arith.constant 0 : i32
    %c0_i32_2 = arith.constant 0 : i32
    return %c0_i32, %c0_i32_0, %c0_i32_1 : i32, i32, i32
  }
  func.func @transform_16(%arg0: i32, %arg1: memref<1xi32, #tpu.memory_space<smem>>) -> (i32, i32, i32) {
    %c0_i32 = arith.constant 0 : i32
    %c0_i32_0 = arith.constant 0 : i32
    %c0_i32_1 = arith.constant 0 : i32
    %c0_i32_2 = arith.constant 0 : i32
    return %c0_i32, %c0_i32_0, %c0_i32_1 : i32, i32, i32
  }
  func.func @transform_17(%arg0: i32, %arg1: memref<1xi32, #tpu.memory_space<smem>>) -> (i32, i32, i32) {
    %c0_i32 = arith.constant 0 : i32
    %c0_i32_0 = arith.constant 0 : i32
    %c0_i32_1 = arith.constant 0 : i32
    %c0_i32_2 = arith.constant 0 : i32
    return %c0_i32, %c0_i32_0, %c0_i32_1 : i32, i32, i32
  }
  func.func @transform_18(%arg0: i32, %arg1: memref<1xi32, #tpu.memory_space<smem>>) -> (i32, i32, i32) {
    %c0_i32 = arith.constant 0 : i32
    %c0_i32_0 = arith.constant 0 : i32
    %c0_i32_1 = arith.constant 0 : i32
    %c0_i32_2 = arith.constant 0 : i32
    return %c0_i32, %c0_i32_0, %c0_i32_1 : i32, i32, i32
  }
  func.func @transform_19(%arg0: i32, %arg1: memref<1xi32, #tpu.memory_space<smem>>) -> (i32, i32, i32) {
    %c0_i32 = arith.constant 0 : i32
    %c0_i32_0 = arith.constant 0 : i32
    %c0_i32_1 = arith.constant 0 : i32
    %c0_i32_2 = arith.constant 0 : i32
    return %c0_i32, %c0_i32_0, %c0_i32_1 : i32, i32, i32
  }
  func.func @transform_20(%arg0: i32, %arg1: memref<1xi32, #tpu.memory_space<smem>>) -> (i32, i32, i32) {
    %c0_i32 = arith.constant 0 : i32
    %c0_i32_0 = arith.constant 0 : i32
    %c0_i32_1 = arith.constant 0 : i32
    %c0_i32_2 = arith.constant 0 : i32
    return %c0_i32, %c0_i32_0, %c0_i32_1 : i32, i32, i32
  }
  func.func @transform_21(%arg0: i32, %arg1: memref<1xi32, #tpu.memory_space<smem>>) -> (i32, i32) {
    %c0_i32 = arith.constant 0 : i32
    %c0_i32_0 = arith.constant 0 : i32
    %c0_i32_1 = arith.constant 0 : i32
    return %c0_i32, %c0_i32_0 : i32, i32
  }
  func.func @transform_22(%arg0: i32, %arg1: memref<1xi32, #tpu.memory_space<smem>>) -> (i32, i32, i32) {
    %c0_i32 = arith.constant 0 : i32
    %c0_i32_0 = arith.constant 0 : i32
    %c0_i32_1 = arith.constant 0 : i32
    return %arg0, %c0_i32, %c0_i32_0 : i32, i32, i32
  }
}

</mosaic_0001>

<llo_original>
// kernel: full_transformer_forward.1
$region0: #{full_transformer_forward.1}
  #allocation0 [shape = 'u32[]', space=smem, size = 0x4, offset = 0x4, fixed_abs, tag = 'smem constant byte address 0x4 - core index']
  #allocation1 [shape = 'u32[144,128]{1,0:T(1,128)}', space=vmem, size = 0x12000, scoped, tag = 'internal scratch']
  #allocation2 [shape = 's32[1]{0}', space=sflag, size = 0x4, scoped, tag = 'scoped memory for full_transformer_forward.1']
  #allocation3 [shape = 's32[1]{0:T(128)S(6)}', space=smem, size = 0x200, scoped, tag = 'prefetched SMEM operand 0']
  %s0 = inlined_call_operand.<no memory space> [shape: s32[1], index: 0, kind: input, shape index: {}]
  %s1 = inlined_call_operand.vmem [shape: bf16[2,8,32], index: 1, kind: input, shape index: {}]
  %s2 = inlined_call_operand.vmem [shape: bf16[32,32], index: 2, kind: input, shape index: {}]
  %s3 = inlined_call_operand.vmem [shape: f32[1,32], index: 3, kind: input, shape index: {}]
  %s4 = inlined_call_operand.vmem [shape: f32[1,32], index: 4, kind: input, shape index: {}]
  %s5 = inlined_call_operand.vmem [shape: f32[9,32], index: 5, kind: input, shape index: {}]
  %s6 = inlined_call_operand.vmem [shape: f32[3,9,32], index: 6, kind: input, shape index: {}]
  %s7 = inlined_call_operand.vmem [shape: bf16[2,32,96], index: 7, kind: input, shape index: {}]
  %s8 = inlined_call_operand.vmem [shape: bf16[2,32,32], index: 8, kind: input, shape index: {}]
  %s9 = inlined_call_operand.vmem [shape: bf16[2,32,128], index: 9, kind: input, shape index: {}]
  %s10 = inlined_call_operand.vmem [shape: bf16[2,128,32], index: 10, kind: input, shape index: {}]
  %s11 = inlined_call_operand.vmem [shape: f32[2,6,32], index: 11, kind: input, shape index: {}]
  %s12 = inlined_call_operand.vmem [shape: f32[2,1,128], index: 12, kind: input, shape index: {}]
  %s13 = inlined_call_operand.vmem [shape: bf16[2,32,96], index: 13, kind: input, shape index: {}]
  %s14 = inlined_call_operand.vmem [shape: bf16[2,32,32], index: 14, kind: input, shape index: {}]
  %s15 = inlined_call_operand.vmem [shape: bf16[2,32,64], index: 15, kind: input, shape index: {}]
  %s16 = inlined_call_operand.vmem [shape: bf16[2,32,32], index: 16, kind: input, shape index: {}]
  %s17 = inlined_call_operand.vmem [shape: bf16[2,32,32], index: 17, kind: input, shape index: {}]
  %s18 = inlined_call_operand.vmem [shape: bf16[2,32,128], index: 18, kind: input, shape index: {}]
  %s19 = inlined_call_operand.vmem [shape: bf16[2,128,32], index: 19, kind: input, shape index: {}]
  %s20 = inlined_call_operand.vmem [shape: f32[2,11,32], index: 20, kind: input, shape index: {}]
  %s21 = inlined_call_operand.vmem [shape: f32[2,1,128], index: 21, kind: input, shape index: {}]
  %s22 = inlined_call_operand.vmem [shape: bf16[32,128], index: 22, kind: input, shape index: {}]
  %s23 = inlined_call_operand.vmem [shape: f32[2,9,128], index: 23, kind: output, shape index: {}]
  %s24 = sld [smem:[#allocation0]]
  $region121: #{full_transformer_forward.1} parent=0
    _
  %s26 = ssub.s32 1, %s24
  %s27 = scalar_select 0, %s26, %s24
  %28 = sst [smem:[#allocation3]] %s0
  loop: start=0, step=1, limit=4
  $region2: #{full_transformer_forward.1} parent=0 // loop_pre_header
    _
  $region3: #{full_transformer_forward.1} parent=0 // loop_header
    %s30 = sphi 0, %s34
    %p31 = scmp.ge.s32.totalorder %s30, 4
    %s40 = sphi 0, %s42
    %s43 = sphi 0, %s40
    %s44 = sphi 0, %s43
    %s60 = sphi 0, %s44
    %s64 = sphi 0, %s64
    %s66 = sphi 0, %s64
    %s67 = sphi 0, %s66
    %s81 = sphi 0, %s67
    %s85 = sphi 0, %s85
    %s87 = sphi 0, %s85
    %s88 = sphi 0, %s87
    %s102 = sphi 0, %s88
    %s106 = sphi 0, %s106
    %s108 = sphi 0, %s106
    %s109 = sphi 0, %s108
    %s123 = sphi 0, %s109
    %s127 = sphi 0, %s127
    %s129 = sphi 0, %s127
    %s130 = sphi 0, %s129
    %s144 = sphi 0, %s130
    %s152 = sphi 0, %s154
    %s155 = sphi 0, %s152
    %s156 = sphi 0, %s155
    %s172 = sphi 0, %s156
    %s176 = sphi 0, %s176
    %s178 = sphi 0, %s176
    %s179 = sphi 0, %s178
    %s193 = sphi 0, %s179
    %s197 = sphi 0, %s197
    %s199 = sphi 0, %s197
    %s200 = sphi 0, %s199
    %s214 = sphi 0, %s200
    %s218 = sphi 0, %s218
    %s220 = sphi 0, %s218
    %s221 = sphi 0, %s220
    %s235 = sphi 0, %s221
    %s239 = sphi 0, %s239
    %s241 = sphi 0, %s239
    %s242 = sphi 0, %s241
    %s256 = sphi 0, %s242
    %s260 = sphi 0, %s260
    %s262 = sphi 0, %s260
    %s263 = sphi 0, %s262
    %s277 = sphi 0, %s263
    %s281 = sphi 0, %s281
    %s283 = sphi 0, %s281
    %s284 = sphi 0, %s283
    %s298 = sphi 0, %s284
    %s302 = sphi 0, %s302
    %s304 = sphi 0, %s302
    %s305 = sphi 0, %s304
    %s319 = sphi 0, %s305
    %s323 = sphi 0, %s323
    %s325 = sphi 0, %s323
    %s326 = sphi 0, %s325
    %s340 = sphi 0, %s326
    %s344 = sphi 0, %s344
    %s346 = sphi 0, %s344
    %s347 = sphi 0, %s346
    %s361 = sphi 0, %s347
    %s365 = sphi 0, %s365
    %s367 = sphi 0, %s365
    %s368 = sphi 0, %s367
    %s382 = sphi 0, %s368
    %s386 = sphi 0, %s386
    %s388 = sphi 0, %s386
    %s389 = sphi 0, %s388
    %s403 = sphi 0, %s389
    %s407 = sphi 0, %s407
    %s409 = sphi 0, %s407
    %s410 = sphi 0, %s409
    %s424 = sphi 0, %s410
    %s428 = sphi 0, %s428
    %s430 = sphi 0, %s428
    %s431 = sphi 0, %s430
    %s445 = sphi 0, %s431
    %s449 = sphi 0, %s449
    %s451 = sphi 0, %s449
    %s452 = sphi 0, %s451
    %s466 = sphi 0, %s452
    %s470 = sphi 0, %s470
    %s472 = sphi 0, %s470
    %s473 = sphi 0, %s472
    %s487 = sphi 0, %s473
    %s491 = sphi 0, %s491
    %s493 = sphi 0, %s491
    %s494 = sphi 0, %s493
    %s508 = sphi 0, %s494
    %s514 = sphi 0, %s516
    %s517 = sphi 0, %s514
    %s518 = sphi 0, %s517
    %s534 = sphi 0, %s518
  $region4: #{full_transformer_forward.1} parent=0 // loop_header_branch
    %33 = sbr.rel (%p31) target = $region8
  $region5: #{full_transformer_forward.1} parent=0 // loop_body
    %s35 = ssub.s32 %s30, 1
    %s36 = ssub.s32 %s30, 2
    %s37 = sadd.s32 %s30, 1
    %s38 = ssub.s32 %s30, %s37
    %p39 = scmp.eq.s32.totalorder %s38, 0
    %s41 = sadd.s32 %s40, 1
    %s42 = scalar_select %p39, %s40, %s41
    %p45 = pneg %p39
    %p46 = scmp.eq.s32.totalorder %s30, 1
    %p47 = por %p45, %p46
    %p48 = scmp.ne.s32.totalorder %s40, %s43
    %p49 = scmp.eq.s32.totalorder %s30, 0
    %p50 = por %p48, %p49
    %p51 = scmp.ne.s32.totalorder %s40, %s43
    %p52 = scmp.eq.s32.totalorder %s35, 1
    %p53 = por %p51, %p52
    %p54 = scmp.ne.s32.totalorder %s43, %s44
    %p55 = scmp.eq.s32.totalorder %s35, 0
    %p56 = por %p54, %p55
    %p57 = scmp.ne.s32.totalorder %s43, %s44
    %p58 = scmp.eq.s32.totalorder %s36, 1
    %p59 = por %p57, %p58
    %p61 = scmp.ne.s32.totalorder %s44, %s60
    %p62 = scmp.eq.s32.totalorder %s36, 0
    %p63 = por %p61, %p62
    %s65 = sadd.s32 %s64, 1
    %p68 = scmp.eq.s32.totalorder %s30, 1
    %p69 = scmp.ne.s32.totalorder %s64, %s66
    %p70 = scmp.eq.s32.totalorder %s30, 0
    %p71 = por %p69, %p70
    %p72 = scmp.ne.s32.totalorder %s64, %s66
    %p73 = scmp.eq.s32.totalorder %s35, 1
    %p74 = por %p72, %p73
    %p75 = scmp.ne.s32.totalorder %s66, %s67
    %p76 = scmp.eq.s32.totalorder %s35, 0
    %p77 = por %p75, %p76
    %p78 = scmp.ne.s32.totalorder %s66, %s67
    %p79 = scmp.eq.s32.totalorder %s36, 1
    %p80 = por %p78, %p79
    %p82 = scmp.ne.s32.totalorder %s67, %s81
    %p83 = scmp.eq.s32.totalorder %s36, 0
    %p84 = por %p82, %p83
    %s86 = sadd.s32 %s85, 1
    %p89 = scmp.eq.s32.totalorder %s30, 1
    %p90 = scmp.ne.s32.totalorder %s85, %s87
    %p91 = scmp.eq.s32.totalorder %s30, 0
    %p92 = por %p90, %p91
    %p93 = scmp.ne.s32.totalorder %s85, %s87
    %p94 = scmp.eq.s32.totalorder %s35, 1
    %p95 = por %p93, %p94
    %p96 = scmp.ne.s32.totalorder %s87, %s88
    %p97 = scmp.eq.s32.totalorder %s35, 0
    %p98 = por %p96, %p97
    %p99 = scmp.ne.s32.totalorder %s87, %s88
    %p100 = scmp.eq.s32.totalorder %s36, 1
    %p101 = por %p99, %p100
    %p103 = scmp.ne.s32.totalorder %s88, %s102
    %p104 = scmp.eq.s32.totalorder %s36, 0
    %p105 = por %p103, %p104
    %s107 = sadd.s32 %s106, 1
    %p110 = scmp.eq.s32.totalorder %s30, 1
    %p111 = scmp.ne.s32.totalorder %s106, %s108
    %p112 = scmp.eq.s32.totalorder %s30, 0
    %p113 = por %p111, %p112
    %p114 = scmp.ne.s32.totalorder %s106, %s108
    %p115 = scmp.eq.s32.totalorder %s35, 1
    %p116 = por %p114, %p115
    %p117 = scmp.ne.s32.totalorder %s108, %s109
    %p118 = scmp.eq.s32.totalorder %s35, 0
    %p119 = por %p117, %p118
    %p120 = scmp.ne.s32.totalorder %s108, %s109
    %p121 = scmp.eq.s32.totalorder %s36, 1
    %p122 = por %p120, %p121
    %p124 = scmp.ne.s32.totalorder %s109, %s123
    %p125 = scmp.eq.s32.totalorder %s36, 0
    %p126 = por %p124, %p125
    %s128 = sadd.s32 %s127, 1
    %p131 = scmp.eq.s32.totalorder %s30, 1
    %p132 = scmp.ne.s32.totalorder %s127, %s129
    %p133 = scmp.eq.s32.totalorder %s30, 0
    %p134 = por %p132, %p133
    %p135 = scmp.ne.s32.totalorder %s127, %s129
    %p136 = scmp.eq.s32.totalorder %s35, 1
    %p137 = por %p135, %p136
    %p138 = scmp.ne.s32.totalorder %s129, %s130
    %p139 = scmp.eq.s32.totalorder %s35, 0
    %p140 = por %p138, %p139
    %p141 = scmp.ne.s32.totalorder %s129, %s130
    %p142 = scmp.eq.s32.totalorder %s36, 1
    %p143 = por %p141, %p142
    %p145 = scmp.ne.s32.totalorder %s130, %s144
    %p146 = scmp.eq.s32.totalorder %s36, 0
    %p147 = por %p145, %p146
    %s148 = sld [smem:[#allocation3]]
    %s149 = sld [smem:[#allocation3]]
    %s150 = ssub.s32 %s148, %s149
    %p151 = scmp.eq.s32.totalorder %s150, 0
    %s153 = sadd.s32 %s152, 1
    %s154 = scalar_select %p151, %s152, %s153
    %p157 = pneg %p151
    %p158 = scmp.eq.s32.totalorder %s30, 1
    %p159 = por %p157, %p158
    %p160 = scmp.ne.s32.totalorder %s152, %s155
    %p161 = scmp.eq.s32.totalorder %s30, 0
    %p162 = por %p160, %p161
    %p163 = scmp.ne.s32.totalorder %s152, %s155
    %p164 = scmp.eq.s32.totalorder %s35, 1
    %p165 = por %p163, %p164
    %p166 = scmp.ne.s32.totalorder %s155, %s156
    %p167 = scmp.eq.s32.totalorder %s35, 0
    %p168 = por %p166, %p167
    %p169 = scmp.ne.s32.totalorder %s155, %s156
    %p170 = scmp.eq.s32.totalorder %s36, 1
    %p171 = por %p169, %p170
    %p173 = scmp.ne.s32.totalorder %s156, %s172
    %p174 = scmp.eq.s32.totalorder %s36, 0
    %p175 = por %p173, %p174
    %s177 = sadd.s32 %s176, 1
    %p180 = scmp.eq.s32.totalorder %s30, 1
    %p181 = scmp.ne.s32.totalorder %s176, %s178
    %p182 = scmp.eq.s32.totalorder %s30, 0
    %p183 = por %p181, %p182
    %p184 = scmp.ne.s32.totalorder %s176, %s178
    %p185 = scmp.eq.s32.totalorder %s35, 1
    %p186 = por %p184, %p185
    %p187 = scmp.ne.s32.totalorder %s178, %s179
    %p188 = scmp.eq.s32.totalorder %s35, 0
    %p189 = por %p187, %p188
    %p190 = scmp.ne.s32.totalorder %s178, %s179
    %p191 = scmp.eq.s32.totalorder %s36, 1
    %p192 = por %p190, %p191
    %p194 = scmp.ne.s32.totalorder %s179, %s193
    %p195 = scmp.eq.s32.totalorder %s36, 0
    %p196 = por %p194, %p195
    %s198 = sadd.s32 %s197, 1
    %p201 = scmp.eq.s32.totalorder %s30, 1
    %p202 = scmp.ne.s32.totalorder %s197, %s199
    %p203 = scmp.eq.s32.totalorder %s30, 0
    %p204 = por %p202, %p203
    %p205 = scmp.ne.s32.totalorder %s197, %s199
    %p206 = scmp.eq.s32.totalorder %s35, 1
    %p207 = por %p205, %p206
    %p208 = scmp.ne.s32.totalorder %s199, %s200
    %p209 = scmp.eq.s32.totalorder %s35, 0
    %p210 = por %p208, %p209
    %p211 = scmp.ne.s32.totalorder %s199, %s200
    %p212 = scmp.eq.s32.totalorder %s36, 1
    %p213 = por %p211, %p212
    %p215 = scmp.ne.s32.totalorder %s200, %s214
    %p216 = scmp.eq.s32.totalorder %s36, 0
    %p217 = por %p215, %p216
    %s219 = sadd.s32 %s218, 1
    %p222 = scmp.eq.s32.totalorder %s30, 1
    %p223 = scmp.ne.s32.totalorder %s218, %s220
    %p224 = scmp.eq.s32.totalorder %s30, 0
    %p225 = por %p223, %p224
    %p226 = scmp.ne.s32.totalorder %s218, %s220
    %p227 = scmp.eq.s32.totalorder %s35, 1
    %p228 = por %p226, %p227
    %p229 = scmp.ne.s32.totalorder %s220, %s221
    %p230 = scmp.eq.s32.totalorder %s35, 0
    %p231 = por %p229, %p230
    %p232 = scmp.ne.s32.totalorder %s220, %s221
    %p233 = scmp.eq.s32.totalorder %s36, 1
    %p234 = por %p232, %p233
    %p236 = scmp.ne.s32.totalorder %s221, %s235
    %p237 = scmp.eq.s32.totalorder %s36, 0
    %p238 = por %p236, %p237
    %s240 = sadd.s32 %s239, 1
    %p243 = scmp.eq.s32.totalorder %s30, 1
    %p244 = scmp.ne.s32.totalorder %s239, %s241
    %p245 = scmp.eq.s32.totalorder %s30, 0
    %p246 = por %p244, %p245
    %p247 = scmp.ne.s32.totalorder %s239, %s241
    %p248 = scmp.eq.s32.totalorder %s35, 1
    %p249 = por %p247, %p248
    %p250 = scmp.ne.s32.totalorder %s241, %s242
    %p251 = scmp.eq.s32.totalorder %s35, 0
    %p252 = por %p250, %p251
    %p253 = scmp.ne.s32.totalorder %s241, %s242
    %p254 = scmp.eq.s32.totalorder %s36, 1
    %p255 = por %p253, %p254
    %p257 = scmp.ne.s32.totalorder %s242, %s256
    %p258 = scmp.eq.s32.totalorder %s36, 0
    %p259 = por %p257, %p258
    %s261 = sadd.s32 %s260, 1
    %p264 = scmp.eq.s32.totalorder %s30, 1
    %p265 = scmp.ne.s32.totalorder %s260, %s262
    %p266 = scmp.eq.s32.totalorder %s30, 0
    %p267 = por %p265, %p266
    %p268 = scmp.ne.s32.totalorder %s260, %s262
    %p269 = scmp.eq.s32.totalorder %s35, 1
    %p270 = por %p268, %p269
    %p271 = scmp.ne.s32.totalorder %s262, %s263
    %p272 = scmp.eq.s32.totalorder %s35, 0
    %p273 = por %p271, %p272
    %p274 = scmp.ne.s32.totalorder %s262, %s263
    %p275 = scmp.eq.s32.totalorder %s36, 1
    %p276 = por %p274, %p275
    %p278 = scmp.ne.s32.totalorder %s263, %s277
    %p279 = scmp.eq.s32.totalorder %s36, 0
    %p280 = por %p278, %p279
    %s282 = sadd.s32 %s281, 1
    %p285 = scmp.eq.s32.totalorder %s30, 1
    %p286 = scmp.ne.s32.totalorder %s281, %s283
    %p287 = scmp.eq.s32.totalorder %s30, 0
    %p288 = por %p286, %p287
    %p289 = scmp.ne.s32.totalorder %s281, %s283
    %p290 = scmp.eq.s32.totalorder %s35, 1
    %p291 = por %p289, %p290
    %p292 = scmp.ne.s32.totalorder %s283, %s284
    %p293 = scmp.eq.s32.totalorder %s35, 0
    %p294 = por %p292, %p293
    %p295 = scmp.ne.s32.totalorder %s283, %s284
    %p296 = scmp.eq.s32.totalorder %s36, 1
    %p297 = por %p295, %p296
    %p299 = scmp.ne.s32.totalorder %s284, %s298
    %p300 = scmp.eq.s32.totalorder %s36, 0
    %p301 = por %p299, %p300
    %s303 = sadd.s32 %s302, 1
    %p306 = scmp.eq.s32.totalorder %s30, 1
    %p307 = scmp.ne.s32.totalorder %s302, %s304
    %p308 = scmp.eq.s32.totalorder %s30, 0
    %p309 = por %p307, %p308
    %p310 = scmp.ne.s32.totalorder %s302, %s304
    %p311 = scmp.eq.s32.totalorder %s35, 1
    %p312 = por %p310, %p311
    %p313 = scmp.ne.s32.totalorder %s304, %s305
    %p314 = scmp.eq.s32.totalorder %s35, 0
    %p315 = por %p313, %p314
    %p316 = scmp.ne.s32.totalorder %s304, %s305
    %p317 = scmp.eq.s32.totalorder %s36, 1
    %p318 = por %p316, %p317
    %p320 = scmp.ne.s32.totalorder %s305, %s319
    %p321 = scmp.eq.s32.totalorder %s36, 0
    %p322 = por %p320, %p321
    %s324 = sadd.s32 %s323, 1
    %p327 = scmp.eq.s32.totalorder %s30, 1
    %p328 = scmp.ne.s32.totalorder %s323, %s325
    %p329 = scmp.eq.s32.totalorder %s30, 0
    %p330 = por %p328, %p329
    %p331 = scmp.ne.s32.totalorder %s323, %s325
    %p332 = scmp.eq.s32.totalorder %s35, 1
    %p333 = por %p331, %p332
    %p334 = scmp.ne.s32.totalorder %s325, %s326
    %p335 = scmp.eq.s32.totalorder %s35, 0
    %p336 = por %p334, %p335
    %p337 = scmp.ne.s32.totalorder %s325, %s326
    %p338 = scmp.eq.s32.totalorder %s36, 1
    %p339 = por %p337, %p338
    %p341 = scmp.ne.s32.totalorder %s326, %s340
    %p342 = scmp.eq.s32.totalorder %s36, 0
    %p343 = por %p341, %p342
    %s345 = sadd.s32 %s344, 1
    %p348 = scmp.eq.s32.totalorder %s30, 1
    %p349 = scmp.ne.s32.totalorder %s344, %s346
    %p350 = scmp.eq.s32.totalorder %s30, 0
    %p351 = por %p349, %p350
    %p352 = scmp.ne.s32.totalorder %s344, %s346
    %p353 = scmp.eq.s32.totalorder %s35, 1
    %p354 = por %p352, %p353
    %p355 = scmp.ne.s32.totalorder %s346, %s347
    %p356 = scmp.eq.s32.totalorder %s35, 0
    %p357 = por %p355, %p356
    %p358 = scmp.ne.s32.totalorder %s346, %s347
    %p359 = scmp.eq.s32.totalorder %s36, 1
    %p360 = por %p358, %p359
    %p362 = scmp.ne.s32.totalorder %s347, %s361
    %p363 = scmp.eq.s32.totalorder %s36, 0
    %p364 = por %p362, %p363
    %s366 = sadd.s32 %s365, 1
    %p369 = scmp.eq.s32.totalorder %s30, 1
    %p370 = scmp.ne.s32.totalorder %s365, %s367
    %p371 = scmp.eq.s32.totalorder %s30, 0
    %p372 = por %p370, %p371
    %p373 = scmp.ne.s32.totalorder %s365, %s367
    %p374 = scmp.eq.s32.totalorder %s35, 1
    %p375 = por %p373, %p374
    %p376 = scmp.ne.s32.totalorder %s367, %s368
    %p377 = scmp.eq.s32.totalorder %s35, 0
    %p378 = por %p376, %p377
    %p379 = scmp.ne.s32.totalorder %s367, %s368
    %p380 = scmp.eq.s32.totalorder %s36, 1
    %p381 = por %p379, %p380
    %p383 = scmp.ne.s32.totalorder %s368, %s382
    %p384 = scmp.eq.s32.totalorder %s36, 0
    %p385 = por %p383, %p384
    %s387 = sadd.s32 %s386, 1
    %p390 = scmp.eq.s32.totalorder %s30, 1
    %p391 = scmp.ne.s32.totalorder %s386, %s388
    %p392 = scmp.eq.s32.totalorder %s30, 0
    %p393 = por %p391, %p392
    %p394 = scmp.ne.s32.totalorder %s386, %s388
    %p395 = scmp.eq.s32.totalorder %s35, 1
    %p396 = por %p394, %p395
    %p397 = scmp.ne.s32.totalorder %s388, %s389
    %p398 = scmp.eq.s32.totalorder %s35, 0
    %p399 = por %p397, %p398
    %p400 = scmp.ne.s32.totalorder %s388, %s389
    %p401 = scmp.eq.s32.totalorder %s36, 1
    %p402 = por %p400, %p401
    %p404 = scmp.ne.s32.totalorder %s389, %s403
    %p405 = scmp.eq.s32.totalorder %s36, 0
    %p406 = por %p404, %p405
    %s408 = sadd.s32 %s407, 1
    %p411 = scmp.eq.s32.totalorder %s30, 1
    %p412 = scmp.ne.s32.totalorder %s407, %s409
    %p413 = scmp.eq.s32.totalorder %s30, 0
    %p414 = por %p412, %p413
    %p415 = scmp.ne.s32.totalorder %s407, %s409
    %p416 = scmp.eq.s32.totalorder %s35, 1
    %p417 = por %p415, %p416
    %p418 = scmp.ne.s32.totalorder %s409, %s410
    %p419 = scmp.eq.s32.totalorder %s35, 0
    %p420 = por %p418, %p419
    %p421 = scmp.ne.s32.totalorder %s409, %s410
    %p422 = scmp.eq.s32.totalorder %s36, 1
    %p423 = por %p421, %p422
    %p425 = scmp.ne.s32.totalorder %s410, %s424
    %p426 = scmp.eq.s32.totalorder %s36, 0
    %p427 = por %p425, %p426
    %s429 = sadd.s32 %s428, 1
    %p432 = scmp.eq.s32.totalorder %s30, 1
    %p433 = scmp.ne.s32.totalorder %s428, %s430
    %p434 = scmp.eq.s32.totalorder %s30, 0
    %p435 = por %p433, %p434
    %p436 = scmp.ne.s32.totalorder %s428, %s430
    %p437 = scmp.eq.s32.totalorder %s35, 1
    %p438 = por %p436, %p437
    %p439 = scmp.ne.s32.totalorder %s430, %s431
    %p440 = scmp.eq.s32.totalorder %s35, 0
    %p441 = por %p439, %p440
    %p442 = scmp.ne.s32.totalorder %s430, %s431
    %p443 = scmp.eq.s32.totalorder %s36, 1
    %p444 = por %p442, %p443
    %p446 = scmp.ne.s32.totalorder %s431, %s445
    %p447 = scmp.eq.s32.totalorder %s36, 0
    %p448 = por %p446, %p447
    %s450 = sadd.s32 %s449, 1
    %p453 = scmp.eq.s32.totalorder %s30, 1
    %p454 = scmp.ne.s32.totalorder %s449, %s451
    %p455 = scmp.eq.s32.totalorder %s30, 0
    %p456 = por %p454, %p455
    %p457 = scmp.ne.s32.totalorder %s449, %s451
    %p458 = scmp.eq.s32.totalorder %s35, 1
    %p459 = por %p457, %p458
    %p460 = scmp.ne.s32.totalorder %s451, %s452
    %p461 = scmp.eq.s32.totalorder %s35, 0
    %p462 = por %p460, %p461
    %p463 = scmp.ne.s32.totalorder %s451, %s452
    %p464 = scmp.eq.s32.totalorder %s36, 1
    %p465 = por %p463, %p464
    %p467 = scmp.ne.s32.totalorder %s452, %s466
    %p468 = scmp.eq.s32.totalorder %s36, 0
    %p469 = por %p467, %p468
    %s471 = sadd.s32 %s470, 1
    %p474 = scmp.eq.s32.totalorder %s30, 1
    %p475 = scmp.ne.s32.totalorder %s470, %s472
    %p476 = scmp.eq.s32.totalorder %s30, 0
    %p477 = por %p475, %p476
    %p478 = scmp.ne.s32.totalorder %s470, %s472
    %p479 = scmp.eq.s32.totalorder %s35, 1
    %p480 = por %p478, %p479
    %p481 = scmp.ne.s32.totalorder %s472, %s473
    %p482 = scmp.eq.s32.totalorder %s35, 0
    %p483 = por %p481, %p482
    %p484 = scmp.ne.s32.totalorder %s472, %s473
    %p485 = scmp.eq.s32.totalorder %s36, 1
    %p486 = por %p484, %p485
    %p488 = scmp.ne.s32.totalorder %s473, %s487
    %p489 = scmp.eq.s32.totalorder %s36, 0
    %p490 = por %p488, %p489
    %s492 = sadd.s32 %s491, 1
    %p495 = scmp.eq.s32.totalorder %s30, 1
    %p496 = scmp.ne.s32.totalorder %s491, %s493
    %p497 = scmp.eq.s32.totalorder %s30, 0
    %p498 = por %p496, %p497
    %p499 = scmp.ne.s32.totalorder %s491, %s493
    %p500 = scmp.eq.s32.totalorder %s35, 1
    %p501 = por %p499, %p500
    %p502 = scmp.ne.s32.totalorder %s493, %s494
    %p503 = scmp.eq.s32.totalorder %s35, 0
    %p504 = por %p502, %p503
    %p505 = scmp.ne.s32.totalorder %s493, %s494
    %p506 = scmp.eq.s32.totalorder %s36, 1
    %p507 = por %p505, %p506
    %p509 = scmp.ne.s32.totalorder %s494, %s508
    %p510 = scmp.eq.s32.totalorder %s36, 0
    %p511 = por %p509, %p510
    %s512 = ssub.s32 %s30, %s37
    %p513 = scmp.eq.s32.totalorder %s512, 0
    %s515 = sadd.s32 %s514, 1
    %s516 = scalar_select %p513, %s514, %s515
    %p519 = pneg %p513
    %p520 = scmp.eq.s32.totalorder %s30, 1
    %p521 = por %p519, %p520
    %p522 = scmp.ne.s32.totalorder %s514, %s517
    %p523 = scmp.eq.s32.totalorder %s30, 0
    %p524 = por %p522, %p523
    %p525 = scmp.ne.s32.totalorder %s514, %s517
    %p526 = scmp.eq.s32.totalorder %s35, 1
    %p527 = por %p525, %p526
    %p528 = scmp.ne.s32.totalorder %s517, %s518
    %p529 = scmp.eq.s32.totalorder %s35, 0
    %p530 = por %p528, %p529
    %p531 = scmp.ne.s32.totalorder %s517, %s518
    %p532 = scmp.eq.s32.totalorder %s36, 1
    %p533 = por %p531, %p532
    %p535 = scmp.ne.s32.totalorder %s518, %s534
    %p536 = scmp.eq.s32.totalorder %s36, 0
    %p537 = por %p535, %p536
    %p538 = scmp.le.s32.totalorder 1, %s30
    %p539 = scmp.lt.s32.totalorder %s30, 3
    %p540 = pnand %p538, %p539
    %p541 = pneg %p540
    // Predicated region
    $region9: #{full_transformer_forward.1} parent=5 // pred_check
      _
    $region10: #{full_transformer_forward.1} parent=5 // pred_check_branch
      %543 = sbr.rel (%p540) target = $region12
    $region11: #{full_transformer_forward.1} parent=5 // pred_region
      %s544 = ssub.s32 %s30, 1
      // Predicated region
      $region13: #{full_transformer_forward.1} parent=11 // pred_check
        %p545 = pneg %p77
      $region14: #{full_transformer_forward.1} parent=11 // pred_check_branch
        %547 = sbr.rel (%p545) target = $region16
      $region15: #{full_transformer_forward.1} parent=11 // pred_region
        _
      $region16: #{full_transformer_forward.1} parent=11 // pred_fallthru
        _
      // Predicated region
      $region17: #{full_transformer_forward.1} parent=11 // pred_check
        %p548 = pneg %p98
      $region18: #{full_transformer_forward.1} parent=11 // pred_check_branch
        %550 = sbr.rel (%p548) target = $region20
      $region19: #{full_transformer_forward.1} parent=11 // pred_region
        _
      $region20: #{full_transformer_forward.1} parent=11 // pred_fallthru
        _
      // Predicated region
      $region21: #{full_transformer_forward.1} parent=11 // pred_check
        %p551 = pneg %p119
      $region22: #{full_transformer_forward.1} parent=11 // pred_check_branch
        %553 = sbr.rel (%p551) target = $region24
      $region23: #{full_transformer_forward.1} parent=11 // pred_region
        _
      $region24: #{full_transformer_forward.1} parent=11 // pred_fallthru
        _
      // Predicated region
      $region25: #{full_transformer_forward.1} parent=11 // pred_check
        %p554 = pneg %p140
      $region26: #{full_transformer_forward.1} parent=11 // pred_check_branch
        %556 = sbr.rel (%p554) target = $region28
      $region27: #{full_transformer_forward.1} parent=11 // pred_region
        _
      $region28: #{full_transformer_forward.1} parent=11 // pred_fallthru
        _
      // Predicated region
      $region29: #{full_transformer_forward.1} parent=11 // pred_check
        %p557 = pneg %p168
      $region30: #{full_transformer_forward.1} parent=11 // pred_check_branch
        %559 = sbr.rel (%p557) target = $region32
      $region31: #{full_transformer_forward.1} parent=11 // pred_region
        %s560 = sld [smem:[#allocation3]]
        %p561 = scmp.lt.s32.totalorder %s560, 2
        %s562 = scalar_select %p561, %s560, 2
        %s563 = smul.addr %s562, 2
        %s564 = smul.addr %s563, 8
        %s565 = scalar_lea.vmem %s6, %s564
        %s566 = sld [smem:[#allocation3]]
      $region32: #{full_transformer_forward.1} parent=11 // pred_fallthru
        _
      // Predicated region
      $region33: #{full_transformer_forward.1} parent=11 // pred_check
        %p567 = pneg %p189
      $region34: #{full_transformer_forward.1} parent=11 // pred_check_branch
        %569 = sbr.rel (%p567) target = $region36
      $region35: #{full_transformer_forward.1} parent=11 // pred_region
        _
      $region36: #{full_transformer_forward.1} parent=11 // pred_fallthru
        _
      // Predicated region
      $region37: #{full_transformer_forward.1} parent=11 // pred_check
        %p570 = pneg %p210
      $region38: #{full_transformer_forward.1} parent=11 // pred_check_branch
        %572 = sbr.rel (%p570) target = $region40
      $region39: #{full_transformer_forward.1} parent=11 // pred_region
        _
      $region40: #{full_transformer_forward.1} parent=11 // pred_fallthru
        _
      // Predicated region
      $region41: #{full_transformer_forward.1} parent=11 // pred_check
        %p573 = pneg %p231
      $region42: #{full_transformer_forward.1} parent=11 // pred_check_branch
        %575 = sbr.rel (%p573) target = $region44
      $region43: #{full_transformer_forward.1} parent=11 // pred_region
        _
      $region44: #{full_transformer_forward.1} parent=11 // pred_fallthru
        _
      // Predicated region
      $region45: #{full_transformer_forward.1} parent=11 // pred_check
        %p576 = pneg %p252
      $region46: #{full_transformer_forward.1} parent=11 // pred_check_branch
        %578 = sbr.rel (%p576) target = $region48
      $region47: #{full_transformer_forward.1} parent=11 // pred_region
        _
      $region48: #{full_transformer_forward.1} parent=11 // pred_fallthru
        _
      // Predicated region
      $region49: #{full_transformer_forward.1} parent=11 // pred_check
        %p579 = pneg %p273
      $region50: #{full_transformer_forward.1} parent=11 // pred_check_branch
        %581 = sbr.rel (%p579) target = $region52
      $region51: #{full_transformer_forward.1} parent=11 // pred_region
        _
      $region52: #{full_transformer_forward.1} parent=11 // pred_fallthru
        _
      // Predicated region
      $region53: #{full_transformer_forward.1} parent=11 // pred_check
        %p582 = pneg %p294
      $region54: #{full_transformer_forward.1} parent=11 // pred_check_branch
        %584 = sbr.rel (%p582) target = $region56
      $region55: #{full_transformer_forward.1} parent=11 // pred_region
        _
      $region56: #{full_transformer_forward.1} parent=11 // pred_fallthru
        _
      // Predicated region
      $region57: #{full_transformer_forward.1} parent=11 // pred_check
        %p585 = pneg %p315
      $region58: #{full_transformer_forward.1} parent=11 // pred_check_branch
        %587 = sbr.rel (%p585) target = $region60
      $region59: #{full_transformer_forward.1} parent=11 // pred_region
        _
      $region60: #{full_transformer_forward.1} parent=11 // pred_fallthru
        _
      // Predicated region
      $region61: #{full_transformer_forward.1} parent=11 // pred_check
        %p588 = pneg %p336
      $region62: #{full_transformer_forward.1} parent=11 // pred_check_branch
        %590 = sbr.rel (%p588) target = $region64
      $region63: #{full_transformer_forward.1} parent=11 // pred_region
        _
      $region64: #{full_transformer_forward.1} parent=11 // pred_fallthru
        _
      // Predicated region
      $region65: #{full_transformer_forward.1} parent=11 // pred_check
        %p591 = pneg %p357
      $region66: #{full_transformer_forward.1} parent=11 // pred_check_branch
        %593 = sbr.rel (%p591) target = $region68
      $region67: #{full_transformer_forward.1} parent=11 // pred_region
        _
      $region68: #{full_transformer_forward.1} parent=11 // pred_fallthru
        _
      // Predicated region
      $region69: #{full_transformer_forward.1} parent=11 // pred_check
        %p594 = pneg %p378
      $region70: #{full_transformer_forward.1} parent=11 // pred_check_branch
        %596 = sbr.rel (%p594) target = $region72
      $region71: #{full_transformer_forward.1} parent=11 // pred_region
        _
      $region72: #{full_transformer_forward.1} parent=11 // pred_fallthru
        _
      // Predicated region
      $region73: #{full_transformer_forward.1} parent=11 // pred_check
        %p597 = pneg %p399
      $region74: #{full_transformer_forward.1} parent=11 // pred_check_branch
        %599 = sbr.rel (%p597) target = $region76
      $region75: #{full_transformer_forward.1} parent=11 // pred_region
        _
      $region76: #{full_transformer_forward.1} parent=11 // pred_fallthru
        _
      // Predicated region
      $region77: #{full_transformer_forward.1} parent=11 // pred_check
        %p600 = pneg %p420
      $region78: #{full_transformer_forward.1} parent=11 // pred_check_branch
        %602 = sbr.rel (%p600) target = $region80
      $region79: #{full_transformer_forward.1} parent=11 // pred_region
        _
      $region80: #{full_transformer_forward.1} parent=11 // pred_fallthru
        _
      // Predicated region
      $region81: #{full_transformer_forward.1} parent=11 // pred_check
        %p603 = pneg %p441
      $region82: #{full_transformer_forward.1} parent=11 // pred_check_branch
        %605 = sbr.rel (%p603) target = $region84
      $region83: #{full_transformer_forward.1} parent=11 // pred_region
        _
      $region84: #{full_transformer_forward.1} parent=11 // pred_fallthru
        _
      // Predicated region
      $region85: #{full_transformer_forward.1} parent=11 // pred_check
        %p606 = pneg %p462
      $region86: #{full_transformer_forward.1} parent=11 // pred_check_branch
        %608 = sbr.rel (%p606) target = $region88
      $region87: #{full_transformer_forward.1} parent=11 // pred_region
        _
      $region88: #{full_transformer_forward.1} parent=11 // pred_fallthru
        _
      // Predicated region
      $region89: #{full_transformer_forward.1} parent=11 // pred_check
        %p609 = pneg %p483
      $region90: #{full_transformer_forward.1} parent=11 // pred_check_branch
        %611 = sbr.rel (%p609) target = $region92
      $region91: #{full_transformer_forward.1} parent=11 // pred_region
        _
      $region92: #{full_transformer_forward.1} parent=11 // pred_fallthru
        _
      // Predicated region
      $region93: #{full_transformer_forward.1} parent=11 // pred_check
        %p612 = pneg %p504
      $region94: #{full_transformer_forward.1} parent=11 // pred_check_branch
        %614 = sbr.rel (%p612) target = $region96
      $region95: #{full_transformer_forward.1} parent=11 // pred_region
        _
      $region96: #{full_transformer_forward.1} parent=11 // pred_fallthru
        _
    $region12: #{full_transformer_forward.1} parent=5 // pred_fallthru
      _
    %p615 = scmp.lt.s32.totalorder %s30, 2
    // Predicated region
    $region97: #{full_transformer_forward.1} parent=5 // pred_check
      %p616 = pneg %p615
    $region98: #{full_transformer_forward.1} parent=5 // pred_check_branch
      %618 = sbr.rel (%p616) target = $region100
    $region99: #{full_transformer_forward.1} parent=5 // pred_region
      // Predicated region
      $region101: #{full_transformer_forward.1} parent=99 // pred_check
        %p619 = pneg %p50
      $region102: #{full_transformer_forward.1} parent=99 // pred_check_branch
        %621 = sbr.rel (%p619) target = $region104
      $region103: #{full_transformer_forward.1} parent=99 // pred_region
        %p622 = scmp.lt.s32.totalorder %s30, 1
        %s623 = scalar_select %p622, %s30, 1
        %s624 = smul.addr %s623, 4
        %s625 = scalar_lea.vmem %s1, %s624
      $region104: #{full_transformer_forward.1} parent=99 // pred_fallthru
        _
    $region100: #{full_transformer_forward.1} parent=5 // pred_fallthru
      _
    %p626 = scmp.le.s32.totalorder 1, %s30
    %p627 = scmp.lt.s32.totalorder %s30, 3
    %p628 = pnand %p626, %p627
    %p629 = pneg %p628
    // Predicated region
    $region105: #{full_transformer_forward.1} parent=5 // pred_check
      _
    $region106: #{full_transformer_forward.1} parent=5 // pred_check_branch
      %631 = sbr.rel (%p628) target = $region108
    $region107: #{full_transformer_forward.1} parent=5 // pred_region
      %s632 = ssub.s32 %s30, 1
      %p633 = scmp.lt.s32.totalorder %s35, 1
      %s634 = scalar_select %p633, %s35, 1
      %s635 = smul.addr %s634, 4
      %s636 = scalar_lea.vmem %s1, %s635
      %p637 = pneg %p56
      %p638 = pneg %p53
      %p639 = pneg %p77
      %p640 = pneg %p74
      %p641 = pneg %p98
      %p642 = pneg %p95
      %p643 = pneg %p119
      %p644 = pneg %p116
      %p645 = pneg %p140
      %p646 = pneg %p137
      %s647 = sld [smem:[#allocation3]]
      %p648 = scmp.lt.s32.totalorder %s647, 2
      %s649 = scalar_select %p648, %s647, 2
      %s650 = smul.addr %s649, 2
      %s651 = smul.addr %s650, 8
      %s652 = scalar_lea.vmem %s6, %s651
      %p653 = pneg %p168
      %p654 = pneg %p165
      %p655 = pneg %p189
      %p656 = pneg %p186
      %p657 = pneg %p210
      %p658 = pneg %p207
      %p659 = pneg %p231
      %p660 = pneg %p228
      %p661 = pneg %p252
      %p662 = pneg %p249
      %p663 = pneg %p273
      %p664 = pneg %p270
      %p665 = pneg %p294
      %p666 = pneg %p291
      %p667 = pneg %p315
      %p668 = pneg %p312
      %p669 = pneg %p336
      %p670 = pneg %p333
      %p671 = pneg %p357
      %p672 = pneg %p354
      %p673 = pneg %p378
      %p674 = pneg %p375
      %p675 = pneg %p399
      %p676 = pneg %p396
      %p677 = pneg %p420
      %p678 = pneg %p417
      %p679 = pneg %p441
      %p680 = pneg %p438
      %p681 = pneg %p462
      %p682 = pneg %p459
      %p683 = pneg %p483
      %p684 = pneg %p480
      %p685 = pneg %p504
      %p686 = pneg %p501
      %p687 = pneg %p530
      %p688 = pneg %p527
      %p689 = scmp.lt.s32.totalorder %s35, 1
      %s690 = scalar_select %p689, %s35, 1
      %s691 = smul.addr %s690, 2
      %s692 = smul.addr %s691, 8
      %s693 = scalar_lea.vmem %s23, %s692
      %p694 = scmp.lt.s32.totalorder %s35, 1
      %s695 = scalar_select %p694, %s35, 1
      %s696 = smul.addr %s695, 4
      %s697 = scalar_lea.vmem %s1, %s696
      %s698 = sld [smem:[#allocation3]]
      %p699 = scmp.lt.s32.totalorder %s698, 2
      %s700 = scalar_select %p699, %s698, 2
      %s701 = smul.addr %s700, 2
      %s702 = smul.addr %s701, 8
      %s703 = scalar_lea.vmem %s6, %s702
      %s704 = sld [smem:[#allocation3]]
      %p705 = scmp.lt.s32.totalorder %s35, 1
      %s706 = scalar_select %p705, %s35, 1
      %s707 = smul.addr %s706, 2
      %s708 = smul.addr %s707, 8
      %s709 = scalar_lea.vmem %s23, %s708
      %v711 = vld [vmem:[%s2] sm:$0xf]
      %v712 = vld [vmem:[%s2 + $0x4] sm:$0xf]
      %v713 = vld [vmem:[%s2 + $0x8] sm:$0xf]
      %v714 = vld [vmem:[%s2 + $0xc] sm:$0xf]
      %v715 = vld [vmem:[%s3] sm:$0x1]
      %v716 = vld [vmem:[%s4] sm:$0x1]
      %v717 = vld [vmem:[%s5] sm:$0xff]
      %v718 = vld [vmem:[%s5 + $0x8] sm:$0x1]
      %v719 = vld [vmem:[%s697] sm:$0xf]
      %v721 = vlaneseq
      %v722 = vshrl.u32 %v721, 7
      %v723 = vsub.s32 0, %v722
      %v724 = vrot.slane %v715, %v723
      %v730 = vunpack.c.l.b16 %v711
      %v731 = vunpack.c.l.b16 %v712
      %v732 = vunpack.c.l.b16 %v713
      %v733 = vunpack.c.l.b16 %v714
      %v734 = vpack.c.b16 %v731, %v730
      %v735 = vpack.c.b16 %v733, %v732
      %vm738 = vcmask 261120
      %v740 = vsel %vm738, %v719, 0
      %742 = vmatprep.subr.bf16.mxu0 0
      %743 = vmatpush1.bf16.msra.mxu0 0
      %744 = vmatprep.subr.bf16.mxu0 0
      %745 = vmatpush1.bf16.msra.mxu0 0
      %746 = vmatprep.subr.bf16.mxu0 0
      %747 = vmatpush1.bf16.msra.mxu0 0
      %748 = vmatprep.subr.bf16.mxu0 0
      %749 = vmatpush1.bf16.msra.mxu0 0
      %750 = vmatprep.subr.bf16.mxu0 0
      %751 = vmatpush1.bf16.msra.mxu0 0
      %752 = vmatprep.subr.bf16.mxu0 0
      %753 = vmatpush1.bf16.msra.mxu0 0
      %754 = vmatprep.subr.bf16.mxu0 0
      %755 = vmatpush1.bf16.msra.mxu0 %v735
      %756 = vmatprep.subr.bf16.mxu0 0
      %757 = vmatpush1.bf16.msra.mxu0 %v734
      %758 = vmatprep.subr.bf16.mxu0 0
      %759 = vmatpush2.bf16.msra.mxu0 0
      %760 = vmatprep.subr.bf16.mxu0 0
      %761 = vmatpush2.bf16.msra.mxu0 0
      %762 = vmatprep.subr.bf16.mxu0 0
      %763 = vmatpush2.bf16.msra.mxu0 0
      %764 = vmatprep.subr.bf16.mxu0 0
      %765 = vmatpush2.bf16.msra.mxu0 0
      %766 = vmatprep.subr.bf16.mxu0 0
      %767 = vmatpush2.bf16.msra.mxu0 0
      %768 = vmatprep.subr.bf16.mxu0 0
      %769 = vmatpush2.bf16.msra.mxu0 0
      %770 = vmatprep.subr.bf16.mxu0 0
      %771 = vmatpush2.bf16.msra.mxu0 0
      %772 = vmatprep.subr.bf16.mxu0 0
      %773 = vmatpush2.bf16.msra.mxu0 0
      %774 = vmatprep.mubr.bf16.mxu0 0
      %775 = vmatmul.mubr.bf16.gmra.mxu0 %v740
      %v776 = vpop.f32.mrf.mxu0
      %v777 = vadd.f32 %v724, %v776
      %v778 = vpop.f32.mrf.mxu0
      %v779 = vpop.f32.mrf.mxu0
      %v780 = vpop.f32.mrf.mxu0
      %781 = vdwg.mxu0
      %v783 = vrot.slane %v777, 7
      %vm785 = vcmask 1040384
      %v786 = vsel %vm785, %v716, %v783
      %v787 = vadd.f32 %v786, %v717
      %v788 = vadd.f32 %v783, %v718
      %v789 = vld [vmem:[%s11] sm:$0x3f]
      %v790 = vsel %vm738, %v787, 0.0
      %791 = vadd.xlane.f32.xlu0 %v790
      %v792 = vpop.xlane.xlu0 %791
      %vm793 = vcmask 253952
      %v794 = vsel %vm793, %v788, 0.0
      %795 = vadd.xlane.f32.xlu0 %v794
      %v796 = vpop.xlane.xlu0 %795
      %v797 = vrcp.pop 32.0
      %v798 = vmul.f32 %v792, %v797
      %v799 = vmul.f32 %v796, %v797
      %v800 = vsub.f32 %v787, %v798
      %v801 = vsub.f32 %v788, %v799
      %v802 = vmul.f32 %v800, %v800
      %v803 = vmul.f32 %v801, %v801
      %v804 = vsel %vm738, %v802, 0.0
      %805 = vadd.xlane.f32.xlu0 %v804
      %v806 = vpop.xlane.xlu0 %805
      %v807 = vsel %vm793, %v803, 0.0
      %808 = vadd.xlane.f32.xlu0 %v807
      %v809 = vpop.xlane.xlu0 %808
      %v810 = vmul.f32 %v806, %v797
      %v811 = vmul.f32 %v809, %v797
      %v812 = vadd.f32 %v810, 1e-05
      %v813 = vadd.f32 %v811, 1e-05
      %v814 = vrsqrt.pop %v812
      %v815 = vrsqrt.pop %v813
      %v816 = vmul.f32 %v800, %v814
      %v817 = vmul.f32 %v801, %v815
      %v818 = vlaneseq
      %v819 = vshrl.u32 %v818, 7
      %v820 = vsub.s32 0, %v819
      %v821 = vrot.slane %v789, %v820
      %v822 = vmul.f32 %v816, %v821
      %v823 = vmul.f32 %v817, %v821
      %v824 = vlaneseq
      %v825 = vshrl.u32 %v824, 7
      %v826 = vsub.s32 1, %v825
      %v827 = vrot.slane %v789, %v826
      %v828 = vadd.f32 %v822, %v827
      %v829 = vadd.f32 %v823, %v827
      %v830 = vld [vmem:[%s7] sm:$0xf]
      %v831 = vld [vmem:[%s7 + $0x4] sm:$0xf]
      %v832 = vld [vmem:[%s7 + $0x8] sm:$0xf]
      %v833 = vld [vmem:[%s7 + $0xc] sm:$0xf]
      %v834 = vld [vmem:[%s8] sm:$0xf]
      %v835 = vld [vmem:[%s8 + $0x4] sm:$0xf]
      %v836 = vld [vmem:[%s8 + $0x8] sm:$0xf]
      %v837 = vld [vmem:[%s8 + $0xc] sm:$0xf]
      %v838 = vpack.c.bf16 %v829, %v828
      %v843 = vunpack.c.l.b16 %v830
      %v844 = vunpack.c.l.b16 %v831
      %v845 = vunpack.c.l.b16 %v832
      %v846 = vunpack.c.l.b16 %v833
      %v847 = vpack.c.b16 %v844, %v843
      %v848 = vpack.c.b16 %v846, %v845
      %v852 = vsel %vm738, %v838, 0
      %854 = vmatprep.subr.bf16.mxu0 0
      %855 = vmatpush1.bf16.msra.mxu0 0
      %856 = vmatprep.subr.bf16.mxu0 0
      %857 = vmatpush1.bf16.msra.mxu0 0
      %858 = vmatprep.subr.bf16.mxu0 0
      %859 = vmatpush1.bf16.msra.mxu0 0
      %860 = vmatprep.subr.bf16.mxu0 0
      %861 = vmatpush1.bf16.msra.mxu0 0
      %862 = vmatprep.subr.bf16.mxu0 0
      %863 = vmatpush1.bf16.msra.mxu0 0
      %864 = vmatprep.subr.bf16.mxu0 0
      %865 = vmatpush1.bf16.msra.mxu0 0
      %866 = vmatprep.subr.bf16.mxu0 0
      %867 = vmatpush1.bf16.msra.mxu0 %v848
      %868 = vmatprep.subr.bf16.mxu0 0
      %869 = vmatpush1.bf16.msra.mxu0 %v847
      %870 = vmatprep.subr.bf16.mxu0 0
      %871 = vmatpush2.bf16.msra.mxu0 0
      %872 = vmatprep.subr.bf16.mxu0 0
      %873 = vmatpush2.bf16.msra.mxu0 0
      %874 = vmatprep.subr.bf16.mxu0 0
      %875 = vmatpush2.bf16.msra.mxu0 0
      %876 = vmatprep.subr.bf16.mxu0 0
      %877 = vmatpush2.bf16.msra.mxu0 0
      %878 = vmatprep.subr.bf16.mxu0 0
      %879 = vmatpush2.bf16.msra.mxu0 0
      %880 = vmatprep.subr.bf16.mxu0 0
      %881 = vmatpush2.bf16.msra.mxu0 0
      %882 = vmatprep.subr.bf16.mxu0 0
      %883 = vmatpush2.bf16.msra.mxu0 0
      %884 = vmatprep.subr.bf16.mxu0 0
      %885 = vmatpush2.bf16.msra.mxu0 0
      %886 = vmatprep.mubr.bf16.mxu0 0
      %887 = vmatmul.mubr.bf16.gmra.mxu0 %v852
      %v888 = vpop.f32.mrf.mxu0
      %v889 = vadd.f32 0.0, %v888
      %v890 = vpop.f32.mrf.mxu0
      %v891 = vpop.f32.mrf.mxu0
      %v892 = vadd.f32 0.0, %v891
      %v893 = vpop.f32.mrf.mxu0
      %894 = vdwg.mxu0
      %897 = vrot.lane.b32.xlu0 %v889, 96
      %v898 = vpop.permute.xlu0 %897
      %899 = vrot.lane.b32.xlu0 %v892, 96
      %v900 = vpop.permute.xlu0 %899
      %vm901 = vcmask 64512
      %v902 = vsel %vm901, %v889, 0
      %v904 = vsel %vm901, %v892, 0
      %v906 = vsel %vm901, %v898, 0
      %v908 = vsel %vm901, %v900, 0
      %910 = vmatprep.subr.mxu0 0.0
      %911 = vmatpush1.xpose.msra.mxu0 0.0
      %912 = vmatprep.subr.mxu0 0.0
      %913 = vmatpush1.xpose.msra.mxu0 0.0
      %914 = vmatprep.subr.mxu0 0.0
      %915 = vmatpush1.xpose.msra.mxu0 0.0
      %916 = vmatprep.subr.mxu0 0.0
      %917 = vmatpush1.xpose.msra.mxu0 0.0
      %918 = vmatprep.subr.mxu0 0.0
      %919 = vmatpush1.xpose.msra.mxu0 0.0
      %920 = vmatprep.subr.mxu0 0.0
      %921 = vmatpush1.xpose.msra.mxu0 0.0
      %922 = vmatprep.subr.mxu0 0.0
      %923 = vmatpush1.xpose.msra.mxu0 0.0
      %924 = vmatprep.subr.mxu0 0.0
      %925 = vmatpush1.xpose.msra.mxu0 0.0
      %926 = vmatprep.subr.mxu0 0.0
      %927 = vmatpush1.xpose.msra.mxu0 0.0
      %928 = vmatprep.subr.mxu0 0.0
      %929 = vmatpush1.xpose.msra.mxu0 0.0
      %930 = vmatprep.subr.mxu0 0.0
      %931 = vmatpush1.xpose.msra.mxu0 0.0
      %932 = vmatprep.subr.mxu0 0.0
      %933 = vmatpush1.xpose.msra.mxu0 0.0
      %934 = vmatprep.subr.mxu0 0.0
      %935 = vmatpush1.xpose.msra.mxu0 0.0
      %936 = vmatprep.subr.mxu0 0.0
      %937 = vmatpush1.xpose.msra.mxu0 0.0
      %938 = vmatprep.subr.mxu0 0.0
      %939 = vmatpush1.xpose.msra.mxu0 %v908
      %940 = vmatprep.subr.mxu0 0.0
      %941 = vmatpush1.xpose.msra.mxu0 %v906
      %942 = vmatprep.subr.mxu0 0.0
      %943 = vmatpush2.xpose.msra.mxu0 0.0
      %944 = vmatprep.subr.mxu0 0.0
      %945 = vmatpush2.xpose.msra.mxu0 0.0
      %946 = vmatprep.subr.mxu0 0.0
      %947 = vmatpush2.xpose.msra.mxu0 0.0
      %948 = vmatprep.subr.mxu0 0.0
      %949 = vmatpush2.xpose.msra.mxu0 0.0
      %950 = vmatprep.subr.mxu0 0.0
      %951 = vmatpush2.xpose.msra.mxu0 0.0
      %952 = vmatprep.subr.mxu0 0.0
      %953 = vmatpush2.xpose.msra.mxu0 0.0
      %954 = vmatprep.subr.mxu0 0.0
      %955 = vmatpush2.xpose.msra.mxu0 0.0
      %956 = vmatprep.subr.mxu0 0.0
      %957 = vmatpush2.xpose.msra.mxu0 0.0
      %958 = vmatprep.subr.mxu0 0.0
      %959 = vmatpush2.xpose.msra.mxu0 0.0
      %960 = vmatprep.subr.mxu0 0.0
      %961 = vmatpush2.xpose.msra.mxu0 0.0
      %962 = vmatprep.subr.mxu0 0.0
      %963 = vmatpush2.xpose.msra.mxu0 0.0
      %964 = vmatprep.subr.mxu0 0.0
      %965 = vmatpush2.xpose.msra.mxu0 0.0
      %966 = vmatprep.subr.mxu0 0.0
      %967 = vmatpush2.xpose.msra.mxu0 0.0
      %968 = vmatprep.subr.mxu0 0.0
      %969 = vmatpush2.xpose.msra.mxu0 0.0
      %970 = vmatprep.subr.mxu0 0.0
      %971 = vmatpush2.xpose.msra.mxu0 0.0
      %972 = vmatprep.subr.mxu0 0.0
      %973 = vmatpush2.xpose.msra.mxu0 0.0
      %974 = vmatprep.mubr.f32.mxu0 0.0
      %975 = vmatmul.mubr.f32.gmra.mxu0 %v902
      %v976 = vpop.f32.mrf.mxu0
      %v977 = vadd.f32 0.0, %v976
      %v978 = vpop.f32.mrf.mxu0
      %979 = vmatprep.mubr.f32.mxu0 0.0
      %980 = vmatmul.mubr.f32.gmra.mxu0 %v904
      %v981 = vpop.f32.mrf.mxu0
      %v982 = vadd.f32 0.0, %v981
      %v983 = vpop.f32.mrf.mxu0
      %984 = vdwg.mxu0
      %v985 = vmul.f32 %v977, 0.35355338
      %v986 = vmul.f32 %v982, 0.35355338
      %vm987 = vcmask 72704
      %v988 = vsel %vm987, %v985, -inf
      %989 = vmax.xlane.f32.xlu0 %v988
      %v990 = vpop.xlane.xlu0 %989
      %vm991 = vcmask 65536
      %v992 = vsel %vm991, %v986, -inf
      %993 = vmax.xlane.f32.xlu0 %v992
      %v994 = vpop.xlane.xlu0 %993
      %v995 = vsub.f32 %v985, %v990
      %v996 = vsub.f32 %v986, %v994
      %v997 = vmul.f32 %v995, 1.442695
      %v998 = vpow.pop %v997
      %v999 = vmul.f32 %v996, 1.442695
      %v1000 = vpow.pop %v999
      %v1001 = vsel %vm987, %v998, 0.0
      %1002 = vadd.xlane.f32.xlu0 %v1001
      %v1003 = vpop.xlane.xlu0 %1002
      %v1004 = vsel %vm991, %v1000, 0.0
      %1005 = vadd.xlane.f32.xlu0 %v1004
      %v1006 = vpop.xlane.xlu0 %1005
      %v1007 = vrcp.pop %v1003
      %v1008 = vrcp.pop %v1006
      %v1009 = vmul.f32 %v998, %v1007
      %v1010 = vmul.f32 %v1000, %v1008
      %1011 = vrot.lane.b32.xlu0 %v889, 64
      %v1012 = vpop.permute.xlu0 %1011
      %1013 = vrot.lane.b32.xlu0 %v892, 64
      %v1014 = vpop.permute.xlu0 %1013
      %v1017 = vsel %vm987, %v1009, 0
      %v1020 = vsel %vm987, %v1010, 0
      %v1022 = vsel %vm785, %v1014, 0
      %1024 = vmatprep.subr.mxu0 0.0
      %1025 = vmatpush1.msra.mxu0 0.0
      %1026 = vmatprep.subr.mxu0 0.0
      %1027 = vmatpush1.msra.mxu0 0.0
      %1028 = vmatprep.subr.mxu0 0.0
      %1029 = vmatpush1.msra.mxu0 0.0
      %1030 = vmatprep.subr.mxu0 0.0
      %1031 = vmatpush1.msra.mxu0 0.0
      %1032 = vmatprep.subr.mxu0 0.0
      %1033 = vmatpush1.msra.mxu0 0.0
      %1034 = vmatprep.subr.mxu0 0.0
      %1035 = vmatpush1.msra.mxu0 0.0
      %1036 = vmatprep.subr.mxu0 0.0
      %1037 = vmatpush1.msra.mxu0 0.0
      %1038 = vmatprep.subr.mxu0 0.0
      %1039 = vmatpush1.msra.mxu0 0.0
      %1040 = vmatprep.subr.mxu0 0.0
      %1041 = vmatpush1.msra.mxu0 0.0
      %1042 = vmatprep.subr.mxu0 0.0
      %1043 = vmatpush1.msra.mxu0 0.0
      %1044 = vmatprep.subr.mxu0 0.0
      %1045 = vmatpush1.msra.mxu0 0.0
      %1046 = vmatprep.subr.mxu0 0.0
      %1047 = vmatpush1.msra.mxu0 0.0
      %1048 = vmatprep.subr.mxu0 0.0
      %1049 = vmatpush1.msra.mxu0 0.0
      %1050 = vmatprep.subr.mxu0 0.0
      %1051 = vmatpush1.msra.mxu0 0.0
      %1052 = vmatprep.subr.mxu0 0.0
      %1053 = vmatpush1.msra.mxu0 %v1022
      %1054 = vmatprep.subr.mxu0 0.0
      %1055 = vmatpush1.msra.mxu0 %v1012
      %1056 = vmatprep.subr.mxu0 0.0
      %1057 = vmatpush2.msra.mxu0 0.0
      %1058 = vmatprep.subr.mxu0 0.0
      %1059 = vmatpush2.msra.mxu0 0.0
      %1060 = vmatprep.subr.mxu0 0.0
      %1061 = vmatpush2.msra.mxu0 0.0
      %1062 = vmatprep.subr.mxu0 0.0
      %1063 = vmatpush2.msra.mxu0 0.0
      %1064 = vmatprep.subr.mxu0 0.0
      %1065 = vmatpush2.msra.mxu0 0.0
      %1066 = vmatprep.subr.mxu0 0.0
      %1067 = vmatpush2.msra.mxu0 0.0
      %1068 = vmatprep.subr.mxu0 0.0
      %1069 = vmatpush2.msra.mxu0 0.0
      %1070 = vmatprep.subr.mxu0 0.0
      %1071 = vmatpush2.msra.mxu0 0.0
      %1072 = vmatprep.subr.mxu0 0.0
      %1073 = vmatpush2.msra.mxu0 0.0
      %1074 = vmatprep.subr.mxu0 0.0
      %1075 = vmatpush2.msra.mxu0 0.0
      %1076 = vmatprep.subr.mxu0 0.0
      %1077 = vmatpush2.msra.mxu0 0.0
      %1078 = vmatprep.subr.mxu0 0.0
      %1079 = vmatpush2.msra.mxu0 0.0
      %1080 = vmatprep.subr.mxu0 0.0
      %1081 = vmatpush2.msra.mxu0 0.0
      %1082 = vmatprep.subr.mxu0 0.0
      %1083 = vmatpush2.msra.mxu0 0.0
      %1084 = vmatprep.subr.mxu0 0.0
      %1085 = vmatpush2.msra.mxu0 0.0
      %1086 = vmatprep.subr.mxu0 0.0
      %1087 = vmatpush2.msra.mxu0 0.0
      %1088 = vmatprep.mubr.f32.mxu0 0.0
      %1089 = vmatmul.mubr.f32.gmra.mxu0 %v1017
      %v1090 = vpop.f32.mrf.mxu0
      %v1091 = vadd.f32 0.0, %v1090
      %v1092 = vpop.f32.mrf.mxu0
      %1093 = vmatprep.mubr.f32.mxu0 0.0
      %1094 = vmatmul.mubr.f32.gmra.mxu0 %v1020
      %v1095 = vpop.f32.mrf.mxu0
      %v1096 = vadd.f32 0.0, %v1095
      %v1097 = vpop.f32.mrf.mxu0
      %1098 = vdwg.mxu0
      %1099 = vrot.lane.b32.xlu0 %v889, 120
      %v1100 = vpop.permute.xlu0 %1099
      %1101 = vrot.lane.b32.xlu0 %v892, 120
      %v1102 = vpop.permute.xlu0 %1101
      %1103 = vrot.lane.b32.xlu0 %v889, 88
      %v1104 = vpop.permute.xlu0 %1103
      %1105 = vrot.lane.b32.xlu0 %v892, 88
      %v1106 = vpop.permute.xlu0 %1105
      %v1107 = vsel %vm901, %v1100, 0
      %v1109 = vsel %vm901, %v1102, 0
      %v1111 = vsel %vm901, %v1104, 0
      %v1113 = vsel %vm901, %v1106, 0
      %1115 = vmatprep.subr.mxu0 0.0
      %1116 = vmatpush1.xpose.msra.mxu0 0.0
      %1117 = vmatprep.subr.mxu0 0.0
      %1118 = vmatpush1.xpose.msra.mxu0 0.0
      %1119 = vmatprep.subr.mxu0 0.0
      %1120 = vmatpush1.xpose.msra.mxu0 0.0
      %1121 = vmatprep.subr.mxu0 0.0
      %1122 = vmatpush1.xpose.msra.mxu0 0.0
      %1123 = vmatprep.subr.mxu0 0.0
      %1124 = vmatpush1.xpose.msra.mxu0 0.0
      %1125 = vmatprep.subr.mxu0 0.0
      %1126 = vmatpush1.xpose.msra.mxu0 0.0
      %1127 = vmatprep.subr.mxu0 0.0
      %1128 = vmatpush1.xpose.msra.mxu0 0.0
      %1129 = vmatprep.subr.mxu0 0.0
      %1130 = vmatpush1.xpose.msra.mxu0 0.0
      %1131 = vmatprep.subr.mxu0 0.0
      %1132 = vmatpush1.xpose.msra.mxu0 0.0
      %1133 = vmatprep.subr.mxu0 0.0
      %1134 = vmatpush1.xpose.msra.mxu0 0.0
      %1135 = vmatprep.subr.mxu0 0.0
      %1136 = vmatpush1.xpose.msra.mxu0 0.0
      %1137 = vmatprep.subr.mxu0 0.0
      %1138 = vmatpush1.xpose.msra.mxu0 0.0
      %1139 = vmatprep.subr.mxu0 0.0
      %1140 = vmatpush1.xpose.msra.mxu0 0.0
      %1141 = vmatprep.subr.mxu0 0.0
      %1142 = vmatpush1.xpose.msra.mxu0 0.0
      %1143 = vmatprep.subr.mxu0 0.0
      %1144 = vmatpush1.xpose.msra.mxu0 %v1113
      %1145 = vmatprep.subr.mxu0 0.0
      %1146 = vmatpush1.xpose.msra.mxu0 %v1111
      %1147 = vmatprep.subr.mxu0 0.0
      %1148 = vmatpush2.xpose.msra.mxu0 0.0
      %1149 = vmatprep.subr.mxu0 0.0
      %1150 = vmatpush2.xpose.msra.mxu0 0.0
      %1151 = vmatprep.subr.mxu0 0.0
      %1152 = vmatpush2.xpose.msra.mxu0 0.0
      %1153 = vmatprep.subr.mxu0 0.0
      %1154 = vmatpush2.xpose.msra.mxu0 0.0
      %1155 = vmatprep.subr.mxu0 0.0
      %1156 = vmatpush2.xpose.msra.mxu0 0.0
      %1157 = vmatprep.subr.mxu0 0.0
      %1158 = vmatpush2.xpose.msra.mxu0 0.0
      %1159 = vmatprep.subr.mxu0 0.0
      %1160 = vmatpush2.xpose.msra.mxu0 0.0
      %1161 = vmatprep.subr.mxu0 0.0
      %1162 = vmatpush2.xpose.msra.mxu0 0.0
      %1163 = vmatprep.subr.mxu0 0.0
      %1164 = vmatpush2.xpose.msra.mxu0 0.0
      %1165 = vmatprep.subr.mxu0 0.0
      %1166 = vmatpush2.xpose.msra.mxu0 0.0
      %1167 = vmatprep.subr.mxu0 0.0
      %1168 = vmatpush2.xpose.msra.mxu0 0.0
      %1169 = vmatprep.subr.mxu0 0.0
      %1170 = vmatpush2.xpose.msra.mxu0 0.0
      %1171 = vmatprep.subr.mxu0 0.0
      %1172 = vmatpush2.xpose.msra.mxu0 0.0
      %1173 = vmatprep.subr.mxu0 0.0
      %1174 = vmatpush2.xpose.msra.mxu0 0.0
      %1175 = vmatprep.subr.mxu0 0.0
      %1176 = vmatpush2.xpose.msra.mxu0 0.0
      %1177 = vmatprep.subr.mxu0 0.0
      %1178 = vmatpush2.xpose.msra.mxu0 0.0
      %1179 = vmatprep.mubr.f32.mxu0 0.0
      %1180 = vmatmul.mubr.f32.gmra.mxu0 %v1107
      %v1181 = vpop.f32.mrf.mxu0
      %v1182 = vadd.f32 0.0, %v1181
      %v1183 = vpop.f32.mrf.mxu0
      %1184 = vmatprep.mubr.f32.mxu0 0.0
      %1185 = vmatmul.mubr.f32.gmra.mxu0 %v1109
      %v1186 = vpop.f32.mrf.mxu0
      %v1187 = vadd.f32 0.0, %v1186
      %v1188 = vpop.f32.mrf.mxu0
      %1189 = vdwg.mxu0
      %v1190 = vmul.f32 %v1182, 0.35355338
      %v1191 = vmul.f32 %v1187, 0.35355338
      %v1192 = vsel %vm987, %v1190, -inf
      %1193 = vmax.xlane.f32.xlu0 %v1192
      %v1194 = vpop.xlane.xlu0 %1193
      %v1195 = vsel %vm991, %v1191, -inf
      %1196 = vmax.xlane.f32.xlu0 %v1195
      %v1197 = vpop.xlane.xlu0 %1196
      %v1198 = vsub.f32 %v1190, %v1194
      %v1199 = vsub.f32 %v1191, %v1197
      %v1200 = vmul.f32 %v1198, 1.442695
      %v1201 = vpow.pop %v1200
      %v1202 = vmul.f32 %v1199, 1.442695
      %v1203 = vpow.pop %v1202
      %v1204 = vsel %vm987, %v1201, 0.0
      %1205 = vadd.xlane.f32.xlu0 %v1204
      %v1206 = vpop.xlane.xlu0 %1205
      %v1207 = vsel %vm991, %v1203, 0.0
      %1208 = vadd.xlane.f32.xlu0 %v1207
      %v1209 = vpop.xlane.xlu0 %1208
      %v1210 = vrcp.pop %v1206
      %v1211 = vrcp.pop %v1209
      %v1212 = vmul.f32 %v1201, %v1210
      %v1213 = vmul.f32 %v1203, %v1211
      %1214 = vrot.lane.b32.xlu0 %v889, 56
      %v1215 = vpop.permute.xlu0 %1214
      %1216 = vrot.lane.b32.xlu0 %v892, 56
      %v1217 = vpop.permute.xlu0 %1216
      %v1220 = vsel %vm987, %v1212, 0
      %v1223 = vsel %vm987, %v1213, 0
      %v1225 = vsel %vm785, %v1217, 0
      %1227 = vmatprep.subr.mxu0 0.0
      %1228 = vmatpush1.msra.mxu0 0.0
      %1229 = vmatprep.subr.mxu0 0.0
      %1230 = vmatpush1.msra.mxu0 0.0
      %1231 = vmatprep.subr.mxu0 0.0
      %1232 = vmatpush1.msra.mxu0 0.0
      %1233 = vmatprep.subr.mxu0 0.0
      %1234 = vmatpush1.msra.mxu0 0.0
      %1235 = vmatprep.subr.mxu0 0.0
      %1236 = vmatpush1.msra.mxu0 0.0
      %1237 = vmatprep.subr.mxu0 0.0
      %1238 = vmatpush1.msra.mxu0 0.0
      %1239 = vmatprep.subr.mxu0 0.0
      %1240 = vmatpush1.msra.mxu0 0.0
      %1241 = vmatprep.subr.mxu0 0.0
      %1242 = vmatpush1.msra.mxu0 0.0
      %1243 = vmatprep.subr.mxu0 0.0
      %1244 = vmatpush1.msra.mxu0 0.0
      %1245 = vmatprep.subr.mxu0 0.0
      %1246 = vmatpush1.msra.mxu0 0.0
      %1247 = vmatprep.subr.mxu0 0.0
      %1248 = vmatpush1.msra.mxu0 0.0
      %1249 = vmatprep.subr.mxu0 0.0
      %1250 = vmatpush1.msra.mxu0 0.0
      %1251 = vmatprep.subr.mxu0 0.0
      %1252 = vmatpush1.msra.mxu0 0.0
      %1253 = vmatprep.subr.mxu0 0.0
      %1254 = vmatpush1.msra.mxu0 0.0
      %1255 = vmatprep.subr.mxu0 0.0
      %1256 = vmatpush1.msra.mxu0 %v1225
      %1257 = vmatprep.subr.mxu0 0.0
      %1258 = vmatpush1.msra.mxu0 %v1215
      %1259 = vmatprep.subr.mxu0 0.0
      %1260 = vmatpush2.msra.mxu0 0.0
      %1261 = vmatprep.subr.mxu0 0.0
      %1262 = vmatpush2.msra.mxu0 0.0
      %1263 = vmatprep.subr.mxu0 0.0
      %1264 = vmatpush2.msra.mxu0 0.0
      %1265 = vmatprep.subr.mxu0 0.0
      %1266 = vmatpush2.msra.mxu0 0.0
      %1267 = vmatprep.subr.mxu0 0.0
      %1268 = vmatpush2.msra.mxu0 0.0
      %1269 = vmatprep.subr.mxu0 0.0
      %1270 = vmatpush2.msra.mxu0 0.0
      %1271 = vmatprep.subr.mxu0 0.0
      %1272 = vmatpush2.msra.mxu0 0.0
      %1273 = vmatprep.subr.mxu0 0.0
      %1274 = vmatpush2.msra.mxu0 0.0
      %1275 = vmatprep.subr.mxu0 0.0
      %1276 = vmatpush2.msra.mxu0 0.0
      %1277 = vmatprep.subr.mxu0 0.0
      %1278 = vmatpush2.msra.mxu0 0.0
      %1279 = vmatprep.subr.mxu0 0.0
      %1280 = vmatpush2.msra.mxu0 0.0
      %1281 = vmatprep.subr.mxu0 0.0
      %1282 = vmatpush2.msra.mxu0 0.0
      %1283 = vmatprep.subr.mxu0 0.0
      %1284 = vmatpush2.msra.mxu0 0.0
      %1285 = vmatprep.subr.mxu0 0.0
      %1286 = vmatpush2.msra.mxu0 0.0
      %1287 = vmatprep.subr.mxu0 0.0
      %1288 = vmatpush2.msra.mxu0 0.0
      %1289 = vmatprep.subr.mxu0 0.0
      %1290 = vmatpush2.msra.mxu0 0.0
      %1291 = vmatprep.mubr.f32.mxu0 0.0
      %1292 = vmatmul.mubr.f32.gmra.mxu0 %v1220
      %v1293 = vpop.f32.mrf.mxu0
      %v1294 = vadd.f32 0.0, %v1293
      %v1295 = vpop.f32.mrf.mxu0
      %1296 = vmatprep.mubr.f32.mxu0 0.0
      %1297 = vmatmul.mubr.f32.gmra.mxu0 %v1223
      %v1298 = vpop.f32.mrf.mxu0
      %v1299 = vadd.f32 0.0, %v1298
      %v1300 = vpop.f32.mrf.mxu0
      %1301 = vdwg.mxu0
      %1302 = vrot.lane.b32.xlu0 %v889, 112
      %v1303 = vpop.permute.xlu0 %1302
      %1304 = vrot.lane.b32.xlu0 %v892, 112
      %v1305 = vpop.permute.xlu0 %1304
      %1306 = vrot.lane.b32.xlu0 %v889, 80
      %v1307 = vpop.permute.xlu0 %1306
      %1308 = vrot.lane.b32.xlu0 %v892, 80
      %v1309 = vpop.permute.xlu0 %1308
      %v1310 = vsel %vm901, %v1303, 0
      %v1312 = vsel %vm901, %v1305, 0
      %v1314 = vsel %vm901, %v1307, 0
      %v1316 = vsel %vm901, %v1309, 0
      %1318 = vmatprep.subr.mxu0 0.0
      %1319 = vmatpush1.xpose.msra.mxu0 0.0
      %1320 = vmatprep.subr.mxu0 0.0
      %1321 = vmatpush1.xpose.msra.mxu0 0.0
      %1322 = vmatprep.subr.mxu0 0.0
      %1323 = vmatpush1.xpose.msra.mxu0 0.0
      %1324 = vmatprep.subr.mxu0 0.0
      %1325 = vmatpush1.xpose.msra.mxu0 0.0
      %1326 = vmatprep.subr.mxu0 0.0
      %1327 = vmatpush1.xpose.msra.mxu0 0.0
      %1328 = vmatprep.subr.mxu0 0.0
      %1329 = vmatpush1.xpose.msra.mxu0 0.0
      %1330 = vmatprep.subr.mxu0 0.0
      %1331 = vmatpush1.xpose.msra.mxu0 0.0
      %1332 = vmatprep.subr.mxu0 0.0
      %1333 = vmatpush1.xpose.msra.mxu0 0.0
      %1334 = vmatprep.subr.mxu0 0.0
      %1335 = vmatpush1.xpose.msra.mxu0 0.0
      %1336 = vmatprep.subr.mxu0 0.0
      %1337 = vmatpush1.xpose.msra.mxu0 0.0
      %1338 = vmatprep.subr.mxu0 0.0
      %1339 = vmatpush1.xpose.msra.mxu0 0.0
      %1340 = vmatprep.subr.mxu0 0.0
      %1341 = vmatpush1.xpose.msra.mxu0 0.0
      %1342 = vmatprep.subr.mxu0 0.0
      %1343 = vmatpush1.xpose.msra.mxu0 0.0
      %1344 = vmatprep.subr.mxu0 0.0
      %1345 = vmatpush1.xpose.msra.mxu0 0.0
      %1346 = vmatprep.subr.mxu0 0.0
      %1347 = vmatpush1.xpose.msra.mxu0 %v1316
      %1348 = vmatprep.subr.mxu0 0.0
      %1349 = vmatpush1.xpose.msra.mxu0 %v1314
      %1350 = vmatprep.subr.mxu0 0.0
      %1351 = vmatpush2.xpose.msra.mxu0 0.0
      %1352 = vmatprep.subr.mxu0 0.0
      %1353 = vmatpush2.xpose.msra.mxu0 0.0
      %1354 = vmatprep.subr.mxu0 0.0
      %1355 = vmatpush2.xpose.msra.mxu0 0.0
      %1356 = vmatprep.subr.mxu0 0.0
      %1357 = vmatpush2.xpose.msra.mxu0 0.0
      %1358 = vmatprep.subr.mxu0 0.0
      %1359 = vmatpush2.xpose.msra.mxu0 0.0
      %1360 = vmatprep.subr.mxu0 0.0
      %1361 = vmatpush2.xpose.msra.mxu0 0.0
      %1362 = vmatprep.subr.mxu0 0.0
      %1363 = vmatpush2.xpose.msra.mxu0 0.0
      %1364 = vmatprep.subr.mxu0 0.0
      %1365 = vmatpush2.xpose.msra.mxu0 0.0
      %1366 = vmatprep.subr.mxu0 0.0
      %1367 = vmatpush2.xpose.msra.mxu0 0.0
      %1368 = vmatprep.subr.mxu0 0.0
      %1369 = vmatpush2.xpose.msra.mxu0 0.0
      %1370 = vmatprep.subr.mxu0 0.0
      %1371 = vmatpush2.xpose.msra.mxu0 0.0
      %1372 = vmatprep.subr.mxu0 0.0
      %1373 = vmatpush2.xpose.msra.mxu0 0.0
      %1374 = vmatprep.subr.mxu0 0.0
      %1375 = vmatpush2.xpose.msra.mxu0 0.0
      %1376 = vmatprep.subr.mxu0 0.0
      %1377 = vmatpush2.xpose.msra.mxu0 0.0
      %1378 = vmatprep.subr.mxu0 0.0
      %1379 = vmatpush2.xpose.msra.mxu0 0.0
      %1380 = vmatprep.subr.mxu0 0.0
      %1381 = vmatpush2.xpose.msra.mxu0 0.0
      %1382 = vmatprep.mubr.f32.mxu0 0.0
      %1383 = vmatmul.mubr.f32.gmra.mxu0 %v1310
      %v1384 = vpop.f32.mrf.mxu0
      %v1385 = vadd.f32 0.0, %v1384
      %v1386 = vpop.f32.mrf.mxu0
      %1387 = vmatprep.mubr.f32.mxu0 0.0
      %1388 = vmatmul.mubr.f32.gmra.mxu0 %v1312
      %v1389 = vpop.f32.mrf.mxu0
      %v1390 = vadd.f32 0.0, %v1389
      %v1391 = vpop.f32.mrf.mxu0
      %1392 = vdwg.mxu0
      %v1393 = vmul.f32 %v1385, 0.35355338
      %v1394 = vmul.f32 %v1390, 0.35355338
      %v1395 = vsel %vm987, %v1393, -inf
      %1396 = vmax.xlane.f32.xlu0 %v1395
      %v1397 = vpop.xlane.xlu0 %1396
      %v1398 = vsel %vm991, %v1394, -inf
      %1399 = vmax.xlane.f32.xlu0 %v1398
      %v1400 = vpop.xlane.xlu0 %1399
      %v1401 = vsub.f32 %v1393, %v1397
      %v1402 = vsub.f32 %v1394, %v1400
      %v1403 = vmul.f32 %v1401, 1.442695
      %v1404 = vpow.pop %v1403
      %v1405 = vmul.f32 %v1402, 1.442695
      %v1406 = vpow.pop %v1405
      %v1407 = vsel %vm987, %v1404, 0.0
      %1408 = vadd.xlane.f32.xlu0 %v1407
      %v1409 = vpop.xlane.xlu0 %1408
      %v1410 = vsel %vm991, %v1406, 0.0
      %1411 = vadd.xlane.f32.xlu0 %v1410
      %v1412 = vpop.xlane.xlu0 %1411
      %v1413 = vrcp.pop %v1409
      %v1414 = vrcp.pop %v1412
      %v1415 = vmul.f32 %v1404, %v1413
      %v1416 = vmul.f32 %v1406, %v1414
      %1417 = vrot.lane.b32.xlu0 %v889, 48
      %v1418 = vpop.permute.xlu0 %1417
      %1419 = vrot.lane.b32.xlu0 %v892, 48
      %v1420 = vpop.permute.xlu0 %1419
      %v1423 = vsel %vm987, %v1415, 0
      %v1426 = vsel %vm987, %v1416, 0
      %v1428 = vsel %vm785, %v1420, 0
      %1430 = vmatprep.subr.mxu0 0.0
      %1431 = vmatpush1.msra.mxu0 0.0
      %1432 = vmatprep.subr.mxu0 0.0
      %1433 = vmatpush1.msra.mxu0 0.0
      %1434 = vmatprep.subr.mxu0 0.0
      %1435 = vmatpush1.msra.mxu0 0.0
      %1436 = vmatprep.subr.mxu0 0.0
      %1437 = vmatpush1.msra.mxu0 0.0
      %1438 = vmatprep.subr.mxu0 0.0
      %1439 = vmatpush1.msra.mxu0 0.0
      %1440 = vmatprep.subr.mxu0 0.0
      %1441 = vmatpush1.msra.mxu0 0.0
      %1442 = vmatprep.subr.mxu0 0.0
      %1443 = vmatpush1.msra.mxu0 0.0
      %1444 = vmatprep.subr.mxu0 0.0
      %1445 = vmatpush1.msra.mxu0 0.0
      %1446 = vmatprep.subr.mxu0 0.0
      %1447 = vmatpush1.msra.mxu0 0.0
      %1448 = vmatprep.subr.mxu0 0.0
      %1449 = vmatpush1.msra.mxu0 0.0
      %1450 = vmatprep.subr.mxu0 0.0
      %1451 = vmatpush1.msra.mxu0 0.0
      %1452 = vmatprep.subr.mxu0 0.0
      %1453 = vmatpush1.msra.mxu0 0.0
      %1454 = vmatprep.subr.mxu0 0.0
      %1455 = vmatpush1.msra.mxu0 0.0
      %1456 = vmatprep.subr.mxu0 0.0
      %1457 = vmatpush1.msra.mxu0 0.0
      %1458 = vmatprep.subr.mxu0 0.0
      %1459 = vmatpush1.msra.mxu0 %v1428
      %1460 = vmatprep.subr.mxu0 0.0
      %1461 = vmatpush1.msra.mxu0 %v1418
      %1462 = vmatprep.subr.mxu0 0.0
      %1463 = vmatpush2.msra.mxu0 0.0
      %1464 = vmatprep.subr.mxu0 0.0
      %1465 = vmatpush2.msra.mxu0 0.0
      %1466 = vmatprep.subr.mxu0 0.0
      %1467 = vmatpush2.msra.mxu0 0.0
      %1468 = vmatprep.subr.mxu0 0.0
      %1469 = vmatpush2.msra.mxu0 0.0
      %1470 = vmatprep.subr.mxu0 0.0
      %1471 = vmatpush2.msra.mxu0 0.0
      %1472 = vmatprep.subr.mxu0 0.0
      %1473 = vmatpush2.msra.mxu0 0.0
      %1474 = vmatprep.subr.mxu0 0.0
      %1475 = vmatpush2.msra.mxu0 0.0
      %1476 = vmatprep.subr.mxu0 0.0
      %1477 = vmatpush2.msra.mxu0 0.0
      %1478 = vmatprep.subr.mxu0 0.0
      %1479 = vmatpush2.msra.mxu0 0.0
      %1480 = vmatprep.subr.mxu0 0.0
      %1481 = vmatpush2.msra.mxu0 0.0
      %1482 = vmatprep.subr.mxu0 0.0
      %1483 = vmatpush2.msra.mxu0 0.0
      %1484 = vmatprep.subr.mxu0 0.0
      %1485 = vmatpush2.msra.mxu0 0.0
      %1486 = vmatprep.subr.mxu0 0.0
      %1487 = vmatpush2.msra.mxu0 0.0
      %1488 = vmatprep.subr.mxu0 0.0
      %1489 = vmatpush2.msra.mxu0 0.0
      %1490 = vmatprep.subr.mxu0 0.0
      %1491 = vmatpush2.msra.mxu0 0.0
      %1492 = vmatprep.subr.mxu0 0.0
      %1493 = vmatpush2.msra.mxu0 0.0
      %1494 = vmatprep.mubr.f32.mxu0 0.0
      %1495 = vmatmul.mubr.f32.gmra.mxu0 %v1423
      %v1496 = vpop.f32.mrf.mxu0
      %v1497 = vadd.f32 0.0, %v1496
      %v1498 = vpop.f32.mrf.mxu0
      %1499 = vmatprep.mubr.f32.mxu0 0.0
      %1500 = vmatmul.mubr.f32.gmra.mxu0 %v1426
      %v1501 = vpop.f32.mrf.mxu0
      %v1502 = vadd.f32 0.0, %v1501
      %v1503 = vpop.f32.mrf.mxu0
      %1504 = vdwg.mxu0
      %1505 = vrot.lane.b32.xlu0 %v889, 104
      %v1506 = vpop.permute.xlu0 %1505
      %1507 = vrot.lane.b32.xlu0 %v892, 104
      %v1508 = vpop.permute.xlu0 %1507
      %1509 = vrot.lane.b32.xlu0 %v889, 72
      %v1510 = vpop.permute.xlu0 %1509
      %1511 = vrot.lane.b32.xlu0 %v892, 72
      %v1512 = vpop.permute.xlu0 %1511
      %v1513 = vsel %vm901, %v1506, 0
      %v1515 = vsel %vm901, %v1508, 0
      %v1517 = vsel %vm901, %v1510, 0
      %v1519 = vsel %vm901, %v1512, 0
      %1521 = vmatprep.subr.mxu0 0.0
      %1522 = vmatpush1.xpose.msra.mxu0 0.0
      %1523 = vmatprep.subr.mxu0 0.0
      %1524 = vmatpush1.xpose.msra.mxu0 0.0
      %1525 = vmatprep.subr.mxu0 0.0
      %1526 = vmatpush1.xpose.msra.mxu0 0.0
      %1527 = vmatprep.subr.mxu0 0.0
      %1528 = vmatpush1.xpose.msra.mxu0 0.0
      %1529 = vmatprep.subr.mxu0 0.0
      %1530 = vmatpush1.xpose.msra.mxu0 0.0
      %1531 = vmatprep.subr.mxu0 0.0
      %1532 = vmatpush1.xpose.msra.mxu0 0.0
      %1533 = vmatprep.subr.mxu0 0.0
      %1534 = vmatpush1.xpose.msra.mxu0 0.0
      %1535 = vmatprep.subr.mxu0 0.0
      %1536 = vmatpush1.xpose.msra.mxu0 0.0
      %1537 = vmatprep.subr.mxu0 0.0
      %1538 = vmatpush1.xpose.msra.mxu0 0.0
      %1539 = vmatprep.subr.mxu0 0.0
      %1540 = vmatpush1.xpose.msra.mxu0 0.0
      %1541 = vmatprep.subr.mxu0 0.0
      %1542 = vmatpush1.xpose.msra.mxu0 0.0
      %1543 = vmatprep.subr.mxu0 0.0
      %1544 = vmatpush1.xpose.msra.mxu0 0.0
      %1545 = vmatprep.subr.mxu0 0.0
      %1546 = vmatpush1.xpose.msra.mxu0 0.0
      %1547 = vmatprep.subr.mxu0 0.0
      %1548 = vmatpush1.xpose.msra.mxu0 0.0
      %1549 = vmatprep.subr.mxu0 0.0
      %1550 = vmatpush1.xpose.msra.mxu0 %v1519
      %1551 = vmatprep.subr.mxu0 0.0
      %1552 = vmatpush1.xpose.msra.mxu0 %v1517
      %1553 = vmatprep.subr.mxu0 0.0
      %1554 = vmatpush2.xpose.msra.mxu0 0.0
      %1555 = vmatprep.subr.mxu0 0.0
      %1556 = vmatpush2.xpose.msra.mxu0 0.0
      %1557 = vmatprep.subr.mxu0 0.0
      %1558 = vmatpush2.xpose.msra.mxu0 0.0
      %1559 = vmatprep.subr.mxu0 0.0
      %1560 = vmatpush2.xpose.msra.mxu0 0.0
      %1561 = vmatprep.subr.mxu0 0.0
      %1562 = vmatpush2.xpose.msra.mxu0 0.0
      %1563 = vmatprep.subr.mxu0 0.0
      %1564 = vmatpush2.xpose.msra.mxu0 0.0
      %1565 = vmatprep.subr.mxu0 0.0
      %1566 = vmatpush2.xpose.msra.mxu0 0.0
      %1567 = vmatprep.subr.mxu0 0.0
      %1568 = vmatpush2.xpose.msra.mxu0 0.0
      %1569 = vmatprep.subr.mxu0 0.0
      %1570 = vmatpush2.xpose.msra.mxu0 0.0
      %1571 = vmatprep.subr.mxu0 0.0
      %1572 = vmatpush2.xpose.msra.mxu0 0.0
      %1573 = vmatprep.subr.mxu0 0.0
      %1574 = vmatpush2.xpose.msra.mxu0 0.0
      %1575 = vmatprep.subr.mxu0 0.0
      %1576 = vmatpush2.xpose.msra.mxu0 0.0
      %1577 = vmatprep.subr.mxu0 0.0
      %1578 = vmatpush2.xpose.msra.mxu0 0.0
      %1579 = vmatprep.subr.mxu0 0.0
      %1580 = vmatpush2.xpose.msra.mxu0 0.0
      %1581 = vmatprep.subr.mxu0 0.0
      %1582 = vmatpush2.xpose.msra.mxu0 0.0
      %1583 = vmatprep.subr.mxu0 0.0
      %1584 = vmatpush2.xpose.msra.mxu0 0.0
      %1585 = vmatprep.mubr.f32.mxu0 0.0
      %1586 = vmatmul.mubr.f32.gmra.mxu0 %v1513
      %v1587 = vpop.f32.mrf.mxu0
      %v1588 = vadd.f32 0.0, %v1587
      %v1589 = vpop.f32.mrf.mxu0
      %1590 = vmatprep.mubr.f32.mxu0 0.0
      %1591 = vmatmul.mubr.f32.gmra.mxu0 %v1515
      %v1592 = vpop.f32.mrf.mxu0
      %v1593 = vadd.f32 0.0, %v1592
      %v1594 = vpop.f32.mrf.mxu0
      %1595 = vdwg.mxu0
      %v1596 = vmul.f32 %v1588, 0.35355338
      %v1597 = vmul.f32 %v1593, 0.35355338
      %v1598 = vsel %vm987, %v1596, -inf
      %1599 = vmax.xlane.f32.xlu0 %v1598
      %v1600 = vpop.xlane.xlu0 %1599
      %v1601 = vsel %vm991, %v1597, -inf
      %1602 = vmax.xlane.f32.xlu0 %v1601
      %v1603 = vpop.xlane.xlu0 %1602
      %v1604 = vsub.f32 %v1596, %v1600
      %v1605 = vsub.f32 %v1597, %v1603
      %v1606 = vmul.f32 %v1604, 1.442695
      %v1607 = vpow.pop %v1606
      %v1608 = vmul.f32 %v1605, 1.442695
      %v1609 = vpow.pop %v1608
      %v1610 = vsel %vm987, %v1607, 0.0
      %1611 = vadd.xlane.f32.xlu0 %v1610
      %v1612 = vpop.xlane.xlu0 %1611
      %v1613 = vsel %vm991, %v1609, 0.0
      %1614 = vadd.xlane.f32.xlu0 %v1613
      %v1615 = vpop.xlane.xlu0 %1614
      %v1616 = vrcp.pop %v1612
      %v1617 = vrcp.pop %v1615
      %v1618 = vmul.f32 %v1607, %v1616
      %v1619 = vmul.f32 %v1609, %v1617
      %1620 = vrot.lane.b32.xlu0 %v889, 40
      %v1621 = vpop.permute.xlu0 %1620
      %1622 = vrot.lane.b32.xlu0 %v892, 40
      %v1623 = vpop.permute.xlu0 %1622
      %v1626 = vsel %vm987, %v1618, 0
      %v1629 = vsel %vm987, %v1619, 0
      %v1631 = vsel %vm785, %v1623, 0
      %1633 = vmatprep.subr.mxu0 0.0
      %1634 = vmatpush1.msra.mxu0 0.0
      %1635 = vmatprep.subr.mxu0 0.0
      %1636 = vmatpush1.msra.mxu0 0.0
      %1637 = vmatprep.subr.mxu0 0.0
      %1638 = vmatpush1.msra.mxu0 0.0
      %1639 = vmatprep.subr.mxu0 0.0
      %1640 = vmatpush1.msra.mxu0 0.0
      %1641 = vmatprep.subr.mxu0 0.0
      %1642 = vmatpush1.msra.mxu0 0.0
      %1643 = vmatprep.subr.mxu0 0.0
      %1644 = vmatpush1.msra.mxu0 0.0
      %1645 = vmatprep.subr.mxu0 0.0
      %1646 = vmatpush1.msra.mxu0 0.0
      %1647 = vmatprep.subr.mxu0 0.0
      %1648 = vmatpush1.msra.mxu0 0.0
      %1649 = vmatprep.subr.mxu0 0.0
      %1650 = vmatpush1.msra.mxu0 0.0
      %1651 = vmatprep.subr.mxu0 0.0
      %1652 = vmatpush1.msra.mxu0 0.0
      %1653 = vmatprep.subr.mxu0 0.0
      %1654 = vmatpush1.msra.mxu0 0.0
      %1655 = vmatprep.subr.mxu0 0.0
      %1656 = vmatpush1.msra.mxu0 0.0
      %1657 = vmatprep.subr.mxu0 0.0
      %1658 = vmatpush1.msra.mxu0 0.0
      %1659 = vmatprep.subr.mxu0 0.0
      %1660 = vmatpush1.msra.mxu0 0.0
      %1661 = vmatprep.subr.mxu0 0.0
      %1662 = vmatpush1.msra.mxu0 %v1631
      %1663 = vmatprep.subr.mxu0 0.0
      %1664 = vmatpush1.msra.mxu0 %v1621
      %1665 = vmatprep.subr.mxu0 0.0
      %1666 = vmatpush2.msra.mxu0 0.0
      %1667 = vmatprep.subr.mxu0 0.0
      %1668 = vmatpush2.msra.mxu0 0.0
      %1669 = vmatprep.subr.mxu0 0.0
      %1670 = vmatpush2.msra.mxu0 0.0
      %1671 = vmatprep.subr.mxu0 0.0
      %1672 = vmatpush2.msra.mxu0 0.0
      %1673 = vmatprep.subr.mxu0 0.0
      %1674 = vmatpush2.msra.mxu0 0.0
      %1675 = vmatprep.subr.mxu0 0.0
      %1676 = vmatpush2.msra.mxu0 0.0
      %1677 = vmatprep.subr.mxu0 0.0
      %1678 = vmatpush2.msra.mxu0 0.0
      %1679 = vmatprep.subr.mxu0 0.0
      %1680 = vmatpush2.msra.mxu0 0.0
      %1681 = vmatprep.subr.mxu0 0.0
      %1682 = vmatpush2.msra.mxu0 0.0
      %1683 = vmatprep.subr.mxu0 0.0
      %1684 = vmatpush2.msra.mxu0 0.0
      %1685 = vmatprep.subr.mxu0 0.0
      %1686 = vmatpush2.msra.mxu0 0.0
      %1687 = vmatprep.subr.mxu0 0.0
      %1688 = vmatpush2.msra.mxu0 0.0
      %1689 = vmatprep.subr.mxu0 0.0
      %1690 = vmatpush2.msra.mxu0 0.0
      %1691 = vmatprep.subr.mxu0 0.0
      %1692 = vmatpush2.msra.mxu0 0.0
      %1693 = vmatprep.subr.mxu0 0.0
      %1694 = vmatpush2.msra.mxu0 0.0
      %1695 = vmatprep.subr.mxu0 0.0
      %1696 = vmatpush2.msra.mxu0 0.0
      %1697 = vmatprep.mubr.f32.mxu0 0.0
      %1698 = vmatmul.mubr.f32.gmra.mxu0 %v1626
      %v1699 = vpop.f32.mrf.mxu0
      %v1700 = vadd.f32 0.0, %v1699
      %v1701 = vpop.f32.mrf.mxu0
      %1702 = vmatprep.mubr.f32.mxu0 0.0
      %1703 = vmatmul.mubr.f32.gmra.mxu0 %v1629
      %v1704 = vpop.f32.mrf.mxu0
      %v1705 = vadd.f32 0.0, %v1704
      %v1706 = vpop.f32.mrf.mxu0
      %1707 = vdwg.mxu0
      %1710 = vrot.lane.b32.xlu0 %v1294, 8
      %v1711 = vpop.permute.xlu0 %1710
      %1712 = vrot.lane.b32.xlu0 %v1299, 8
      %v1713 = vpop.permute.xlu0 %1712
      %1718 = vrot.lane.b32.xlu0 %v1497, 16
      %v1719 = vpop.permute.xlu0 %1718
      %1720 = vrot.lane.b32.xlu0 %v1502, 16
      %v1721 = vpop.permute.xlu0 %1720
      %1726 = vrot.lane.b32.xlu0 %v1700, 24
      %v1727 = vpop.permute.xlu0 %1726
      %1728 = vrot.lane.b32.xlu0 %v1705, 24
      %v1729 = vpop.permute.xlu0 %1728
      %v1732 = vsel %vm901, %v1091, %v1711
      %v1733 = vsel %vm901, %v1096, %v1713
      %vm1734 = vcmask 130048
      %v1735 = vsel %vm1734, %v1732, %v1719
      %v1736 = vsel %vm1734, %v1733, %v1721
      %vm1737 = vcmask 195584
      %v1738 = vsel %vm1737, %v1735, %v1727
      %v1739 = vsel %vm1737, %v1736, %v1729
      %v1740 = vpack.c.bf16 %v1739, %v1738
      %v1741 = vlaneseq
      %v1742 = vshrl.u32 %v1741, 7
      %v1743 = vsub.s32 4, %v1742
      %v1744 = vrot.slane %v789, %v1743
      %v1749 = vunpack.c.l.b16 %v834
      %v1750 = vunpack.c.l.b16 %v835
      %v1751 = vunpack.c.l.b16 %v836
      %v1752 = vunpack.c.l.b16 %v837
      %v1753 = vpack.c.b16 %v1750, %v1749
      %v1754 = vpack.c.b16 %v1752, %v1751
      %v1758 = vsel %vm738, %v1740, 0
      %1760 = vmatprep.subr.bf16.mxu0 0
      %1761 = vmatpush1.bf16.msra.mxu0 0
      %1762 = vmatprep.subr.bf16.mxu0 0
      %1763 = vmatpush1.bf16.msra.mxu0 0
      %1764 = vmatprep.subr.bf16.mxu0 0
      %1765 = vmatpush1.bf16.msra.mxu0 0
      %1766 = vmatprep.subr.bf16.mxu0 0
      %1767 = vmatpush1.bf16.msra.mxu0 0
      %1768 = vmatprep.subr.bf16.mxu0 0
      %1769 = vmatpush1.bf16.msra.mxu0 0
      %1770 = vmatprep.subr.bf16.mxu0 0
      %1771 = vmatpush1.bf16.msra.mxu0 0
      %1772 = vmatprep.subr.bf16.mxu0 0
      %1773 = vmatpush1.bf16.msra.mxu0 %v1754
      %1774 = vmatprep.subr.bf16.mxu0 0
      %1775 = vmatpush1.bf16.msra.mxu0 %v1753
      %1776 = vmatprep.subr.bf16.mxu0 0
      %1777 = vmatpush2.bf16.msra.mxu0 0
      %1778 = vmatprep.subr.bf16.mxu0 0
      %1779 = vmatpush2.bf16.msra.mxu0 0
      %1780 = vmatprep.subr.bf16.mxu0 0
      %1781 = vmatpush2.bf16.msra.mxu0 0
      %1782 = vmatprep.subr.bf16.mxu0 0
      %1783 = vmatpush2.bf16.msra.mxu0 0
      %1784 = vmatprep.subr.bf16.mxu0 0
      %1785 = vmatpush2.bf16.msra.mxu0 0
      %1786 = vmatprep.subr.bf16.mxu0 0
      %1787 = vmatpush2.bf16.msra.mxu0 0
      %1788 = vmatprep.subr.bf16.mxu0 0
      %1789 = vmatpush2.bf16.msra.mxu0 0
      %1790 = vmatprep.subr.bf16.mxu0 0
      %1791 = vmatpush2.bf16.msra.mxu0 0
      %1792 = vmatprep.mubr.bf16.mxu0 0
      %1793 = vmatmul.mubr.bf16.gmra.mxu0 %v1758
      %v1794 = vpop.f32.mrf.mxu0
      %v1795 = vadd.f32 %v1744, %v1794
      %v1796 = vpop.f32.mrf.mxu0
      %v1797 = vpop.f32.mrf.mxu0
      %v1798 = vadd.f32 %v1744, %v1797
      %v1799 = vpop.f32.mrf.mxu0
      %1800 = vdwg.mxu0
      %v1801 = vadd.f32 %v787, %v1795
      %v1802 = vadd.f32 %v788, %v1798
      %v1803 = vsel %vm738, %v1801, 0.0
      %1804 = vadd.xlane.f32.xlu0 %v1803
      %v1805 = vpop.xlane.xlu0 %1804
      %v1806 = vsel %vm793, %v1802, 0.0
      %1807 = vadd.xlane.f32.xlu0 %v1806
      %v1808 = vpop.xlane.xlu0 %1807
      %v1809 = vmul.f32 %v1805, %v797
      %v1810 = vmul.f32 %v1808, %v797
      %v1811 = vsub.f32 %v1801, %v1809
      %v1812 = vsub.f32 %v1802, %v1810
      %v1813 = vmul.f32 %v1811, %v1811
      %v1814 = vmul.f32 %v1812, %v1812
      %v1815 = vsel %vm738, %v1813, 0.0
      %1816 = vadd.xlane.f32.xlu0 %v1815
      %v1817 = vpop.xlane.xlu0 %1816
      %v1818 = vsel %vm793, %v1814, 0.0
      %1819 = vadd.xlane.f32.xlu0 %v1818
      %v1820 = vpop.xlane.xlu0 %1819
      %v1821 = vmul.f32 %v1817, %v797
      %v1822 = vmul.f32 %v1820, %v797
      %v1823 = vadd.f32 %v1821, 1e-05
      %v1824 = vadd.f32 %v1822, 1e-05
      %v1825 = vrsqrt.pop %v1823
      %v1826 = vrsqrt.pop %v1824
      %v1827 = vmul.f32 %v1811, %v1825
      %v1828 = vmul.f32 %v1812, %v1826
      %v1829 = vlaneseq
      %v1830 = vshrl.u32 %v1829, 7
      %v1831 = vsub.s32 2, %v1830
      %v1832 = vrot.slane %v789, %v1831
      %v1833 = vmul.f32 %v1827, %v1832
      %v1834 = vmul.f32 %v1828, %v1832
      %v1835 = vlaneseq
      %v1836 = vshrl.u32 %v1835, 7
      %v1837 = vsub.s32 3, %v1836
      %v1838 = vrot.slane %v789, %v1837
      %v1839 = vadd.f32 %v1833, %v1838
      %v1840 = vadd.f32 %v1834, %v1838
      %v1841 = vld [vmem:[%s9] sm:$0xf]
      %v1842 = vld [vmem:[%s9 + $0x4] sm:$0xf]
      %v1843 = vld [vmem:[%s9 + $0x8] sm:$0xf]
      %v1844 = vld [vmem:[%s9 + $0xc] sm:$0xf]
      %v1845 = vld [vmem:[%s12] sm:$0x1]
      %v1846 = vld [vmem:[%s10] sm:$0xf]
      %v1847 = vld [vmem:[%s10 + $0x4] sm:$0xf]
      %v1848 = vld [vmem:[%s10 + $0x8] sm:$0xf]
      %v1849 = vld [vmem:[%s10 + $0xc] sm:$0xf]
      %v1850 = vld [vmem:[%s10 + $0x10] sm:$0xf]
      %v1851 = vld [vmem:[%s10 + $0x14] sm:$0xf]
      %v1852 = vld [vmem:[%s10 + $0x18] sm:$0xf]
      %v1853 = vld [vmem:[%s10 + $0x1c] sm:$0xf]
      %v1854 = vld [vmem:[%s10 + $0x20] sm:$0xf]
      %v1855 = vld [vmem:[%s10 + $0x24] sm:$0xf]
      %v1856 = vld [vmem:[%s10 + $0x28] sm:$0xf]
      %v1857 = vld [vmem:[%s10 + $0x2c] sm:$0xf]
      %v1858 = vld [vmem:[%s10 + $0x30] sm:$0xf]
      %v1859 = vld [vmem:[%s10 + $0x34] sm:$0xf]
      %v1860 = vld [vmem:[%s10 + $0x38] sm:$0xf]
      %v1861 = vld [vmem:[%s10 + $0x3c] sm:$0xf]
      %v1862 = vpack.c.bf16 %v1840, %v1839
      %v1864 = vlaneseq
      %v1865 = vshrl.u32 %v1864, 7
      %v1866 = vsub.s32 0, %v1865
      %v1867 = vrot.slane %v1845, %v1866
      %v1873 = vunpack.c.l.b16 %v1841
      %v1874 = vunpack.c.l.b16 %v1842
      %v1875 = vunpack.c.l.b16 %v1843
      %v1876 = vunpack.c.l.b16 %v1844
      %v1877 = vpack.c.b16 %v1874, %v1873
      %v1878 = vpack.c.b16 %v1876, %v1875
      %v1882 = vsel %vm738, %v1862, 0
      %1884 = vmatprep.subr.bf16.mxu0 0
      %1885 = vmatpush1.bf16.msra.mxu0 0
      %1886 = vmatprep.subr.bf16.mxu0 0
      %1887 = vmatpush1.bf16.msra.mxu0 0
      %1888 = vmatprep.subr.bf16.mxu0 0
      %1889 = vmatpush1.bf16.msra.mxu0 0
      %1890 = vmatprep.subr.bf16.mxu0 0
      %1891 = vmatpush1.bf16.msra.mxu0 0
      %1892 = vmatprep.subr.bf16.mxu0 0
      %1893 = vmatpush1.bf16.msra.mxu0 0
      %1894 = vmatprep.subr.bf16.mxu0 0
      %1895 = vmatpush1.bf16.msra.mxu0 0
      %1896 = vmatprep.subr.bf16.mxu0 0
      %1897 = vmatpush1.bf16.msra.mxu0 %v1878
      %1898 = vmatprep.subr.bf16.mxu0 0
      %1899 = vmatpush1.bf16.msra.mxu0 %v1877
      %1900 = vmatprep.subr.bf16.mxu0 0
      %1901 = vmatpush2.bf16.msra.mxu0 0
      %1902 = vmatprep.subr.bf16.mxu0 0
      %1903 = vmatpush2.bf16.msra.mxu0 0
      %1904 = vmatprep.subr.bf16.mxu0 0
      %1905 = vmatpush2.bf16.msra.mxu0 0
      %1906 = vmatprep.subr.bf16.mxu0 0
      %1907 = vmatpush2.bf16.msra.mxu0 0
      %1908 = vmatprep.subr.bf16.mxu0 0
      %1909 = vmatpush2.bf16.msra.mxu0 0
      %1910 = vmatprep.subr.bf16.mxu0 0
      %1911 = vmatpush2.bf16.msra.mxu0 0
      %1912 = vmatprep.subr.bf16.mxu0 0
      %1913 = vmatpush2.bf16.msra.mxu0 0
      %1914 = vmatprep.subr.bf16.mxu0 0
      %1915 = vmatpush2.bf16.msra.mxu0 0
      %1916 = vmatprep.mubr.bf16.mxu0 0
      %1917 = vmatmul.mubr.bf16.gmra.mxu0 %v1882
      %v1918 = vpop.f32.mrf.mxu0
      %v1919 = vadd.f32 %v1867, %v1918
      %v1920 = vpop.f32.mrf.mxu0
      %v1921 = vpop.f32.mrf.mxu0
      %v1922 = vadd.f32 %v1867, %v1921
      %v1923 = vpop.f32.mrf.mxu0
      %1924 = vdwg.mxu0
      %v1925 = vmul.f32 %v1919, 0.5
      %v1926 = vmul.f32 %v1922, 0.5
      %v1927 = vmul.f32 %v1919, 0.70710677
      %v1928 = vmul.f32 %v1922, 0.70710677
      %v1929 = verf.f32.pop %v1927
      %v1930 = verf.f32.pop %v1928
      %v1931 = vadd.f32 %v1929, 1.0
      %v1932 = vadd.f32 %v1930, 1.0
      %v1933 = vmul.f32 %v1925, %v1931
      %v1934 = vmul.f32 %v1926, %v1932
      %v1935 = vpack.c.bf16 %v1934, %v1933
      %v1936 = vlaneseq
      %v1937 = vshrl.u32 %v1936, 7
      %v1938 = vsub.s32 5, %v1937
      %v1939 = vrot.slane %v789, %v1938
      %v1956 = vunpack.c.l.b16 %v1846
      %v1957 = vunpack.c.l.b16 %v1847
      %v1958 = vunpack.c.l.b16 %v1848
      %v1959 = vunpack.c.l.b16 %v1849
      %v1960 = vunpack.c.l.b16 %v1850
      %v1961 = vunpack.c.l.b16 %v1851
      %v1962 = vunpack.c.l.b16 %v1852
      %v1963 = vunpack.c.l.b16 %v1853
      %v1964 = vunpack.c.l.b16 %v1854
      %v1965 = vunpack.c.l.b16 %v1855
      %v1966 = vunpack.c.l.b16 %v1856
      %v1967 = vunpack.c.l.b16 %v1857
      %v1968 = vunpack.c.l.b16 %v1858
      %v1969 = vunpack.c.l.b16 %v1859
      %v1970 = vunpack.c.l.b16 %v1860
      %v1971 = vunpack.c.l.b16 %v1861
      %v1972 = vpack.c.b16 %v1957, %v1956
      %v1973 = vpack.c.b16 %v1959, %v1958
      %v1974 = vpack.c.b16 %v1961, %v1960
      %v1975 = vpack.c.b16 %v1963, %v1962
      %v1976 = vpack.c.b16 %v1965, %v1964
      %v1977 = vpack.c.b16 %v1967, %v1966
      %v1978 = vpack.c.b16 %v1969, %v1968
      %v1979 = vpack.c.b16 %v1971, %v1970
      %1988 = vmatprep.subr.bf16.mxu0 0
      %1989 = vmatpush1.bf16.msra.mxu0 %v1979
      %1990 = vmatprep.subr.bf16.mxu0 0
      %1991 = vmatpush1.bf16.msra.mxu0 %v1978
      %1992 = vmatprep.subr.bf16.mxu0 0
      %1993 = vmatpush1.bf16.msra.mxu0 %v1977
      %1994 = vmatprep.subr.bf16.mxu0 0
      %1995 = vmatpush1.bf16.msra.mxu0 %v1976
      %1996 = vmatprep.subr.bf16.mxu0 0
      %1997 = vmatpush1.bf16.msra.mxu0 %v1975
      %1998 = vmatprep.subr.bf16.mxu0 0
      %1999 = vmatpush1.bf16.msra.mxu0 %v1974
      %2000 = vmatprep.subr.bf16.mxu0 0
      %2001 = vmatpush1.bf16.msra.mxu0 %v1973
      %2002 = vmatprep.subr.bf16.mxu0 0
      %2003 = vmatpush1.bf16.msra.mxu0 %v1972
      %2004 = vmatprep.subr.bf16.mxu0 0
      %2005 = vmatpush2.bf16.msra.mxu0 0
      %2006 = vmatprep.subr.bf16.mxu0 0
      %2007 = vmatpush2.bf16.msra.mxu0 0
      %2008 = vmatprep.subr.bf16.mxu0 0
      %2009 = vmatpush2.bf16.msra.mxu0 0
      %2010 = vmatprep.subr.bf16.mxu0 0
      %2011 = vmatpush2.bf16.msra.mxu0 0
      %2012 = vmatprep.subr.bf16.mxu0 0
      %2013 = vmatpush2.bf16.msra.mxu0 0
      %2014 = vmatprep.subr.bf16.mxu0 0
      %2015 = vmatpush2.bf16.msra.mxu0 0
      %2016 = vmatprep.subr.bf16.mxu0 0
      %2017 = vmatpush2.bf16.msra.mxu0 0
      %2018 = vmatprep.subr.bf16.mxu0 0
      %2019 = vmatpush2.bf16.msra.mxu0 0
      %2020 = vmatprep.mubr.bf16.mxu0 0
      %2021 = vmatmul.mubr.bf16.gmra.mxu0 %v1935
      %v2022 = vpop.f32.mrf.mxu0
      %v2023 = vadd.f32 %v1939, %v2022
      %v2024 = vpop.f32.mrf.mxu0
      %v2025 = vpop.f32.mrf.mxu0
      %v2026 = vadd.f32 %v1939, %v2025
      %v2027 = vpop.f32.mrf.mxu0
      %2028 = vdwg.mxu0
      %v2029 = vadd.f32 %v1801, %v2023
      %v2030 = vadd.f32 %v1802, %v2026
      %s2031 = scalar_lea.vmem %s11, 8
      %v2032 = vld [vmem:[%s2031] sm:$0x3f]
      %v2033 = vsel %vm738, %v2029, 0.0
      %2034 = vadd.xlane.f32.xlu0 %v2033
      %v2035 = vpop.xlane.xlu0 %2034
      %v2036 = vsel %vm793, %v2030, 0.0
      %2037 = vadd.xlane.f32.xlu0 %v2036
      %v2038 = vpop.xlane.xlu0 %2037
      %v2039 = vmul.f32 %v2035, %v797
      %v2040 = vmul.f32 %v2038, %v797
      %v2041 = vsub.f32 %v2029, %v2039
      %v2042 = vsub.f32 %v2030, %v2040
      %v2043 = vmul.f32 %v2041, %v2041
      %v2044 = vmul.f32 %v2042, %v2042
      %v2045 = vsel %vm738, %v2043, 0.0
      %2046 = vadd.xlane.f32.xlu0 %v2045
      %v2047 = vpop.xlane.xlu0 %2046
      %v2048 = vsel %vm793, %v2044, 0.0
      %2049 = vadd.xlane.f32.xlu0 %v2048
      %v2050 = vpop.xlane.xlu0 %2049
      %v2051 = vmul.f32 %v2047, %v797
      %v2052 = vmul.f32 %v2050, %v797
      %v2053 = vadd.f32 %v2051, 1e-05
      %v2054 = vadd.f32 %v2052, 1e-05
      %v2055 = vrsqrt.pop %v2053
      %v2056 = vrsqrt.pop %v2054
      %v2057 = vmul.f32 %v2041, %v2055
      %v2058 = vmul.f32 %v2042, %v2056
      %v2059 = vlaneseq
      %v2060 = vshrl.u32 %v2059, 7
      %v2061 = vsub.s32 0, %v2060
      %v2062 = vrot.slane %v2032, %v2061
      %v2063 = vmul.f32 %v2057, %v2062
      %v2064 = vmul.f32 %v2058, %v2062
      %v2065 = vlaneseq
      %v2066 = vshrl.u32 %v2065, 7
      %v2067 = vsub.s32 1, %v2066
      %v2068 = vrot.slane %v2032, %v2067
      %v2069 = vadd.f32 %v2063, %v2068
      %v2070 = vadd.f32 %v2064, %v2068
      %s2071 = scalar_lea.vmem %s7, 16
      %v2072 = vld [vmem:[%s2071] sm:$0xf]
      %v2073 = vld [vmem:[%s2071 + $0x4] sm:$0xf]
      %v2074 = vld [vmem:[%s2071 + $0x8] sm:$0xf]
      %v2075 = vld [vmem:[%s2071 + $0xc] sm:$0xf]
      %s2076 = scalar_lea.vmem %s8, 16
      %v2077 = vld [vmem:[%s2076] sm:$0xf]
      %v2078 = vld [vmem:[%s2076 + $0x4] sm:$0xf]
      %v2079 = vld [vmem:[%s2076 + $0x8] sm:$0xf]
      %v2080 = vld [vmem:[%s2076 + $0xc] sm:$0xf]
      %v2081 = vpack.c.bf16 %v2070, %v2069
      %v2086 = vunpack.c.l.b16 %v2072
      %v2087 = vunpack.c.l.b16 %v2073
      %v2088 = vunpack.c.l.b16 %v2074
      %v2089 = vunpack.c.l.b16 %v2075
      %v2090 = vpack.c.b16 %v2087, %v2086
      %v2091 = vpack.c.b16 %v2089, %v2088
      %v2095 = vsel %vm738, %v2081, 0
      %2097 = vmatprep.subr.bf16.mxu0 0
      %2098 = vmatpush1.bf16.msra.mxu0 0
      %2099 = vmatprep.subr.bf16.mxu0 0
      %2100 = vmatpush1.bf16.msra.mxu0 0
      %2101 = vmatprep.subr.bf16.mxu0 0
      %2102 = vmatpush1.bf16.msra.mxu0 0
      %2103 = vmatprep.subr.bf16.mxu0 0
      %2104 = vmatpush1.bf16.msra.mxu0 0
      %2105 = vmatprep.subr.bf16.mxu0 0
      %2106 = vmatpush1.bf16.msra.mxu0 0
      %2107 = vmatprep.subr.bf16.mxu0 0
      %2108 = vmatpush1.bf16.msra.mxu0 0
      %2109 = vmatprep.subr.bf16.mxu0 0
      %2110 = vmatpush1.bf16.msra.mxu0 %v2091
      %2111 = vmatprep.subr.bf16.mxu0 0
      %2112 = vmatpush1.bf16.msra.mxu0 %v2090
      %2113 = vmatprep.subr.bf16.mxu0 0
      %2114 = vmatpush2.bf16.msra.mxu0 0
      %2115 = vmatprep.subr.bf16.mxu0 0
      %2116 = vmatpush2.bf16.msra.mxu0 0
      %2117 = vmatprep.subr.bf16.mxu0 0
      %2118 = vmatpush2.bf16.msra.mxu0 0
      %2119 = vmatprep.subr.bf16.mxu0 0
      %2120 = vmatpush2.bf16.msra.mxu0 0
      %2121 = vmatprep.subr.bf16.mxu0 0
      %2122 = vmatpush2.bf16.msra.mxu0 0
      %2123 = vmatprep.subr.bf16.mxu0 0
      %2124 = vmatpush2.bf16.msra.mxu0 0
      %2125 = vmatprep.subr.bf16.mxu0 0
      %2126 = vmatpush2.bf16.msra.mxu0 0
      %2127 = vmatprep.subr.bf16.mxu0 0
      %2128 = vmatpush2.bf16.msra.mxu0 0
      %2129 = vmatprep.mubr.bf16.mxu0 0
      %2130 = vmatmul.mubr.bf16.gmra.mxu0 %v2095
      %v2131 = vpop.f32.mrf.mxu0
      %v2132 = vadd.f32 0.0, %v2131
      %v2133 = vpop.f32.mrf.mxu0
      %v2134 = vpop.f32.mrf.mxu0
      %v2135 = vadd.f32 0.0, %v2134
      %v2136 = vpop.f32.mrf.mxu0
      %2137 = vdwg.mxu0
      %2140 = vrot.lane.b32.xlu0 %v2132, 96
      %v2141 = vpop.permute.xlu0 %2140
      %2142 = vrot.lane.b32.xlu0 %v2135, 96
      %v2143 = vpop.permute.xlu0 %2142
      %v2144 = vsel %vm901, %v2132, 0
      %v2146 = vsel %vm901, %v2135, 0
      %v2148 = vsel %vm901, %v2141, 0
      %v2150 = vsel %vm901, %v2143, 0
      %2152 = vmatprep.subr.mxu0 0.0
      %2153 = vmatpush1.xpose.msra.mxu0 0.0
      %2154 = vmatprep.subr.mxu0 0.0
      %2155 = vmatpush1.xpose.msra.mxu0 0.0
      %2156 = vmatprep.subr.mxu0 0.0
      %2157 = vmatpush1.xpose.msra.mxu0 0.0
      %2158 = vmatprep.subr.mxu0 0.0
      %2159 = vmatpush1.xpose.msra.mxu0 0.0
      %2160 = vmatprep.subr.mxu0 0.0
      %2161 = vmatpush1.xpose.msra.mxu0 0.0
      %2162 = vmatprep.subr.mxu0 0.0
      %2163 = vmatpush1.xpose.msra.mxu0 0.0
      %2164 = vmatprep.subr.mxu0 0.0
      %2165 = vmatpush1.xpose.msra.mxu0 0.0
      %2166 = vmatprep.subr.mxu0 0.0
      %2167 = vmatpush1.xpose.msra.mxu0 0.0
      %2168 = vmatprep.subr.mxu0 0.0
      %2169 = vmatpush1.xpose.msra.mxu0 0.0
      %2170 = vmatprep.subr.mxu0 0.0
      %2171 = vmatpush1.xpose.msra.mxu0 0.0
      %2172 = vmatprep.subr.mxu0 0.0
      %2173 = vmatpush1.xpose.msra.mxu0 0.0
      %2174 = vmatprep.subr.mxu0 0.0
      %2175 = vmatpush1.xpose.msra.mxu0 0.0
      %2176 = vmatprep.subr.mxu0 0.0
      %2177 = vmatpush1.xpose.msra.mxu0 0.0
      %2178 = vmatprep.subr.mxu0 0.0
      %2179 = vmatpush1.xpose.msra.mxu0 0.0
      %2180 = vmatprep.subr.mxu0 0.0
      %2181 = vmatpush1.xpose.msra.mxu0 %v2150
      %2182 = vmatprep.subr.mxu0 0.0
      %2183 = vmatpush1.xpose.msra.mxu0 %v2148
      %2184 = vmatprep.subr.mxu0 0.0
      %2185 = vmatpush2.xpose.msra.mxu0 0.0
      %2186 = vmatprep.subr.mxu0 0.0
      %2187 = vmatpush2.xpose.msra.mxu0 0.0
      %2188 = vmatprep.subr.mxu0 0.0
      %2189 = vmatpush2.xpose.msra.mxu0 0.0
      %2190 = vmatprep.subr.mxu0 0.0
      %2191 = vmatpush2.xpose.msra.mxu0 0.0
      %2192 = vmatprep.subr.mxu0 0.0
      %2193 = vmatpush2.xpose.msra.mxu0 0.0
      %2194 = vmatprep.subr.mxu0 0.0
      %2195 = vmatpush2.xpose.msra.mxu0 0.0
      %2196 = vmatprep.subr.mxu0 0.0
      %2197 = vmatpush2.xpose.msra.mxu0 0.0
      %2198 = vmatprep.subr.mxu0 0.0
      %2199 = vmatpush2.xpose.msra.mxu0 0.0
      %2200 = vmatprep.subr.mxu0 0.0
      %2201 = vmatpush2.xpose.msra.mxu0 0.0
      %2202 = vmatprep.subr.mxu0 0.0
      %2203 = vmatpush2.xpose.msra.mxu0 0.0
      %2204 = vmatprep.subr.mxu0 0.0
      %2205 = vmatpush2.xpose.msra.mxu0 0.0
      %2206 = vmatprep.subr.mxu0 0.0
      %2207 = vmatpush2.xpose.msra.mxu0 0.0
      %2208 = vmatprep.subr.mxu0 0.0
      %2209 = vmatpush2.xpose.msra.mxu0 0.0
      %2210 = vmatprep.subr.mxu0 0.0
      %2211 = vmatpush2.xpose.msra.mxu0 0.0
      %2212 = vmatprep.subr.mxu0 0.0
      %2213 = vmatpush2.xpose.msra.mxu0 0.0
      %2214 = vmatprep.subr.mxu0 0.0
      %2215 = vmatpush2.xpose.msra.mxu0 0.0
      %2216 = vmatprep.mubr.f32.mxu0 0.0
      %2217 = vmatmul.mubr.f32.gmra.mxu0 %v2144
      %v2218 = vpop.f32.mrf.mxu0
      %v2219 = vadd.f32 0.0, %v2218
      %v2220 = vpop.f32.mrf.mxu0
      %2221 = vmatprep.mubr.f32.mxu0 0.0
      %2222 = vmatmul.mubr.f32.gmra.mxu0 %v2146
      %v2223 = vpop.f32.mrf.mxu0
      %v2224 = vadd.f32 0.0, %v2223
      %v2225 = vpop.f32.mrf.mxu0
      %2226 = vdwg.mxu0
      %v2227 = vmul.f32 %v2219, 0.35355338
      %v2228 = vmul.f32 %v2224, 0.35355338
      %v2229 = vsel %vm987, %v2227, -inf
      %2230 = vmax.xlane.f32.xlu0 %v2229
      %v2231 = vpop.xlane.xlu0 %2230
      %v2232 = vsel %vm991, %v2228, -inf
      %2233 = vmax.xlane.f32.xlu0 %v2232
      %v2234 = vpop.xlane.xlu0 %2233
      %v2235 = vsub.f32 %v2227, %v2231
      %v2236 = vsub.f32 %v2228, %v2234
      %v2237 = vmul.f32 %v2235, 1.442695
      %v2238 = vpow.pop %v2237
      %v2239 = vmul.f32 %v2236, 1.442695
      %v2240 = vpow.pop %v2239
      %v2241 = vsel %vm987, %v2238, 0.0
      %2242 = vadd.xlane.f32.xlu0 %v2241
      %v2243 = vpop.xlane.xlu0 %2242
      %v2244 = vsel %vm991, %v2240, 0.0
      %2245 = vadd.xlane.f32.xlu0 %v2244
      %v2246 = vpop.xlane.xlu0 %2245
      %v2247 = vrcp.pop %v2243
      %v2248 = vrcp.pop %v2246
      %v2249 = vmul.f32 %v2238, %v2247
      %v2250 = vmul.f32 %v2240, %v2248
      %2251 = vrot.lane.b32.xlu0 %v2132, 64
      %v2252 = vpop.permute.xlu0 %2251
      %2253 = vrot.lane.b32.xlu0 %v2135, 64
      %v2254 = vpop.permute.xlu0 %2253
      %v2257 = vsel %vm987, %v2249, 0
      %v2260 = vsel %vm987, %v2250, 0
      %v2262 = vsel %vm785, %v2254, 0
      %2264 = vmatprep.subr.mxu0 0.0
      %2265 = vmatpush1.msra.mxu0 0.0
      %2266 = vmatprep.subr.mxu0 0.0
      %2267 = vmatpush1.msra.mxu0 0.0
      %2268 = vmatprep.subr.mxu0 0.0
      %2269 = vmatpush1.msra.mxu0 0.0
      %2270 = vmatprep.subr.mxu0 0.0
      %2271 = vmatpush1.msra.mxu0 0.0
      %2272 = vmatprep.subr.mxu0 0.0
      %2273 = vmatpush1.msra.mxu0 0.0
      %2274 = vmatprep.subr.mxu0 0.0
      %2275 = vmatpush1.msra.mxu0 0.0
      %2276 = vmatprep.subr.mxu0 0.0
      %2277 = vmatpush1.msra.mxu0 0.0
      %2278 = vmatprep.subr.mxu0 0.0
      %2279 = vmatpush1.msra.mxu0 0.0
      %2280 = vmatprep.subr.mxu0 0.0
      %2281 = vmatpush1.msra.mxu0 0.0
      %2282 = vmatprep.subr.mxu0 0.0
      %2283 = vmatpush1.msra.mxu0 0.0
      %2284 = vmatprep.subr.mxu0 0.0
      %2285 = vmatpush1.msra.mxu0 0.0
      %2286 = vmatprep.subr.mxu0 0.0
      %2287 = vmatpush1.msra.mxu0 0.0
      %2288 = vmatprep.subr.mxu0 0.0
      %2289 = vmatpush1.msra.mxu0 0.0
      %2290 = vmatprep.subr.mxu0 0.0
      %2291 = vmatpush1.msra.mxu0 0.0
      %2292 = vmatprep.subr.mxu0 0.0
      %2293 = vmatpush1.msra.mxu0 %v2262
      %2294 = vmatprep.subr.mxu0 0.0
      %2295 = vmatpush1.msra.mxu0 %v2252
      %2296 = vmatprep.subr.mxu0 0.0
      %2297 = vmatpush2.msra.mxu0 0.0
      %2298 = vmatprep.subr.mxu0 0.0
      %2299 = vmatpush2.msra.mxu0 0.0
      %2300 = vmatprep.subr.mxu0 0.0
      %2301 = vmatpush2.msra.mxu0 0.0
      %2302 = vmatprep.subr.mxu0 0.0
      %2303 = vmatpush2.msra.mxu0 0.0
      %2304 = vmatprep.subr.mxu0 0.0
      %2305 = vmatpush2.msra.mxu0 0.0
      %2306 = vmatprep.subr.mxu0 0.0
      %2307 = vmatpush2.msra.mxu0 0.0
      %2308 = vmatprep.subr.mxu0 0.0
      %2309 = vmatpush2.msra.mxu0 0.0
      %2310 = vmatprep.subr.mxu0 0.0
      %2311 = vmatpush2.msra.mxu0 0.0
      %2312 = vmatprep.subr.mxu0 0.0
      %2313 = vmatpush2.msra.mxu0 0.0
      %2314 = vmatprep.subr.mxu0 0.0
      %2315 = vmatpush2.msra.mxu0 0.0
      %2316 = vmatprep.subr.mxu0 0.0
      %2317 = vmatpush2.msra.mxu0 0.0
      %2318 = vmatprep.subr.mxu0 0.0
      %2319 = vmatpush2.msra.mxu0 0.0
      %2320 = vmatprep.subr.mxu0 0.0
      %2321 = vmatpush2.msra.mxu0 0.0
      %2322 = vmatprep.subr.mxu0 0.0
      %2323 = vmatpush2.msra.mxu0 0.0
      %2324 = vmatprep.subr.mxu0 0.0
      %2325 = vmatpush2.msra.mxu0 0.0
      %2326 = vmatprep.subr.mxu0 0.0
      %2327 = vmatpush2.msra.mxu0 0.0
      %2328 = vmatprep.mubr.f32.mxu0 0.0
      %2329 = vmatmul.mubr.f32.gmra.mxu0 %v2257
      %v2330 = vpop.f32.mrf.mxu0
      %v2331 = vadd.f32 0.0, %v2330
      %v2332 = vpop.f32.mrf.mxu0
      %2333 = vmatprep.mubr.f32.mxu0 0.0
      %2334 = vmatmul.mubr.f32.gmra.mxu0 %v2260
      %v2335 = vpop.f32.mrf.mxu0
      %v2336 = vadd.f32 0.0, %v2335
      %v2337 = vpop.f32.mrf.mxu0
      %2338 = vdwg.mxu0
      %2339 = vrot.lane.b32.xlu0 %v2132, 120
      %v2340 = vpop.permute.xlu0 %2339
      %2341 = vrot.lane.b32.xlu0 %v2135, 120
      %v2342 = vpop.permute.xlu0 %2341
      %2343 = vrot.lane.b32.xlu0 %v2132, 88
      %v2344 = vpop.permute.xlu0 %2343
      %2345 = vrot.lane.b32.xlu0 %v2135, 88
      %v2346 = vpop.permute.xlu0 %2345
      %v2347 = vsel %vm901, %v2340, 0
      %v2349 = vsel %vm901, %v2342, 0
      %v2351 = vsel %vm901, %v2344, 0
      %v2353 = vsel %vm901, %v2346, 0
      %2355 = vmatprep.subr.mxu0 0.0
      %2356 = vmatpush1.xpose.msra.mxu0 0.0
      %2357 = vmatprep.subr.mxu0 0.0
      %2358 = vmatpush1.xpose.msra.mxu0 0.0
      %2359 = vmatprep.subr.mxu0 0.0
      %2360 = vmatpush1.xpose.msra.mxu0 0.0
      %2361 = vmatprep.subr.mxu0 0.0
      %2362 = vmatpush1.xpose.msra.mxu0 0.0
      %2363 = vmatprep.subr.mxu0 0.0
      %2364 = vmatpush1.xpose.msra.mxu0 0.0
      %2365 = vmatprep.subr.mxu0 0.0
      %2366 = vmatpush1.xpose.msra.mxu0 0.0
      %2367 = vmatprep.subr.mxu0 0.0
      %2368 = vmatpush1.xpose.msra.mxu0 0.0
      %2369 = vmatprep.subr.mxu0 0.0
      %2370 = vmatpush1.xpose.msra.mxu0 0.0
      %2371 = vmatprep.subr.mxu0 0.0
      %2372 = vmatpush1.xpose.msra.mxu0 0.0
      %2373 = vmatprep.subr.mxu0 0.0
      %2374 = vmatpush1.xpose.msra.mxu0 0.0
      %2375 = vmatprep.subr.mxu0 0.0
      %2376 = vmatpush1.xpose.msra.mxu0 0.0
      %2377 = vmatprep.subr.mxu0 0.0
      %2378 = vmatpush1.xpose.msra.mxu0 0.0
      %2379 = vmatprep.subr.mxu0 0.0
      %2380 = vmatpush1.xpose.msra.mxu0 0.0
      %2381 = vmatprep.subr.mxu0 0.0
      %2382 = vmatpush1.xpose.msra.mxu0 0.0
      %2383 = vmatprep.subr.mxu0 0.0
      %2384 = vmatpush1.xpose.msra.mxu0 %v2353
      %2385 = vmatprep.subr.mxu0 0.0
      %2386 = vmatpush1.xpose.msra.mxu0 %v2351
      %2387 = vmatprep.subr.mxu0 0.0
      %2388 = vmatpush2.xpose.msra.mxu0 0.0
      %2389 = vmatprep.subr.mxu0 0.0
      %2390 = vmatpush2.xpose.msra.mxu0 0.0
      %2391 = vmatprep.subr.mxu0 0.0
      %2392 = vmatpush2.xpose.msra.mxu0 0.0
      %2393 = vmatprep.subr.mxu0 0.0
      %2394 = vmatpush2.xpose.msra.mxu0 0.0
      %2395 = vmatprep.subr.mxu0 0.0
      %2396 = vmatpush2.xpose.msra.mxu0 0.0
      %2397 = vmatprep.subr.mxu0 0.0
      %2398 = vmatpush2.xpose.msra.mxu0 0.0
      %2399 = vmatprep.subr.mxu0 0.0
      %2400 = vmatpush2.xpose.msra.mxu0 0.0
      %2401 = vmatprep.subr.mxu0 0.0
      %2402 = vmatpush2.xpose.msra.mxu0 0.0
      %2403 = vmatprep.subr.mxu0 0.0
      %2404 = vmatpush2.xpose.msra.mxu0 0.0
      %2405 = vmatprep.subr.mxu0 0.0
      %2406 = vmatpush2.xpose.msra.mxu0 0.0
      %2407 = vmatprep.subr.mxu0 0.0
      %2408 = vmatpush2.xpose.msra.mxu0 0.0
      %2409 = vmatprep.subr.mxu0 0.0
      %2410 = vmatpush2.xpose.msra.mxu0 0.0
      %2411 = vmatprep.subr.mxu0 0.0
      %2412 = vmatpush2.xpose.msra.mxu0 0.0
      %2413 = vmatprep.subr.mxu0 0.0
      %2414 = vmatpush2.xpose.msra.mxu0 0.0
      %2415 = vmatprep.subr.mxu0 0.0
      %2416 = vmatpush2.xpose.msra.mxu0 0.0
      %2417 = vmatprep.subr.mxu0 0.0
      %2418 = vmatpush2.xpose.msra.mxu0 0.0
      %2419 = vmatprep.mubr.f32.mxu0 0.0
      %2420 = vmatmul.mubr.f32.gmra.mxu0 %v2347
      %v2421 = vpop.f32.mrf.mxu0
      %v2422 = vadd.f32 0.0, %v2421
      %v2423 = vpop.f32.mrf.mxu0
      %2424 = vmatprep.mubr.f32.mxu0 0.0
      %2425 = vmatmul.mubr.f32.gmra.mxu0 %v2349
      %v2426 = vpop.f32.mrf.mxu0
      %v2427 = vadd.f32 0.0, %v2426
      %v2428 = vpop.f32.mrf.mxu0
      %2429 = vdwg.mxu0
      %v2430 = vmul.f32 %v2422, 0.35355338
      %v2431 = vmul.f32 %v2427, 0.35355338
      %v2432 = vsel %vm987, %v2430, -inf
      %2433 = vmax.xlane.f32.xlu0 %v2432
      %v2434 = vpop.xlane.xlu0 %2433
      %v2435 = vsel %vm991, %v2431, -inf
      %2436 = vmax.xlane.f32.xlu0 %v2435
      %v2437 = vpop.xlane.xlu0 %2436
      %v2438 = vsub.f32 %v2430, %v2434
      %v2439 = vsub.f32 %v2431, %v2437
      %v2440 = vmul.f32 %v2438, 1.442695
      %v2441 = vpow.pop %v2440
      %v2442 = vmul.f32 %v2439, 1.442695
      %v2443 = vpow.pop %v2442
      %v2444 = vsel %vm987, %v2441, 0.0
      %2445 = vadd.xlane.f32.xlu0 %v2444
      %v2446 = vpop.xlane.xlu0 %2445
      %v2447 = vsel %vm991, %v2443, 0.0
      %2448 = vadd.xlane.f32.xlu0 %v2447
      %v2449 = vpop.xlane.xlu0 %2448
      %v2450 = vrcp.pop %v2446
      %v2451 = vrcp.pop %v2449
      %v2452 = vmul.f32 %v2441, %v2450
      %v2453 = vmul.f32 %v2443, %v2451
      %2454 = vrot.lane.b32.xlu0 %v2132, 56
      %v2455 = vpop.permute.xlu0 %2454
      %2456 = vrot.lane.b32.xlu0 %v2135, 56
      %v2457 = vpop.permute.xlu0 %2456
      %v2460 = vsel %vm987, %v2452, 0
      %v2463 = vsel %vm987, %v2453, 0
      %v2465 = vsel %vm785, %v2457, 0
      %2467 = vmatprep.subr.mxu0 0.0
      %2468 = vmatpush1.msra.mxu0 0.0
      %2469 = vmatprep.subr.mxu0 0.0
      %2470 = vmatpush1.msra.mxu0 0.0
      %2471 = vmatprep.subr.mxu0 0.0
      %2472 = vmatpush1.msra.mxu0 0.0
      %2473 = vmatprep.subr.mxu0 0.0
      %2474 = vmatpush1.msra.mxu0 0.0
      %2475 = vmatprep.subr.mxu0 0.0
      %2476 = vmatpush1.msra.mxu0 0.0
      %2477 = vmatprep.subr.mxu0 0.0
      %2478 = vmatpush1.msra.mxu0 0.0
      %2479 = vmatprep.subr.mxu0 0.0
      %2480 = vmatpush1.msra.mxu0 0.0
      %2481 = vmatprep.subr.mxu0 0.0
      %2482 = vmatpush1.msra.mxu0 0.0
      %2483 = vmatprep.subr.mxu0 0.0
      %2484 = vmatpush1.msra.mxu0 0.0
      %2485 = vmatprep.subr.mxu0 0.0
      %2486 = vmatpush1.msra.mxu0 0.0
      %2487 = vmatprep.subr.mxu0 0.0
      %2488 = vmatpush1.msra.mxu0 0.0
      %2489 = vmatprep.subr.mxu0 0.0
      %2490 = vmatpush1.msra.mxu0 0.0
      %2491 = vmatprep.subr.mxu0 0.0
      %2492 = vmatpush1.msra.mxu0 0.0
      %2493 = vmatprep.subr.mxu0 0.0
      %2494 = vmatpush1.msra.mxu0 0.0
      %2495 = vmatprep.subr.mxu0 0.0
      %2496 = vmatpush1.msra.mxu0 %v2465
      %2497 = vmatprep.subr.mxu0 0.0
      %2498 = vmatpush1.msra.mxu0 %v2455
      %2499 = vmatprep.subr.mxu0 0.0
      %2500 = vmatpush2.msra.mxu0 0.0
      %2501 = vmatprep.subr.mxu0 0.0
      %2502 = vmatpush2.msra.mxu0 0.0
      %2503 = vmatprep.subr.mxu0 0.0
      %2504 = vmatpush2.msra.mxu0 0.0
      %2505 = vmatprep.subr.mxu0 0.0
      %2506 = vmatpush2.msra.mxu0 0.0
      %2507 = vmatprep.subr.mxu0 0.0
      %2508 = vmatpush2.msra.mxu0 0.0
      %2509 = vmatprep.subr.mxu0 0.0
      %2510 = vmatpush2.msra.mxu0 0.0
      %2511 = vmatprep.subr.mxu0 0.0
      %2512 = vmatpush2.msra.mxu0 0.0
      %2513 = vmatprep.subr.mxu0 0.0
      %2514 = vmatpush2.msra.mxu0 0.0
      %2515 = vmatprep.subr.mxu0 0.0
      %2516 = vmatpush2.msra.mxu0 0.0
      %2517 = vmatprep.subr.mxu0 0.0
      %2518 = vmatpush2.msra.mxu0 0.0
      %2519 = vmatprep.subr.mxu0 0.0
      %2520 = vmatpush2.msra.mxu0 0.0
      %2521 = vmatprep.subr.mxu0 0.0
      %2522 = vmatpush2.msra.mxu0 0.0
      %2523 = vmatprep.subr.mxu0 0.0
      %2524 = vmatpush2.msra.mxu0 0.0
      %2525 = vmatprep.subr.mxu0 0.0
      %2526 = vmatpush2.msra.mxu0 0.0
      %2527 = vmatprep.subr.mxu0 0.0
      %2528 = vmatpush2.msra.mxu0 0.0
      %2529 = vmatprep.subr.mxu0 0.0
      %2530 = vmatpush2.msra.mxu0 0.0
      %2531 = vmatprep.mubr.f32.mxu0 0.0
      %2532 = vmatmul.mubr.f32.gmra.mxu0 %v2460
      %v2533 = vpop.f32.mrf.mxu0
      %v2534 = vadd.f32 0.0, %v2533
      %v2535 = vpop.f32.mrf.mxu0
      %2536 = vmatprep.mubr.f32.mxu0 0.0
      %2537 = vmatmul.mubr.f32.gmra.mxu0 %v2463
      %v2538 = vpop.f32.mrf.mxu0
      %v2539 = vadd.f32 0.0, %v2538
      %v2540 = vpop.f32.mrf.mxu0
      %2541 = vdwg.mxu0
      %2542 = vrot.lane.b32.xlu0 %v2132, 112
      %v2543 = vpop.permute.xlu0 %2542
      %2544 = vrot.lane.b32.xlu0 %v2135, 112
      %v2545 = vpop.permute.xlu0 %2544
      %2546 = vrot.lane.b32.xlu0 %v2132, 80
      %v2547 = vpop.permute.xlu0 %2546
      %2548 = vrot.lane.b32.xlu0 %v2135, 80
      %v2549 = vpop.permute.xlu0 %2548
      %v2550 = vsel %vm901, %v2543, 0
      %v2552 = vsel %vm901, %v2545, 0
      %v2554 = vsel %vm901, %v2547, 0
      %v2556 = vsel %vm901, %v2549, 0
      %2558 = vmatprep.subr.mxu0 0.0
      %2559 = vmatpush1.xpose.msra.mxu0 0.0
      %2560 = vmatprep.subr.mxu0 0.0
      %2561 = vmatpush1.xpose.msra.mxu0 0.0
      %2562 = vmatprep.subr.mxu0 0.0
      %2563 = vmatpush1.xpose.msra.mxu0 0.0
      %2564 = vmatprep.subr.mxu0 0.0
      %2565 = vmatpush1.xpose.msra.mxu0 0.0
      %2566 = vmatprep.subr.mxu0 0.0
      %2567 = vmatpush1.xpose.msra.mxu0 0.0
      %2568 = vmatprep.subr.mxu0 0.0
      %2569 = vmatpush1.xpose.msra.mxu0 0.0
      %2570 = vmatprep.subr.mxu0 0.0
      %2571 = vmatpush1.xpose.msra.mxu0 0.0
      %2572 = vmatprep.subr.mxu0 0.0
      %2573 = vmatpush1.xpose.msra.mxu0 0.0
      %2574 = vmatprep.subr.mxu0 0.0
      %2575 = vmatpush1.xpose.msra.mxu0 0.0
      %2576 = vmatprep.subr.mxu0 0.0
      %2577 = vmatpush1.xpose.msra.mxu0 0.0
      %2578 = vmatprep.subr.mxu0 0.0
      %2579 = vmatpush1.xpose.msra.mxu0 0.0
      %2580 = vmatprep.subr.mxu0 0.0
      %2581 = vmatpush1.xpose.msra.mxu0 0.0
      %2582 = vmatprep.subr.mxu0 0.0
      %2583 = vmatpush1.xpose.msra.mxu0 0.0
      %2584 = vmatprep.subr.mxu0 0.0
      %2585 = vmatpush1.xpose.msra.mxu0 0.0
      %2586 = vmatprep.subr.mxu0 0.0
      %2587 = vmatpush1.xpose.msra.mxu0 %v2556
      %2588 = vmatprep.subr.mxu0 0.0
      %2589 = vmatpush1.xpose.msra.mxu0 %v2554
      %2590 = vmatprep.subr.mxu0 0.0
      %2591 = vmatpush2.xpose.msra.mxu0 0.0
      %2592 = vmatprep.subr.mxu0 0.0
      %2593 = vmatpush2.xpose.msra.mxu0 0.0
      %2594 = vmatprep.subr.mxu0 0.0
      %2595 = vmatpush2.xpose.msra.mxu0 0.0
      %2596 = vmatprep.subr.mxu0 0.0
      %2597 = vmatpush2.xpose.msra.mxu0 0.0
      %2598 = vmatprep.subr.mxu0 0.0
      %2599 = vmatpush2.xpose.msra.mxu0 0.0
      %2600 = vmatprep.subr.mxu0 0.0
      %2601 = vmatpush2.xpose.msra.mxu0 0.0
      %2602 = vmatprep.subr.mxu0 0.0
      %2603 = vmatpush2.xpose.msra.mxu0 0.0
      %2604 = vmatprep.subr.mxu0 0.0
      %2605 = vmatpush2.xpose.msra.mxu0 0.0
      %2606 = vmatprep.subr.mxu0 0.0
      %2607 = vmatpush2.xpose.msra.mxu0 0.0
      %2608 = vmatprep.subr.mxu0 0.0
      %2609 = vmatpush2.xpose.msra.mxu0 0.0
      %2610 = vmatprep.subr.mxu0 0.0
      %2611 = vmatpush2.xpose.msra.mxu0 0.0
      %2612 = vmatprep.subr.mxu0 0.0
      %2613 = vmatpush2.xpose.msra.mxu0 0.0
      %2614 = vmatprep.subr.mxu0 0.0
      %2615 = vmatpush2.xpose.msra.mxu0 0.0
      %2616 = vmatprep.subr.mxu0 0.0
      %2617 = vmatpush2.xpose.msra.mxu0 0.0
      %2618 = vmatprep.subr.mxu0 0.0
      %2619 = vmatpush2.xpose.msra.mxu0 0.0
      %2620 = vmatprep.subr.mxu0 0.0
      %2621 = vmatpush2.xpose.msra.mxu0 0.0
      %2622 = vmatprep.mubr.f32.mxu0 0.0
      %2623 = vmatmul.mubr.f32.gmra.mxu0 %v2550
      %v2624 = vpop.f32.mrf.mxu0
      %v2625 = vadd.f32 0.0, %v2624
      %v2626 = vpop.f32.mrf.mxu0
      %2627 = vmatprep.mubr.f32.mxu0 0.0
      %2628 = vmatmul.mubr.f32.gmra.mxu0 %v2552
      %v2629 = vpop.f32.mrf.mxu0
      %v2630 = vadd.f32 0.0, %v2629
      %v2631 = vpop.f32.mrf.mxu0
      %2632 = vdwg.mxu0
      %v2633 = vmul.f32 %v2625, 0.35355338
      %v2634 = vmul.f32 %v2630, 0.35355338
      %v2635 = vsel %vm987, %v2633, -inf
      %2636 = vmax.xlane.f32.xlu0 %v2635
      %v2637 = vpop.xlane.xlu0 %2636
      %v2638 = vsel %vm991, %v2634, -inf
      %2639 = vmax.xlane.f32.xlu0 %v2638
      %v2640 = vpop.xlane.xlu0 %2639
      %v2641 = vsub.f32 %v2633, %v2637
      %v2642 = vsub.f32 %v2634, %v2640
      %v2643 = vmul.f32 %v2641, 1.442695
      %v2644 = vpow.pop %v2643
      %v2645 = vmul.f32 %v2642, 1.442695
      %v2646 = vpow.pop %v2645
      %v2647 = vsel %vm987, %v2644, 0.0
      %2648 = vadd.xlane.f32.xlu0 %v2647
      %v2649 = vpop.xlane.xlu0 %2648
      %v2650 = vsel %vm991, %v2646, 0.0
      %2651 = vadd.xlane.f32.xlu0 %v2650
      %v2652 = vpop.xlane.xlu0 %2651
      %v2653 = vrcp.pop %v2649
      %v2654 = vrcp.pop %v2652
      %v2655 = vmul.f32 %v2644, %v2653
      %v2656 = vmul.f32 %v2646, %v2654
      %2657 = vrot.lane.b32.xlu0 %v2132, 48
      %v2658 = vpop.permute.xlu0 %2657
      %2659 = vrot.lane.b32.xlu0 %v2135, 48
      %v2660 = vpop.permute.xlu0 %2659
      %v2663 = vsel %vm987, %v2655, 0
      %v2666 = vsel %vm987, %v2656, 0
      %v2668 = vsel %vm785, %v2660, 0
      %2670 = vmatprep.subr.mxu0 0.0
      %2671 = vmatpush1.msra.mxu0 0.0
      %2672 = vmatprep.subr.mxu0 0.0
      %2673 = vmatpush1.msra.mxu0 0.0
      %2674 = vmatprep.subr.mxu0 0.0
      %2675 = vmatpush1.msra.mxu0 0.0
      %2676 = vmatprep.subr.mxu0 0.0
      %2677 = vmatpush1.msra.mxu0 0.0
      %2678 = vmatprep.subr.mxu0 0.0
      %2679 = vmatpush1.msra.mxu0 0.0
      %2680 = vmatprep.subr.mxu0 0.0
      %2681 = vmatpush1.msra.mxu0 0.0
      %2682 = vmatprep.subr.mxu0 0.0
      %2683 = vmatpush1.msra.mxu0 0.0
      %2684 = vmatprep.subr.mxu0 0.0
      %2685 = vmatpush1.msra.mxu0 0.0
      %2686 = vmatprep.subr.mxu0 0.0
      %2687 = vmatpush1.msra.mxu0 0.0
      %2688 = vmatprep.subr.mxu0 0.0
      %2689 = vmatpush1.msra.mxu0 0.0
      %2690 = vmatprep.subr.mxu0 0.0
      %2691 = vmatpush1.msra.mxu0 0.0
      %2692 = vmatprep.subr.mxu0 0.0
      %2693 = vmatpush1.msra.mxu0 0.0
      %2694 = vmatprep.subr.mxu0 0.0
      %2695 = vmatpush1.msra.mxu0 0.0
      %2696 = vmatprep.subr.mxu0 0.0
      %2697 = vmatpush1.msra.mxu0 0.0
      %2698 = vmatprep.subr.mxu0 0.0
      %2699 = vmatpush1.msra.mxu0 %v2668
      %2700 = vmatprep.subr.mxu0 0.0
      %2701 = vmatpush1.msra.mxu0 %v2658
      %2702 = vmatprep.subr.mxu0 0.0
      %2703 = vmatpush2.msra.mxu0 0.0
      %2704 = vmatprep.subr.mxu0 0.0
      %2705 = vmatpush2.msra.mxu0 0.0
      %2706 = vmatprep.subr.mxu0 0.0
      %2707 = vmatpush2.msra.mxu0 0.0
      %2708 = vmatprep.subr.mxu0 0.0
      %2709 = vmatpush2.msra.mxu0 0.0
      %2710 = vmatprep.subr.mxu0 0.0
      %2711 = vmatpush2.msra.mxu0 0.0
      %2712 = vmatprep.subr.mxu0 0.0
      %2713 = vmatpush2.msra.mxu0 0.0
      %2714 = vmatprep.subr.mxu0 0.0
      %2715 = vmatpush2.msra.mxu0 0.0
      %2716 = vmatprep.subr.mxu0 0.0
      %2717 = vmatpush2.msra.mxu0 0.0
      %2718 = vmatprep.subr.mxu0 0.0
      %2719 = vmatpush2.msra.mxu0 0.0
      %2720 = vmatprep.subr.mxu0 0.0
      %2721 = vmatpush2.msra.mxu0 0.0
      %2722 = vmatprep.subr.mxu0 0.0
      %2723 = vmatpush2.msra.mxu0 0.0
      %2724 = vmatprep.subr.mxu0 0.0
      %2725 = vmatpush2.msra.mxu0 0.0
      %2726 = vmatprep.subr.mxu0 0.0
      %2727 = vmatpush2.msra.mxu0 0.0
      %2728 = vmatprep.subr.mxu0 0.0
      %2729 = vmatpush2.msra.mxu0 0.0
      %2730 = vmatprep.subr.mxu0 0.0
      %2731 = vmatpush2.msra.mxu0 0.0
      %2732 = vmatprep.subr.mxu0 0.0
      %2733 = vmatpush2.msra.mxu0 0.0
      %2734 = vmatprep.mubr.f32.mxu0 0.0
      %2735 = vmatmul.mubr.f32.gmra.mxu0 %v2663
      %v2736 = vpop.f32.mrf.mxu0
      %v2737 = vadd.f32 0.0, %v2736
      %v2738 = vpop.f32.mrf.mxu0
      %2739 = vmatprep.mubr.f32.mxu0 0.0
      %2740 = vmatmul.mubr.f32.gmra.mxu0 %v2666
      %v2741 = vpop.f32.mrf.mxu0
      %v2742 = vadd.f32 0.0, %v2741
      %v2743 = vpop.f32.mrf.mxu0
      %2744 = vdwg.mxu0
      %2745 = vrot.lane.b32.xlu0 %v2132, 104
      %v2746 = vpop.permute.xlu0 %2745
      %2747 = vrot.lane.b32.xlu0 %v2135, 104
      %v2748 = vpop.permute.xlu0 %2747
      %2749 = vrot.lane.b32.xlu0 %v2132, 72
      %v2750 = vpop.permute.xlu0 %2749
      %2751 = vrot.lane.b32.xlu0 %v2135, 72
      %v2752 = vpop.permute.xlu0 %2751
      %v2753 = vsel %vm901, %v2746, 0
      %v2755 = vsel %vm901, %v2748, 0
      %v2757 = vsel %vm901, %v2750, 0
      %v2759 = vsel %vm901, %v2752, 0
      %2761 = vmatprep.subr.mxu0 0.0
      %2762 = vmatpush1.xpose.msra.mxu0 0.0
      %2763 = vmatprep.subr.mxu0 0.0
      %2764 = vmatpush1.xpose.msra.mxu0 0.0
      %2765 = vmatprep.subr.mxu0 0.0
      %2766 = vmatpush1.xpose.msra.mxu0 0.0
      %2767 = vmatprep.subr.mxu0 0.0
      %2768 = vmatpush1.xpose.msra.mxu0 0.0
      %2769 = vmatprep.subr.mxu0 0.0
      %2770 = vmatpush1.xpose.msra.mxu0 0.0
      %2771 = vmatprep.subr.mxu0 0.0
      %2772 = vmatpush1.xpose.msra.mxu0 0.0
      %2773 = vmatprep.subr.mxu0 0.0
      %2774 = vmatpush1.xpose.msra.mxu0 0.0
      %2775 = vmatprep.subr.mxu0 0.0
      %2776 = vmatpush1.xpose.msra.mxu0 0.0
      %2777 = vmatprep.subr.mxu0 0.0
      %2778 = vmatpush1.xpose.msra.mxu0 0.0
      %2779 = vmatprep.subr.mxu0 0.0
      %2780 = vmatpush1.xpose.msra.mxu0 0.0
      %2781 = vmatprep.subr.mxu0 0.0
      %2782 = vmatpush1.xpose.msra.mxu0 0.0
      %2783 = vmatprep.subr.mxu0 0.0
      %2784 = vmatpush1.xpose.msra.mxu0 0.0
      %2785 = vmatprep.subr.mxu0 0.0
      %2786 = vmatpush1.xpose.msra.mxu0 0.0
      %2787 = vmatprep.subr.mxu0 0.0
      %2788 = vmatpush1.xpose.msra.mxu0 0.0
      %2789 = vmatprep.subr.mxu0 0.0
      %2790 = vmatpush1.xpose.msra.mxu0 %v2759
      %2791 = vmatprep.subr.mxu0 0.0
      %2792 = vmatpush1.xpose.msra.mxu0 %v2757
      %2793 = vmatprep.subr.mxu0 0.0
      %2794 = vmatpush2.xpose.msra.mxu0 0.0
      %2795 = vmatprep.subr.mxu0 0.0
      %2796 = vmatpush2.xpose.msra.mxu0 0.0
      %2797 = vmatprep.subr.mxu0 0.0
      %2798 = vmatpush2.xpose.msra.mxu0 0.0
      %2799 = vmatprep.subr.mxu0 0.0
      %2800 = vmatpush2.xpose.msra.mxu0 0.0
      %2801 = vmatprep.subr.mxu0 0.0
      %2802 = vmatpush2.xpose.msra.mxu0 0.0
      %2803 = vmatprep.subr.mxu0 0.0
      %2804 = vmatpush2.xpose.msra.mxu0 0.0
      %2805 = vmatprep.subr.mxu0 0.0
      %2806 = vmatpush2.xpose.msra.mxu0 0.0
      %2807 = vmatprep.subr.mxu0 0.0
      %2808 = vmatpush2.xpose.msra.mxu0 0.0
      %2809 = vmatprep.subr.mxu0 0.0
      %2810 = vmatpush2.xpose.msra.mxu0 0.0
      %2811 = vmatprep.subr.mxu0 0.0
      %2812 = vmatpush2.xpose.msra.mxu0 0.0
      %2813 = vmatprep.subr.mxu0 0.0
      %2814 = vmatpush2.xpose.msra.mxu0 0.0
      %2815 = vmatprep.subr.mxu0 0.0
      %2816 = vmatpush2.xpose.msra.mxu0 0.0
      %2817 = vmatprep.subr.mxu0 0.0
      %2818 = vmatpush2.xpose.msra.mxu0 0.0
      %2819 = vmatprep.subr.mxu0 0.0
      %2820 = vmatpush2.xpose.msra.mxu0 0.0
      %2821 = vmatprep.subr.mxu0 0.0
      %2822 = vmatpush2.xpose.msra.mxu0 0.0
      %2823 = vmatprep.subr.mxu0 0.0
      %2824 = vmatpush2.xpose.msra.mxu0 0.0
      %2825 = vmatprep.mubr.f32.mxu0 0.0
      %2826 = vmatmul.mubr.f32.gmra.mxu0 %v2753
      %v2827 = vpop.f32.mrf.mxu0
      %v2828 = vadd.f32 0.0, %v2827
      %v2829 = vpop.f32.mrf.mxu0
      %2830 = vmatprep.mubr.f32.mxu0 0.0
      %2831 = vmatmul.mubr.f32.gmra.mxu0 %v2755
      %v2832 = vpop.f32.mrf.mxu0
      %v2833 = vadd.f32 0.0, %v2832
      %v2834 = vpop.f32.mrf.mxu0
      %2835 = vdwg.mxu0
      %v2836 = vmul.f32 %v2828, 0.35355338
      %v2837 = vmul.f32 %v2833, 0.35355338
      %v2838 = vsel %vm987, %v2836, -inf
      %2839 = vmax.xlane.f32.xlu0 %v2838
      %v2840 = vpop.xlane.xlu0 %2839
      %v2841 = vsel %vm991, %v2837, -inf
      %2842 = vmax.xlane.f32.xlu0 %v2841
      %v2843 = vpop.xlane.xlu0 %2842
      %v2844 = vsub.f32 %v2836, %v2840
      %v2845 = vsub.f32 %v2837, %v2843
      %v2846 = vmul.f32 %v2844, 1.442695
      %v2847 = vpow.pop %v2846
      %v2848 = vmul.f32 %v2845, 1.442695
      %v2849 = vpow.pop %v2848
      %v2850 = vsel %vm987, %v2847, 0.0
      %2851 = vadd.xlane.f32.xlu0 %v2850
      %v2852 = vpop.xlane.xlu0 %2851
      %v2853 = vsel %vm991, %v2849, 0.0
      %2854 = vadd.xlane.f32.xlu0 %v2853
      %v2855 = vpop.xlane.xlu0 %2854
      %v2856 = vrcp.pop %v2852
      %v2857 = vrcp.pop %v2855
      %v2858 = vmul.f32 %v2847, %v2856
      %v2859 = vmul.f32 %v2849, %v2857
      %2860 = vrot.lane.b32.xlu0 %v2132, 40
      %v2861 = vpop.permute.xlu0 %2860
      %2862 = vrot.lane.b32.xlu0 %v2135, 40
      %v2863 = vpop.permute.xlu0 %2862
      %v2866 = vsel %vm987, %v2858, 0
      %v2869 = vsel %vm987, %v2859, 0
      %v2871 = vsel %vm785, %v2863, 0
      %2873 = vmatprep.subr.mxu0 0.0
      %2874 = vmatpush1.msra.mxu0 0.0
      %2875 = vmatprep.subr.mxu0 0.0
      %2876 = vmatpush1.msra.mxu0 0.0
      %2877 = vmatprep.subr.mxu0 0.0
      %2878 = vmatpush1.msra.mxu0 0.0
      %2879 = vmatprep.subr.mxu0 0.0
      %2880 = vmatpush1.msra.mxu0 0.0
      %2881 = vmatprep.subr.mxu0 0.0
      %2882 = vmatpush1.msra.mxu0 0.0
      %2883 = vmatprep.subr.mxu0 0.0
      %2884 = vmatpush1.msra.mxu0 0.0
      %2885 = vmatprep.subr.mxu0 0.0
      %2886 = vmatpush1.msra.mxu0 0.0
      %2887 = vmatprep.subr.mxu0 0.0
      %2888 = vmatpush1.msra.mxu0 0.0
      %2889 = vmatprep.subr.mxu0 0.0
      %2890 = vmatpush1.msra.mxu0 0.0
      %2891 = vmatprep.subr.mxu0 0.0
      %2892 = vmatpush1.msra.mxu0 0.0
      %2893 = vmatprep.subr.mxu0 0.0
      %2894 = vmatpush1.msra.mxu0 0.0
      %2895 = vmatprep.subr.mxu0 0.0
      %2896 = vmatpush1.msra.mxu0 0.0
      %2897 = vmatprep.subr.mxu0 0.0
      %2898 = vmatpush1.msra.mxu0 0.0
      %2899 = vmatprep.subr.mxu0 0.0
      %2900 = vmatpush1.msra.mxu0 0.0
      %2901 = vmatprep.subr.mxu0 0.0
      %2902 = vmatpush1.msra.mxu0 %v2871
      %2903 = vmatprep.subr.mxu0 0.0
      %2904 = vmatpush1.msra.mxu0 %v2861
      %2905 = vmatprep.subr.mxu0 0.0
      %2906 = vmatpush2.msra.mxu0 0.0
      %2907 = vmatprep.subr.mxu0 0.0
      %2908 = vmatpush2.msra.mxu0 0.0
      %2909 = vmatprep.subr.mxu0 0.0
      %2910 = vmatpush2.msra.mxu0 0.0
      %2911 = vmatprep.subr.mxu0 0.0
      %2912 = vmatpush2.msra.mxu0 0.0
      %2913 = vmatprep.subr.mxu0 0.0
      %2914 = vmatpush2.msra.mxu0 0.0
      %2915 = vmatprep.subr.mxu0 0.0
      %2916 = vmatpush2.msra.mxu0 0.0
      %2917 = vmatprep.subr.mxu0 0.0
      %2918 = vmatpush2.msra.mxu0 0.0
      %2919 = vmatprep.subr.mxu0 0.0
      %2920 = vmatpush2.msra.mxu0 0.0
      %2921 = vmatprep.subr.mxu0 0.0
      %2922 = vmatpush2.msra.mxu0 0.0
      %2923 = vmatprep.subr.mxu0 0.0
      %2924 = vmatpush2.msra.mxu0 0.0
      %2925 = vmatprep.subr.mxu0 0.0
      %2926 = vmatpush2.msra.mxu0 0.0
      %2927 = vmatprep.subr.mxu0 0.0
      %2928 = vmatpush2.msra.mxu0 0.0
      %2929 = vmatprep.subr.mxu0 0.0
      %2930 = vmatpush2.msra.mxu0 0.0
      %2931 = vmatprep.subr.mxu0 0.0
      %2932 = vmatpush2.msra.mxu0 0.0
      %2933 = vmatprep.subr.mxu0 0.0
      %2934 = vmatpush2.msra.mxu0 0.0
      %2935 = vmatprep.subr.mxu0 0.0
      %2936 = vmatpush2.msra.mxu0 0.0
      %2937 = vmatprep.mubr.f32.mxu0 0.0
      %2938 = vmatmul.mubr.f32.gmra.mxu0 %v2866
      %v2939 = vpop.f32.mrf.mxu0
      %v2940 = vadd.f32 0.0, %v2939
      %v2941 = vpop.f32.mrf.mxu0
      %2942 = vmatprep.mubr.f32.mxu0 0.0
      %2943 = vmatmul.mubr.f32.gmra.mxu0 %v2869
      %v2944 = vpop.f32.mrf.mxu0
      %v2945 = vadd.f32 0.0, %v2944
      %v2946 = vpop.f32.mrf.mxu0
      %2947 = vdwg.mxu0
      %2950 = vrot.lane.b32.xlu0 %v2534, 8
      %v2951 = vpop.permute.xlu0 %2950
      %2952 = vrot.lane.b32.xlu0 %v2539, 8
      %v2953 = vpop.permute.xlu0 %2952
      %2958 = vrot.lane.b32.xlu0 %v2737, 16
      %v2959 = vpop.permute.xlu0 %2958
      %2960 = vrot.lane.b32.xlu0 %v2742, 16
      %v2961 = vpop.permute.xlu0 %2960
      %2966 = vrot.lane.b32.xlu0 %v2940, 24
      %v2967 = vpop.permute.xlu0 %2966
      %2968 = vrot.lane.b32.xlu0 %v2945, 24
      %v2969 = vpop.permute.xlu0 %2968
      %v2972 = vsel %vm901, %v2331, %v2951
      %v2973 = vsel %vm901, %v2336, %v2953
      %v2974 = vsel %vm1734, %v2972, %v2959
      %v2975 = vsel %vm1734, %v2973, %v2961
      %v2976 = vsel %vm1737, %v2974, %v2967
      %v2977 = vsel %vm1737, %v2975, %v2969
      %v2978 = vpack.c.bf16 %v2977, %v2976
      %v2979 = vlaneseq
      %v2980 = vshrl.u32 %v2979, 7
      %v2981 = vsub.s32 4, %v2980
      %v2982 = vrot.slane %v2032, %v2981
      %v2987 = vunpack.c.l.b16 %v2077
      %v2988 = vunpack.c.l.b16 %v2078
      %v2989 = vunpack.c.l.b16 %v2079
      %v2990 = vunpack.c.l.b16 %v2080
      %v2991 = vpack.c.b16 %v2988, %v2987
      %v2992 = vpack.c.b16 %v2990, %v2989
      %v2996 = vsel %vm738, %v2978, 0
      %2998 = vmatprep.subr.bf16.mxu0 0
      %2999 = vmatpush1.bf16.msra.mxu0 0
      %3000 = vmatprep.subr.bf16.mxu0 0
      %3001 = vmatpush1.bf16.msra.mxu0 0
      %3002 = vmatprep.subr.bf16.mxu0 0
      %3003 = vmatpush1.bf16.msra.mxu0 0
      %3004 = vmatprep.subr.bf16.mxu0 0
      %3005 = vmatpush1.bf16.msra.mxu0 0
      %3006 = vmatprep.subr.bf16.mxu0 0
      %3007 = vmatpush1.bf16.msra.mxu0 0
      %3008 = vmatprep.subr.bf16.mxu0 0
      %3009 = vmatpush1.bf16.msra.mxu0 0
      %3010 = vmatprep.subr.bf16.mxu0 0
      %3011 = vmatpush1.bf16.msra.mxu0 %v2992
      %3012 = vmatprep.subr.bf16.mxu0 0
      %3013 = vmatpush1.bf16.msra.mxu0 %v2991
      %3014 = vmatprep.subr.bf16.mxu0 0
      %3015 = vmatpush2.bf16.msra.mxu0 0
      %3016 = vmatprep.subr.bf16.mxu0 0
      %3017 = vmatpush2.bf16.msra.mxu0 0
      %3018 = vmatprep.subr.bf16.mxu0 0
      %3019 = vmatpush2.bf16.msra.mxu0 0
      %3020 = vmatprep.subr.bf16.mxu0 0
      %3021 = vmatpush2.bf16.msra.mxu0 0
      %3022 = vmatprep.subr.bf16.mxu0 0
      %3023 = vmatpush2.bf16.msra.mxu0 0
      %3024 = vmatprep.subr.bf16.mxu0 0
      %3025 = vmatpush2.bf16.msra.mxu0 0
      %3026 = vmatprep.subr.bf16.mxu0 0
      %3027 = vmatpush2.bf16.msra.mxu0 0
      %3028 = vmatprep.subr.bf16.mxu0 0
      %3029 = vmatpush2.bf16.msra.mxu0 0
      %3030 = vmatprep.mubr.bf16.mxu0 0
      %3031 = vmatmul.mubr.bf16.gmra.mxu0 %v2996
      %v3032 = vpop.f32.mrf.mxu0
      %v3033 = vadd.f32 %v2982, %v3032
      %v3034 = vpop.f32.mrf.mxu0
      %v3035 = vpop.f32.mrf.mxu0
      %v3036 = vadd.f32 %v2982, %v3035
      %v3037 = vpop.f32.mrf.mxu0
      %3038 = vdwg.mxu0
      %v3039 = vadd.f32 %v2029, %v3033
      %v3040 = vadd.f32 %v2030, %v3036
      %v3041 = vsel %vm738, %v3039, 0.0
      %3042 = vadd.xlane.f32.xlu0 %v3041
      %v3043 = vpop.xlane.xlu0 %3042
      %v3044 = vsel %vm793, %v3040, 0.0
      %3045 = vadd.xlane.f32.xlu0 %v3044
      %v3046 = vpop.xlane.xlu0 %3045
      %v3047 = vmul.f32 %v3043, %v797
      %v3048 = vmul.f32 %v3046, %v797
      %v3049 = vsub.f32 %v3039, %v3047
      %v3050 = vsub.f32 %v3040, %v3048
      %v3051 = vmul.f32 %v3049, %v3049
      %v3052 = vmul.f32 %v3050, %v3050
      %v3053 = vsel %vm738, %v3051, 0.0
      %3054 = vadd.xlane.f32.xlu0 %v3053
      %v3055 = vpop.xlane.xlu0 %3054
      %v3056 = vsel %vm793, %v3052, 0.0
      %3057 = vadd.xlane.f32.xlu0 %v3056
      %v3058 = vpop.xlane.xlu0 %3057
      %v3059 = vmul.f32 %v3055, %v797
      %v3060 = vmul.f32 %v3058, %v797
      %v3061 = vadd.f32 %v3059, 1e-05
      %v3062 = vadd.f32 %v3060, 1e-05
      %v3063 = vrsqrt.pop %v3061
      %v3064 = vrsqrt.pop %v3062
      %v3065 = vmul.f32 %v3049, %v3063
      %v3066 = vmul.f32 %v3050, %v3064
      %v3067 = vlaneseq
      %v3068 = vshrl.u32 %v3067, 7
      %v3069 = vsub.s32 2, %v3068
      %v3070 = vrot.slane %v2032, %v3069
      %v3071 = vmul.f32 %v3065, %v3070
      %v3072 = vmul.f32 %v3066, %v3070
      %v3073 = vlaneseq
      %v3074 = vshrl.u32 %v3073, 7
      %v3075 = vsub.s32 3, %v3074
      %v3076 = vrot.slane %v2032, %v3075
      %v3077 = vadd.f32 %v3071, %v3076
      %v3078 = vadd.f32 %v3072, %v3076
      %s3079 = scalar_lea.vmem %s9, 16
      %v3080 = vld [vmem:[%s3079] sm:$0xf]
      %v3081 = vld [vmem:[%s3079 + $0x4] sm:$0xf]
      %v3082 = vld [vmem:[%s3079 + $0x8] sm:$0xf]
      %v3083 = vld [vmem:[%s3079 + $0xc] sm:$0xf]
      %s3084 = scalar_lea.vmem %s12, 1
      %v3085 = vld [vmem:[%s3084] sm:$0x1]
      %s3086 = scalar_lea.vmem %s10, 64
      %v3087 = vld [vmem:[%s3086] sm:$0xf]
      %v3088 = vld [vmem:[%s3086 + $0x4] sm:$0xf]
      %v3089 = vld [vmem:[%s3086 + $0x8] sm:$0xf]
      %v3090 = vld [vmem:[%s3086 + $0xc] sm:$0xf]
      %v3091 = vld [vmem:[%s3086 + $0x10] sm:$0xf]
      %v3092 = vld [vmem:[%s3086 + $0x14] sm:$0xf]
      %v3093 = vld [vmem:[%s3086 + $0x18] sm:$0xf]
      %v3094 = vld [vmem:[%s3086 + $0x1c] sm:$0xf]
      %v3095 = vld [vmem:[%s3086 + $0x20] sm:$0xf]
      %v3096 = vld [vmem:[%s3086 + $0x24] sm:$0xf]
      %v3097 = vld [vmem:[%s3086 + $0x28] sm:$0xf]
      %v3098 = vld [vmem:[%s3086 + $0x2c] sm:$0xf]
      %v3099 = vld [vmem:[%s3086 + $0x30] sm:$0xf]
      %v3100 = vld [vmem:[%s3086 + $0x34] sm:$0xf]
      %v3101 = vld [vmem:[%s3086 + $0x38] sm:$0xf]
      %v3102 = vld [vmem:[%s3086 + $0x3c] sm:$0xf]
      %v3103 = vpack.c.bf16 %v3078, %v3077
      %v3105 = vlaneseq
      %v3106 = vshrl.u32 %v3105, 7
      %v3107 = vsub.s32 0, %v3106
      %v3108 = vrot.slane %v3085, %v3107
      %v3114 = vunpack.c.l.b16 %v3080
      %v3115 = vunpack.c.l.b16 %v3081
      %v3116 = vunpack.c.l.b16 %v3082
      %v3117 = vunpack.c.l.b16 %v3083
      %v3118 = vpack.c.b16 %v3115, %v3114
      %v3119 = vpack.c.b16 %v3117, %v3116
      %v3123 = vsel %vm738, %v3103, 0
      %3125 = vmatprep.subr.bf16.mxu0 0
      %3126 = vmatpush1.bf16.msra.mxu0 0
      %3127 = vmatprep.subr.bf16.mxu0 0
      %3128 = vmatpush1.bf16.msra.mxu0 0
      %3129 = vmatprep.subr.bf16.mxu0 0
      %3130 = vmatpush1.bf16.msra.mxu0 0
      %3131 = vmatprep.subr.bf16.mxu0 0
      %3132 = vmatpush1.bf16.msra.mxu0 0
      %3133 = vmatprep.subr.bf16.mxu0 0
      %3134 = vmatpush1.bf16.msra.mxu0 0
      %3135 = vmatprep.subr.bf16.mxu0 0
      %3136 = vmatpush1.bf16.msra.mxu0 0
      %3137 = vmatprep.subr.bf16.mxu0 0
      %3138 = vmatpush1.bf16.msra.mxu0 %v3119
      %3139 = vmatprep.subr.bf16.mxu0 0
      %3140 = vmatpush1.bf16.msra.mxu0 %v3118
      %3141 = vmatprep.subr.bf16.mxu0 0
      %3142 = vmatpush2.bf16.msra.mxu0 0
      %3143 = vmatprep.subr.bf16.mxu0 0
      %3144 = vmatpush2.bf16.msra.mxu0 0
      %3145 = vmatprep.subr.bf16.mxu0 0
      %3146 = vmatpush2.bf16.msra.mxu0 0
      %3147 = vmatprep.subr.bf16.mxu0 0
      %3148 = vmatpush2.bf16.msra.mxu0 0
      %3149 = vmatprep.subr.bf16.mxu0 0
      %3150 = vmatpush2.bf16.msra.mxu0 0
      %3151 = vmatprep.subr.bf16.mxu0 0
      %3152 = vmatpush2.bf16.msra.mxu0 0
      %3153 = vmatprep.subr.bf16.mxu0 0
      %3154 = vmatpush2.bf16.msra.mxu0 0
      %3155 = vmatprep.subr.bf16.mxu0 0
      %3156 = vmatpush2.bf16.msra.mxu0 0
      %3157 = vmatprep.mubr.bf16.mxu0 0
      %3158 = vmatmul.mubr.bf16.gmra.mxu0 %v3123
      %v3159 = vpop.f32.mrf.mxu0
      %v3160 = vadd.f32 %v3108, %v3159
      %v3161 = vpop.f32.mrf.mxu0
      %v3162 = vpop.f32.mrf.mxu0
      %v3163 = vadd.f32 %v3108, %v3162
      %v3164 = vpop.f32.mrf.mxu0
      %3165 = vdwg.mxu0
      %v3166 = vmul.f32 %v3160, 0.5
      %v3167 = vmul.f32 %v3163, 0.5
      %v3168 = vmul.f32 %v3160, 0.70710677
      %v3169 = vmul.f32 %v3163, 0.70710677
      %v3170 = verf.f32.pop %v3168
      %v3171 = verf.f32.pop %v3169
      %v3172 = vadd.f32 %v3170, 1.0
      %v3173 = vadd.f32 %v3171, 1.0
      %v3174 = vmul.f32 %v3166, %v3172
      %v3175 = vmul.f32 %v3167, %v3173
      %v3176 = vpack.c.bf16 %v3175, %v3174
      %v3177 = vlaneseq
      %v3178 = vshrl.u32 %v3177, 7
      %v3179 = vsub.s32 5, %v3178
      %v3180 = vrot.slane %v2032, %v3179
      %v3197 = vunpack.c.l.b16 %v3087
      %v3198 = vunpack.c.l.b16 %v3088
      %v3199 = vunpack.c.l.b16 %v3089
      %v3200 = vunpack.c.l.b16 %v3090
      %v3201 = vunpack.c.l.b16 %v3091
      %v3202 = vunpack.c.l.b16 %v3092
      %v3203 = vunpack.c.l.b16 %v3093
      %v3204 = vunpack.c.l.b16 %v3094
      %v3205 = vunpack.c.l.b16 %v3095
      %v3206 = vunpack.c.l.b16 %v3096
      %v3207 = vunpack.c.l.b16 %v3097
      %v3208 = vunpack.c.l.b16 %v3098
      %v3209 = vunpack.c.l.b16 %v3099
      %v3210 = vunpack.c.l.b16 %v3100
      %v3211 = vunpack.c.l.b16 %v3101
      %v3212 = vunpack.c.l.b16 %v3102
      %v3213 = vpack.c.b16 %v3198, %v3197
      %v3214 = vpack.c.b16 %v3200, %v3199
      %v3215 = vpack.c.b16 %v3202, %v3201
      %v3216 = vpack.c.b16 %v3204, %v3203
      %v3217 = vpack.c.b16 %v3206, %v3205
      %v3218 = vpack.c.b16 %v3208, %v3207
      %v3219 = vpack.c.b16 %v3210, %v3209
      %v3220 = vpack.c.b16 %v3212, %v3211
      %3229 = vmatprep.subr.bf16.mxu0 0
      %3230 = vmatpush1.bf16.msra.mxu0 %v3220
      %3231 = vmatprep.subr.bf16.mxu0 0
      %3232 = vmatpush1.bf16.msra.mxu0 %v3219
      %3233 = vmatprep.subr.bf16.mxu0 0
      %3234 = vmatpush1.bf16.msra.mxu0 %v3218
      %3235 = vmatprep.subr.bf16.mxu0 0
      %3236 = vmatpush1.bf16.msra.mxu0 %v3217
      %3237 = vmatprep.subr.bf16.mxu0 0
      %3238 = vmatpush1.bf16.msra.mxu0 %v3216
      %3239 = vmatprep.subr.bf16.mxu0 0
      %3240 = vmatpush1.bf16.msra.mxu0 %v3215
      %3241 = vmatprep.subr.bf16.mxu0 0
      %3242 = vmatpush1.bf16.msra.mxu0 %v3214
      %3243 = vmatprep.subr.bf16.mxu0 0
      %3244 = vmatpush1.bf16.msra.mxu0 %v3213
      %3245 = vmatprep.subr.bf16.mxu0 0
      %3246 = vmatpush2.bf16.msra.mxu0 0
      %3247 = vmatprep.subr.bf16.mxu0 0
      %3248 = vmatpush2.bf16.msra.mxu0 0
      %3249 = vmatprep.subr.bf16.mxu0 0
      %3250 = vmatpush2.bf16.msra.mxu0 0
      %3251 = vmatprep.subr.bf16.mxu0 0
      %3252 = vmatpush2.bf16.msra.mxu0 0
      %3253 = vmatprep.subr.bf16.mxu0 0
      %3254 = vmatpush2.bf16.msra.mxu0 0
      %3255 = vmatprep.subr.bf16.mxu0 0
      %3256 = vmatpush2.bf16.msra.mxu0 0
      %3257 = vmatprep.subr.bf16.mxu0 0
      %3258 = vmatpush2.bf16.msra.mxu0 0
      %3259 = vmatprep.subr.bf16.mxu0 0
      %3260 = vmatpush2.bf16.msra.mxu0 0
      %3261 = vmatprep.mubr.bf16.mxu0 0
      %3262 = vmatmul.mubr.bf16.gmra.mxu0 %v3176
      %v3263 = vpop.f32.mrf.mxu0
      %v3264 = vadd.f32 %v3180, %v3263
      %v3265 = vpop.f32.mrf.mxu0
      %v3266 = vpop.f32.mrf.mxu0
      %v3267 = vadd.f32 %v3180, %v3266
      %v3268 = vpop.f32.mrf.mxu0
      %3269 = vdwg.mxu0
      %v3270 = vadd.f32 %v3039, %v3264
      %v3271 = vadd.f32 %v3040, %v3267
      %v3272 = vld [vmem:[%s703] sm:$0xff]
      %v3273 = vld [vmem:[%s703 + $0x8] sm:$0x1]
      %v3274 = vld [vmem:[%s20] sm:$0xff]
      %v3275 = vld [vmem:[%s20 + $0x8] sm:$0x7]
      %v3276 = vsel %vm738, %v3272, 0.0
      %3277 = vadd.xlane.f32.xlu0 %v3276
      %v3278 = vpop.xlane.xlu0 %3277
      %v3279 = vsel %vm793, %v3273, 0.0
      %3280 = vadd.xlane.f32.xlu0 %v3279
      %v3281 = vpop.xlane.xlu0 %3280
      %v3282 = vmul.f32 %v3278, %v797
      %v3283 = vmul.f32 %v3281, %v797
      %v3284 = vsub.f32 %v3272, %v3282
      %v3285 = vsub.f32 %v3273, %v3283
      %v3286 = vmul.f32 %v3284, %v3284
      %v3287 = vmul.f32 %v3285, %v3285
      %v3288 = vsel %vm738, %v3286, 0.0
      %3289 = vadd.xlane.f32.xlu0 %v3288
      %v3290 = vpop.xlane.xlu0 %3289
      %v3291 = vsel %vm793, %v3287, 0.0
      %3292 = vadd.xlane.f32.xlu0 %v3291
      %v3293 = vpop.xlane.xlu0 %3292
      %v3294 = vmul.f32 %v3290, %v797
      %v3295 = vmul.f32 %v3293, %v797
      %v3296 = vadd.f32 %v3294, 1e-05
      %v3297 = vadd.f32 %v3295, 1e-05
      %v3298 = vrsqrt.pop %v3296
      %v3299 = vrsqrt.pop %v3297
      %v3300 = vmul.f32 %v3284, %v3298
      %v3301 = vmul.f32 %v3285, %v3299
      %v3302 = vlaneseq
      %v3303 = vshrl.u32 %v3302, 7
      %v3304 = vsub.s32 0, %v3303
      %v3305 = vrot.slane %v3274, %v3304
      %v3306 = vmul.f32 %v3300, %v3305
      %v3307 = vmul.f32 %v3301, %v3305
      %v3308 = vlaneseq
      %v3309 = vshrl.u32 %v3308, 7
      %v3310 = vsub.s32 1, %v3309
      %v3311 = vrot.slane %v3274, %v3310
      %v3312 = vadd.f32 %v3306, %v3311
      %v3313 = vadd.f32 %v3307, %v3311
      %v3314 = vld [vmem:[%s13] sm:$0xf]
      %v3315 = vld [vmem:[%s13 + $0x4] sm:$0xf]
      %v3316 = vld [vmem:[%s13 + $0x8] sm:$0xf]
      %v3317 = vld [vmem:[%s13 + $0xc] sm:$0xf]
      %v3318 = vld [vmem:[%s14] sm:$0xf]
      %v3319 = vld [vmem:[%s14 + $0x4] sm:$0xf]
      %v3320 = vld [vmem:[%s14 + $0x8] sm:$0xf]
      %v3321 = vld [vmem:[%s14 + $0xc] sm:$0xf]
      %v3322 = vpack.c.bf16 %v3313, %v3312
      %v3327 = vunpack.c.l.b16 %v3314
      %v3328 = vunpack.c.l.b16 %v3315
      %v3329 = vunpack.c.l.b16 %v3316
      %v3330 = vunpack.c.l.b16 %v3317
      %v3331 = vpack.c.b16 %v3328, %v3327
      %v3332 = vpack.c.b16 %v3330, %v3329
      %v3336 = vsel %vm738, %v3322, 0
      %3338 = vmatprep.subr.bf16.mxu0 0
      %3339 = vmatpush1.bf16.msra.mxu0 0
      %3340 = vmatprep.subr.bf16.mxu0 0
      %3341 = vmatpush1.bf16.msra.mxu0 0
      %3342 = vmatprep.subr.bf16.mxu0 0
      %3343 = vmatpush1.bf16.msra.mxu0 0
      %3344 = vmatprep.subr.bf16.mxu0 0
      %3345 = vmatpush1.bf16.msra.mxu0 0
      %3346 = vmatprep.subr.bf16.mxu0 0
      %3347 = vmatpush1.bf16.msra.mxu0 0
      %3348 = vmatprep.subr.bf16.mxu0 0
      %3349 = vmatpush1.bf16.msra.mxu0 0
      %3350 = vmatprep.subr.bf16.mxu0 0
      %3351 = vmatpush1.bf16.msra.mxu0 %v3332
      %3352 = vmatprep.subr.bf16.mxu0 0
      %3353 = vmatpush1.bf16.msra.mxu0 %v3331
      %3354 = vmatprep.subr.bf16.mxu0 0
      %3355 = vmatpush2.bf16.msra.mxu0 0
      %3356 = vmatprep.subr.bf16.mxu0 0
      %3357 = vmatpush2.bf16.msra.mxu0 0
      %3358 = vmatprep.subr.bf16.mxu0 0
      %3359 = vmatpush2.bf16.msra.mxu0 0
      %3360 = vmatprep.subr.bf16.mxu0 0
      %3361 = vmatpush2.bf16.msra.mxu0 0
      %3362 = vmatprep.subr.bf16.mxu0 0
      %3363 = vmatpush2.bf16.msra.mxu0 0
      %3364 = vmatprep.subr.bf16.mxu0 0
      %3365 = vmatpush2.bf16.msra.mxu0 0
      %3366 = vmatprep.subr.bf16.mxu0 0
      %3367 = vmatpush2.bf16.msra.mxu0 0
      %3368 = vmatprep.subr.bf16.mxu0 0
      %3369 = vmatpush2.bf16.msra.mxu0 0
      %3370 = vmatprep.mubr.bf16.mxu0 0
      %3371 = vmatmul.mubr.bf16.gmra.mxu0 %v3336
      %v3372 = vpop.f32.mrf.mxu0
      %v3373 = vadd.f32 0.0, %v3372
      %v3374 = vpop.f32.mrf.mxu0
      %v3375 = vpop.f32.mrf.mxu0
      %v3376 = vadd.f32 0.0, %v3375
      %v3377 = vpop.f32.mrf.mxu0
      %3378 = vdwg.mxu0
      %3381 = vrot.lane.b32.xlu0 %v3373, 96
      %v3382 = vpop.permute.xlu0 %3381
      %3383 = vrot.lane.b32.xlu0 %v3376, 96
      %v3384 = vpop.permute.xlu0 %3383
      %v3385 = vsel %vm901, %v3373, 0
      %v3387 = vsel %vm901, %v3376, 0
      %v3389 = vsel %vm901, %v3382, 0
      %v3391 = vsel %vm901, %v3384, 0
      %3393 = vmatprep.subr.mxu0 0.0
      %3394 = vmatpush1.xpose.msra.mxu0 0.0
      %3395 = vmatprep.subr.mxu0 0.0
      %3396 = vmatpush1.xpose.msra.mxu0 0.0
      %3397 = vmatprep.subr.mxu0 0.0
      %3398 = vmatpush1.xpose.msra.mxu0 0.0
      %3399 = vmatprep.subr.mxu0 0.0
      %3400 = vmatpush1.xpose.msra.mxu0 0.0
      %3401 = vmatprep.subr.mxu0 0.0
      %3402 = vmatpush1.xpose.msra.mxu0 0.0
      %3403 = vmatprep.subr.mxu0 0.0
      %3404 = vmatpush1.xpose.msra.mxu0 0.0
      %3405 = vmatprep.subr.mxu0 0.0
      %3406 = vmatpush1.xpose.msra.mxu0 0.0
      %3407 = vmatprep.subr.mxu0 0.0
      %3408 = vmatpush1.xpose.msra.mxu0 0.0
      %3409 = vmatprep.subr.mxu0 0.0
      %3410 = vmatpush1.xpose.msra.mxu0 0.0
      %3411 = vmatprep.subr.mxu0 0.0
      %3412 = vmatpush1.xpose.msra.mxu0 0.0
      %3413 = vmatprep.subr.mxu0 0.0
      %3414 = vmatpush1.xpose.msra.mxu0 0.0
      %3415 = vmatprep.subr.mxu0 0.0
      %3416 = vmatpush1.xpose.msra.mxu0 0.0
      %3417 = vmatprep.subr.mxu0 0.0
      %3418 = vmatpush1.xpose.msra.mxu0 0.0
      %3419 = vmatprep.subr.mxu0 0.0
      %3420 = vmatpush1.xpose.msra.mxu0 0.0
      %3421 = vmatprep.subr.mxu0 0.0
      %3422 = vmatpush1.xpose.msra.mxu0 %v3391
      %3423 = vmatprep.subr.mxu0 0.0
      %3424 = vmatpush1.xpose.msra.mxu0 %v3389
      %3425 = vmatprep.subr.mxu0 0.0
      %3426 = vmatpush2.xpose.msra.mxu0 0.0
      %3427 = vmatprep.subr.mxu0 0.0
      %3428 = vmatpush2.xpose.msra.mxu0 0.0
      %3429 = vmatprep.subr.mxu0 0.0
      %3430 = vmatpush2.xpose.msra.mxu0 0.0
      %3431 = vmatprep.subr.mxu0 0.0
      %3432 = vmatpush2.xpose.msra.mxu0 0.0
      %3433 = vmatprep.subr.mxu0 0.0
      %3434 = vmatpush2.xpose.msra.mxu0 0.0
      %3435 = vmatprep.subr.mxu0 0.0
      %3436 = vmatpush2.xpose.msra.mxu0 0.0
      %3437 = vmatprep.subr.mxu0 0.0
      %3438 = vmatpush2.xpose.msra.mxu0 0.0
      %3439 = vmatprep.subr.mxu0 0.0
      %3440 = vmatpush2.xpose.msra.mxu0 0.0
      %3441 = vmatprep.subr.mxu0 0.0
      %3442 = vmatpush2.xpose.msra.mxu0 0.0
      %3443 = vmatprep.subr.mxu0 0.0
      %3444 = vmatpush2.xpose.msra.mxu0 0.0
      %3445 = vmatprep.subr.mxu0 0.0
      %3446 = vmatpush2.xpose.msra.mxu0 0.0
      %3447 = vmatprep.subr.mxu0 0.0
      %3448 = vmatpush2.xpose.msra.mxu0 0.0
      %3449 = vmatprep.subr.mxu0 0.0
      %3450 = vmatpush2.xpose.msra.mxu0 0.0
      %3451 = vmatprep.subr.mxu0 0.0
      %3452 = vmatpush2.xpose.msra.mxu0 0.0
      %3453 = vmatprep.subr.mxu0 0.0
      %3454 = vmatpush2.xpose.msra.mxu0 0.0
      %3455 = vmatprep.subr.mxu0 0.0
      %3456 = vmatpush2.xpose.msra.mxu0 0.0
      %3457 = vmatprep.mubr.f32.mxu0 0.0
      %3458 = vmatmul.mubr.f32.gmra.mxu0 %v3385
      %v3459 = vpop.f32.mrf.mxu0
      %v3460 = vadd.f32 0.0, %v3459
      %v3461 = vpop.f32.mrf.mxu0
      %3462 = vmatprep.mubr.f32.mxu0 0.0
      %3463 = vmatmul.mubr.f32.gmra.mxu0 %v3387
      %v3464 = vpop.f32.mrf.mxu0
      %v3465 = vadd.f32 0.0, %v3464
      %v3466 = vpop.f32.mrf.mxu0
      %3467 = vdwg.mxu0
      %v3468 = vmul.f32 %v3460, 0.35355338
      %v3469 = vmul.f32 %v3465, 0.35355338
      %v3470 = vsel %vm987, %v3468, -inf
      %3471 = vmax.xlane.f32.xlu0 %v3470
      %v3472 = vpop.xlane.xlu0 %3471
      %v3473 = vsel %vm991, %v3469, -inf
      %3474 = vmax.xlane.f32.xlu0 %v3473
      %v3475 = vpop.xlane.xlu0 %3474
      %v3476 = vsub.f32 %v3468, %v3472
      %v3477 = vsub.f32 %v3469, %v3475
      %v3478 = vmul.f32 %v3476, 1.442695
      %v3479 = vpow.pop %v3478
      %v3480 = vmul.f32 %v3477, 1.442695
      %v3481 = vpow.pop %v3480
      %v3482 = vsel %vm987, %v3479, 0.0
      %3483 = vadd.xlane.f32.xlu0 %v3482
      %v3484 = vpop.xlane.xlu0 %3483
      %v3485 = vsel %vm991, %v3481, 0.0
      %3486 = vadd.xlane.f32.xlu0 %v3485
      %v3487 = vpop.xlane.xlu0 %3486
      %v3488 = vrcp.pop %v3484
      %v3489 = vrcp.pop %v3487
      %v3490 = vmul.f32 %v3479, %v3488
      %v3491 = vmul.f32 %v3481, %v3489
      %3492 = vrot.lane.b32.xlu0 %v3373, 64
      %v3493 = vpop.permute.xlu0 %3492
      %3494 = vrot.lane.b32.xlu0 %v3376, 64
      %v3495 = vpop.permute.xlu0 %3494
      %v3498 = vsel %vm987, %v3490, 0
      %v3501 = vsel %vm987, %v3491, 0
      %v3503 = vsel %vm785, %v3495, 0
      %3505 = vmatprep.subr.mxu0 0.0
      %3506 = vmatpush1.msra.mxu0 0.0
      %3507 = vmatprep.subr.mxu0 0.0
      %3508 = vmatpush1.msra.mxu0 0.0
      %3509 = vmatprep.subr.mxu0 0.0
      %3510 = vmatpush1.msra.mxu0 0.0
      %3511 = vmatprep.subr.mxu0 0.0
      %3512 = vmatpush1.msra.mxu0 0.0
      %3513 = vmatprep.subr.mxu0 0.0
      %3514 = vmatpush1.msra.mxu0 0.0
      %3515 = vmatprep.subr.mxu0 0.0
      %3516 = vmatpush1.msra.mxu0 0.0
      %3517 = vmatprep.subr.mxu0 0.0
      %3518 = vmatpush1.msra.mxu0 0.0
      %3519 = vmatprep.subr.mxu0 0.0
      %3520 = vmatpush1.msra.mxu0 0.0
      %3521 = vmatprep.subr.mxu0 0.0
      %3522 = vmatpush1.msra.mxu0 0.0
      %3523 = vmatprep.subr.mxu0 0.0
      %3524 = vmatpush1.msra.mxu0 0.0
      %3525 = vmatprep.subr.mxu0 0.0
      %3526 = vmatpush1.msra.mxu0 0.0
      %3527 = vmatprep.subr.mxu0 0.0
      %3528 = vmatpush1.msra.mxu0 0.0
      %3529 = vmatprep.subr.mxu0 0.0
      %3530 = vmatpush1.msra.mxu0 0.0
      %3531 = vmatprep.subr.mxu0 0.0
      %3532 = vmatpush1.msra.mxu0 0.0
      %3533 = vmatprep.subr.mxu0 0.0
      %3534 = vmatpush1.msra.mxu0 %v3503
      %3535 = vmatprep.subr.mxu0 0.0
      %3536 = vmatpush1.msra.mxu0 %v3493
      %3537 = vmatprep.subr.mxu0 0.0
      %3538 = vmatpush2.msra.mxu0 0.0
      %3539 = vmatprep.subr.mxu0 0.0
      %3540 = vmatpush2.msra.mxu0 0.0
      %3541 = vmatprep.subr.mxu0 0.0
      %3542 = vmatpush2.msra.mxu0 0.0
      %3543 = vmatprep.subr.mxu0 0.0
      %3544 = vmatpush2.msra.mxu0 0.0
      %3545 = vmatprep.subr.mxu0 0.0
      %3546 = vmatpush2.msra.mxu0 0.0
      %3547 = vmatprep.subr.mxu0 0.0
      %3548 = vmatpush2.msra.mxu0 0.0
      %3549 = vmatprep.subr.mxu0 0.0
      %3550 = vmatpush2.msra.mxu0 0.0
      %3551 = vmatprep.subr.mxu0 0.0
      %3552 = vmatpush2.msra.mxu0 0.0
      %3553 = vmatprep.subr.mxu0 0.0
      %3554 = vmatpush2.msra.mxu0 0.0
      %3555 = vmatprep.subr.mxu0 0.0
      %3556 = vmatpush2.msra.mxu0 0.0
      %3557 = vmatprep.subr.mxu0 0.0
      %3558 = vmatpush2.msra.mxu0 0.0
      %3559 = vmatprep.subr.mxu0 0.0
      %3560 = vmatpush2.msra.mxu0 0.0
      %3561 = vmatprep.subr.mxu0 0.0
      %3562 = vmatpush2.msra.mxu0 0.0
      %3563 = vmatprep.subr.mxu0 0.0
      %3564 = vmatpush2.msra.mxu0 0.0
      %3565 = vmatprep.subr.mxu0 0.0
      %3566 = vmatpush2.msra.mxu0 0.0
      %3567 = vmatprep.subr.mxu0 0.0
      %3568 = vmatpush2.msra.mxu0 0.0
      %3569 = vmatprep.mubr.f32.mxu0 0.0
      %3570 = vmatmul.mubr.f32.gmra.mxu0 %v3498
      %v3571 = vpop.f32.mrf.mxu0
      %v3572 = vadd.f32 0.0, %v3571
      %v3573 = vpop.f32.mrf.mxu0
      %3574 = vmatprep.mubr.f32.mxu0 0.0
      %3575 = vmatmul.mubr.f32.gmra.mxu0 %v3501
      %v3576 = vpop.f32.mrf.mxu0
      %v3577 = vadd.f32 0.0, %v3576
      %v3578 = vpop.f32.mrf.mxu0
      %3579 = vdwg.mxu0
      %3580 = vrot.lane.b32.xlu0 %v3373, 120
      %v3581 = vpop.permute.xlu0 %3580
      %3582 = vrot.lane.b32.xlu0 %v3376, 120
      %v3583 = vpop.permute.xlu0 %3582
      %3584 = vrot.lane.b32.xlu0 %v3373, 88
      %v3585 = vpop.permute.xlu0 %3584
      %3586 = vrot.lane.b32.xlu0 %v3376, 88
      %v3587 = vpop.permute.xlu0 %3586
      %v3588 = vsel %vm901, %v3581, 0
      %v3590 = vsel %vm901, %v3583, 0
      %v3592 = vsel %vm901, %v3585, 0
      %v3594 = vsel %vm901, %v3587, 0
      %3596 = vmatprep.subr.mxu0 0.0
      %3597 = vmatpush1.xpose.msra.mxu0 0.0
      %3598 = vmatprep.subr.mxu0 0.0
      %3599 = vmatpush1.xpose.msra.mxu0 0.0
      %3600 = vmatprep.subr.mxu0 0.0
      %3601 = vmatpush1.xpose.msra.mxu0 0.0
      %3602 = vmatprep.subr.mxu0 0.0
      %3603 = vmatpush1.xpose.msra.mxu0 0.0
      %3604 = vmatprep.subr.mxu0 0.0
      %3605 = vmatpush1.xpose.msra.mxu0 0.0
      %3606 = vmatprep.subr.mxu0 0.0
      %3607 = vmatpush1.xpose.msra.mxu0 0.0
      %3608 = vmatprep.subr.mxu0 0.0
      %3609 = vmatpush1.xpose.msra.mxu0 0.0
      %3610 = vmatprep.subr.mxu0 0.0
      %3611 = vmatpush1.xpose.msra.mxu0 0.0
      %3612 = vmatprep.subr.mxu0 0.0
      %3613 = vmatpush1.xpose.msra.mxu0 0.0
      %3614 = vmatprep.subr.mxu0 0.0
      %3615 = vmatpush1.xpose.msra.mxu0 0.0
      %3616 = vmatprep.subr.mxu0 0.0
      %3617 = vmatpush1.xpose.msra.mxu0 0.0
      %3618 = vmatprep.subr.mxu0 0.0
      %3619 = vmatpush1.xpose.msra.mxu0 0.0
      %3620 = vmatprep.subr.mxu0 0.0
      %3621 = vmatpush1.xpose.msra.mxu0 0.0
      %3622 = vmatprep.subr.mxu0 0.0
      %3623 = vmatpush1.xpose.msra.mxu0 0.0
      %3624 = vmatprep.subr.mxu0 0.0
      %3625 = vmatpush1.xpose.msra.mxu0 %v3594
      %3626 = vmatprep.subr.mxu0 0.0
      %3627 = vmatpush1.xpose.msra.mxu0 %v3592
      %3628 = vmatprep.subr.mxu0 0.0
      %3629 = vmatpush2.xpose.msra.mxu0 0.0
      %3630 = vmatprep.subr.mxu0 0.0
      %3631 = vmatpush2.xpose.msra.mxu0 0.0
      %3632 = vmatprep.subr.mxu0 0.0
      %3633 = vmatpush2.xpose.msra.mxu0 0.0
      %3634 = vmatprep.subr.mxu0 0.0
      %3635 = vmatpush2.xpose.msra.mxu0 0.0
      %3636 = vmatprep.subr.mxu0 0.0
      %3637 = vmatpush2.xpose.msra.mxu0 0.0
      %3638 = vmatprep.subr.mxu0 0.0
      %3639 = vmatpush2.xpose.msra.mxu0 0.0
      %3640 = vmatprep.subr.mxu0 0.0
      %3641 = vmatpush2.xpose.msra.mxu0 0.0
      %3642 = vmatprep.subr.mxu0 0.0
      %3643 = vmatpush2.xpose.msra.mxu0 0.0
      %3644 = vmatprep.subr.mxu0 0.0
      %3645 = vmatpush2.xpose.msra.mxu0 0.0
      %3646 = vmatprep.subr.mxu0 0.0
      %3647 = vmatpush2.xpose.msra.mxu0 0.0
      %3648 = vmatprep.subr.mxu0 0.0
      %3649 = vmatpush2.xpose.msra.mxu0 0.0
      %3650 = vmatprep.subr.mxu0 0.0
      %3651 = vmatpush2.xpose.msra.mxu0 0.0
      %3652 = vmatprep.subr.mxu0 0.0
      %3653 = vmatpush2.xpose.msra.mxu0 0.0
      %3654 = vmatprep.subr.mxu0 0.0
      %3655 = vmatpush2.xpose.msra.mxu0 0.0
      %3656 = vmatprep.subr.mxu0 0.0
      %3657 = vmatpush2.xpose.msra.mxu0 0.0
      %3658 = vmatprep.subr.mxu0 0.0
      %3659 = vmatpush2.xpose.msra.mxu0 0.0
      %3660 = vmatprep.mubr.f32.mxu0 0.0
      %3661 = vmatmul.mubr.f32.gmra.mxu0 %v3588
      %v3662 = vpop.f32.mrf.mxu0
      %v3663 = vadd.f32 0.0, %v3662
      %v3664 = vpop.f32.mrf.mxu0
      %3665 = vmatprep.mubr.f32.mxu0 0.0
      %3666 = vmatmul.mubr.f32.gmra.mxu0 %v3590
      %v3667 = vpop.f32.mrf.mxu0
      %v3668 = vadd.f32 0.0, %v3667
      %v3669 = vpop.f32.mrf.mxu0
      %3670 = vdwg.mxu0
      %v3671 = vmul.f32 %v3663, 0.35355338
      %v3672 = vmul.f32 %v3668, 0.35355338
      %v3673 = vsel %vm987, %v3671, -inf
      %3674 = vmax.xlane.f32.xlu0 %v3673
      %v3675 = vpop.xlane.xlu0 %3674
      %v3676 = vsel %vm991, %v3672, -inf
      %3677 = vmax.xlane.f32.xlu0 %v3676
      %v3678 = vpop.xlane.xlu0 %3677
      %v3679 = vsub.f32 %v3671, %v3675
      %v3680 = vsub.f32 %v3672, %v3678
      %v3681 = vmul.f32 %v3679, 1.442695
      %v3682 = vpow.pop %v3681
      %v3683 = vmul.f32 %v3680, 1.442695
      %v3684 = vpow.pop %v3683
      %v3685 = vsel %vm987, %v3682, 0.0
      %3686 = vadd.xlane.f32.xlu0 %v3685
      %v3687 = vpop.xlane.xlu0 %3686
      %v3688 = vsel %vm991, %v3684, 0.0
      %3689 = vadd.xlane.f32.xlu0 %v3688
      %v3690 = vpop.xlane.xlu0 %3689
      %v3691 = vrcp.pop %v3687
      %v3692 = vrcp.pop %v3690
      %v3693 = vmul.f32 %v3682, %v3691
      %v3694 = vmul.f32 %v3684, %v3692
      %3695 = vrot.lane.b32.xlu0 %v3373, 56
      %v3696 = vpop.permute.xlu0 %3695
      %3697 = vrot.lane.b32.xlu0 %v3376, 56
      %v3698 = vpop.permute.xlu0 %3697
      %v3701 = vsel %vm987, %v3693, 0
      %v3704 = vsel %vm987, %v3694, 0
      %v3706 = vsel %vm785, %v3698, 0
      %3708 = vmatprep.subr.mxu0 0.0
      %3709 = vmatpush1.msra.mxu0 0.0
      %3710 = vmatprep.subr.mxu0 0.0
      %3711 = vmatpush1.msra.mxu0 0.0
      %3712 = vmatprep.subr.mxu0 0.0
      %3713 = vmatpush1.msra.mxu0 0.0
      %3714 = vmatprep.subr.mxu0 0.0
      %3715 = vmatpush1.msra.mxu0 0.0
      %3716 = vmatprep.subr.mxu0 0.0
      %3717 = vmatpush1.msra.mxu0 0.0
      %3718 = vmatprep.subr.mxu0 0.0
      %3719 = vmatpush1.msra.mxu0 0.0
      %3720 = vmatprep.subr.mxu0 0.0
      %3721 = vmatpush1.msra.mxu0 0.0
      %3722 = vmatprep.subr.mxu0 0.0
      %3723 = vmatpush1.msra.mxu0 0.0
      %3724 = vmatprep.subr.mxu0 0.0
      %3725 = vmatpush1.msra.mxu0 0.0
      %3726 = vmatprep.subr.mxu0 0.0
      %3727 = vmatpush1.msra.mxu0 0.0
      %3728 = vmatprep.subr.mxu0 0.0
      %3729 = vmatpush1.msra.mxu0 0.0
      %3730 = vmatprep.subr.mxu0 0.0
      %3731 = vmatpush1.msra.mxu0 0.0
      %3732 = vmatprep.subr.mxu0 0.0
      %3733 = vmatpush1.msra.mxu0 0.0
      %3734 = vmatprep.subr.mxu0 0.0
      %3735 = vmatpush1.msra.mxu0 0.0
      %3736 = vmatprep.subr.mxu0 0.0
      %3737 = vmatpush1.msra.mxu0 %v3706
      %3738 = vmatprep.subr.mxu0 0.0
      %3739 = vmatpush1.msra.mxu0 %v3696
      %3740 = vmatprep.subr.mxu0 0.0
      %3741 = vmatpush2.msra.mxu0 0.0
      %3742 = vmatprep.subr.mxu0 0.0
      %3743 = vmatpush2.msra.mxu0 0.0
      %3744 = vmatprep.subr.mxu0 0.0
      %3745 = vmatpush2.msra.mxu0 0.0
      %3746 = vmatprep.subr.mxu0 0.0
      %3747 = vmatpush2.msra.mxu0 0.0
      %3748 = vmatprep.subr.mxu0 0.0
      %3749 = vmatpush2.msra.mxu0 0.0
      %3750 = vmatprep.subr.mxu0 0.0
      %3751 = vmatpush2.msra.mxu0 0.0
      %3752 = vmatprep.subr.mxu0 0.0
      %3753 = vmatpush2.msra.mxu0 0.0
      %3754 = vmatprep.subr.mxu0 0.0
      %3755 = vmatpush2.msra.mxu0 0.0
      %3756 = vmatprep.subr.mxu0 0.0
      %3757 = vmatpush2.msra.mxu0 0.0
      %3758 = vmatprep.subr.mxu0 0.0
      %3759 = vmatpush2.msra.mxu0 0.0
      %3760 = vmatprep.subr.mxu0 0.0
      %3761 = vmatpush2.msra.mxu0 0.0
      %3762 = vmatprep.subr.mxu0 0.0
      %3763 = vmatpush2.msra.mxu0 0.0
      %3764 = vmatprep.subr.mxu0 0.0
      %3765 = vmatpush2.msra.mxu0 0.0
      %3766 = vmatprep.subr.mxu0 0.0
      %3767 = vmatpush2.msra.mxu0 0.0
      %3768 = vmatprep.subr.mxu0 0.0
      %3769 = vmatpush2.msra.mxu0 0.0
      %3770 = vmatprep.subr.mxu0 0.0
      %3771 = vmatpush2.msra.mxu0 0.0
      %3772 = vmatprep.mubr.f32.mxu0 0.0
      %3773 = vmatmul.mubr.f32.gmra.mxu0 %v3701
      %v3774 = vpop.f32.mrf.mxu0
      %v3775 = vadd.f32 0.0, %v3774
      %v3776 = vpop.f32.mrf.mxu0
      %3777 = vmatprep.mubr.f32.mxu0 0.0
      %3778 = vmatmul.mubr.f32.gmra.mxu0 %v3704
      %v3779 = vpop.f32.mrf.mxu0
      %v3780 = vadd.f32 0.0, %v3779
      %v3781 = vpop.f32.mrf.mxu0
      %3782 = vdwg.mxu0
      %3783 = vrot.lane.b32.xlu0 %v3373, 112
      %v3784 = vpop.permute.xlu0 %3783
      %3785 = vrot.lane.b32.xlu0 %v3376, 112
      %v3786 = vpop.permute.xlu0 %3785
      %3787 = vrot.lane.b32.xlu0 %v3373, 80
      %v3788 = vpop.permute.xlu0 %3787
      %3789 = vrot.lane.b32.xlu0 %v3376, 80
      %v3790 = vpop.permute.xlu0 %3789
      %v3791 = vsel %vm901, %v3784, 0
      %v3793 = vsel %vm901, %v3786, 0
      %v3795 = vsel %vm901, %v3788, 0
      %v3797 = vsel %vm901, %v3790, 0
      %3799 = vmatprep.subr.mxu0 0.0
      %3800 = vmatpush1.xpose.msra.mxu0 0.0
      %3801 = vmatprep.subr.mxu0 0.0
      %3802 = vmatpush1.xpose.msra.mxu0 0.0
      %3803 = vmatprep.subr.mxu0 0.0
      %3804 = vmatpush1.xpose.msra.mxu0 0.0
      %3805 = vmatprep.subr.mxu0 0.0
      %3806 = vmatpush1.xpose.msra.mxu0 0.0
      %3807 = vmatprep.subr.mxu0 0.0
      %3808 = vmatpush1.xpose.msra.mxu0 0.0
      %3809 = vmatprep.subr.mxu0 0.0
      %3810 = vmatpush1.xpose.msra.mxu0 0.0
      %3811 = vmatprep.subr.mxu0 0.0
      %3812 = vmatpush1.xpose.msra.mxu0 0.0
      %3813 = vmatprep.subr.mxu0 0.0
      %3814 = vmatpush1.xpose.msra.mxu0 0.0
      %3815 = vmatprep.subr.mxu0 0.0
      %3816 = vmatpush1.xpose.msra.mxu0 0.0
      %3817 = vmatprep.subr.mxu0 0.0
      %3818 = vmatpush1.xpose.msra.mxu0 0.0
      %3819 = vmatprep.subr.mxu0 0.0
      %3820 = vmatpush1.xpose.msra.mxu0 0.0
      %3821 = vmatprep.subr.mxu0 0.0
      %3822 = vmatpush1.xpose.msra.mxu0 0.0
      %3823 = vmatprep.subr.mxu0 0.0
      %3824 = vmatpush1.xpose.msra.mxu0 0.0
      %3825 = vmatprep.subr.mxu0 0.0
      %3826 = vmatpush1.xpose.msra.mxu0 0.0
      %3827 = vmatprep.subr.mxu0 0.0
      %3828 = vmatpush1.xpose.msra.mxu0 %v3797
      %3829 = vmatprep.subr.mxu0 0.0
      %3830 = vmatpush1.xpose.msra.mxu0 %v3795
      %3831 = vmatprep.subr.mxu0 0.0
      %3832 = vmatpush2.xpose.msra.mxu0 0.0
      %3833 = vmatprep.subr.mxu0 0.0
      %3834 = vmatpush2.xpose.msra.mxu0 0.0
      %3835 = vmatprep.subr.mxu0 0.0
      %3836 = vmatpush2.xpose.msra.mxu0 0.0
      %3837 = vmatprep.subr.mxu0 0.0
      %3838 = vmatpush2.xpose.msra.mxu0 0.0
      %3839 = vmatprep.subr.mxu0 0.0
      %3840 = vmatpush2.xpose.msra.mxu0 0.0
      %3841 = vmatprep.subr.mxu0 0.0
      %3842 = vmatpush2.xpose.msra.mxu0 0.0
      %3843 = vmatprep.subr.mxu0 0.0
      %3844 = vmatpush2.xpose.msra.mxu0 0.0
      %3845 = vmatprep.subr.mxu0 0.0
      %3846 = vmatpush2.xpose.msra.mxu0 0.0
      %3847 = vmatprep.subr.mxu0 0.0
      %3848 = vmatpush2.xpose.msra.mxu0 0.0
      %3849 = vmatprep.subr.mxu0 0.0
      %3850 = vmatpush2.xpose.msra.mxu0 0.0
      %3851 = vmatprep.subr.mxu0 0.0
      %3852 = vmatpush2.xpose.msra.mxu0 0.0
      %3853 = vmatprep.subr.mxu0 0.0
      %3854 = vmatpush2.xpose.msra.mxu0 0.0
      %3855 = vmatprep.subr.mxu0 0.0
      %3856 = vmatpush2.xpose.msra.mxu0 0.0
      %3857 = vmatprep.subr.mxu0 0.0
      %3858 = vmatpush2.xpose.msra.mxu0 0.0
      %3859 = vmatprep.subr.mxu0 0.0
      %3860 = vmatpush2.xpose.msra.mxu0 0.0
      %3861 = vmatprep.subr.mxu0 0.0
      %3862 = vmatpush2.xpose.msra.mxu0 0.0
      %3863 = vmatprep.mubr.f32.mxu0 0.0
      %3864 = vmatmul.mubr.f32.gmra.mxu0 %v3791
      %v3865 = vpop.f32.mrf.mxu0
      %v3866 = vadd.f32 0.0, %v3865
      %v3867 = vpop.f32.mrf.mxu0
      %3868 = vmatprep.mubr.f32.mxu0 0.0
      %3869 = vmatmul.mubr.f32.gmra.mxu0 %v3793
      %v3870 = vpop.f32.mrf.mxu0
      %v3871 = vadd.f32 0.0, %v3870
      %v3872 = vpop.f32.mrf.mxu0
      %3873 = vdwg.mxu0
      %v3874 = vmul.f32 %v3866, 0.35355338
      %v3875 = vmul.f32 %v3871, 0.35355338
      %v3876 = vsel %vm987, %v3874, -inf
      %3877 = vmax.xlane.f32.xlu0 %v3876
      %v3878 = vpop.xlane.xlu0 %3877
      %v3879 = vsel %vm991, %v3875, -inf
      %3880 = vmax.xlane.f32.xlu0 %v3879
      %v3881 = vpop.xlane.xlu0 %3880
      %v3882 = vsub.f32 %v3874, %v3878
      %v3883 = vsub.f32 %v3875, %v3881
      %v3884 = vmul.f32 %v3882, 1.442695
      %v3885 = vpow.pop %v3884
      %v3886 = vmul.f32 %v3883, 1.442695
      %v3887 = vpow.pop %v3886
      %v3888 = vsel %vm987, %v3885, 0.0
      %3889 = vadd.xlane.f32.xlu0 %v3888
      %v3890 = vpop.xlane.xlu0 %3889
      %v3891 = vsel %vm991, %v3887, 0.0
      %3892 = vadd.xlane.f32.xlu0 %v3891
      %v3893 = vpop.xlane.xlu0 %3892
      %v3894 = vrcp.pop %v3890
      %v3895 = vrcp.pop %v3893
      %v3896 = vmul.f32 %v3885, %v3894
      %v3897 = vmul.f32 %v3887, %v3895
      %3898 = vrot.lane.b32.xlu0 %v3373, 48
      %v3899 = vpop.permute.xlu0 %3898
      %3900 = vrot.lane.b32.xlu0 %v3376, 48
      %v3901 = vpop.permute.xlu0 %3900
      %v3904 = vsel %vm987, %v3896, 0
      %v3907 = vsel %vm987, %v3897, 0
      %v3909 = vsel %vm785, %v3901, 0
      %3911 = vmatprep.subr.mxu0 0.0
      %3912 = vmatpush1.msra.mxu0 0.0
      %3913 = vmatprep.subr.mxu0 0.0
      %3914 = vmatpush1.msra.mxu0 0.0
      %3915 = vmatprep.subr.mxu0 0.0
      %3916 = vmatpush1.msra.mxu0 0.0
      %3917 = vmatprep.subr.mxu0 0.0
      %3918 = vmatpush1.msra.mxu0 0.0
      %3919 = vmatprep.subr.mxu0 0.0
      %3920 = vmatpush1.msra.mxu0 0.0
      %3921 = vmatprep.subr.mxu0 0.0
      %3922 = vmatpush1.msra.mxu0 0.0
      %3923 = vmatprep.subr.mxu0 0.0
      %3924 = vmatpush1.msra.mxu0 0.0
      %3925 = vmatprep.subr.mxu0 0.0
      %3926 = vmatpush1.msra.mxu0 0.0
      %3927 = vmatprep.subr.mxu0 0.0
      %3928 = vmatpush1.msra.mxu0 0.0
      %3929 = vmatprep.subr.mxu0 0.0
      %3930 = vmatpush1.msra.mxu0 0.0
      %3931 = vmatprep.subr.mxu0 0.0
      %3932 = vmatpush1.msra.mxu0 0.0
      %3933 = vmatprep.subr.mxu0 0.0
      %3934 = vmatpush1.msra.mxu0 0.0
      %3935 = vmatprep.subr.mxu0 0.0
      %3936 = vmatpush1.msra.mxu0 0.0
      %3937 = vmatprep.subr.mxu0 0.0
      %3938 = vmatpush1.msra.mxu0 0.0
      %3939 = vmatprep.subr.mxu0 0.0
      %3940 = vmatpush1.msra.mxu0 %v3909
      %3941 = vmatprep.subr.mxu0 0.0
      %3942 = vmatpush1.msra.mxu0 %v3899
      %3943 = vmatprep.subr.mxu0 0.0
      %3944 = vmatpush2.msra.mxu0 0.0
      %3945 = vmatprep.subr.mxu0 0.0
      %3946 = vmatpush2.msra.mxu0 0.0
      %3947 = vmatprep.subr.mxu0 0.0
      %3948 = vmatpush2.msra.mxu0 0.0
      %3949 = vmatprep.subr.mxu0 0.0
      %3950 = vmatpush2.msra.mxu0 0.0
      %3951 = vmatprep.subr.mxu0 0.0
      %3952 = vmatpush2.msra.mxu0 0.0
      %3953 = vmatprep.subr.mxu0 0.0
      %3954 = vmatpush2.msra.mxu0 0.0
      %3955 = vmatprep.subr.mxu0 0.0
      %3956 = vmatpush2.msra.mxu0 0.0
      %3957 = vmatprep.subr.mxu0 0.0
      %3958 = vmatpush2.msra.mxu0 0.0
      %3959 = vmatprep.subr.mxu0 0.0
      %3960 = vmatpush2.msra.mxu0 0.0
      %3961 = vmatprep.subr.mxu0 0.0
      %3962 = vmatpush2.msra.mxu0 0.0
      %3963 = vmatprep.subr.mxu0 0.0
      %3964 = vmatpush2.msra.mxu0 0.0
      %3965 = vmatprep.subr.mxu0 0.0
      %3966 = vmatpush2.msra.mxu0 0.0
      %3967 = vmatprep.subr.mxu0 0.0
      %3968 = vmatpush2.msra.mxu0 0.0
      %3969 = vmatprep.subr.mxu0 0.0
      %3970 = vmatpush2.msra.mxu0 0.0
      %3971 = vmatprep.subr.mxu0 0.0
      %3972 = vmatpush2.msra.mxu0 0.0
      %3973 = vmatprep.subr.mxu0 0.0
      %3974 = vmatpush2.msra.mxu0 0.0
      %3975 = vmatprep.mubr.f32.mxu0 0.0
      %3976 = vmatmul.mubr.f32.gmra.mxu0 %v3904
      %v3977 = vpop.f32.mrf.mxu0
      %v3978 = vadd.f32 0.0, %v3977
      %v3979 = vpop.f32.mrf.mxu0
      %3980 = vmatprep.mubr.f32.mxu0 0.0
      %3981 = vmatmul.mubr.f32.gmra.mxu0 %v3907
      %v3982 = vpop.f32.mrf.mxu0
      %v3983 = vadd.f32 0.0, %v3982
      %v3984 = vpop.f32.mrf.mxu0
      %3985 = vdwg.mxu0
      %3986 = vrot.lane.b32.xlu0 %v3373, 104
      %v3987 = vpop.permute.xlu0 %3986
      %3988 = vrot.lane.b32.xlu0 %v3376, 104
      %v3989 = vpop.permute.xlu0 %3988
      %3990 = vrot.lane.b32.xlu0 %v3373, 72
      %v3991 = vpop.permute.xlu0 %3990
      %3992 = vrot.lane.b32.xlu0 %v3376, 72
      %v3993 = vpop.permute.xlu0 %3992
      %v3994 = vsel %vm901, %v3987, 0
      %v3996 = vsel %vm901, %v3989, 0
      %v3998 = vsel %vm901, %v3991, 0
      %v4000 = vsel %vm901, %v3993, 0
      %4002 = vmatprep.subr.mxu0 0.0
      %4003 = vmatpush1.xpose.msra.mxu0 0.0
      %4004 = vmatprep.subr.mxu0 0.0
      %4005 = vmatpush1.xpose.msra.mxu0 0.0
      %4006 = vmatprep.subr.mxu0 0.0
      %4007 = vmatpush1.xpose.msra.mxu0 0.0
      %4008 = vmatprep.subr.mxu0 0.0
      %4009 = vmatpush1.xpose.msra.mxu0 0.0
      %4010 = vmatprep.subr.mxu0 0.0
      %4011 = vmatpush1.xpose.msra.mxu0 0.0
      %4012 = vmatprep.subr.mxu0 0.0
      %4013 = vmatpush1.xpose.msra.mxu0 0.0
      %4014 = vmatprep.subr.mxu0 0.0
      %4015 = vmatpush1.xpose.msra.mxu0 0.0
      %4016 = vmatprep.subr.mxu0 0.0
      %4017 = vmatpush1.xpose.msra.mxu0 0.0
      %4018 = vmatprep.subr.mxu0 0.0
      %4019 = vmatpush1.xpose.msra.mxu0 0.0
      %4020 = vmatprep.subr.mxu0 0.0
      %4021 = vmatpush1.xpose.msra.mxu0 0.0
      %4022 = vmatprep.subr.mxu0 0.0
      %4023 = vmatpush1.xpose.msra.mxu0 0.0
      %4024 = vmatprep.subr.mxu0 0.0
      %4025 = vmatpush1.xpose.msra.mxu0 0.0
      %4026 = vmatprep.subr.mxu0 0.0
      %4027 = vmatpush1.xpose.msra.mxu0 0.0
      %4028 = vmatprep.subr.mxu0 0.0
      %4029 = vmatpush1.xpose.msra.mxu0 0.0
      %4030 = vmatprep.subr.mxu0 0.0
      %4031 = vmatpush1.xpose.msra.mxu0 %v4000
      %4032 = vmatprep.subr.mxu0 0.0
      %4033 = vmatpush1.xpose.msra.mxu0 %v3998
      %4034 = vmatprep.subr.mxu0 0.0
      %4035 = vmatpush2.xpose.msra.mxu0 0.0
      %4036 = vmatprep.subr.mxu0 0.0
      %4037 = vmatpush2.xpose.msra.mxu0 0.0
      %4038 = vmatprep.subr.mxu0 0.0
      %4039 = vmatpush2.xpose.msra.mxu0 0.0
      %4040 = vmatprep.subr.mxu0 0.0
      %4041 = vmatpush2.xpose.msra.mxu0 0.0
      %4042 = vmatprep.subr.mxu0 0.0
      %4043 = vmatpush2.xpose.msra.mxu0 0.0
      %4044 = vmatprep.subr.mxu0 0.0
      %4045 = vmatpush2.xpose.msra.mxu0 0.0
      %4046 = vmatprep.subr.mxu0 0.0
      %4047 = vmatpush2.xpose.msra.mxu0 0.0
      %4048 = vmatprep.subr.mxu0 0.0
      %4049 = vmatpush2.xpose.msra.mxu0 0.0
      %4050 = vmatprep.subr.mxu0 0.0
      %4051 = vmatpush2.xpose.msra.mxu0 0.0
      %4052 = vmatprep.subr.mxu0 0.0
      %4053 = vmatpush2.xpose.msra.mxu0 0.0
      %4054 = vmatprep.subr.mxu0 0.0
      %4055 = vmatpush2.xpose.msra.mxu0 0.0
      %4056 = vmatprep.subr.mxu0 0.0
      %4057 = vmatpush2.xpose.msra.mxu0 0.0
      %4058 = vmatprep.subr.mxu0 0.0
      %4059 = vmatpush2.xpose.msra.mxu0 0.0
      %4060 = vmatprep.subr.mxu0 0.0
      %4061 = vmatpush2.xpose.msra.mxu0 0.0
      %4062 = vmatprep.subr.mxu0 0.0
      %4063 = vmatpush2.xpose.msra.mxu0 0.0
      %4064 = vmatprep.subr.mxu0 0.0
      %4065 = vmatpush2.xpose.msra.mxu0 0.0
      %4066 = vmatprep.mubr.f32.mxu0 0.0
      %4067 = vmatmul.mubr.f32.gmra.mxu0 %v3994
      %v4068 = vpop.f32.mrf.mxu0
      %v4069 = vadd.f32 0.0, %v4068
      %v4070 = vpop.f32.mrf.mxu0
      %4071 = vmatprep.mubr.f32.mxu0 0.0
      %4072 = vmatmul.mubr.f32.gmra.mxu0 %v3996
      %v4073 = vpop.f32.mrf.mxu0
      %v4074 = vadd.f32 0.0, %v4073
      %v4075 = vpop.f32.mrf.mxu0
      %4076 = vdwg.mxu0
      %v4077 = vmul.f32 %v4069, 0.35355338
      %v4078 = vmul.f32 %v4074, 0.35355338
      %v4079 = vsel %vm987, %v4077, -inf
      %4080 = vmax.xlane.f32.xlu0 %v4079
      %v4081 = vpop.xlane.xlu0 %4080
      %v4082 = vsel %vm991, %v4078, -inf
      %4083 = vmax.xlane.f32.xlu0 %v4082
      %v4084 = vpop.xlane.xlu0 %4083
      %v4085 = vsub.f32 %v4077, %v4081
      %v4086 = vsub.f32 %v4078, %v4084
      %v4087 = vmul.f32 %v4085, 1.442695
      %v4088 = vpow.pop %v4087
      %v4089 = vmul.f32 %v4086, 1.442695
      %v4090 = vpow.pop %v4089
      %v4091 = vsel %vm987, %v4088, 0.0
      %4092 = vadd.xlane.f32.xlu0 %v4091
      %v4093 = vpop.xlane.xlu0 %4092
      %v4094 = vsel %vm991, %v4090, 0.0
      %4095 = vadd.xlane.f32.xlu0 %v4094
      %v4096 = vpop.xlane.xlu0 %4095
      %v4097 = vrcp.pop %v4093
      %v4098 = vrcp.pop %v4096
      %v4099 = vmul.f32 %v4088, %v4097
      %v4100 = vmul.f32 %v4090, %v4098
      %4101 = vrot.lane.b32.xlu0 %v3373, 40
      %v4102 = vpop.permute.xlu0 %4101
      %4103 = vrot.lane.b32.xlu0 %v3376, 40
      %v4104 = vpop.permute.xlu0 %4103
      %v4107 = vsel %vm987, %v4099, 0
      %v4110 = vsel %vm987, %v4100, 0
      %v4112 = vsel %vm785, %v4104, 0
      %4114 = vmatprep.subr.mxu0 0.0
      %4115 = vmatpush1.msra.mxu0 0.0
      %4116 = vmatprep.subr.mxu0 0.0
      %4117 = vmatpush1.msra.mxu0 0.0
      %4118 = vmatprep.subr.mxu0 0.0
      %4119 = vmatpush1.msra.mxu0 0.0
      %4120 = vmatprep.subr.mxu0 0.0
      %4121 = vmatpush1.msra.mxu0 0.0
      %4122 = vmatprep.subr.mxu0 0.0
      %4123 = vmatpush1.msra.mxu0 0.0
      %4124 = vmatprep.subr.mxu0 0.0
      %4125 = vmatpush1.msra.mxu0 0.0
      %4126 = vmatprep.subr.mxu0 0.0
      %4127 = vmatpush1.msra.mxu0 0.0
      %4128 = vmatprep.subr.mxu0 0.0
      %4129 = vmatpush1.msra.mxu0 0.0
      %4130 = vmatprep.subr.mxu0 0.0
      %4131 = vmatpush1.msra.mxu0 0.0
      %4132 = vmatprep.subr.mxu0 0.0
      %4133 = vmatpush1.msra.mxu0 0.0
      %4134 = vmatprep.subr.mxu0 0.0
      %4135 = vmatpush1.msra.mxu0 0.0
      %4136 = vmatprep.subr.mxu0 0.0
      %4137 = vmatpush1.msra.mxu0 0.0
      %4138 = vmatprep.subr.mxu0 0.0
      %4139 = vmatpush1.msra.mxu0 0.0
      %4140 = vmatprep.subr.mxu0 0.0
      %4141 = vmatpush1.msra.mxu0 0.0
      %4142 = vmatprep.subr.mxu0 0.0
      %4143 = vmatpush1.msra.mxu0 %v4112
      %4144 = vmatprep.subr.mxu0 0.0
      %4145 = vmatpush1.msra.mxu0 %v4102
      %4146 = vmatprep.subr.mxu0 0.0
      %4147 = vmatpush2.msra.mxu0 0.0
      %4148 = vmatprep.subr.mxu0 0.0
      %4149 = vmatpush2.msra.mxu0 0.0
      %4150 = vmatprep.subr.mxu0 0.0
      %4151 = vmatpush2.msra.mxu0 0.0
      %4152 = vmatprep.subr.mxu0 0.0
      %4153 = vmatpush2.msra.mxu0 0.0
      %4154 = vmatprep.subr.mxu0 0.0
      %4155 = vmatpush2.msra.mxu0 0.0
      %4156 = vmatprep.subr.mxu0 0.0
      %4157 = vmatpush2.msra.mxu0 0.0
      %4158 = vmatprep.subr.mxu0 0.0
      %4159 = vmatpush2.msra.mxu0 0.0
      %4160 = vmatprep.subr.mxu0 0.0
      %4161 = vmatpush2.msra.mxu0 0.0
      %4162 = vmatprep.subr.mxu0 0.0
      %4163 = vmatpush2.msra.mxu0 0.0
      %4164 = vmatprep.subr.mxu0 0.0
      %4165 = vmatpush2.msra.mxu0 0.0
      %4166 = vmatprep.subr.mxu0 0.0
      %4167 = vmatpush2.msra.mxu0 0.0
      %4168 = vmatprep.subr.mxu0 0.0
      %4169 = vmatpush2.msra.mxu0 0.0
      %4170 = vmatprep.subr.mxu0 0.0
      %4171 = vmatpush2.msra.mxu0 0.0
      %4172 = vmatprep.subr.mxu0 0.0
      %4173 = vmatpush2.msra.mxu0 0.0
      %4174 = vmatprep.subr.mxu0 0.0
      %4175 = vmatpush2.msra.mxu0 0.0
      %4176 = vmatprep.subr.mxu0 0.0
      %4177 = vmatpush2.msra.mxu0 0.0
      %4178 = vmatprep.mubr.f32.mxu0 0.0
      %4179 = vmatmul.mubr.f32.gmra.mxu0 %v4107
      %v4180 = vpop.f32.mrf.mxu0
      %v4181 = vadd.f32 0.0, %v4180
      %v4182 = vpop.f32.mrf.mxu0
      %4183 = vmatprep.mubr.f32.mxu0 0.0
      %4184 = vmatmul.mubr.f32.gmra.mxu0 %v4110
      %v4185 = vpop.f32.mrf.mxu0
      %v4186 = vadd.f32 0.0, %v4185
      %v4187 = vpop.f32.mrf.mxu0
      %4188 = vdwg.mxu0
      %4191 = vrot.lane.b32.xlu0 %v3775, 8
      %v4192 = vpop.permute.xlu0 %4191
      %4193 = vrot.lane.b32.xlu0 %v3780, 8
      %v4194 = vpop.permute.xlu0 %4193
      %4199 = vrot.lane.b32.xlu0 %v3978, 16
      %v4200 = vpop.permute.xlu0 %4199
      %4201 = vrot.lane.b32.xlu0 %v3983, 16
      %v4202 = vpop.permute.xlu0 %4201
      %4207 = vrot.lane.b32.xlu0 %v4181, 24
      %v4208 = vpop.permute.xlu0 %4207
      %4209 = vrot.lane.b32.xlu0 %v4186, 24
      %v4210 = vpop.permute.xlu0 %4209
      %v4213 = vsel %vm901, %v3572, %v4192
      %v4214 = vsel %vm901, %v3577, %v4194
      %v4215 = vsel %vm1734, %v4213, %v4200
      %v4216 = vsel %vm1734, %v4214, %v4202
      %v4217 = vsel %vm1737, %v4215, %v4208
      %v4218 = vsel %vm1737, %v4216, %v4210
      %v4219 = vpack.c.bf16 %v4218, %v4217
      %v4220 = vlaneseq
      %v4221 = vshrl.u32 %v4220, 7
      %v4222 = vsub.s32 0, %v4221
      %v4223 = vrot.slane %v3275, %v4222
      %v4228 = vunpack.c.l.b16 %v3318
      %v4229 = vunpack.c.l.b16 %v3319
      %v4230 = vunpack.c.l.b16 %v3320
      %v4231 = vunpack.c.l.b16 %v3321
      %v4232 = vpack.c.b16 %v4229, %v4228
      %v4233 = vpack.c.b16 %v4231, %v4230
      %v4237 = vsel %vm738, %v4219, 0
      %4239 = vmatprep.subr.bf16.mxu0 0
      %4240 = vmatpush1.bf16.msra.mxu0 0
      %4241 = vmatprep.subr.bf16.mxu0 0
      %4242 = vmatpush1.bf16.msra.mxu0 0
      %4243 = vmatprep.subr.bf16.mxu0 0
      %4244 = vmatpush1.bf16.msra.mxu0 0
      %4245 = vmatprep.subr.bf16.mxu0 0
      %4246 = vmatpush1.bf16.msra.mxu0 0
      %4247 = vmatprep.subr.bf16.mxu0 0
      %4248 = vmatpush1.bf16.msra.mxu0 0
      %4249 = vmatprep.subr.bf16.mxu0 0
      %4250 = vmatpush1.bf16.msra.mxu0 0
      %4251 = vmatprep.subr.bf16.mxu0 0
      %4252 = vmatpush1.bf16.msra.mxu0 %v4233
      %4253 = vmatprep.subr.bf16.mxu0 0
      %4254 = vmatpush1.bf16.msra.mxu0 %v4232
      %4255 = vmatprep.subr.bf16.mxu0 0
      %4256 = vmatpush2.bf16.msra.mxu0 0
      %4257 = vmatprep.subr.bf16.mxu0 0
      %4258 = vmatpush2.bf16.msra.mxu0 0
      %4259 = vmatprep.subr.bf16.mxu0 0
      %4260 = vmatpush2.bf16.msra.mxu0 0
      %4261 = vmatprep.subr.bf16.mxu0 0
      %4262 = vmatpush2.bf16.msra.mxu0 0
      %4263 = vmatprep.subr.bf16.mxu0 0
      %4264 = vmatpush2.bf16.msra.mxu0 0
      %4265 = vmatprep.subr.bf16.mxu0 0
      %4266 = vmatpush2.bf16.msra.mxu0 0
      %4267 = vmatprep.subr.bf16.mxu0 0
      %4268 = vmatpush2.bf16.msra.mxu0 0
      %4269 = vmatprep.subr.bf16.mxu0 0
      %4270 = vmatpush2.bf16.msra.mxu0 0
      %4271 = vmatprep.mubr.bf16.mxu0 0
      %4272 = vmatmul.mubr.bf16.gmra.mxu0 %v4237
      %v4273 = vpop.f32.mrf.mxu0
      %v4274 = vadd.f32 %v4223, %v4273
      %v4275 = vpop.f32.mrf.mxu0
      %v4276 = vpop.f32.mrf.mxu0
      %v4277 = vadd.f32 %v4223, %v4276
      %v4278 = vpop.f32.mrf.mxu0
      %4279 = vdwg.mxu0
      %v4280 = vadd.f32 %v3272, %v4274
      %v4281 = vadd.f32 %v3273, %v4277
      %v4282 = vsel %vm738, %v3270, 0.0
      %4283 = vadd.xlane.f32.xlu0 %v4282
      %v4284 = vpop.xlane.xlu0 %4283
      %v4285 = vsel %vm793, %v3271, 0.0
      %4286 = vadd.xlane.f32.xlu0 %v4285
      %v4287 = vpop.xlane.xlu0 %4286
      %v4288 = vmul.f32 %v4284, %v797
      %v4289 = vmul.f32 %v4287, %v797
      %v4290 = vsub.f32 %v3270, %v4288
      %v4291 = vsub.f32 %v3271, %v4289
      %v4292 = vmul.f32 %v4290, %v4290
      %v4293 = vmul.f32 %v4291, %v4291
      %v4294 = vsel %vm738, %v4292, 0.0
      %4295 = vadd.xlane.f32.xlu0 %v4294
      %v4296 = vpop.xlane.xlu0 %4295
      %v4297 = vsel %vm793, %v4293, 0.0
      %4298 = vadd.xlane.f32.xlu0 %v4297
      %v4299 = vpop.xlane.xlu0 %4298
      %v4300 = vmul.f32 %v4296, %v797
      %v4301 = vmul.f32 %v4299, %v797
      %v4302 = vadd.f32 %v4300, 1e-05
      %v4303 = vadd.f32 %v4301, 1e-05
      %v4304 = vrsqrt.pop %v4302
      %v4305 = vrsqrt.pop %v4303
      %v4306 = vmul.f32 %v4290, %v4304
      %v4307 = vmul.f32 %v4291, %v4305
      %v4308 = vlaneseq
      %v4309 = vshrl.u32 %v4308, 7
      %v4310 = vsub.s32 2, %v4309
      %v4311 = vrot.slane %v3274, %v4310
      %v4312 = vmul.f32 %v4306, %v4311
      %v4313 = vmul.f32 %v4307, %v4311
      %v4314 = vlaneseq
      %v4315 = vshrl.u32 %v4314, 7
      %v4316 = vsub.s32 3, %v4315
      %v4317 = vrot.slane %v3274, %v4316
      %v4318 = vadd.f32 %v4312, %v4317
      %v4319 = vadd.f32 %v4313, %v4317
      %v4320 = vsel %vm738, %v4280, 0.0
      %4321 = vadd.xlane.f32.xlu0 %v4320
      %v4322 = vpop.xlane.xlu0 %4321
      %v4323 = vsel %vm793, %v4281, 0.0
      %4324 = vadd.xlane.f32.xlu0 %v4323
      %v4325 = vpop.xlane.xlu0 %4324
      %v4326 = vmul.f32 %v4322, %v797
      %v4327 = vmul.f32 %v4325, %v797
      %v4328 = vsub.f32 %v4280, %v4326
      %v4329 = vsub.f32 %v4281, %v4327
      %v4330 = vmul.f32 %v4328, %v4328
      %v4331 = vmul.f32 %v4329, %v4329
      %v4332 = vsel %vm738, %v4330, 0.0
      %4333 = vadd.xlane.f32.xlu0 %v4332
      %v4334 = vpop.xlane.xlu0 %4333
      %v4335 = vsel %vm793, %v4331, 0.0
      %4336 = vadd.xlane.f32.xlu0 %v4335
      %v4337 = vpop.xlane.xlu0 %4336
      %v4338 = vmul.f32 %v4334, %v797
      %v4339 = vmul.f32 %v4337, %v797
      %v4340 = vadd.f32 %v4338, 1e-05
      %v4341 = vadd.f32 %v4339, 1e-05
      %v4342 = vrsqrt.pop %v4340
      %v4343 = vrsqrt.pop %v4341
      %v4344 = vmul.f32 %v4328, %v4342
      %v4345 = vmul.f32 %v4329, %v4343
      %v4346 = vlaneseq
      %v4347 = vshrl.u32 %v4346, 7
      %v4348 = vsub.s32 4, %v4347
      %v4349 = vrot.slane %v3274, %v4348
      %v4350 = vmul.f32 %v4344, %v4349
      %v4351 = vmul.f32 %v4345, %v4349
      %v4352 = vlaneseq
      %v4353 = vshrl.u32 %v4352, 7
      %v4354 = vsub.s32 5, %v4353
      %v4355 = vrot.slane %v3274, %v4354
      %v4356 = vadd.f32 %v4350, %v4355
      %v4357 = vadd.f32 %v4351, %v4355
      %v4358 = vld [vmem:[%s16] sm:$0xf]
      %v4359 = vld [vmem:[%s16 + $0x4] sm:$0xf]
      %v4360 = vld [vmem:[%s16 + $0x8] sm:$0xf]
      %v4361 = vld [vmem:[%s16 + $0xc] sm:$0xf]
      %v4362 = vld [vmem:[%s15] sm:$0xf]
      %v4363 = vld [vmem:[%s15 + $0x4] sm:$0xf]
      %v4364 = vld [vmem:[%s15 + $0x8] sm:$0xf]
      %v4365 = vld [vmem:[%s15 + $0xc] sm:$0xf]
      %v4366 = vld [vmem:[%s17] sm:$0xf]
      %v4367 = vld [vmem:[%s17 + $0x4] sm:$0xf]
      %v4368 = vld [vmem:[%s17 + $0x8] sm:$0xf]
      %v4369 = vld [vmem:[%s17 + $0xc] sm:$0xf]
      %v4370 = vpack.c.bf16 %v4357, %v4356
      %v4375 = vunpack.c.l.b16 %v4358
      %v4376 = vunpack.c.l.b16 %v4359
      %v4377 = vunpack.c.l.b16 %v4360
      %v4378 = vunpack.c.l.b16 %v4361
      %v4379 = vpack.c.b16 %v4376, %v4375
      %v4380 = vpack.c.b16 %v4378, %v4377
      %v4384 = vsel %vm738, %v4370, 0
      %4386 = vmatprep.subr.bf16.mxu0 0
      %4387 = vmatpush1.bf16.msra.mxu0 0
      %4388 = vmatprep.subr.bf16.mxu0 0
      %4389 = vmatpush1.bf16.msra.mxu0 0
      %4390 = vmatprep.subr.bf16.mxu0 0
      %4391 = vmatpush1.bf16.msra.mxu0 0
      %4392 = vmatprep.subr.bf16.mxu0 0
      %4393 = vmatpush1.bf16.msra.mxu0 0
      %4394 = vmatprep.subr.bf16.mxu0 0
      %4395 = vmatpush1.bf16.msra.mxu0 0
      %4396 = vmatprep.subr.bf16.mxu0 0
      %4397 = vmatpush1.bf16.msra.mxu0 0
      %4398 = vmatprep.subr.bf16.mxu0 0
      %4399 = vmatpush1.bf16.msra.mxu0 %v4380
      %4400 = vmatprep.subr.bf16.mxu0 0
      %4401 = vmatpush1.bf16.msra.mxu0 %v4379
      %4402 = vmatprep.subr.bf16.mxu0 0
      %4403 = vmatpush2.bf16.msra.mxu0 0
      %4404 = vmatprep.subr.bf16.mxu0 0
      %4405 = vmatpush2.bf16.msra.mxu0 0
      %4406 = vmatprep.subr.bf16.mxu0 0
      %4407 = vmatpush2.bf16.msra.mxu0 0
      %4408 = vmatprep.subr.bf16.mxu0 0
      %4409 = vmatpush2.bf16.msra.mxu0 0
      %4410 = vmatprep.subr.bf16.mxu0 0
      %4411 = vmatpush2.bf16.msra.mxu0 0
      %4412 = vmatprep.subr.bf16.mxu0 0
      %4413 = vmatpush2.bf16.msra.mxu0 0
      %4414 = vmatprep.subr.bf16.mxu0 0
      %4415 = vmatpush2.bf16.msra.mxu0 0
      %4416 = vmatprep.subr.bf16.mxu0 0
      %4417 = vmatpush2.bf16.msra.mxu0 0
      %4418 = vmatprep.mubr.bf16.mxu0 0
      %4419 = vmatmul.mubr.bf16.gmra.mxu0 %v4384
      %v4420 = vpop.f32.mrf.mxu0
      %v4421 = vadd.f32 0.0, %v4420
      %v4422 = vpop.f32.mrf.mxu0
      %v4423 = vpop.f32.mrf.mxu0
      %v4424 = vadd.f32 0.0, %v4423
      %v4425 = vpop.f32.mrf.mxu0
      %4426 = vdwg.mxu0
      %v4427 = vpack.c.bf16 %v4319, %v4318
      %v4432 = vunpack.c.l.b16 %v4362
      %v4433 = vunpack.c.l.b16 %v4363
      %v4434 = vunpack.c.l.b16 %v4364
      %v4435 = vunpack.c.l.b16 %v4365
      %v4436 = vpack.c.b16 %v4433, %v4432
      %v4437 = vpack.c.b16 %v4435, %v4434
      %v4441 = vsel %vm738, %v4427, 0
      %4443 = vmatprep.subr.bf16.mxu0 0
      %4444 = vmatpush1.bf16.msra.mxu0 0
      %4445 = vmatprep.subr.bf16.mxu0 0
      %4446 = vmatpush1.bf16.msra.mxu0 0
      %4447 = vmatprep.subr.bf16.mxu0 0
      %4448 = vmatpush1.bf16.msra.mxu0 0
      %4449 = vmatprep.subr.bf16.mxu0 0
      %4450 = vmatpush1.bf16.msra.mxu0 0
      %4451 = vmatprep.subr.bf16.mxu0 0
      %4452 = vmatpush1.bf16.msra.mxu0 0
      %4453 = vmatprep.subr.bf16.mxu0 0
      %4454 = vmatpush1.bf16.msra.mxu0 0
      %4455 = vmatprep.subr.bf16.mxu0 0
      %4456 = vmatpush1.bf16.msra.mxu0 %v4437
      %4457 = vmatprep.subr.bf16.mxu0 0
      %4458 = vmatpush1.bf16.msra.mxu0 %v4436
      %4459 = vmatprep.subr.bf16.mxu0 0
      %4460 = vmatpush2.bf16.msra.mxu0 0
      %4461 = vmatprep.subr.bf16.mxu0 0
      %4462 = vmatpush2.bf16.msra.mxu0 0
      %4463 = vmatprep.subr.bf16.mxu0 0
      %4464 = vmatpush2.bf16.msra.mxu0 0
      %4465 = vmatprep.subr.bf16.mxu0 0
      %4466 = vmatpush2.bf16.msra.mxu0 0
      %4467 = vmatprep.subr.bf16.mxu0 0
      %4468 = vmatpush2.bf16.msra.mxu0 0
      %4469 = vmatprep.subr.bf16.mxu0 0
      %4470 = vmatpush2.bf16.msra.mxu0 0
      %4471 = vmatprep.subr.bf16.mxu0 0
      %4472 = vmatpush2.bf16.msra.mxu0 0
      %4473 = vmatprep.subr.bf16.mxu0 0
      %4474 = vmatpush2.bf16.msra.mxu0 0
      %4475 = vmatprep.mubr.bf16.mxu0 0
      %4476 = vmatmul.mubr.bf16.gmra.mxu0 %v4441
      %v4477 = vpop.f32.mrf.mxu0
      %v4478 = vadd.f32 0.0, %v4477
      %v4479 = vpop.f32.mrf.mxu0
      %v4480 = vpop.f32.mrf.mxu0
      %v4481 = vadd.f32 0.0, %v4480
      %v4482 = vpop.f32.mrf.mxu0
      %4483 = vdwg.mxu0
      %v4485 = vsel %vm901, %v4421, 0
      %v4488 = vsel %vm901, %v4424, 0
      %v4491 = vsel %vm901, %v4478, 0
      %v4494 = vsel %vm901, %v4481, 0
      %4496 = vmatprep.subr.mxu0 0.0
      %4497 = vmatpush1.xpose.msra.mxu0 0.0
      %4498 = vmatprep.subr.mxu0 0.0
      %4499 = vmatpush1.xpose.msra.mxu0 0.0
      %4500 = vmatprep.subr.mxu0 0.0
      %4501 = vmatpush1.xpose.msra.mxu0 0.0
      %4502 = vmatprep.subr.mxu0 0.0
      %4503 = vmatpush1.xpose.msra.mxu0 0.0
      %4504 = vmatprep.subr.mxu0 0.0
      %4505 = vmatpush1.xpose.msra.mxu0 0.0
      %4506 = vmatprep.subr.mxu0 0.0
      %4507 = vmatpush1.xpose.msra.mxu0 0.0
      %4508 = vmatprep.subr.mxu0 0.0
      %4509 = vmatpush1.xpose.msra.mxu0 0.0
      %4510 = vmatprep.subr.mxu0 0.0
      %4511 = vmatpush1.xpose.msra.mxu0 0.0
      %4512 = vmatprep.subr.mxu0 0.0
      %4513 = vmatpush1.xpose.msra.mxu0 0.0
      %4514 = vmatprep.subr.mxu0 0.0
      %4515 = vmatpush1.xpose.msra.mxu0 0.0
      %4516 = vmatprep.subr.mxu0 0.0
      %4517 = vmatpush1.xpose.msra.mxu0 0.0
      %4518 = vmatprep.subr.mxu0 0.0
      %4519 = vmatpush1.xpose.msra.mxu0 0.0
      %4520 = vmatprep.subr.mxu0 0.0
      %4521 = vmatpush1.xpose.msra.mxu0 0.0
      %4522 = vmatprep.subr.mxu0 0.0
      %4523 = vmatpush1.xpose.msra.mxu0 0.0
      %4524 = vmatprep.subr.mxu0 0.0
      %4525 = vmatpush1.xpose.msra.mxu0 %v4494
      %4526 = vmatprep.subr.mxu0 0.0
      %4527 = vmatpush1.xpose.msra.mxu0 %v4491
      %4528 = vmatprep.subr.mxu0 0.0
      %4529 = vmatpush2.xpose.msra.mxu0 0.0
      %4530 = vmatprep.subr.mxu0 0.0
      %4531 = vmatpush2.xpose.msra.mxu0 0.0
      %4532 = vmatprep.subr.mxu0 0.0
      %4533 = vmatpush2.xpose.msra.mxu0 0.0
      %4534 = vmatprep.subr.mxu0 0.0
      %4535 = vmatpush2.xpose.msra.mxu0 0.0
      %4536 = vmatprep.subr.mxu0 0.0
      %4537 = vmatpush2.xpose.msra.mxu0 0.0
      %4538 = vmatprep.subr.mxu0 0.0
      %4539 = vmatpush2.xpose.msra.mxu0 0.0
      %4540 = vmatprep.subr.mxu0 0.0
      %4541 = vmatpush2.xpose.msra.mxu0 0.0
      %4542 = vmatprep.subr.mxu0 0.0
      %4543 = vmatpush2.xpose.msra.mxu0 0.0
      %4544 = vmatprep.subr.mxu0 0.0
      %4545 = vmatpush2.xpose.msra.mxu0 0.0
      %4546 = vmatprep.subr.mxu0 0.0
      %4547 = vmatpush2.xpose.msra.mxu0 0.0
      %4548 = vmatprep.subr.mxu0 0.0
      %4549 = vmatpush2.xpose.msra.mxu0 0.0
      %4550 = vmatprep.subr.mxu0 0.0
      %4551 = vmatpush2.xpose.msra.mxu0 0.0
      %4552 = vmatprep.subr.mxu0 0.0
      %4553 = vmatpush2.xpose.msra.mxu0 0.0
      %4554 = vmatprep.subr.mxu0 0.0
      %4555 = vmatpush2.xpose.msra.mxu0 0.0
      %4556 = vmatprep.subr.mxu0 0.0
      %4557 = vmatpush2.xpose.msra.mxu0 0.0
      %4558 = vmatprep.subr.mxu0 0.0
      %4559 = vmatpush2.xpose.msra.mxu0 0.0
      %4560 = vmatprep.mubr.f32.mxu0 0.0
      %4561 = vmatmul.mubr.f32.gmra.mxu0 %v4485
      %v4562 = vpop.f32.mrf.mxu0
      %v4563 = vadd.f32 0.0, %v4562
      %v4564 = vpop.f32.mrf.mxu0
      %4565 = vmatprep.mubr.f32.mxu0 0.0
      %4566 = vmatmul.mubr.f32.gmra.mxu0 %v4488
      %v4567 = vpop.f32.mrf.mxu0
      %v4568 = vadd.f32 0.0, %v4567
      %v4569 = vpop.f32.mrf.mxu0
      %4570 = vdwg.mxu0
      %v4571 = vmul.f32 %v4563, 0.35355338
      %v4572 = vmul.f32 %v4568, 0.35355338
      %v4573 = vsel %vm987, %v4571, -inf
      %4574 = vmax.xlane.f32.xlu0 %v4573
      %v4575 = vpop.xlane.xlu0 %4574
      %v4576 = vsel %vm991, %v4572, -inf
      %4577 = vmax.xlane.f32.xlu0 %v4576
      %v4578 = vpop.xlane.xlu0 %4577
      %v4579 = vsub.f32 %v4571, %v4575
      %v4580 = vsub.f32 %v4572, %v4578
      %v4581 = vmul.f32 %v4579, 1.442695
      %v4582 = vpow.pop %v4581
      %v4583 = vmul.f32 %v4580, 1.442695
      %v4584 = vpow.pop %v4583
      %v4585 = vsel %vm987, %v4582, 0.0
      %4586 = vadd.xlane.f32.xlu0 %v4585
      %v4587 = vpop.xlane.xlu0 %4586
      %v4588 = vsel %vm991, %v4584, 0.0
      %4589 = vadd.xlane.f32.xlu0 %v4588
      %v4590 = vpop.xlane.xlu0 %4589
      %v4591 = vrcp.pop %v4587
      %v4592 = vrcp.pop %v4590
      %v4593 = vmul.f32 %v4582, %v4591
      %v4594 = vmul.f32 %v4584, %v4592
      %4595 = vrot.lane.b32.xlu0 %v4478, 96
      %v4596 = vpop.permute.xlu0 %4595
      %4597 = vrot.lane.b32.xlu0 %v4481, 96
      %v4598 = vpop.permute.xlu0 %4597
      %v4601 = vsel %vm987, %v4593, 0
      %v4604 = vsel %vm987, %v4594, 0
      %v4606 = vsel %vm785, %v4598, 0
      %4608 = vmatprep.subr.mxu0 0.0
      %4609 = vmatpush1.msra.mxu0 0.0
      %4610 = vmatprep.subr.mxu0 0.0
      %4611 = vmatpush1.msra.mxu0 0.0
      %4612 = vmatprep.subr.mxu0 0.0
      %4613 = vmatpush1.msra.mxu0 0.0
      %4614 = vmatprep.subr.mxu0 0.0
      %4615 = vmatpush1.msra.mxu0 0.0
      %4616 = vmatprep.subr.mxu0 0.0
      %4617 = vmatpush1.msra.mxu0 0.0
      %4618 = vmatprep.subr.mxu0 0.0
      %4619 = vmatpush1.msra.mxu0 0.0
      %4620 = vmatprep.subr.mxu0 0.0
      %4621 = vmatpush1.msra.mxu0 0.0
      %4622 = vmatprep.subr.mxu0 0.0
      %4623 = vmatpush1.msra.mxu0 0.0
      %4624 = vmatprep.subr.mxu0 0.0
      %4625 = vmatpush1.msra.mxu0 0.0
      %4626 = vmatprep.subr.mxu0 0.0
      %4627 = vmatpush1.msra.mxu0 0.0
      %4628 = vmatprep.subr.mxu0 0.0
      %4629 = vmatpush1.msra.mxu0 0.0
      %4630 = vmatprep.subr.mxu0 0.0
      %4631 = vmatpush1.msra.mxu0 0.0
      %4632 = vmatprep.subr.mxu0 0.0
      %4633 = vmatpush1.msra.mxu0 0.0
      %4634 = vmatprep.subr.mxu0 0.0
      %4635 = vmatpush1.msra.mxu0 0.0
      %4636 = vmatprep.subr.mxu0 0.0
      %4637 = vmatpush1.msra.mxu0 %v4606
      %4638 = vmatprep.subr.mxu0 0.0
      %4639 = vmatpush1.msra.mxu0 %v4596
      %4640 = vmatprep.subr.mxu0 0.0
      %4641 = vmatpush2.msra.mxu0 0.0
      %4642 = vmatprep.subr.mxu0 0.0
      %4643 = vmatpush2.msra.mxu0 0.0
      %4644 = vmatprep.subr.mxu0 0.0
      %4645 = vmatpush2.msra.mxu0 0.0
      %4646 = vmatprep.subr.mxu0 0.0
      %4647 = vmatpush2.msra.mxu0 0.0
      %4648 = vmatprep.subr.mxu0 0.0
      %4649 = vmatpush2.msra.mxu0 0.0
      %4650 = vmatprep.subr.mxu0 0.0
      %4651 = vmatpush2.msra.mxu0 0.0
      %4652 = vmatprep.subr.mxu0 0.0
      %4653 = vmatpush2.msra.mxu0 0.0
      %4654 = vmatprep.subr.mxu0 0.0
      %4655 = vmatpush2.msra.mxu0 0.0
      %4656 = vmatprep.subr.mxu0 0.0
      %4657 = vmatpush2.msra.mxu0 0.0
      %4658 = vmatprep.subr.mxu0 0.0
      %4659 = vmatpush2.msra.mxu0 0.0
      %4660 = vmatprep.subr.mxu0 0.0
      %4661 = vmatpush2.msra.mxu0 0.0
      %4662 = vmatprep.subr.mxu0 0.0
      %4663 = vmatpush2.msra.mxu0 0.0
      %4664 = vmatprep.subr.mxu0 0.0
      %4665 = vmatpush2.msra.mxu0 0.0
      %4666 = vmatprep.subr.mxu0 0.0
      %4667 = vmatpush2.msra.mxu0 0.0
      %4668 = vmatprep.subr.mxu0 0.0
      %4669 = vmatpush2.msra.mxu0 0.0
      %4670 = vmatprep.subr.mxu0 0.0
      %4671 = vmatpush2.msra.mxu0 0.0
      %4672 = vmatprep.mubr.f32.mxu0 0.0
      %4673 = vmatmul.mubr.f32.gmra.mxu0 %v4601
      %v4674 = vpop.f32.mrf.mxu0
      %v4675 = vadd.f32 0.0, %v4674
      %v4676 = vpop.f32.mrf.mxu0
      %4677 = vmatprep.mubr.f32.mxu0 0.0
      %4678 = vmatmul.mubr.f32.gmra.mxu0 %v4604
      %v4679 = vpop.f32.mrf.mxu0
      %v4680 = vadd.f32 0.0, %v4679
      %v4681 = vpop.f32.mrf.mxu0
      %4682 = vdwg.mxu0
      %4683 = vrot.lane.b32.xlu0 %v4421, 120
      %v4684 = vpop.permute.xlu0 %4683
      %4685 = vrot.lane.b32.xlu0 %v4424, 120
      %v4686 = vpop.permute.xlu0 %4685
      %4687 = vrot.lane.b32.xlu0 %v4478, 120
      %v4688 = vpop.permute.xlu0 %4687
      %4689 = vrot.lane.b32.xlu0 %v4481, 120
      %v4690 = vpop.permute.xlu0 %4689
      %v4691 = vsel %vm901, %v4684, 0
      %v4693 = vsel %vm901, %v4686, 0
      %v4695 = vsel %vm901, %v4688, 0
      %v4697 = vsel %vm901, %v4690, 0
      %4699 = vmatprep.subr.mxu0 0.0
      %4700 = vmatpush1.xpose.msra.mxu0 0.0
      %4701 = vmatprep.subr.mxu0 0.0
      %4702 = vmatpush1.xpose.msra.mxu0 0.0
      %4703 = vmatprep.subr.mxu0 0.0
      %4704 = vmatpush1.xpose.msra.mxu0 0.0
      %4705 = vmatprep.subr.mxu0 0.0
      %4706 = vmatpush1.xpose.msra.mxu0 0.0
      %4707 = vmatprep.subr.mxu0 0.0
      %4708 = vmatpush1.xpose.msra.mxu0 0.0
      %4709 = vmatprep.subr.mxu0 0.0
      %4710 = vmatpush1.xpose.msra.mxu0 0.0
      %4711 = vmatprep.subr.mxu0 0.0
      %4712 = vmatpush1.xpose.msra.mxu0 0.0
      %4713 = vmatprep.subr.mxu0 0.0
      %4714 = vmatpush1.xpose.msra.mxu0 0.0
      %4715 = vmatprep.subr.mxu0 0.0
      %4716 = vmatpush1.xpose.msra.mxu0 0.0
      %4717 = vmatprep.subr.mxu0 0.0
      %4718 = vmatpush1.xpose.msra.mxu0 0.0
      %4719 = vmatprep.subr.mxu0 0.0
      %4720 = vmatpush1.xpose.msra.mxu0 0.0
      %4721 = vmatprep.subr.mxu0 0.0
      %4722 = vmatpush1.xpose.msra.mxu0 0.0
      %4723 = vmatprep.subr.mxu0 0.0
      %4724 = vmatpush1.xpose.msra.mxu0 0.0
      %4725 = vmatprep.subr.mxu0 0.0
      %4726 = vmatpush1.xpose.msra.mxu0 0.0
      %4727 = vmatprep.subr.mxu0 0.0
      %4728 = vmatpush1.xpose.msra.mxu0 %v4697
      %4729 = vmatprep.subr.mxu0 0.0
      %4730 = vmatpush1.xpose.msra.mxu0 %v4695
      %4731 = vmatprep.subr.mxu0 0.0
      %4732 = vmatpush2.xpose.msra.mxu0 0.0
      %4733 = vmatprep.subr.mxu0 0.0
      %4734 = vmatpush2.xpose.msra.mxu0 0.0
      %4735 = vmatprep.subr.mxu0 0.0
      %4736 = vmatpush2.xpose.msra.mxu0 0.0
      %4737 = vmatprep.subr.mxu0 0.0
      %4738 = vmatpush2.xpose.msra.mxu0 0.0
      %4739 = vmatprep.subr.mxu0 0.0
      %4740 = vmatpush2.xpose.msra.mxu0 0.0
      %4741 = vmatprep.subr.mxu0 0.0
      %4742 = vmatpush2.xpose.msra.mxu0 0.0
      %4743 = vmatprep.subr.mxu0 0.0
      %4744 = vmatpush2.xpose.msra.mxu0 0.0
      %4745 = vmatprep.subr.mxu0 0.0
      %4746 = vmatpush2.xpose.msra.mxu0 0.0
      %4747 = vmatprep.subr.mxu0 0.0
      %4748 = vmatpush2.xpose.msra.mxu0 0.0
      %4749 = vmatprep.subr.mxu0 0.0
      %4750 = vmatpush2.xpose.msra.mxu0 0.0
      %4751 = vmatprep.subr.mxu0 0.0
      %4752 = vmatpush2.xpose.msra.mxu0 0.0
      %4753 = vmatprep.subr.mxu0 0.0
      %4754 = vmatpush2.xpose.msra.mxu0 0.0
      %4755 = vmatprep.subr.mxu0 0.0
      %4756 = vmatpush2.xpose.msra.mxu0 0.0
      %4757 = vmatprep.subr.mxu0 0.0
      %4758 = vmatpush2.xpose.msra.mxu0 0.0
      %4759 = vmatprep.subr.mxu0 0.0
      %4760 = vmatpush2.xpose.msra.mxu0 0.0
      %4761 = vmatprep.subr.mxu0 0.0
      %4762 = vmatpush2.xpose.msra.mxu0 0.0
      %4763 = vmatprep.mubr.f32.mxu0 0.0
      %4764 = vmatmul.mubr.f32.gmra.mxu0 %v4691
      %v4765 = vpop.f32.mrf.mxu0
      %v4766 = vadd.f32 0.0, %v4765
      %v4767 = vpop.f32.mrf.mxu0
      %4768 = vmatprep.mubr.f32.mxu0 0.0
      %4769 = vmatmul.mubr.f32.gmra.mxu0 %v4693
      %v4770 = vpop.f32.mrf.mxu0
      %v4771 = vadd.f32 0.0, %v4770
      %v4772 = vpop.f32.mrf.mxu0
      %4773 = vdwg.mxu0
      %v4774 = vmul.f32 %v4766, 0.35355338
      %v4775 = vmul.f32 %v4771, 0.35355338
      %v4776 = vsel %vm987, %v4774, -inf
      %4777 = vmax.xlane.f32.xlu0 %v4776
      %v4778 = vpop.xlane.xlu0 %4777
      %v4779 = vsel %vm991, %v4775, -inf
      %4780 = vmax.xlane.f32.xlu0 %v4779
      %v4781 = vpop.xlane.xlu0 %4780
      %v4782 = vsub.f32 %v4774, %v4778
      %v4783 = vsub.f32 %v4775, %v4781
      %v4784 = vmul.f32 %v4782, 1.442695
      %v4785 = vpow.pop %v4784
      %v4786 = vmul.f32 %v4783, 1.442695
      %v4787 = vpow.pop %v4786
      %v4788 = vsel %vm987, %v4785, 0.0
      %4789 = vadd.xlane.f32.xlu0 %v4788
      %v4790 = vpop.xlane.xlu0 %4789
      %v4791 = vsel %vm991, %v4787, 0.0
      %4792 = vadd.xlane.f32.xlu0 %v4791
      %v4793 = vpop.xlane.xlu0 %4792
      %v4794 = vrcp.pop %v4790
      %v4795 = vrcp.pop %v4793
      %v4796 = vmul.f32 %v4785, %v4794
      %v4797 = vmul.f32 %v4787, %v4795
      %4798 = vrot.lane.b32.xlu0 %v4478, 88
      %v4799 = vpop.permute.xlu0 %4798
      %4800 = vrot.lane.b32.xlu0 %v4481, 88
      %v4801 = vpop.permute.xlu0 %4800
      %v4804 = vsel %vm987, %v4796, 0
      %v4807 = vsel %vm987, %v4797, 0
      %v4809 = vsel %vm785, %v4801, 0
      %4811 = vmatprep.subr.mxu0 0.0
      %4812 = vmatpush1.msra.mxu0 0.0
      %4813 = vmatprep.subr.mxu0 0.0
      %4814 = vmatpush1.msra.mxu0 0.0
      %4815 = vmatprep.subr.mxu0 0.0
      %4816 = vmatpush1.msra.mxu0 0.0
      %4817 = vmatprep.subr.mxu0 0.0
      %4818 = vmatpush1.msra.mxu0 0.0
      %4819 = vmatprep.subr.mxu0 0.0
      %4820 = vmatpush1.msra.mxu0 0.0
      %4821 = vmatprep.subr.mxu0 0.0
      %4822 = vmatpush1.msra.mxu0 0.0
      %4823 = vmatprep.subr.mxu0 0.0
      %4824 = vmatpush1.msra.mxu0 0.0
      %4825 = vmatprep.subr.mxu0 0.0
      %4826 = vmatpush1.msra.mxu0 0.0
      %4827 = vmatprep.subr.mxu0 0.0
      %4828 = vmatpush1.msra.mxu0 0.0
      %4829 = vmatprep.subr.mxu0 0.0
      %4830 = vmatpush1.msra.mxu0 0.0
      %4831 = vmatprep.subr.mxu0 0.0
      %4832 = vmatpush1.msra.mxu0 0.0
      %4833 = vmatprep.subr.mxu0 0.0
      %4834 = vmatpush1.msra.mxu0 0.0
      %4835 = vmatprep.subr.mxu0 0.0
      %4836 = vmatpush1.msra.mxu0 0.0
      %4837 = vmatprep.subr.mxu0 0.0
      %4838 = vmatpush1.msra.mxu0 0.0
      %4839 = vmatprep.subr.mxu0 0.0
      %4840 = vmatpush1.msra.mxu0 %v4809
      %4841 = vmatprep.subr.mxu0 0.0
      %4842 = vmatpush1.msra.mxu0 %v4799
      %4843 = vmatprep.subr.mxu0 0.0
      %4844 = vmatpush2.msra.mxu0 0.0
      %4845 = vmatprep.subr.mxu0 0.0
      %4846 = vmatpush2.msra.mxu0 0.0
      %4847 = vmatprep.subr.mxu0 0.0
      %4848 = vmatpush2.msra.mxu0 0.0
      %4849 = vmatprep.subr.mxu0 0.0
      %4850 = vmatpush2.msra.mxu0 0.0
      %4851 = vmatprep.subr.mxu0 0.0
      %4852 = vmatpush2.msra.mxu0 0.0
      %4853 = vmatprep.subr.mxu0 0.0
      %4854 = vmatpush2.msra.mxu0 0.0
      %4855 = vmatprep.subr.mxu0 0.0
      %4856 = vmatpush2.msra.mxu0 0.0
      %4857 = vmatprep.subr.mxu0 0.0
      %4858 = vmatpush2.msra.mxu0 0.0
      %4859 = vmatprep.subr.mxu0 0.0
      %4860 = vmatpush2.msra.mxu0 0.0
      %4861 = vmatprep.subr.mxu0 0.0
      %4862 = vmatpush2.msra.mxu0 0.0
      %4863 = vmatprep.subr.mxu0 0.0
      %4864 = vmatpush2.msra.mxu0 0.0
      %4865 = vmatprep.subr.mxu0 0.0
      %4866 = vmatpush2.msra.mxu0 0.0
      %4867 = vmatprep.subr.mxu0 0.0
      %4868 = vmatpush2.msra.mxu0 0.0
      %4869 = vmatprep.subr.mxu0 0.0
      %4870 = vmatpush2.msra.mxu0 0.0
      %4871 = vmatprep.subr.mxu0 0.0
      %4872 = vmatpush2.msra.mxu0 0.0
      %4873 = vmatprep.subr.mxu0 0.0
      %4874 = vmatpush2.msra.mxu0 0.0
      %4875 = vmatprep.mubr.f32.mxu0 0.0
      %4876 = vmatmul.mubr.f32.gmra.mxu0 %v4804
      %v4877 = vpop.f32.mrf.mxu0
      %v4878 = vadd.f32 0.0, %v4877
      %v4879 = vpop.f32.mrf.mxu0
      %4880 = vmatprep.mubr.f32.mxu0 0.0
      %4881 = vmatmul.mubr.f32.gmra.mxu0 %v4807
      %v4882 = vpop.f32.mrf.mxu0
      %v4883 = vadd.f32 0.0, %v4882
      %v4884 = vpop.f32.mrf.mxu0
      %4885 = vdwg.mxu0
      %4886 = vrot.lane.b32.xlu0 %v4421, 112
      %v4887 = vpop.permute.xlu0 %4886
      %4888 = vrot.lane.b32.xlu0 %v4424, 112
      %v4889 = vpop.permute.xlu0 %4888
      %4890 = vrot.lane.b32.xlu0 %v4478, 112
      %v4891 = vpop.permute.xlu0 %4890
      %4892 = vrot.lane.b32.xlu0 %v4481, 112
      %v4893 = vpop.permute.xlu0 %4892
      %v4894 = vsel %vm901, %v4887, 0
      %v4896 = vsel %vm901, %v4889, 0
      %v4898 = vsel %vm901, %v4891, 0
      %v4900 = vsel %vm901, %v4893, 0
      %4902 = vmatprep.subr.mxu0 0.0
      %4903 = vmatpush1.xpose.msra.mxu0 0.0
      %4904 = vmatprep.subr.mxu0 0.0
      %4905 = vmatpush1.xpose.msra.mxu0 0.0
      %4906 = vmatprep.subr.mxu0 0.0
      %4907 = vmatpush1.xpose.msra.mxu0 0.0
      %4908 = vmatprep.subr.mxu0 0.0
      %4909 = vmatpush1.xpose.msra.mxu0 0.0
      %4910 = vmatprep.subr.mxu0 0.0
      %4911 = vmatpush1.xpose.msra.mxu0 0.0
      %4912 = vmatprep.subr.mxu0 0.0
      %4913 = vmatpush1.xpose.msra.mxu0 0.0
      %4914 = vmatprep.subr.mxu0 0.0
      %4915 = vmatpush1.xpose.msra.mxu0 0.0
      %4916 = vmatprep.subr.mxu0 0.0
      %4917 = vmatpush1.xpose.msra.mxu0 0.0
      %4918 = vmatprep.subr.mxu0 0.0
      %4919 = vmatpush1.xpose.msra.mxu0 0.0
      %4920 = vmatprep.subr.mxu0 0.0
      %4921 = vmatpush1.xpose.msra.mxu0 0.0
      %4922 = vmatprep.subr.mxu0 0.0
      %4923 = vmatpush1.xpose.msra.mxu0 0.0
      %4924 = vmatprep.subr.mxu0 0.0
      %4925 = vmatpush1.xpose.msra.mxu0 0.0
      %4926 = vmatprep.subr.mxu0 0.0
      %4927 = vmatpush1.xpose.msra.mxu0 0.0
      %4928 = vmatprep.subr.mxu0 0.0
      %4929 = vmatpush1.xpose.msra.mxu0 0.0
      %4930 = vmatprep.subr.mxu0 0.0
      %4931 = vmatpush1.xpose.msra.mxu0 %v4900
      %4932 = vmatprep.subr.mxu0 0.0
      %4933 = vmatpush1.xpose.msra.mxu0 %v4898
      %4934 = vmatprep.subr.mxu0 0.0
      %4935 = vmatpush2.xpose.msra.mxu0 0.0
      %4936 = vmatprep.subr.mxu0 0.0
      %4937 = vmatpush2.xpose.msra.mxu0 0.0
      %4938 = vmatprep.subr.mxu0 0.0
      %4939 = vmatpush2.xpose.msra.mxu0 0.0
      %4940 = vmatprep.subr.mxu0 0.0
      %4941 = vmatpush2.xpose.msra.mxu0 0.0
      %4942 = vmatprep.subr.mxu0 0.0
      %4943 = vmatpush2.xpose.msra.mxu0 0.0
      %4944 = vmatprep.subr.mxu0 0.0
      %4945 = vmatpush2.xpose.msra.mxu0 0.0
      %4946 = vmatprep.subr.mxu0 0.0
      %4947 = vmatpush2.xpose.msra.mxu0 0.0
      %4948 = vmatprep.subr.mxu0 0.0
      %4949 = vmatpush2.xpose.msra.mxu0 0.0
      %4950 = vmatprep.subr.mxu0 0.0
      %4951 = vmatpush2.xpose.msra.mxu0 0.0
      %4952 = vmatprep.subr.mxu0 0.0
      %4953 = vmatpush2.xpose.msra.mxu0 0.0
      %4954 = vmatprep.subr.mxu0 0.0
      %4955 = vmatpush2.xpose.msra.mxu0 0.0
      %4956 = vmatprep.subr.mxu0 0.0
      %4957 = vmatpush2.xpose.msra.mxu0 0.0
      %4958 = vmatprep.subr.mxu0 0.0
      %4959 = vmatpush2.xpose.msra.mxu0 0.0
      %4960 = vmatprep.subr.mxu0 0.0
      %4961 = vmatpush2.xpose.msra.mxu0 0.0
      %4962 = vmatprep.subr.mxu0 0.0
      %4963 = vmatpush2.xpose.msra.mxu0 0.0
      %4964 = vmatprep.subr.mxu0 0.0
      %4965 = vmatpush2.xpose.msra.mxu0 0.0
      %4966 = vmatprep.mubr.f32.mxu0 0.0
      %4967 = vmatmul.mubr.f32.gmra.mxu0 %v4894
      %v4968 = vpop.f32.mrf.mxu0
      %v4969 = vadd.f32 0.0, %v4968
      %v4970 = vpop.f32.mrf.mxu0
      %4971 = vmatprep.mubr.f32.mxu0 0.0
      %4972 = vmatmul.mubr.f32.gmra.mxu0 %v4896
      %v4973 = vpop.f32.mrf.mxu0
      %v4974 = vadd.f32 0.0, %v4973
      %v4975 = vpop.f32.mrf.mxu0
      %4976 = vdwg.mxu0
      %v4977 = vmul.f32 %v4969, 0.35355338
      %v4978 = vmul.f32 %v4974, 0.35355338
      %v4979 = vsel %vm987, %v4977, -inf
      %4980 = vmax.xlane.f32.xlu0 %v4979
      %v4981 = vpop.xlane.xlu0 %4980
      %v4982 = vsel %vm991, %v4978, -inf
      %4983 = vmax.xlane.f32.xlu0 %v4982
      %v4984 = vpop.xlane.xlu0 %4983
      %v4985 = vsub.f32 %v4977, %v4981
      %v4986 = vsub.f32 %v4978, %v4984
      %v4987 = vmul.f32 %v4985, 1.442695
      %v4988 = vpow.pop %v4987
      %v4989 = vmul.f32 %v4986, 1.442695
      %v4990 = vpow.pop %v4989
      %v4991 = vsel %vm987, %v4988, 0.0
      %4992 = vadd.xlane.f32.xlu0 %v4991
      %v4993 = vpop.xlane.xlu0 %4992
      %v4994 = vsel %vm991, %v4990, 0.0
      %4995 = vadd.xlane.f32.xlu0 %v4994
      %v4996 = vpop.xlane.xlu0 %4995
      %v4997 = vrcp.pop %v4993
      %v4998 = vrcp.pop %v4996
      %v4999 = vmul.f32 %v4988, %v4997
      %v5000 = vmul.f32 %v4990, %v4998
      %5001 = vrot.lane.b32.xlu0 %v4478, 80
      %v5002 = vpop.permute.xlu0 %5001
      %5003 = vrot.lane.b32.xlu0 %v4481, 80
      %v5004 = vpop.permute.xlu0 %5003
      %v5007 = vsel %vm987, %v4999, 0
      %v5010 = vsel %vm987, %v5000, 0
      %v5012 = vsel %vm785, %v5004, 0
      %5014 = vmatprep.subr.mxu0 0.0
      %5015 = vmatpush1.msra.mxu0 0.0
      %5016 = vmatprep.subr.mxu0 0.0
      %5017 = vmatpush1.msra.mxu0 0.0
      %5018 = vmatprep.subr.mxu0 0.0
      %5019 = vmatpush1.msra.mxu0 0.0
      %5020 = vmatprep.subr.mxu0 0.0
      %5021 = vmatpush1.msra.mxu0 0.0
      %5022 = vmatprep.subr.mxu0 0.0
      %5023 = vmatpush1.msra.mxu0 0.0
      %5024 = vmatprep.subr.mxu0 0.0
      %5025 = vmatpush1.msra.mxu0 0.0
      %5026 = vmatprep.subr.mxu0 0.0
      %5027 = vmatpush1.msra.mxu0 0.0
      %5028 = vmatprep.subr.mxu0 0.0
      %5029 = vmatpush1.msra.mxu0 0.0
      %5030 = vmatprep.subr.mxu0 0.0
      %5031 = vmatpush1.msra.mxu0 0.0
      %5032 = vmatprep.subr.mxu0 0.0
      %5033 = vmatpush1.msra.mxu0 0.0
      %5034 = vmatprep.subr.mxu0 0.0
      %5035 = vmatpush1.msra.mxu0 0.0
      %5036 = vmatprep.subr.mxu0 0.0
      %5037 = vmatpush1.msra.mxu0 0.0
      %5038 = vmatprep.subr.mxu0 0.0
      %5039 = vmatpush1.msra.mxu0 0.0
      %5040 = vmatprep.subr.mxu0 0.0
      %5041 = vmatpush1.msra.mxu0 0.0
      %5042 = vmatprep.subr.mxu0 0.0
      %5043 = vmatpush1.msra.mxu0 %v5012
      %5044 = vmatprep.subr.mxu0 0.0
      %5045 = vmatpush1.msra.mxu0 %v5002
      %5046 = vmatprep.subr.mxu0 0.0
      %5047 = vmatpush2.msra.mxu0 0.0
      %5048 = vmatprep.subr.mxu0 0.0
      %5049 = vmatpush2.msra.mxu0 0.0
      %5050 = vmatprep.subr.mxu0 0.0
      %5051 = vmatpush2.msra.mxu0 0.0
      %5052 = vmatprep.subr.mxu0 0.0
      %5053 = vmatpush2.msra.mxu0 0.0
      %5054 = vmatprep.subr.mxu0 0.0
      %5055 = vmatpush2.msra.mxu0 0.0
      %5056 = vmatprep.subr.mxu0 0.0
      %5057 = vmatpush2.msra.mxu0 0.0
      %5058 = vmatprep.subr.mxu0 0.0
      %5059 = vmatpush2.msra.mxu0 0.0
      %5060 = vmatprep.subr.mxu0 0.0
      %5061 = vmatpush2.msra.mxu0 0.0
      %5062 = vmatprep.subr.mxu0 0.0
      %5063 = vmatpush2.msra.mxu0 0.0
      %5064 = vmatprep.subr.mxu0 0.0
      %5065 = vmatpush2.msra.mxu0 0.0
      %5066 = vmatprep.subr.mxu0 0.0
      %5067 = vmatpush2.msra.mxu0 0.0
      %5068 = vmatprep.subr.mxu0 0.0
      %5069 = vmatpush2.msra.mxu0 0.0
      %5070 = vmatprep.subr.mxu0 0.0
      %5071 = vmatpush2.msra.mxu0 0.0
      %5072 = vmatprep.subr.mxu0 0.0
      %5073 = vmatpush2.msra.mxu0 0.0
      %5074 = vmatprep.subr.mxu0 0.0
      %5075 = vmatpush2.msra.mxu0 0.0
      %5076 = vmatprep.subr.mxu0 0.0
      %5077 = vmatpush2.msra.mxu0 0.0
      %5078 = vmatprep.mubr.f32.mxu0 0.0
      %5079 = vmatmul.mubr.f32.gmra.mxu0 %v5007
      %v5080 = vpop.f32.mrf.mxu0
      %v5081 = vadd.f32 0.0, %v5080
      %v5082 = vpop.f32.mrf.mxu0
      %5083 = vmatprep.mubr.f32.mxu0 0.0
      %5084 = vmatmul.mubr.f32.gmra.mxu0 %v5010
      %v5085 = vpop.f32.mrf.mxu0
      %v5086 = vadd.f32 0.0, %v5085
      %v5087 = vpop.f32.mrf.mxu0
      %5088 = vdwg.mxu0
      %5089 = vrot.lane.b32.xlu0 %v4421, 104
      %v5090 = vpop.permute.xlu0 %5089
      %5091 = vrot.lane.b32.xlu0 %v4424, 104
      %v5092 = vpop.permute.xlu0 %5091
      %5093 = vrot.lane.b32.xlu0 %v4478, 104
      %v5094 = vpop.permute.xlu0 %5093
      %5095 = vrot.lane.b32.xlu0 %v4481, 104
      %v5096 = vpop.permute.xlu0 %5095
      %v5097 = vsel %vm901, %v5090, 0
      %v5099 = vsel %vm901, %v5092, 0
      %v5101 = vsel %vm901, %v5094, 0
      %v5103 = vsel %vm901, %v5096, 0
      %5105 = vmatprep.subr.mxu0 0.0
      %5106 = vmatpush1.xpose.msra.mxu0 0.0
      %5107 = vmatprep.subr.mxu0 0.0
      %5108 = vmatpush1.xpose.msra.mxu0 0.0
      %5109 = vmatprep.subr.mxu0 0.0
      %5110 = vmatpush1.xpose.msra.mxu0 0.0
      %5111 = vmatprep.subr.mxu0 0.0
      %5112 = vmatpush1.xpose.msra.mxu0 0.0
      %5113 = vmatprep.subr.mxu0 0.0
      %5114 = vmatpush1.xpose.msra.mxu0 0.0
      %5115 = vmatprep.subr.mxu0 0.0
      %5116 = vmatpush1.xpose.msra.mxu0 0.0
      %5117 = vmatprep.subr.mxu0 0.0
      %5118 = vmatpush1.xpose.msra.mxu0 0.0
      %5119 = vmatprep.subr.mxu0 0.0
      %5120 = vmatpush1.xpose.msra.mxu0 0.0
      %5121 = vmatprep.subr.mxu0 0.0
      %5122 = vmatpush1.xpose.msra.mxu0 0.0
      %5123 = vmatprep.subr.mxu0 0.0
      %5124 = vmatpush1.xpose.msra.mxu0 0.0
      %5125 = vmatprep.subr.mxu0 0.0
      %5126 = vmatpush1.xpose.msra.mxu0 0.0
      %5127 = vmatprep.subr.mxu0 0.0
      %5128 = vmatpush1.xpose.msra.mxu0 0.0
      %5129 = vmatprep.subr.mxu0 0.0
      %5130 = vmatpush1.xpose.msra.mxu0 0.0
      %5131 = vmatprep.subr.mxu0 0.0
      %5132 = vmatpush1.xpose.msra.mxu0 0.0
      %5133 = vmatprep.subr.mxu0 0.0
      %5134 = vmatpush1.xpose.msra.mxu0 %v5103
      %5135 = vmatprep.subr.mxu0 0.0
      %5136 = vmatpush1.xpose.msra.mxu0 %v5101
      %5137 = vmatprep.subr.mxu0 0.0
      %5138 = vmatpush2.xpose.msra.mxu0 0.0
      %5139 = vmatprep.subr.mxu0 0.0
      %5140 = vmatpush2.xpose.msra.mxu0 0.0
      %5141 = vmatprep.subr.mxu0 0.0
      %5142 = vmatpush2.xpose.msra.mxu0 0.0
      %5143 = vmatprep.subr.mxu0 0.0
      %5144 = vmatpush2.xpose.msra.mxu0 0.0
      %5145 = vmatprep.subr.mxu0 0.0
      %5146 = vmatpush2.xpose.msra.mxu0 0.0
      %5147 = vmatprep.subr.mxu0 0.0
      %5148 = vmatpush2.xpose.msra.mxu0 0.0
      %5149 = vmatprep.subr.mxu0 0.0
      %5150 = vmatpush2.xpose.msra.mxu0 0.0
      %5151 = vmatprep.subr.mxu0 0.0
      %5152 = vmatpush2.xpose.msra.mxu0 0.0
      %5153 = vmatprep.subr.mxu0 0.0
      %5154 = vmatpush2.xpose.msra.mxu0 0.0
      %5155 = vmatprep.subr.mxu0 0.0
      %5156 = vmatpush2.xpose.msra.mxu0 0.0
      %5157 = vmatprep.subr.mxu0 0.0
      %5158 = vmatpush2.xpose.msra.mxu0 0.0
      %5159 = vmatprep.subr.mxu0 0.0
      %5160 = vmatpush2.xpose.msra.mxu0 0.0
      %5161 = vmatprep.subr.mxu0 0.0
      %5162 = vmatpush2.xpose.msra.mxu0 0.0
      %5163 = vmatprep.subr.mxu0 0.0
      %5164 = vmatpush2.xpose.msra.mxu0 0.0
      %5165 = vmatprep.subr.mxu0 0.0
      %5166 = vmatpush2.xpose.msra.mxu0 0.0
      %5167 = vmatprep.subr.mxu0 0.0
      %5168 = vmatpush2.xpose.msra.mxu0 0.0
      %5169 = vmatprep.mubr.f32.mxu0 0.0
      %5170 = vmatmul.mubr.f32.gmra.mxu0 %v5097
      %v5171 = vpop.f32.mrf.mxu0
      %v5172 = vadd.f32 0.0, %v5171
      %v5173 = vpop.f32.mrf.mxu0
      %5174 = vmatprep.mubr.f32.mxu0 0.0
      %5175 = vmatmul.mubr.f32.gmra.mxu0 %v5099
      %v5176 = vpop.f32.mrf.mxu0
      %v5177 = vadd.f32 0.0, %v5176
      %v5178 = vpop.f32.mrf.mxu0
      %5179 = vdwg.mxu0
      %v5180 = vmul.f32 %v5172, 0.35355338
      %v5181 = vmul.f32 %v5177, 0.35355338
      %v5182 = vsel %vm987, %v5180, -inf
      %5183 = vmax.xlane.f32.xlu0 %v5182
      %v5184 = vpop.xlane.xlu0 %5183
      %v5185 = vsel %vm991, %v5181, -inf
      %5186 = vmax.xlane.f32.xlu0 %v5185
      %v5187 = vpop.xlane.xlu0 %5186
      %v5188 = vsub.f32 %v5180, %v5184
      %v5189 = vsub.f32 %v5181, %v5187
      %v5190 = vmul.f32 %v5188, 1.442695
      %v5191 = vpow.pop %v5190
      %v5192 = vmul.f32 %v5189, 1.442695
      %v5193 = vpow.pop %v5192
      %v5194 = vsel %vm987, %v5191, 0.0
      %5195 = vadd.xlane.f32.xlu0 %v5194
      %v5196 = vpop.xlane.xlu0 %5195
      %v5197 = vsel %vm991, %v5193, 0.0
      %5198 = vadd.xlane.f32.xlu0 %v5197
      %v5199 = vpop.xlane.xlu0 %5198
      %v5200 = vrcp.pop %v5196
      %v5201 = vrcp.pop %v5199
      %v5202 = vmul.f32 %v5191, %v5200
      %v5203 = vmul.f32 %v5193, %v5201
      %5204 = vrot.lane.b32.xlu0 %v4478, 72
      %v5205 = vpop.permute.xlu0 %5204
      %5206 = vrot.lane.b32.xlu0 %v4481, 72
      %v5207 = vpop.permute.xlu0 %5206
      %v5210 = vsel %vm987, %v5202, 0
      %v5213 = vsel %vm987, %v5203, 0
      %v5215 = vsel %vm785, %v5207, 0
      %5217 = vmatprep.subr.mxu0 0.0
      %5218 = vmatpush1.msra.mxu0 0.0
      %5219 = vmatprep.subr.mxu0 0.0
      %5220 = vmatpush1.msra.mxu0 0.0
      %5221 = vmatprep.subr.mxu0 0.0
      %5222 = vmatpush1.msra.mxu0 0.0
      %5223 = vmatprep.subr.mxu0 0.0
      %5224 = vmatpush1.msra.mxu0 0.0
      %5225 = vmatprep.subr.mxu0 0.0
      %5226 = vmatpush1.msra.mxu0 0.0
      %5227 = vmatprep.subr.mxu0 0.0
      %5228 = vmatpush1.msra.mxu0 0.0
      %5229 = vmatprep.subr.mxu0 0.0
      %5230 = vmatpush1.msra.mxu0 0.0
      %5231 = vmatprep.subr.mxu0 0.0
      %5232 = vmatpush1.msra.mxu0 0.0
      %5233 = vmatprep.subr.mxu0 0.0
      %5234 = vmatpush1.msra.mxu0 0.0
      %5235 = vmatprep.subr.mxu0 0.0
      %5236 = vmatpush1.msra.mxu0 0.0
      %5237 = vmatprep.subr.mxu0 0.0
      %5238 = vmatpush1.msra.mxu0 0.0
      %5239 = vmatprep.subr.mxu0 0.0
      %5240 = vmatpush1.msra.mxu0 0.0
      %5241 = vmatprep.subr.mxu0 0.0
      %5242 = vmatpush1.msra.mxu0 0.0
      %5243 = vmatprep.subr.mxu0 0.0
      %5244 = vmatpush1.msra.mxu0 0.0
      %5245 = vmatprep.subr.mxu0 0.0
      %5246 = vmatpush1.msra.mxu0 %v5215
      %5247 = vmatprep.subr.mxu0 0.0
      %5248 = vmatpush1.msra.mxu0 %v5205
      %5249 = vmatprep.subr.mxu0 0.0
      %5250 = vmatpush2.msra.mxu0 0.0
      %5251 = vmatprep.subr.mxu0 0.0
      %5252 = vmatpush2.msra.mxu0 0.0
      %5253 = vmatprep.subr.mxu0 0.0
      %5254 = vmatpush2.msra.mxu0 0.0
      %5255 = vmatprep.subr.mxu0 0.0
      %5256 = vmatpush2.msra.mxu0 0.0
      %5257 = vmatprep.subr.mxu0 0.0
      %5258 = vmatpush2.msra.mxu0 0.0
      %5259 = vmatprep.subr.mxu0 0.0
      %5260 = vmatpush2.msra.mxu0 0.0
      %5261 = vmatprep.subr.mxu0 0.0
      %5262 = vmatpush2.msra.mxu0 0.0
      %5263 = vmatprep.subr.mxu0 0.0
      %5264 = vmatpush2.msra.mxu0 0.0
      %5265 = vmatprep.subr.mxu0 0.0
      %5266 = vmatpush2.msra.mxu0 0.0
      %5267 = vmatprep.subr.mxu0 0.0
      %5268 = vmatpush2.msra.mxu0 0.0
      %5269 = vmatprep.subr.mxu0 0.0
      %5270 = vmatpush2.msra.mxu0 0.0
      %5271 = vmatprep.subr.mxu0 0.0
      %5272 = vmatpush2.msra.mxu0 0.0
      %5273 = vmatprep.subr.mxu0 0.0
      %5274 = vmatpush2.msra.mxu0 0.0
      %5275 = vmatprep.subr.mxu0 0.0
      %5276 = vmatpush2.msra.mxu0 0.0
      %5277 = vmatprep.subr.mxu0 0.0
      %5278 = vmatpush2.msra.mxu0 0.0
      %5279 = vmatprep.subr.mxu0 0.0
      %5280 = vmatpush2.msra.mxu0 0.0
      %5281 = vmatprep.mubr.f32.mxu0 0.0
      %5282 = vmatmul.mubr.f32.gmra.mxu0 %v5210
      %v5283 = vpop.f32.mrf.mxu0
      %v5284 = vadd.f32 0.0, %v5283
      %v5285 = vpop.f32.mrf.mxu0
      %5286 = vmatprep.mubr.f32.mxu0 0.0
      %5287 = vmatmul.mubr.f32.gmra.mxu0 %v5213
      %v5288 = vpop.f32.mrf.mxu0
      %v5289 = vadd.f32 0.0, %v5288
      %v5290 = vpop.f32.mrf.mxu0
      %5291 = vdwg.mxu0
      %5294 = vrot.lane.b32.xlu0 %v4878, 8
      %v5295 = vpop.permute.xlu0 %5294
      %5296 = vrot.lane.b32.xlu0 %v4883, 8
      %v5297 = vpop.permute.xlu0 %5296
      %5302 = vrot.lane.b32.xlu0 %v5081, 16
      %v5303 = vpop.permute.xlu0 %5302
      %5304 = vrot.lane.b32.xlu0 %v5086, 16
      %v5305 = vpop.permute.xlu0 %5304
      %5310 = vrot.lane.b32.xlu0 %v5284, 24
      %v5311 = vpop.permute.xlu0 %5310
      %5312 = vrot.lane.b32.xlu0 %v5289, 24
      %v5313 = vpop.permute.xlu0 %5312
      %v5316 = vsel %vm901, %v4675, %v5295
      %v5317 = vsel %vm901, %v4680, %v5297
      %v5318 = vsel %vm1734, %v5316, %v5303
      %v5319 = vsel %vm1734, %v5317, %v5305
      %v5320 = vsel %vm1737, %v5318, %v5311
      %v5321 = vsel %vm1737, %v5319, %v5313
      %v5322 = vpack.c.bf16 %v5321, %v5320
      %v5323 = vlaneseq
      %v5324 = vshrl.u32 %v5323, 7
      %v5325 = vsub.s32 1, %v5324
      %v5326 = vrot.slane %v3275, %v5325
      %v5331 = vunpack.c.l.b16 %v4366
      %v5332 = vunpack.c.l.b16 %v4367
      %v5333 = vunpack.c.l.b16 %v4368
      %v5334 = vunpack.c.l.b16 %v4369
      %v5335 = vpack.c.b16 %v5332, %v5331
      %v5336 = vpack.c.b16 %v5334, %v5333
      %v5340 = vsel %vm738, %v5322, 0
      %5342 = vmatprep.subr.bf16.mxu0 0
      %5343 = vmatpush1.bf16.msra.mxu0 0
      %5344 = vmatprep.subr.bf16.mxu0 0
      %5345 = vmatpush1.bf16.msra.mxu0 0
      %5346 = vmatprep.subr.bf16.mxu0 0
      %5347 = vmatpush1.bf16.msra.mxu0 0
      %5348 = vmatprep.subr.bf16.mxu0 0
      %5349 = vmatpush1.bf16.msra.mxu0 0
      %5350 = vmatprep.subr.bf16.mxu0 0
      %5351 = vmatpush1.bf16.msra.mxu0 0
      %5352 = vmatprep.subr.bf16.mxu0 0
      %5353 = vmatpush1.bf16.msra.mxu0 0
      %5354 = vmatprep.subr.bf16.mxu0 0
      %5355 = vmatpush1.bf16.msra.mxu0 %v5336
      %5356 = vmatprep.subr.bf16.mxu0 0
      %5357 = vmatpush1.bf16.msra.mxu0 %v5335
      %5358 = vmatprep.subr.bf16.mxu0 0
      %5359 = vmatpush2.bf16.msra.mxu0 0
      %5360 = vmatprep.subr.bf16.mxu0 0
      %5361 = vmatpush2.bf16.msra.mxu0 0
      %5362 = vmatprep.subr.bf16.mxu0 0
      %5363 = vmatpush2.bf16.msra.mxu0 0
      %5364 = vmatprep.subr.bf16.mxu0 0
      %5365 = vmatpush2.bf16.msra.mxu0 0
      %5366 = vmatprep.subr.bf16.mxu0 0
      %5367 = vmatpush2.bf16.msra.mxu0 0
      %5368 = vmatprep.subr.bf16.mxu0 0
      %5369 = vmatpush2.bf16.msra.mxu0 0
      %5370 = vmatprep.subr.bf16.mxu0 0
      %5371 = vmatpush2.bf16.msra.mxu0 0
      %5372 = vmatprep.subr.bf16.mxu0 0
      %5373 = vmatpush2.bf16.msra.mxu0 0
      %5374 = vmatprep.mubr.bf16.mxu0 0
      %5375 = vmatmul.mubr.bf16.gmra.mxu0 %v5340
      %v5376 = vpop.f32.mrf.mxu0
      %v5377 = vadd.f32 %v5326, %v5376
      %v5378 = vpop.f32.mrf.mxu0
      %v5379 = vpop.f32.mrf.mxu0
      %v5380 = vadd.f32 %v5326, %v5379
      %v5381 = vpop.f32.mrf.mxu0
      %5382 = vdwg.mxu0
      %v5383 = vadd.f32 %v4280, %v5377
      %v5384 = vadd.f32 %v4281, %v5380
      %v5385 = vsel %vm738, %v5383, 0.0
      %5386 = vadd.xlane.f32.xlu0 %v5385
      %v5387 = vpop.xlane.xlu0 %5386
      %v5388 = vsel %vm793, %v5384, 0.0
      %5389 = vadd.xlane.f32.xlu0 %v5388
      %v5390 = vpop.xlane.xlu0 %5389
      %v5391 = vmul.f32 %v5387, %v797
      %v5392 = vmul.f32 %v5390, %v797
      %v5393 = vsub.f32 %v5383, %v5391
      %v5394 = vsub.f32 %v5384, %v5392
      %v5395 = vmul.f32 %v5393, %v5393
      %v5396 = vmul.f32 %v5394, %v5394
      %v5397 = vsel %vm738, %v5395, 0.0
      %5398 = vadd.xlane.f32.xlu0 %v5397
      %v5399 = vpop.xlane.xlu0 %5398
      %v5400 = vsel %vm793, %v5396, 0.0
      %5401 = vadd.xlane.f32.xlu0 %v5400
      %v5402 = vpop.xlane.xlu0 %5401
      %v5403 = vmul.f32 %v5399, %v797
      %v5404 = vmul.f32 %v5402, %v797
      %v5405 = vadd.f32 %v5403, 1e-05
      %v5406 = vadd.f32 %v5404, 1e-05
      %v5407 = vrsqrt.pop %v5405
      %v5408 = vrsqrt.pop %v5406
      %v5409 = vmul.f32 %v5393, %v5407
      %v5410 = vmul.f32 %v5394, %v5408
      %v5411 = vlaneseq
      %v5412 = vshrl.u32 %v5411, 7
      %v5413 = vsub.s32 6, %v5412
      %v5414 = vrot.slane %v3274, %v5413
      %v5415 = vmul.f32 %v5409, %v5414
      %v5416 = vmul.f32 %v5410, %v5414
      %v5417 = vlaneseq
      %v5418 = vshrl.u32 %v5417, 7
      %v5419 = vsub.s32 7, %v5418
      %v5420 = vrot.slane %v3274, %v5419
      %v5421 = vadd.f32 %v5415, %v5420
      %v5422 = vadd.f32 %v5416, %v5420
      %v5423 = vld [vmem:[%s18] sm:$0xf]
      %v5424 = vld [vmem:[%s18 + $0x4] sm:$0xf]
      %v5425 = vld [vmem:[%s18 + $0x8] sm:$0xf]
      %v5426 = vld [vmem:[%s18 + $0xc] sm:$0xf]
      %v5427 = vld [vmem:[%s21] sm:$0x1]
      %v5428 = vld [vmem:[%s19] sm:$0xf]
      %v5429 = vld [vmem:[%s19 + $0x4] sm:$0xf]
      %v5430 = vld [vmem:[%s19 + $0x8] sm:$0xf]
      %v5431 = vld [vmem:[%s19 + $0xc] sm:$0xf]
      %v5432 = vld [vmem:[%s19 + $0x10] sm:$0xf]
      %v5433 = vld [vmem:[%s19 + $0x14] sm:$0xf]
      %v5434 = vld [vmem:[%s19 + $0x18] sm:$0xf]
      %v5435 = vld [vmem:[%s19 + $0x1c] sm:$0xf]
      %v5436 = vld [vmem:[%s19 + $0x20] sm:$0xf]
      %v5437 = vld [vmem:[%s19 + $0x24] sm:$0xf]
      %v5438 = vld [vmem:[%s19 + $0x28] sm:$0xf]
      %v5439 = vld [vmem:[%s19 + $0x2c] sm:$0xf]
      %v5440 = vld [vmem:[%s19 + $0x30] sm:$0xf]
      %v5441 = vld [vmem:[%s19 + $0x34] sm:$0xf]
      %v5442 = vld [vmem:[%s19 + $0x38] sm:$0xf]
      %v5443 = vld [vmem:[%s19 + $0x3c] sm:$0xf]
      %v5444 = vpack.c.bf16 %v5422, %v5421
      %v5446 = vlaneseq
      %v5447 = vshrl.u32 %v5446, 7
      %v5448 = vsub.s32 0, %v5447
      %v5449 = vrot.slane %v5427, %v5448
      %v5455 = vunpack.c.l.b16 %v5423
      %v5456 = vunpack.c.l.b16 %v5424
      %v5457 = vunpack.c.l.b16 %v5425
      %v5458 = vunpack.c.l.b16 %v5426
      %v5459 = vpack.c.b16 %v5456, %v5455
      %v5460 = vpack.c.b16 %v5458, %v5457
      %v5464 = vsel %vm738, %v5444, 0
      %5466 = vmatprep.subr.bf16.mxu0 0
      %5467 = vmatpush1.bf16.msra.mxu0 0
      %5468 = vmatprep.subr.bf16.mxu0 0
      %5469 = vmatpush1.bf16.msra.mxu0 0
      %5470 = vmatprep.subr.bf16.mxu0 0
      %5471 = vmatpush1.bf16.msra.mxu0 0
      %5472 = vmatprep.subr.bf16.mxu0 0
      %5473 = vmatpush1.bf16.msra.mxu0 0
      %5474 = vmatprep.subr.bf16.mxu0 0
      %5475 = vmatpush1.bf16.msra.mxu0 0
      %5476 = vmatprep.subr.bf16.mxu0 0
      %5477 = vmatpush1.bf16.msra.mxu0 0
      %5478 = vmatprep.subr.bf16.mxu0 0
      %5479 = vmatpush1.bf16.msra.mxu0 %v5460
      %5480 = vmatprep.subr.bf16.mxu0 0
      %5481 = vmatpush1.bf16.msra.mxu0 %v5459
      %5482 = vmatprep.subr.bf16.mxu0 0
      %5483 = vmatpush2.bf16.msra.mxu0 0
      %5484 = vmatprep.subr.bf16.mxu0 0
      %5485 = vmatpush2.bf16.msra.mxu0 0
      %5486 = vmatprep.subr.bf16.mxu0 0
      %5487 = vmatpush2.bf16.msra.mxu0 0
      %5488 = vmatprep.subr.bf16.mxu0 0
      %5489 = vmatpush2.bf16.msra.mxu0 0
      %5490 = vmatprep.subr.bf16.mxu0 0
      %5491 = vmatpush2.bf16.msra.mxu0 0
      %5492 = vmatprep.subr.bf16.mxu0 0
      %5493 = vmatpush2.bf16.msra.mxu0 0
      %5494 = vmatprep.subr.bf16.mxu0 0
      %5495 = vmatpush2.bf16.msra.mxu0 0
      %5496 = vmatprep.subr.bf16.mxu0 0
      %5497 = vmatpush2.bf16.msra.mxu0 0
      %5498 = vmatprep.mubr.bf16.mxu0 0
      %5499 = vmatmul.mubr.bf16.gmra.mxu0 %v5464
      %v5500 = vpop.f32.mrf.mxu0
      %v5501 = vadd.f32 %v5449, %v5500
      %v5502 = vpop.f32.mrf.mxu0
      %v5503 = vpop.f32.mrf.mxu0
      %v5504 = vadd.f32 %v5449, %v5503
      %v5505 = vpop.f32.mrf.mxu0
      %5506 = vdwg.mxu0
      %v5507 = vmul.f32 %v5501, 0.5
      %v5508 = vmul.f32 %v5504, 0.5
      %v5509 = vmul.f32 %v5501, 0.70710677
      %v5510 = vmul.f32 %v5504, 0.70710677
      %v5511 = verf.f32.pop %v5509
      %v5512 = verf.f32.pop %v5510
      %v5513 = vadd.f32 %v5511, 1.0
      %v5514 = vadd.f32 %v5512, 1.0
      %v5515 = vmul.f32 %v5507, %v5513
      %v5516 = vmul.f32 %v5508, %v5514
      %v5517 = vpack.c.bf16 %v5516, %v5515
      %v5518 = vlaneseq
      %v5519 = vshrl.u32 %v5518, 7
      %v5520 = vsub.s32 2, %v5519
      %v5521 = vrot.slane %v3275, %v5520
      %v5538 = vunpack.c.l.b16 %v5428
      %v5539 = vunpack.c.l.b16 %v5429
      %v5540 = vunpack.c.l.b16 %v5430
      %v5541 = vunpack.c.l.b16 %v5431
      %v5542 = vunpack.c.l.b16 %v5432
      %v5543 = vunpack.c.l.b16 %v5433
      %v5544 = vunpack.c.l.b16 %v5434
      %v5545 = vunpack.c.l.b16 %v5435
      %v5546 = vunpack.c.l.b16 %v5436
      %v5547 = vunpack.c.l.b16 %v5437
      %v5548 = vunpack.c.l.b16 %v5438
      %v5549 = vunpack.c.l.b16 %v5439
      %v5550 = vunpack.c.l.b16 %v5440
      %v5551 = vunpack.c.l.b16 %v5441
      %v5552 = vunpack.c.l.b16 %v5442
      %v5553 = vunpack.c.l.b16 %v5443
      %v5554 = vpack.c.b16 %v5539, %v5538
      %v5555 = vpack.c.b16 %v5541, %v5540
      %v5556 = vpack.c.b16 %v5543, %v5542
      %v5557 = vpack.c.b16 %v5545, %v5544
      %v5558 = vpack.c.b16 %v5547, %v5546
      %v5559 = vpack.c.b16 %v5549, %v5548
      %v5560 = vpack.c.b16 %v5551, %v5550
      %v5561 = vpack.c.b16 %v5553, %v5552
      %5570 = vmatprep.subr.bf16.mxu0 0
      %5571 = vmatpush1.bf16.msra.mxu0 %v5561
      %5572 = vmatprep.subr.bf16.mxu0 0
      %5573 = vmatpush1.bf16.msra.mxu0 %v5560
      %5574 = vmatprep.subr.bf16.mxu0 0
      %5575 = vmatpush1.bf16.msra.mxu0 %v5559
      %5576 = vmatprep.subr.bf16.mxu0 0
      %5577 = vmatpush1.bf16.msra.mxu0 %v5558
      %5578 = vmatprep.subr.bf16.mxu0 0
      %5579 = vmatpush1.bf16.msra.mxu0 %v5557
      %5580 = vmatprep.subr.bf16.mxu0 0
      %5581 = vmatpush1.bf16.msra.mxu0 %v5556
      %5582 = vmatprep.subr.bf16.mxu0 0
      %5583 = vmatpush1.bf16.msra.mxu0 %v5555
      %5584 = vmatprep.subr.bf16.mxu0 0
      %5585 = vmatpush1.bf16.msra.mxu0 %v5554
      %5586 = vmatprep.subr.bf16.mxu0 0
      %5587 = vmatpush2.bf16.msra.mxu0 0
      %5588 = vmatprep.subr.bf16.mxu0 0
      %5589 = vmatpush2.bf16.msra.mxu0 0
      %5590 = vmatprep.subr.bf16.mxu0 0
      %5591 = vmatpush2.bf16.msra.mxu0 0
      %5592 = vmatprep.subr.bf16.mxu0 0
      %5593 = vmatpush2.bf16.msra.mxu0 0
      %5594 = vmatprep.subr.bf16.mxu0 0
      %5595 = vmatpush2.bf16.msra.mxu0 0
      %5596 = vmatprep.subr.bf16.mxu0 0
      %5597 = vmatpush2.bf16.msra.mxu0 0
      %5598 = vmatprep.subr.bf16.mxu0 0
      %5599 = vmatpush2.bf16.msra.mxu0 0
      %5600 = vmatprep.subr.bf16.mxu0 0
      %5601 = vmatpush2.bf16.msra.mxu0 0
      %5602 = vmatprep.mubr.bf16.mxu0 0
      %5603 = vmatmul.mubr.bf16.gmra.mxu0 %v5517
      %v5604 = vpop.f32.mrf.mxu0
      %v5605 = vadd.f32 %v5521, %v5604
      %v5606 = vpop.f32.mrf.mxu0
      %v5607 = vpop.f32.mrf.mxu0
      %v5608 = vadd.f32 %v5521, %v5607
      %v5609 = vpop.f32.mrf.mxu0
      %5610 = vdwg.mxu0
      %v5611 = vadd.f32 %v5383, %v5605
      %v5612 = vadd.f32 %v5384, %v5608
      %s5613 = scalar_lea.vmem %s20, 16
      %v5614 = vld [vmem:[%s5613] sm:$0xff]
      %v5615 = vld [vmem:[%s5613 + $0x8] sm:$0x7]
      %v5616 = vsel %vm738, %v5611, 0.0
      %5617 = vadd.xlane.f32.xlu0 %v5616
      %v5618 = vpop.xlane.xlu0 %5617
      %v5619 = vsel %vm793, %v5612, 0.0
      %5620 = vadd.xlane.f32.xlu0 %v5619
      %v5621 = vpop.xlane.xlu0 %5620
      %v5622 = vmul.f32 %v5618, %v797
      %v5623 = vmul.f32 %v5621, %v797
      %v5624 = vsub.f32 %v5611, %v5622
      %v5625 = vsub.f32 %v5612, %v5623
      %v5626 = vmul.f32 %v5624, %v5624
      %v5627 = vmul.f32 %v5625, %v5625
      %v5628 = vsel %vm738, %v5626, 0.0
      %5629 = vadd.xlane.f32.xlu0 %v5628
      %v5630 = vpop.xlane.xlu0 %5629
      %v5631 = vsel %vm793, %v5627, 0.0
      %5632 = vadd.xlane.f32.xlu0 %v5631
      %v5633 = vpop.xlane.xlu0 %5632
      %v5634 = vmul.f32 %v5630, %v797
      %v5635 = vmul.f32 %v5633, %v797
      %v5636 = vadd.f32 %v5634, 1e-05
      %v5637 = vadd.f32 %v5635, 1e-05
      %v5638 = vrsqrt.pop %v5636
      %v5639 = vrsqrt.pop %v5637
      %v5640 = vmul.f32 %v5624, %v5638
      %v5641 = vmul.f32 %v5625, %v5639
      %v5642 = vlaneseq
      %v5643 = vshrl.u32 %v5642, 7
      %v5644 = vsub.s32 0, %v5643
      %v5645 = vrot.slane %v5614, %v5644
      %v5646 = vmul.f32 %v5640, %v5645
      %v5647 = vmul.f32 %v5641, %v5645
      %v5648 = vlaneseq
      %v5649 = vshrl.u32 %v5648, 7
      %v5650 = vsub.s32 1, %v5649
      %v5651 = vrot.slane %v5614, %v5650
      %v5652 = vadd.f32 %v5646, %v5651
      %v5653 = vadd.f32 %v5647, %v5651
      %s5654 = scalar_lea.vmem %s13, 16
      %v5655 = vld [vmem:[%s5654] sm:$0xf]
      %v5656 = vld [vmem:[%s5654 + $0x4] sm:$0xf]
      %v5657 = vld [vmem:[%s5654 + $0x8] sm:$0xf]
      %v5658 = vld [vmem:[%s5654 + $0xc] sm:$0xf]
      %s5659 = scalar_lea.vmem %s14, 16
      %v5660 = vld [vmem:[%s5659] sm:$0xf]
      %v5661 = vld [vmem:[%s5659 + $0x4] sm:$0xf]
      %v5662 = vld [vmem:[%s5659 + $0x8] sm:$0xf]
      %v5663 = vld [vmem:[%s5659 + $0xc] sm:$0xf]
      %v5664 = vpack.c.bf16 %v5653, %v5652
      %v5669 = vunpack.c.l.b16 %v5655
      %v5670 = vunpack.c.l.b16 %v5656
      %v5671 = vunpack.c.l.b16 %v5657
      %v5672 = vunpack.c.l.b16 %v5658
      %v5673 = vpack.c.b16 %v5670, %v5669
      %v5674 = vpack.c.b16 %v5672, %v5671
      %v5678 = vsel %vm738, %v5664, 0
      %5680 = vmatprep.subr.bf16.mxu0 0
      %5681 = vmatpush1.bf16.msra.mxu0 0
      %5682 = vmatprep.subr.bf16.mxu0 0
      %5683 = vmatpush1.bf16.msra.mxu0 0
      %5684 = vmatprep.subr.bf16.mxu0 0
      %5685 = vmatpush1.bf16.msra.mxu0 0
      %5686 = vmatprep.subr.bf16.mxu0 0
      %5687 = vmatpush1.bf16.msra.mxu0 0
      %5688 = vmatprep.subr.bf16.mxu0 0
      %5689 = vmatpush1.bf16.msra.mxu0 0
      %5690 = vmatprep.subr.bf16.mxu0 0
      %5691 = vmatpush1.bf16.msra.mxu0 0
      %5692 = vmatprep.subr.bf16.mxu0 0
      %5693 = vmatpush1.bf16.msra.mxu0 %v5674
      %5694 = vmatprep.subr.bf16.mxu0 0
      %5695 = vmatpush1.bf16.msra.mxu0 %v5673
      %5696 = vmatprep.subr.bf16.mxu0 0
      %5697 = vmatpush2.bf16.msra.mxu0 0
      %5698 = vmatprep.subr.bf16.mxu0 0
      %5699 = vmatpush2.bf16.msra.mxu0 0
      %5700 = vmatprep.subr.bf16.mxu0 0
      %5701 = vmatpush2.bf16.msra.mxu0 0
      %5702 = vmatprep.subr.bf16.mxu0 0
      %5703 = vmatpush2.bf16.msra.mxu0 0
      %5704 = vmatprep.subr.bf16.mxu0 0
      %5705 = vmatpush2.bf16.msra.mxu0 0
      %5706 = vmatprep.subr.bf16.mxu0 0
      %5707 = vmatpush2.bf16.msra.mxu0 0
      %5708 = vmatprep.subr.bf16.mxu0 0
      %5709 = vmatpush2.bf16.msra.mxu0 0
      %5710 = vmatprep.subr.bf16.mxu0 0
      %5711 = vmatpush2.bf16.msra.mxu0 0
      %5712 = vmatprep.mubr.bf16.mxu0 0
      %5713 = vmatmul.mubr.bf16.gmra.mxu0 %v5678
      %v5714 = vpop.f32.mrf.mxu0
      %v5715 = vadd.f32 0.0, %v5714
      %v5716 = vpop.f32.mrf.mxu0
      %v5717 = vpop.f32.mrf.mxu0
      %v5718 = vadd.f32 0.0, %v5717
      %v5719 = vpop.f32.mrf.mxu0
      %5720 = vdwg.mxu0
      %5723 = vrot.lane.b32.xlu0 %v5715, 96
      %v5724 = vpop.permute.xlu0 %5723
      %5725 = vrot.lane.b32.xlu0 %v5718, 96
      %v5726 = vpop.permute.xlu0 %5725
      %v5727 = vsel %vm901, %v5715, 0
      %v5729 = vsel %vm901, %v5718, 0
      %v5731 = vsel %vm901, %v5724, 0
      %v5733 = vsel %vm901, %v5726, 0
      %5735 = vmatprep.subr.mxu0 0.0
      %5736 = vmatpush1.xpose.msra.mxu0 0.0
      %5737 = vmatprep.subr.mxu0 0.0
      %5738 = vmatpush1.xpose.msra.mxu0 0.0
      %5739 = vmatprep.subr.mxu0 0.0
      %5740 = vmatpush1.xpose.msra.mxu0 0.0
      %5741 = vmatprep.subr.mxu0 0.0
      %5742 = vmatpush1.xpose.msra.mxu0 0.0
      %5743 = vmatprep.subr.mxu0 0.0
      %5744 = vmatpush1.xpose.msra.mxu0 0.0
      %5745 = vmatprep.subr.mxu0 0.0
      %5746 = vmatpush1.xpose.msra.mxu0 0.0
      %5747 = vmatprep.subr.mxu0 0.0
      %5748 = vmatpush1.xpose.msra.mxu0 0.0
      %5749 = vmatprep.subr.mxu0 0.0
      %5750 = vmatpush1.xpose.msra.mxu0 0.0
      %5751 = vmatprep.subr.mxu0 0.0
      %5752 = vmatpush1.xpose.msra.mxu0 0.0
      %5753 = vmatprep.subr.mxu0 0.0
      %5754 = vmatpush1.xpose.msra.mxu0 0.0
      %5755 = vmatprep.subr.mxu0 0.0
      %5756 = vmatpush1.xpose.msra.mxu0 0.0
      %5757 = vmatprep.subr.mxu0 0.0
      %5758 = vmatpush1.xpose.msra.mxu0 0.0
      %5759 = vmatprep.subr.mxu0 0.0
      %5760 = vmatpush1.xpose.msra.mxu0 0.0
      %5761 = vmatprep.subr.mxu0 0.0
      %5762 = vmatpush1.xpose.msra.mxu0 0.0
      %5763 = vmatprep.subr.mxu0 0.0
      %5764 = vmatpush1.xpose.msra.mxu0 %v5733
      %5765 = vmatprep.subr.mxu0 0.0
      %5766 = vmatpush1.xpose.msra.mxu0 %v5731
      %5767 = vmatprep.subr.mxu0 0.0
      %5768 = vmatpush2.xpose.msra.mxu0 0.0
      %5769 = vmatprep.subr.mxu0 0.0
      %5770 = vmatpush2.xpose.msra.mxu0 0.0
      %5771 = vmatprep.subr.mxu0 0.0
      %5772 = vmatpush2.xpose.msra.mxu0 0.0
      %5773 = vmatprep.subr.mxu0 0.0
      %5774 = vmatpush2.xpose.msra.mxu0 0.0
      %5775 = vmatprep.subr.mxu0 0.0
      %5776 = vmatpush2.xpose.msra.mxu0 0.0
      %5777 = vmatprep.subr.mxu0 0.0
      %5778 = vmatpush2.xpose.msra.mxu0 0.0
      %5779 = vmatprep.subr.mxu0 0.0
      %5780 = vmatpush2.xpose.msra.mxu0 0.0
      %5781 = vmatprep.subr.mxu0 0.0
      %5782 = vmatpush2.xpose.msra.mxu0 0.0
      %5783 = vmatprep.subr.mxu0 0.0
      %5784 = vmatpush2.xpose.msra.mxu0 0.0
      %5785 = vmatprep.subr.mxu0 0.0
      %5786 = vmatpush2.xpose.msra.mxu0 0.0
      %5787 = vmatprep.subr.mxu0 0.0
      %5788 = vmatpush2.xpose.msra.mxu0 0.0
      %5789 = vmatprep.subr.mxu0 0.0
      %5790 = vmatpush2.xpose.msra.mxu0 0.0
      %5791 = vmatprep.subr.mxu0 0.0
      %5792 = vmatpush2.xpose.msra.mxu0 0.0
      %5793 = vmatprep.subr.mxu0 0.0
      %5794 = vmatpush2.xpose.msra.mxu0 0.0
      %5795 = vmatprep.subr.mxu0 0.0
      %5796 = vmatpush2.xpose.msra.mxu0 0.0
      %5797 = vmatprep.subr.mxu0 0.0
      %5798 = vmatpush2.xpose.msra.mxu0 0.0
      %5799 = vmatprep.mubr.f32.mxu0 0.0
      %5800 = vmatmul.mubr.f32.gmra.mxu0 %v5727
      %v5801 = vpop.f32.mrf.mxu0
      %v5802 = vadd.f32 0.0, %v5801
      %v5803 = vpop.f32.mrf.mxu0
      %5804 = vmatprep.mubr.f32.mxu0 0.0
      %5805 = vmatmul.mubr.f32.gmra.mxu0 %v5729
      %v5806 = vpop.f32.mrf.mxu0
      %v5807 = vadd.f32 0.0, %v5806
      %v5808 = vpop.f32.mrf.mxu0
      %5809 = vdwg.mxu0
      %v5810 = vmul.f32 %v5802, 0.35355338
      %v5811 = vmul.f32 %v5807, 0.35355338
      %v5812 = vsel %vm987, %v5810, -inf
      %5813 = vmax.xlane.f32.xlu0 %v5812
      %v5814 = vpop.xlane.xlu0 %5813
      %v5815 = vsel %vm991, %v5811, -inf
      %5816 = vmax.xlane.f32.xlu0 %v5815
      %v5817 = vpop.xlane.xlu0 %5816
      %v5818 = vsub.f32 %v5810, %v5814
      %v5819 = vsub.f32 %v5811, %v5817
      %v5820 = vmul.f32 %v5818, 1.442695
      %v5821 = vpow.pop %v5820
      %v5822 = vmul.f32 %v5819, 1.442695
      %v5823 = vpow.pop %v5822
      %v5824 = vsel %vm987, %v5821, 0.0
      %5825 = vadd.xlane.f32.xlu0 %v5824
      %v5826 = vpop.xlane.xlu0 %5825
      %v5827 = vsel %vm991, %v5823, 0.0
      %5828 = vadd.xlane.f32.xlu0 %v5827
      %v5829 = vpop.xlane.xlu0 %5828
      %v5830 = vrcp.pop %v5826
      %v5831 = vrcp.pop %v5829
      %v5832 = vmul.f32 %v5821, %v5830
      %v5833 = vmul.f32 %v5823, %v5831
      %5834 = vrot.lane.b32.xlu0 %v5715, 64
      %v5835 = vpop.permute.xlu0 %5834
      %5836 = vrot.lane.b32.xlu0 %v5718, 64
      %v5837 = vpop.permute.xlu0 %5836
      %v5840 = vsel %vm987, %v5832, 0
      %v5843 = vsel %vm987, %v5833, 0
      %v5845 = vsel %vm785, %v5837, 0
      %5847 = vmatprep.subr.mxu0 0.0
      %5848 = vmatpush1.msra.mxu0 0.0
      %5849 = vmatprep.subr.mxu0 0.0
      %5850 = vmatpush1.msra.mxu0 0.0
      %5851 = vmatprep.subr.mxu0 0.0
      %5852 = vmatpush1.msra.mxu0 0.0
      %5853 = vmatprep.subr.mxu0 0.0
      %5854 = vmatpush1.msra.mxu0 0.0
      %5855 = vmatprep.subr.mxu0 0.0
      %5856 = vmatpush1.msra.mxu0 0.0
      %5857 = vmatprep.subr.mxu0 0.0
      %5858 = vmatpush1.msra.mxu0 0.0
      %5859 = vmatprep.subr.mxu0 0.0
      %5860 = vmatpush1.msra.mxu0 0.0
      %5861 = vmatprep.subr.mxu0 0.0
      %5862 = vmatpush1.msra.mxu0 0.0
      %5863 = vmatprep.subr.mxu0 0.0
      %5864 = vmatpush1.msra.mxu0 0.0
      %5865 = vmatprep.subr.mxu0 0.0
      %5866 = vmatpush1.msra.mxu0 0.0
      %5867 = vmatprep.subr.mxu0 0.0
      %5868 = vmatpush1.msra.mxu0 0.0
      %5869 = vmatprep.subr.mxu0 0.0
      %5870 = vmatpush1.msra.mxu0 0.0
      %5871 = vmatprep.subr.mxu0 0.0
      %5872 = vmatpush1.msra.mxu0 0.0
      %5873 = vmatprep.subr.mxu0 0.0
      %5874 = vmatpush1.msra.mxu0 0.0
      %5875 = vmatprep.subr.mxu0 0.0
      %5876 = vmatpush1.msra.mxu0 %v5845
      %5877 = vmatprep.subr.mxu0 0.0
      %5878 = vmatpush1.msra.mxu0 %v5835
      %5879 = vmatprep.subr.mxu0 0.0
      %5880 = vmatpush2.msra.mxu0 0.0
      %5881 = vmatprep.subr.mxu0 0.0
      %5882 = vmatpush2.msra.mxu0 0.0
      %5883 = vmatprep.subr.mxu0 0.0
      %5884 = vmatpush2.msra.mxu0 0.0
      %5885 = vmatprep.subr.mxu0 0.0
      %5886 = vmatpush2.msra.mxu0 0.0
      %5887 = vmatprep.subr.mxu0 0.0
      %5888 = vmatpush2.msra.mxu0 0.0
      %5889 = vmatprep.subr.mxu0 0.0
      %5890 = vmatpush2.msra.mxu0 0.0
      %5891 = vmatprep.subr.mxu0 0.0
      %5892 = vmatpush2.msra.mxu0 0.0
      %5893 = vmatprep.subr.mxu0 0.0
      %5894 = vmatpush2.msra.mxu0 0.0
      %5895 = vmatprep.subr.mxu0 0.0
      %5896 = vmatpush2.msra.mxu0 0.0
      %5897 = vmatprep.subr.mxu0 0.0
      %5898 = vmatpush2.msra.mxu0 0.0
      %5899 = vmatprep.subr.mxu0 0.0
      %5900 = vmatpush2.msra.mxu0 0.0
      %5901 = vmatprep.subr.mxu0 0.0
      %5902 = vmatpush2.msra.mxu0 0.0
      %5903 = vmatprep.subr.mxu0 0.0
      %5904 = vmatpush2.msra.mxu0 0.0
      %5905 = vmatprep.subr.mxu0 0.0
      %5906 = vmatpush2.msra.mxu0 0.0
      %5907 = vmatprep.subr.mxu0 0.0
      %5908 = vmatpush2.msra.mxu0 0.0
      %5909 = vmatprep.subr.mxu0 0.0
      %5910 = vmatpush2.msra.mxu0 0.0
      %5911 = vmatprep.mubr.f32.mxu0 0.0
      %5912 = vmatmul.mubr.f32.gmra.mxu0 %v5840
      %v5913 = vpop.f32.mrf.mxu0
      %v5914 = vadd.f32 0.0, %v5913
      %v5915 = vpop.f32.mrf.mxu0
      %5916 = vmatprep.mubr.f32.mxu0 0.0
      %5917 = vmatmul.mubr.f32.gmra.mxu0 %v5843
      %v5918 = vpop.f32.mrf.mxu0
      %v5919 = vadd.f32 0.0, %v5918
      %v5920 = vpop.f32.mrf.mxu0
      %5921 = vdwg.mxu0
      %5922 = vrot.lane.b32.xlu0 %v5715, 120
      %v5923 = vpop.permute.xlu0 %5922
      %5924 = vrot.lane.b32.xlu0 %v5718, 120
      %v5925 = vpop.permute.xlu0 %5924
      %5926 = vrot.lane.b32.xlu0 %v5715, 88
      %v5927 = vpop.permute.xlu0 %5926
      %5928 = vrot.lane.b32.xlu0 %v5718, 88
      %v5929 = vpop.permute.xlu0 %5928
      %v5930 = vsel %vm901, %v5923, 0
      %v5932 = vsel %vm901, %v5925, 0
      %v5934 = vsel %vm901, %v5927, 0
      %v5936 = vsel %vm901, %v5929, 0
      %5938 = vmatprep.subr.mxu0 0.0
      %5939 = vmatpush1.xpose.msra.mxu0 0.0
      %5940 = vmatprep.subr.mxu0 0.0
      %5941 = vmatpush1.xpose.msra.mxu0 0.0
      %5942 = vmatprep.subr.mxu0 0.0
      %5943 = vmatpush1.xpose.msra.mxu0 0.0
      %5944 = vmatprep.subr.mxu0 0.0
      %5945 = vmatpush1.xpose.msra.mxu0 0.0
      %5946 = vmatprep.subr.mxu0 0.0
      %5947 = vmatpush1.xpose.msra.mxu0 0.0
      %5948 = vmatprep.subr.mxu0 0.0
      %5949 = vmatpush1.xpose.msra.mxu0 0.0
      %5950 = vmatprep.subr.mxu0 0.0
      %5951 = vmatpush1.xpose.msra.mxu0 0.0
      %5952 = vmatprep.subr.mxu0 0.0
      %5953 = vmatpush1.xpose.msra.mxu0 0.0
      %5954 = vmatprep.subr.mxu0 0.0
      %5955 = vmatpush1.xpose.msra.mxu0 0.0
      %5956 = vmatprep.subr.mxu0 0.0
      %5957 = vmatpush1.xpose.msra.mxu0 0.0
      %5958 = vmatprep.subr.mxu0 0.0
      %5959 = vmatpush1.xpose.msra.mxu0 0.0
      %5960 = vmatprep.subr.mxu0 0.0
      %5961 = vmatpush1.xpose.msra.mxu0 0.0
      %5962 = vmatprep.subr.mxu0 0.0
      %5963 = vmatpush1.xpose.msra.mxu0 0.0
      %5964 = vmatprep.subr.mxu0 0.0
      %5965 = vmatpush1.xpose.msra.mxu0 0.0
      %5966 = vmatprep.subr.mxu0 0.0
      %5967 = vmatpush1.xpose.msra.mxu0 %v5936
      %5968 = vmatprep.subr.mxu0 0.0
      %5969 = vmatpush1.xpose.msra.mxu0 %v5934
      %5970 = vmatprep.subr.mxu0 0.0
      %5971 = vmatpush2.xpose.msra.mxu0 0.0
      %5972 = vmatprep.subr.mxu0 0.0
      %5973 = vmatpush2.xpose.msra.mxu0 0.0
      %5974 = vmatprep.subr.mxu0 0.0
      %5975 = vmatpush2.xpose.msra.mxu0 0.0
      %5976 = vmatprep.subr.mxu0 0.0
      %5977 = vmatpush2.xpose.msra.mxu0 0.0
      %5978 = vmatprep.subr.mxu0 0.0
      %5979 = vmatpush2.xpose.msra.mxu0 0.0
      %5980 = vmatprep.subr.mxu0 0.0
      %5981 = vmatpush2.xpose.msra.mxu0 0.0
      %5982 = vmatprep.subr.mxu0 0.0
      %5983 = vmatpush2.xpose.msra.mxu0 0.0
      %5984 = vmatprep.subr.mxu0 0.0
      %5985 = vmatpush2.xpose.msra.mxu0 0.0
      %5986 = vmatprep.subr.mxu0 0.0
      %5987 = vmatpush2.xpose.msra.mxu0 0.0
      %5988 = vmatprep.subr.mxu0 0.0
      %5989 = vmatpush2.xpose.msra.mxu0 0.0
      %5990 = vmatprep.subr.mxu0 0.0
      %5991 = vmatpush2.xpose.msra.mxu0 0.0
      %5992 = vmatprep.subr.mxu0 0.0
      %5993 = vmatpush2.xpose.msra.mxu0 0.0
      %5994 = vmatprep.subr.mxu0 0.0
      %5995 = vmatpush2.xpose.msra.mxu0 0.0
      %5996 = vmatprep.subr.mxu0 0.0
      %5997 = vmatpush2.xpose.msra.mxu0 0.0
      %5998 = vmatprep.subr.mxu0 0.0
      %5999 = vmatpush2.xpose.msra.mxu0 0.0
      %6000 = vmatprep.subr.mxu0 0.0
      %6001 = vmatpush2.xpose.msra.mxu0 0.0
      %6002 = vmatprep.mubr.f32.mxu0 0.0
      %6003 = vmatmul.mubr.f32.gmra.mxu0 %v5930
      %v6004 = vpop.f32.mrf.mxu0
      %v6005 = vadd.f32 0.0, %v6004
      %v6006 = vpop.f32.mrf.mxu0
      %6007 = vmatprep.mubr.f32.mxu0 0.0
      %6008 = vmatmul.mubr.f32.gmra.mxu0 %v5932
      %v6009 = vpop.f32.mrf.mxu0
      %v6010 = vadd.f32 0.0, %v6009
      %v6011 = vpop.f32.mrf.mxu0
      %6012 = vdwg.mxu0
      %v6013 = vmul.f32 %v6005, 0.35355338
      %v6014 = vmul.f32 %v6010, 0.35355338
      %v6015 = vsel %vm987, %v6013, -inf
      %6016 = vmax.xlane.f32.xlu0 %v6015
      %v6017 = vpop.xlane.xlu0 %6016
      %v6018 = vsel %vm991, %v6014, -inf
      %6019 = vmax.xlane.f32.xlu0 %v6018
      %v6020 = vpop.xlane.xlu0 %6019
      %v6021 = vsub.f32 %v6013, %v6017
      %v6022 = vsub.f32 %v6014, %v6020
      %v6023 = vmul.f32 %v6021, 1.442695
      %v6024 = vpow.pop %v6023
      %v6025 = vmul.f32 %v6022, 1.442695
      %v6026 = vpow.pop %v6025
      %v6027 = vsel %vm987, %v6024, 0.0
      %6028 = vadd.xlane.f32.xlu0 %v6027
      %v6029 = vpop.xlane.xlu0 %6028
      %v6030 = vsel %vm991, %v6026, 0.0
      %6031 = vadd.xlane.f32.xlu0 %v6030
      %v6032 = vpop.xlane.xlu0 %6031
      %v6033 = vrcp.pop %v6029
      %v6034 = vrcp.pop %v6032
      %v6035 = vmul.f32 %v6024, %v6033
      %v6036 = vmul.f32 %v6026, %v6034
      %6037 = vrot.lane.b32.xlu0 %v5715, 56
      %v6038 = vpop.permute.xlu0 %6037
      %6039 = vrot.lane.b32.xlu0 %v5718, 56
      %v6040 = vpop.permute.xlu0 %6039
      %v6043 = vsel %vm987, %v6035, 0
      %v6046 = vsel %vm987, %v6036, 0
      %v6048 = vsel %vm785, %v6040, 0
      %6050 = vmatprep.subr.mxu0 0.0
      %6051 = vmatpush1.msra.mxu0 0.0
      %6052 = vmatprep.subr.mxu0 0.0
      %6053 = vmatpush1.msra.mxu0 0.0
      %6054 = vmatprep.subr.mxu0 0.0
      %6055 = vmatpush1.msra.mxu0 0.0
      %6056 = vmatprep.subr.mxu0 0.0
      %6057 = vmatpush1.msra.mxu0 0.0
      %6058 = vmatprep.subr.mxu0 0.0
      %6059 = vmatpush1.msra.mxu0 0.0
      %6060 = vmatprep.subr.mxu0 0.0
      %6061 = vmatpush1.msra.mxu0 0.0
      %6062 = vmatprep.subr.mxu0 0.0
      %6063 = vmatpush1.msra.mxu0 0.0
      %6064 = vmatprep.subr.mxu0 0.0
      %6065 = vmatpush1.msra.mxu0 0.0
      %6066 = vmatprep.subr.mxu0 0.0
      %6067 = vmatpush1.msra.mxu0 0.0
      %6068 = vmatprep.subr.mxu0 0.0
      %6069 = vmatpush1.msra.mxu0 0.0
      %6070 = vmatprep.subr.mxu0 0.0
      %6071 = vmatpush1.msra.mxu0 0.0
      %6072 = vmatprep.subr.mxu0 0.0
      %6073 = vmatpush1.msra.mxu0 0.0
      %6074 = vmatprep.subr.mxu0 0.0
      %6075 = vmatpush1.msra.mxu0 0.0
      %6076 = vmatprep.subr.mxu0 0.0
      %6077 = vmatpush1.msra.mxu0 0.0
      %6078 = vmatprep.subr.mxu0 0.0
      %6079 = vmatpush1.msra.mxu0 %v6048
      %6080 = vmatprep.subr.mxu0 0.0
      %6081 = vmatpush1.msra.mxu0 %v6038
      %6082 = vmatprep.subr.mxu0 0.0
      %6083 = vmatpush2.msra.mxu0 0.0
      %6084 = vmatprep.subr.mxu0 0.0
      %6085 = vmatpush2.msra.mxu0 0.0
      %6086 = vmatprep.subr.mxu0 0.0
      %6087 = vmatpush2.msra.mxu0 0.0
      %6088 = vmatprep.subr.mxu0 0.0
      %6089 = vmatpush2.msra.mxu0 0.0
      %6090 = vmatprep.subr.mxu0 0.0
      %6091 = vmatpush2.msra.mxu0 0.0
      %6092 = vmatprep.subr.mxu0 0.0
      %6093 = vmatpush2.msra.mxu0 0.0
      %6094 = vmatprep.subr.mxu0 0.0
      %6095 = vmatpush2.msra.mxu0 0.0
      %6096 = vmatprep.subr.mxu0 0.0
      %6097 = vmatpush2.msra.mxu0 0.0
      %6098 = vmatprep.subr.mxu0 0.0
      %6099 = vmatpush2.msra.mxu0 0.0
      %6100 = vmatprep.subr.mxu0 0.0
      %6101 = vmatpush2.msra.mxu0 0.0
      %6102 = vmatprep.subr.mxu0 0.0
      %6103 = vmatpush2.msra.mxu0 0.0
      %6104 = vmatprep.subr.mxu0 0.0
      %6105 = vmatpush2.msra.mxu0 0.0
      %6106 = vmatprep.subr.mxu0 0.0
      %6107 = vmatpush2.msra.mxu0 0.0
      %6108 = vmatprep.subr.mxu0 0.0
      %6109 = vmatpush2.msra.mxu0 0.0
      %6110 = vmatprep.subr.mxu0 0.0
      %6111 = vmatpush2.msra.mxu0 0.0
      %6112 = vmatprep.subr.mxu0 0.0
      %6113 = vmatpush2.msra.mxu0 0.0
      %6114 = vmatprep.mubr.f32.mxu0 0.0
      %6115 = vmatmul.mubr.f32.gmra.mxu0 %v6043
      %v6116 = vpop.f32.mrf.mxu0
      %v6117 = vadd.f32 0.0, %v6116
      %v6118 = vpop.f32.mrf.mxu0
      %6119 = vmatprep.mubr.f32.mxu0 0.0
      %6120 = vmatmul.mubr.f32.gmra.mxu0 %v6046
      %v6121 = vpop.f32.mrf.mxu0
      %v6122 = vadd.f32 0.0, %v6121
      %v6123 = vpop.f32.mrf.mxu0
      %6124 = vdwg.mxu0
      %6125 = vrot.lane.b32.xlu0 %v5715, 112
      %v6126 = vpop.permute.xlu0 %6125
      %6127 = vrot.lane.b32.xlu0 %v5718, 112
      %v6128 = vpop.permute.xlu0 %6127
      %6129 = vrot.lane.b32.xlu0 %v5715, 80
      %v6130 = vpop.permute.xlu0 %6129
      %6131 = vrot.lane.b32.xlu0 %v5718, 80
      %v6132 = vpop.permute.xlu0 %6131
      %v6133 = vsel %vm901, %v6126, 0
      %v6135 = vsel %vm901, %v6128, 0
      %v6137 = vsel %vm901, %v6130, 0
      %v6139 = vsel %vm901, %v6132, 0
      %6141 = vmatprep.subr.mxu0 0.0
      %6142 = vmatpush1.xpose.msra.mxu0 0.0
      %6143 = vmatprep.subr.mxu0 0.0
      %6144 = vmatpush1.xpose.msra.mxu0 0.0
      %6145 = vmatprep.subr.mxu0 0.0
      %6146 = vmatpush1.xpose.msra.mxu0 0.0
      %6147 = vmatprep.subr.mxu0 0.0
      %6148 = vmatpush1.xpose.msra.mxu0 0.0
      %6149 = vmatprep.subr.mxu0 0.0
      %6150 = vmatpush1.xpose.msra.mxu0 0.0
      %6151 = vmatprep.subr.mxu0 0.0
      %6152 = vmatpush1.xpose.msra.mxu0 0.0
      %6153 = vmatprep.subr.mxu0 0.0
      %6154 = vmatpush1.xpose.msra.mxu0 0.0
      %6155 = vmatprep.subr.mxu0 0.0
      %6156 = vmatpush1.xpose.msra.mxu0 0.0
      %6157 = vmatprep.subr.mxu0 0.0
      %6158 = vmatpush1.xpose.msra.mxu0 0.0
      %6159 = vmatprep.subr.mxu0 0.0
      %6160 = vmatpush1.xpose.msra.mxu0 0.0
      %6161 = vmatprep.subr.mxu0 0.0
      %6162 = vmatpush1.xpose.msra.mxu0 0.0
      %6163 = vmatprep.subr.mxu0 0.0
      %6164 = vmatpush1.xpose.msra.mxu0 0.0
      %6165 = vmatprep.subr.mxu0 0.0
      %6166 = vmatpush1.xpose.msra.mxu0 0.0
      %6167 = vmatprep.subr.mxu0 0.0
      %6168 = vmatpush1.xpose.msra.mxu0 0.0
      %6169 = vmatprep.subr.mxu0 0.0
      %6170 = vmatpush1.xpose.msra.mxu0 %v6139
      %6171 = vmatprep.subr.mxu0 0.0
      %6172 = vmatpush1.xpose.msra.mxu0 %v6137
      %6173 = vmatprep.subr.mxu0 0.0
      %6174 = vmatpush2.xpose.msra.mxu0 0.0
      %6175 = vmatprep.subr.mxu0 0.0
      %6176 = vmatpush2.xpose.msra.mxu0 0.0
      %6177 = vmatprep.subr.mxu0 0.0
      %6178 = vmatpush2.xpose.msra.mxu0 0.0
      %6179 = vmatprep.subr.mxu0 0.0
      %6180 = vmatpush2.xpose.msra.mxu0 0.0
      %6181 = vmatprep.subr.mxu0 0.0
      %6182 = vmatpush2.xpose.msra.mxu0 0.0
      %6183 = vmatprep.subr.mxu0 0.0
      %6184 = vmatpush2.xpose.msra.mxu0 0.0
      %6185 = vmatprep.subr.mxu0 0.0
      %6186 = vmatpush2.xpose.msra.mxu0 0.0
      %6187 = vmatprep.subr.mxu0 0.0
      %6188 = vmatpush2.xpose.msra.mxu0 0.0
      %6189 = vmatprep.subr.mxu0 0.0
      %6190 = vmatpush2.xpose.msra.mxu0 0.0
      %6191 = vmatprep.subr.mxu0 0.0
      %6192 = vmatpush2.xpose.msra.mxu0 0.0
      %6193 = vmatprep.subr.mxu0 0.0
      %6194 = vmatpush2.xpose.msra.mxu0 0.0
      %6195 = vmatprep.subr.mxu0 0.0
      %6196 = vmatpush2.xpose.msra.mxu0 0.0
      %6197 = vmatprep.subr.mxu0 0.0
      %6198 = vmatpush2.xpose.msra.mxu0 0.0
      %6199 = vmatprep.subr.mxu0 0.0
      %6200 = vmatpush2.xpose.msra.mxu0 0.0
      %6201 = vmatprep.subr.mxu0 0.0
      %6202 = vmatpush2.xpose.msra.mxu0 0.0
      %6203 = vmatprep.subr.mxu0 0.0
      %6204 = vmatpush2.xpose.msra.mxu0 0.0
      %6205 = vmatprep.mubr.f32.mxu0 0.0
      %6206 = vmatmul.mubr.f32.gmra.mxu0 %v6133
      %v6207 = vpop.f32.mrf.mxu0
      %v6208 = vadd.f32 0.0, %v6207
      %v6209 = vpop.f32.mrf.mxu0
      %6210 = vmatprep.mubr.f32.mxu0 0.0
      %6211 = vmatmul.mubr.f32.gmra.mxu0 %v6135
      %v6212 = vpop.f32.mrf.mxu0
      %v6213 = vadd.f32 0.0, %v6212
      %v6214 = vpop.f32.mrf.mxu0
      %6215 = vdwg.mxu0
      %v6216 = vmul.f32 %v6208, 0.35355338
      %v6217 = vmul.f32 %v6213, 0.35355338
      %v6218 = vsel %vm987, %v6216, -inf
      %6219 = vmax.xlane.f32.xlu0 %v6218
      %v6220 = vpop.xlane.xlu0 %6219
      %v6221 = vsel %vm991, %v6217, -inf
      %6222 = vmax.xlane.f32.xlu0 %v6221
      %v6223 = vpop.xlane.xlu0 %6222
      %v6224 = vsub.f32 %v6216, %v6220
      %v6225 = vsub.f32 %v6217, %v6223
      %v6226 = vmul.f32 %v6224, 1.442695
      %v6227 = vpow.pop %v6226
      %v6228 = vmul.f32 %v6225, 1.442695
      %v6229 = vpow.pop %v6228
      %v6230 = vsel %vm987, %v6227, 0.0
      %6231 = vadd.xlane.f32.xlu0 %v6230
      %v6232 = vpop.xlane.xlu0 %6231
      %v6233 = vsel %vm991, %v6229, 0.0
      %6234 = vadd.xlane.f32.xlu0 %v6233
      %v6235 = vpop.xlane.xlu0 %6234
      %v6236 = vrcp.pop %v6232
      %v6237 = vrcp.pop %v6235
      %v6238 = vmul.f32 %v6227, %v6236
      %v6239 = vmul.f32 %v6229, %v6237
      %6240 = vrot.lane.b32.xlu0 %v5715, 48
      %v6241 = vpop.permute.xlu0 %6240
      %6242 = vrot.lane.b32.xlu0 %v5718, 48
      %v6243 = vpop.permute.xlu0 %6242
      %v6246 = vsel %vm987, %v6238, 0
      %v6249 = vsel %vm987, %v6239, 0
      %v6251 = vsel %vm785, %v6243, 0
      %6253 = vmatprep.subr.mxu0 0.0
      %6254 = vmatpush1.msra.mxu0 0.0
      %6255 = vmatprep.subr.mxu0 0.0
      %6256 = vmatpush1.msra.mxu0 0.0
      %6257 = vmatprep.subr.mxu0 0.0
      %6258 = vmatpush1.msra.mxu0 0.0
      %6259 = vmatprep.subr.mxu0 0.0
      %6260 = vmatpush1.msra.mxu0 0.0
      %6261 = vmatprep.subr.mxu0 0.0
      %6262 = vmatpush1.msra.mxu0 0.0
      %6263 = vmatprep.subr.mxu0 0.0
      %6264 = vmatpush1.msra.mxu0 0.0
      %6265 = vmatprep.subr.mxu0 0.0
      %6266 = vmatpush1.msra.mxu0 0.0
      %6267 = vmatprep.subr.mxu0 0.0
      %6268 = vmatpush1.msra.mxu0 0.0
      %6269 = vmatprep.subr.mxu0 0.0
      %6270 = vmatpush1.msra.mxu0 0.0
      %6271 = vmatprep.subr.mxu0 0.0
      %6272 = vmatpush1.msra.mxu0 0.0
      %6273 = vmatprep.subr.mxu0 0.0
      %6274 = vmatpush1.msra.mxu0 0.0
      %6275 = vmatprep.subr.mxu0 0.0
      %6276 = vmatpush1.msra.mxu0 0.0
      %6277 = vmatprep.subr.mxu0 0.0
      %6278 = vmatpush1.msra.mxu0 0.0
      %6279 = vmatprep.subr.mxu0 0.0
      %6280 = vmatpush1.msra.mxu0 0.0
      %6281 = vmatprep.subr.mxu0 0.0
      %6282 = vmatpush1.msra.mxu0 %v6251
      %6283 = vmatprep.subr.mxu0 0.0
      %6284 = vmatpush1.msra.mxu0 %v6241
      %6285 = vmatprep.subr.mxu0 0.0
      %6286 = vmatpush2.msra.mxu0 0.0
      %6287 = vmatprep.subr.mxu0 0.0
      %6288 = vmatpush2.msra.mxu0 0.0
      %6289 = vmatprep.subr.mxu0 0.0
      %6290 = vmatpush2.msra.mxu0 0.0
      %6291 = vmatprep.subr.mxu0 0.0
      %6292 = vmatpush2.msra.mxu0 0.0
      %6293 = vmatprep.subr.mxu0 0.0
      %6294 = vmatpush2.msra.mxu0 0.0
      %6295 = vmatprep.subr.mxu0 0.0
      %6296 = vmatpush2.msra.mxu0 0.0
      %6297 = vmatprep.subr.mxu0 0.0
      %6298 = vmatpush2.msra.mxu0 0.0
      %6299 = vmatprep.subr.mxu0 0.0
      %6300 = vmatpush2.msra.mxu0 0.0
      %6301 = vmatprep.subr.mxu0 0.0
      %6302 = vmatpush2.msra.mxu0 0.0
      %6303 = vmatprep.subr.mxu0 0.0
      %6304 = vmatpush2.msra.mxu0 0.0
      %6305 = vmatprep.subr.mxu0 0.0
      %6306 = vmatpush2.msra.mxu0 0.0
      %6307 = vmatprep.subr.mxu0 0.0
      %6308 = vmatpush2.msra.mxu0 0.0
      %6309 = vmatprep.subr.mxu0 0.0
      %6310 = vmatpush2.msra.mxu0 0.0
      %6311 = vmatprep.subr.mxu0 0.0
      %6312 = vmatpush2.msra.mxu0 0.0
      %6313 = vmatprep.subr.mxu0 0.0
      %6314 = vmatpush2.msra.mxu0 0.0
      %6315 = vmatprep.subr.mxu0 0.0
      %6316 = vmatpush2.msra.mxu0 0.0
      %6317 = vmatprep.mubr.f32.mxu0 0.0
      %6318 = vmatmul.mubr.f32.gmra.mxu0 %v6246
      %v6319 = vpop.f32.mrf.mxu0
      %v6320 = vadd.f32 0.0, %v6319
      %v6321 = vpop.f32.mrf.mxu0
      %6322 = vmatprep.mubr.f32.mxu0 0.0
      %6323 = vmatmul.mubr.f32.gmra.mxu0 %v6249
      %v6324 = vpop.f32.mrf.mxu0
      %v6325 = vadd.f32 0.0, %v6324
      %v6326 = vpop.f32.mrf.mxu0
      %6327 = vdwg.mxu0
      %6328 = vrot.lane.b32.xlu0 %v5715, 104
      %v6329 = vpop.permute.xlu0 %6328
      %6330 = vrot.lane.b32.xlu0 %v5718, 104
      %v6331 = vpop.permute.xlu0 %6330
      %6332 = vrot.lane.b32.xlu0 %v5715, 72
      %v6333 = vpop.permute.xlu0 %6332
      %6334 = vrot.lane.b32.xlu0 %v5718, 72
      %v6335 = vpop.permute.xlu0 %6334
      %v6336 = vsel %vm901, %v6329, 0
      %v6338 = vsel %vm901, %v6331, 0
      %v6340 = vsel %vm901, %v6333, 0
      %v6342 = vsel %vm901, %v6335, 0
      %6344 = vmatprep.subr.mxu0 0.0
      %6345 = vmatpush1.xpose.msra.mxu0 0.0
      %6346 = vmatprep.subr.mxu0 0.0
      %6347 = vmatpush1.xpose.msra.mxu0 0.0
      %6348 = vmatprep.subr.mxu0 0.0
      %6349 = vmatpush1.xpose.msra.mxu0 0.0
      %6350 = vmatprep.subr.mxu0 0.0
      %6351 = vmatpush1.xpose.msra.mxu0 0.0
      %6352 = vmatprep.subr.mxu0 0.0
      %6353 = vmatpush1.xpose.msra.mxu0 0.0
      %6354 = vmatprep.subr.mxu0 0.0
      %6355 = vmatpush1.xpose.msra.mxu0 0.0
      %6356 = vmatprep.subr.mxu0 0.0
      %6357 = vmatpush1.xpose.msra.mxu0 0.0
      %6358 = vmatprep.subr.mxu0 0.0
      %6359 = vmatpush1.xpose.msra.mxu0 0.0
      %6360 = vmatprep.subr.mxu0 0.0
      %6361 = vmatpush1.xpose.msra.mxu0 0.0
      %6362 = vmatprep.subr.mxu0 0.0
      %6363 = vmatpush1.xpose.msra.mxu0 0.0
      %6364 = vmatprep.subr.mxu0 0.0
      %6365 = vmatpush1.xpose.msra.mxu0 0.0
      %6366 = vmatprep.subr.mxu0 0.0
      %6367 = vmatpush1.xpose.msra.mxu0 0.0
      %6368 = vmatprep.subr.mxu0 0.0
      %6369 = vmatpush1.xpose.msra.mxu0 0.0
      %6370 = vmatprep.subr.mxu0 0.0
      %6371 = vmatpush1.xpose.msra.mxu0 0.0
      %6372 = vmatprep.subr.mxu0 0.0
      %6373 = vmatpush1.xpose.msra.mxu0 %v6342
      %6374 = vmatprep.subr.mxu0 0.0
      %6375 = vmatpush1.xpose.msra.mxu0 %v6340
      %6376 = vmatprep.subr.mxu0 0.0
      %6377 = vmatpush2.xpose.msra.mxu0 0.0
      %6378 = vmatprep.subr.mxu0 0.0
      %6379 = vmatpush2.xpose.msra.mxu0 0.0
      %6380 = vmatprep.subr.mxu0 0.0
      %6381 = vmatpush2.xpose.msra.mxu0 0.0
      %6382 = vmatprep.subr.mxu0 0.0
      %6383 = vmatpush2.xpose.msra.mxu0 0.0
      %6384 = vmatprep.subr.mxu0 0.0
      %6385 = vmatpush2.xpose.msra.mxu0 0.0
      %6386 = vmatprep.subr.mxu0 0.0
      %6387 = vmatpush2.xpose.msra.mxu0 0.0
      %6388 = vmatprep.subr.mxu0 0.0
      %6389 = vmatpush2.xpose.msra.mxu0 0.0
      %6390 = vmatprep.subr.mxu0 0.0
      %6391 = vmatpush2.xpose.msra.mxu0 0.0
      %6392 = vmatprep.subr.mxu0 0.0
      %6393 = vmatpush2.xpose.msra.mxu0 0.0
      %6394 = vmatprep.subr.mxu0 0.0
      %6395 = vmatpush2.xpose.msra.mxu0 0.0
      %6396 = vmatprep.subr.mxu0 0.0
      %6397 = vmatpush2.xpose.msra.mxu0 0.0
      %6398 = vmatprep.subr.mxu0 0.0
      %6399 = vmatpush2.xpose.msra.mxu0 0.0
      %6400 = vmatprep.subr.mxu0 0.0
      %6401 = vmatpush2.xpose.msra.mxu0 0.0
      %6402 = vmatprep.subr.mxu0 0.0
      %6403 = vmatpush2.xpose.msra.mxu0 0.0
      %6404 = vmatprep.subr.mxu0 0.0
      %6405 = vmatpush2.xpose.msra.mxu0 0.0
      %6406 = vmatprep.subr.mxu0 0.0
      %6407 = vmatpush2.xpose.msra.mxu0 0.0
      %6408 = vmatprep.mubr.f32.mxu0 0.0
      %6409 = vmatmul.mubr.f32.gmra.mxu0 %v6336
      %v6410 = vpop.f32.mrf.mxu0
      %v6411 = vadd.f32 0.0, %v6410
      %v6412 = vpop.f32.mrf.mxu0
      %6413 = vmatprep.mubr.f32.mxu0 0.0
      %6414 = vmatmul.mubr.f32.gmra.mxu0 %v6338
      %v6415 = vpop.f32.mrf.mxu0
      %v6416 = vadd.f32 0.0, %v6415
      %v6417 = vpop.f32.mrf.mxu0
      %6418 = vdwg.mxu0
      %v6419 = vmul.f32 %v6411, 0.35355338
      %v6420 = vmul.f32 %v6416, 0.35355338
      %v6421 = vsel %vm987, %v6419, -inf
      %6422 = vmax.xlane.f32.xlu0 %v6421
      %v6423 = vpop.xlane.xlu0 %6422
      %v6424 = vsel %vm991, %v6420, -inf
      %6425 = vmax.xlane.f32.xlu0 %v6424
      %v6426 = vpop.xlane.xlu0 %6425
      %v6427 = vsub.f32 %v6419, %v6423
      %v6428 = vsub.f32 %v6420, %v6426
      %v6429 = vmul.f32 %v6427, 1.442695
      %v6430 = vpow.pop %v6429
      %v6431 = vmul.f32 %v6428, 1.442695
      %v6432 = vpow.pop %v6431
      %v6433 = vsel %vm987, %v6430, 0.0
      %6434 = vadd.xlane.f32.xlu0 %v6433
      %v6435 = vpop.xlane.xlu0 %6434
      %v6436 = vsel %vm991, %v6432, 0.0
      %6437 = vadd.xlane.f32.xlu0 %v6436
      %v6438 = vpop.xlane.xlu0 %6437
      %v6439 = vrcp.pop %v6435
      %v6440 = vrcp.pop %v6438
      %v6441 = vmul.f32 %v6430, %v6439
      %v6442 = vmul.f32 %v6432, %v6440
      %6443 = vrot.lane.b32.xlu0 %v5715, 40
      %v6444 = vpop.permute.xlu0 %6443
      %6445 = vrot.lane.b32.xlu0 %v5718, 40
      %v6446 = vpop.permute.xlu0 %6445
      %v6449 = vsel %vm987, %v6441, 0
      %v6452 = vsel %vm987, %v6442, 0
      %v6454 = vsel %vm785, %v6446, 0
      %6456 = vmatprep.subr.mxu0 0.0
      %6457 = vmatpush1.msra.mxu0 0.0
      %6458 = vmatprep.subr.mxu0 0.0
      %6459 = vmatpush1.msra.mxu0 0.0
      %6460 = vmatprep.subr.mxu0 0.0
      %6461 = vmatpush1.msra.mxu0 0.0
      %6462 = vmatprep.subr.mxu0 0.0
      %6463 = vmatpush1.msra.mxu0 0.0
      %6464 = vmatprep.subr.mxu0 0.0
      %6465 = vmatpush1.msra.mxu0 0.0
      %6466 = vmatprep.subr.mxu0 0.0
      %6467 = vmatpush1.msra.mxu0 0.0
      %6468 = vmatprep.subr.mxu0 0.0
      %6469 = vmatpush1.msra.mxu0 0.0
      %6470 = vmatprep.subr.mxu0 0.0
      %6471 = vmatpush1.msra.mxu0 0.0
      %6472 = vmatprep.subr.mxu0 0.0
      %6473 = vmatpush1.msra.mxu0 0.0
      %6474 = vmatprep.subr.mxu0 0.0
      %6475 = vmatpush1.msra.mxu0 0.0
      %6476 = vmatprep.subr.mxu0 0.0
      %6477 = vmatpush1.msra.mxu0 0.0
      %6478 = vmatprep.subr.mxu0 0.0
      %6479 = vmatpush1.msra.mxu0 0.0
      %6480 = vmatprep.subr.mxu0 0.0
      %6481 = vmatpush1.msra.mxu0 0.0
      %6482 = vmatprep.subr.mxu0 0.0
      %6483 = vmatpush1.msra.mxu0 0.0
      %6484 = vmatprep.subr.mxu0 0.0
      %6485 = vmatpush1.msra.mxu0 %v6454
      %6486 = vmatprep.subr.mxu0 0.0
      %6487 = vmatpush1.msra.mxu0 %v6444
      %6488 = vmatprep.subr.mxu0 0.0
      %6489 = vmatpush2.msra.mxu0 0.0
      %6490 = vmatprep.subr.mxu0 0.0
      %6491 = vmatpush2.msra.mxu0 0.0
      %6492 = vmatprep.subr.mxu0 0.0
      %6493 = vmatpush2.msra.mxu0 0.0
      %6494 = vmatprep.subr.mxu0 0.0
      %6495 = vmatpush2.msra.mxu0 0.0
      %6496 = vmatprep.subr.mxu0 0.0
      %6497 = vmatpush2.msra.mxu0 0.0
      %6498 = vmatprep.subr.mxu0 0.0
      %6499 = vmatpush2.msra.mxu0 0.0
      %6500 = vmatprep.subr.mxu0 0.0
      %6501 = vmatpush2.msra.mxu0 0.0
      %6502 = vmatprep.subr.mxu0 0.0
      %6503 = vmatpush2.msra.mxu0 0.0
      %6504 = vmatprep.subr.mxu0 0.0
      %6505 = vmatpush2.msra.mxu0 0.0
      %6506 = vmatprep.subr.mxu0 0.0
      %6507 = vmatpush2.msra.mxu0 0.0
      %6508 = vmatprep.subr.mxu0 0.0
      %6509 = vmatpush2.msra.mxu0 0.0
      %6510 = vmatprep.subr.mxu0 0.0
      %6511 = vmatpush2.msra.mxu0 0.0
      %6512 = vmatprep.subr.mxu0 0.0
      %6513 = vmatpush2.msra.mxu0 0.0
      %6514 = vmatprep.subr.mxu0 0.0
      %6515 = vmatpush2.msra.mxu0 0.0
      %6516 = vmatprep.subr.mxu0 0.0
      %6517 = vmatpush2.msra.mxu0 0.0
      %6518 = vmatprep.subr.mxu0 0.0
      %6519 = vmatpush2.msra.mxu0 0.0
      %6520 = vmatprep.mubr.f32.mxu0 0.0
      %6521 = vmatmul.mubr.f32.gmra.mxu0 %v6449
      %v6522 = vpop.f32.mrf.mxu0
      %v6523 = vadd.f32 0.0, %v6522
      %v6524 = vpop.f32.mrf.mxu0
      %6525 = vmatprep.mubr.f32.mxu0 0.0
      %6526 = vmatmul.mubr.f32.gmra.mxu0 %v6452
      %v6527 = vpop.f32.mrf.mxu0
      %v6528 = vadd.f32 0.0, %v6527
      %v6529 = vpop.f32.mrf.mxu0
      %6530 = vdwg.mxu0
      %6533 = vrot.lane.b32.xlu0 %v6117, 8
      %v6534 = vpop.permute.xlu0 %6533
      %6535 = vrot.lane.b32.xlu0 %v6122, 8
      %v6536 = vpop.permute.xlu0 %6535
      %6541 = vrot.lane.b32.xlu0 %v6320, 16
      %v6542 = vpop.permute.xlu0 %6541
      %6543 = vrot.lane.b32.xlu0 %v6325, 16
      %v6544 = vpop.permute.xlu0 %6543
      %6549 = vrot.lane.b32.xlu0 %v6523, 24
      %v6550 = vpop.permute.xlu0 %6549
      %6551 = vrot.lane.b32.xlu0 %v6528, 24
      %v6552 = vpop.permute.xlu0 %6551
      %v6555 = vsel %vm901, %v5914, %v6534
      %v6556 = vsel %vm901, %v5919, %v6536
      %v6557 = vsel %vm1734, %v6555, %v6542
      %v6558 = vsel %vm1734, %v6556, %v6544
      %v6559 = vsel %vm1737, %v6557, %v6550
      %v6560 = vsel %vm1737, %v6558, %v6552
      %v6561 = vpack.c.bf16 %v6560, %v6559
      %v6562 = vlaneseq
      %v6563 = vshrl.u32 %v6562, 7
      %v6564 = vsub.s32 0, %v6563
      %v6565 = vrot.slane %v5615, %v6564
      %v6570 = vunpack.c.l.b16 %v5660
      %v6571 = vunpack.c.l.b16 %v5661
      %v6572 = vunpack.c.l.b16 %v5662
      %v6573 = vunpack.c.l.b16 %v5663
      %v6574 = vpack.c.b16 %v6571, %v6570
      %v6575 = vpack.c.b16 %v6573, %v6572
      %v6579 = vsel %vm738, %v6561, 0
      %6581 = vmatprep.subr.bf16.mxu0 0
      %6582 = vmatpush1.bf16.msra.mxu0 0
      %6583 = vmatprep.subr.bf16.mxu0 0
      %6584 = vmatpush1.bf16.msra.mxu0 0
      %6585 = vmatprep.subr.bf16.mxu0 0
      %6586 = vmatpush1.bf16.msra.mxu0 0
      %6587 = vmatprep.subr.bf16.mxu0 0
      %6588 = vmatpush1.bf16.msra.mxu0 0
      %6589 = vmatprep.subr.bf16.mxu0 0
      %6590 = vmatpush1.bf16.msra.mxu0 0
      %6591 = vmatprep.subr.bf16.mxu0 0
      %6592 = vmatpush1.bf16.msra.mxu0 0
      %6593 = vmatprep.subr.bf16.mxu0 0
      %6594 = vmatpush1.bf16.msra.mxu0 %v6575
      %6595 = vmatprep.subr.bf16.mxu0 0
      %6596 = vmatpush1.bf16.msra.mxu0 %v6574
      %6597 = vmatprep.subr.bf16.mxu0 0
      %6598 = vmatpush2.bf16.msra.mxu0 0
      %6599 = vmatprep.subr.bf16.mxu0 0
      %6600 = vmatpush2.bf16.msra.mxu0 0
      %6601 = vmatprep.subr.bf16.mxu0 0
      %6602 = vmatpush2.bf16.msra.mxu0 0
      %6603 = vmatprep.subr.bf16.mxu0 0
      %6604 = vmatpush2.bf16.msra.mxu0 0
      %6605 = vmatprep.subr.bf16.mxu0 0
      %6606 = vmatpush2.bf16.msra.mxu0 0
      %6607 = vmatprep.subr.bf16.mxu0 0
      %6608 = vmatpush2.bf16.msra.mxu0 0
      %6609 = vmatprep.subr.bf16.mxu0 0
      %6610 = vmatpush2.bf16.msra.mxu0 0
      %6611 = vmatprep.subr.bf16.mxu0 0
      %6612 = vmatpush2.bf16.msra.mxu0 0
      %6613 = vmatprep.mubr.bf16.mxu0 0
      %6614 = vmatmul.mubr.bf16.gmra.mxu0 %v6579
      %v6615 = vpop.f32.mrf.mxu0
      %v6616 = vadd.f32 %v6565, %v6615
      %v6617 = vpop.f32.mrf.mxu0
      %v6618 = vpop.f32.mrf.mxu0
      %v6619 = vadd.f32 %v6565, %v6618
      %v6620 = vpop.f32.mrf.mxu0
      %6621 = vdwg.mxu0
      %v6622 = vadd.f32 %v5611, %v6616
      %v6623 = vadd.f32 %v5612, %v6619
      %v6624 = vlaneseq
      %v6625 = vshrl.u32 %v6624, 7
      %v6626 = vsub.s32 2, %v6625
      %v6627 = vrot.slane %v5614, %v6626
      %v6628 = vmul.f32 %v4306, %v6627
      %v6629 = vmul.f32 %v4307, %v6627
      %v6630 = vlaneseq
      %v6631 = vshrl.u32 %v6630, 7
      %v6632 = vsub.s32 3, %v6631
      %v6633 = vrot.slane %v5614, %v6632
      %v6634 = vadd.f32 %v6628, %v6633
      %v6635 = vadd.f32 %v6629, %v6633
      %v6636 = vsel %vm738, %v6622, 0.0
      %6637 = vadd.xlane.f32.xlu0 %v6636
      %v6638 = vpop.xlane.xlu0 %6637
      %v6639 = vsel %vm793, %v6623, 0.0
      %6640 = vadd.xlane.f32.xlu0 %v6639
      %v6641 = vpop.xlane.xlu0 %6640
      %v6642 = vmul.f32 %v6638, %v797
      %v6643 = vmul.f32 %v6641, %v797
      %v6644 = vsub.f32 %v6622, %v6642
      %v6645 = vsub.f32 %v6623, %v6643
      %v6646 = vmul.f32 %v6644, %v6644
      %v6647 = vmul.f32 %v6645, %v6645
      %v6648 = vsel %vm738, %v6646, 0.0
      %6649 = vadd.xlane.f32.xlu0 %v6648
      %v6650 = vpop.xlane.xlu0 %6649
      %v6651 = vsel %vm793, %v6647, 0.0
      %6652 = vadd.xlane.f32.xlu0 %v6651
      %v6653 = vpop.xlane.xlu0 %6652
      %v6654 = vmul.f32 %v6650, %v797
      %v6655 = vmul.f32 %v6653, %v797
      %v6656 = vadd.f32 %v6654, 1e-05
      %v6657 = vadd.f32 %v6655, 1e-05
      %v6658 = vrsqrt.pop %v6656
      %v6659 = vrsqrt.pop %v6657
      %v6660 = vmul.f32 %v6644, %v6658
      %v6661 = vmul.f32 %v6645, %v6659
      %v6662 = vlaneseq
      %v6663 = vshrl.u32 %v6662, 7
      %v6664 = vsub.s32 4, %v6663
      %v6665 = vrot.slane %v5614, %v6664
      %v6666 = vmul.f32 %v6660, %v6665
      %v6667 = vmul.f32 %v6661, %v6665
      %v6668 = vlaneseq
      %v6669 = vshrl.u32 %v6668, 7
      %v6670 = vsub.s32 5, %v6669
      %v6671 = vrot.slane %v5614, %v6670
      %v6672 = vadd.f32 %v6666, %v6671
      %v6673 = vadd.f32 %v6667, %v6671
      %s6674 = scalar_lea.vmem %s16, 16
      %v6675 = vld [vmem:[%s6674] sm:$0xf]
      %v6676 = vld [vmem:[%s6674 + $0x4] sm:$0xf]
      %v6677 = vld [vmem:[%s6674 + $0x8] sm:$0xf]
      %v6678 = vld [vmem:[%s6674 + $0xc] sm:$0xf]
      %s6679 = scalar_lea.vmem %s15, 16
      %v6680 = vld [vmem:[%s6679] sm:$0xf]
      %v6681 = vld [vmem:[%s6679 + $0x4] sm:$0xf]
      %v6682 = vld [vmem:[%s6679 + $0x8] sm:$0xf]
      %v6683 = vld [vmem:[%s6679 + $0xc] sm:$0xf]
      %s6684 = scalar_lea.vmem %s17, 16
      %v6685 = vld [vmem:[%s6684] sm:$0xf]
      %v6686 = vld [vmem:[%s6684 + $0x4] sm:$0xf]
      %v6687 = vld [vmem:[%s6684 + $0x8] sm:$0xf]
      %v6688 = vld [vmem:[%s6684 + $0xc] sm:$0xf]
      %v6689 = vpack.c.bf16 %v6673, %v6672
      %v6694 = vunpack.c.l.b16 %v6675
      %v6695 = vunpack.c.l.b16 %v6676
      %v6696 = vunpack.c.l.b16 %v6677
      %v6697 = vunpack.c.l.b16 %v6678
      %v6698 = vpack.c.b16 %v6695, %v6694
      %v6699 = vpack.c.b16 %v6697, %v6696
      %v6703 = vsel %vm738, %v6689, 0
      %6705 = vmatprep.subr.bf16.mxu0 0
      %6706 = vmatpush1.bf16.msra.mxu0 0
      %6707 = vmatprep.subr.bf16.mxu0 0
      %6708 = vmatpush1.bf16.msra.mxu0 0
      %6709 = vmatprep.subr.bf16.mxu0 0
      %6710 = vmatpush1.bf16.msra.mxu0 0
      %6711 = vmatprep.subr.bf16.mxu0 0
      %6712 = vmatpush1.bf16.msra.mxu0 0
      %6713 = vmatprep.subr.bf16.mxu0 0
      %6714 = vmatpush1.bf16.msra.mxu0 0
      %6715 = vmatprep.subr.bf16.mxu0 0
      %6716 = vmatpush1.bf16.msra.mxu0 0
      %6717 = vmatprep.subr.bf16.mxu0 0
      %6718 = vmatpush1.bf16.msra.mxu0 %v6699
      %6719 = vmatprep.subr.bf16.mxu0 0
      %6720 = vmatpush1.bf16.msra.mxu0 %v6698
      %6721 = vmatprep.subr.bf16.mxu0 0
      %6722 = vmatpush2.bf16.msra.mxu0 0
      %6723 = vmatprep.subr.bf16.mxu0 0
      %6724 = vmatpush2.bf16.msra.mxu0 0
      %6725 = vmatprep.subr.bf16.mxu0 0
      %6726 = vmatpush2.bf16.msra.mxu0 0
      %6727 = vmatprep.subr.bf16.mxu0 0
      %6728 = vmatpush2.bf16.msra.mxu0 0
      %6729 = vmatprep.subr.bf16.mxu0 0
      %6730 = vmatpush2.bf16.msra.mxu0 0
      %6731 = vmatprep.subr.bf16.mxu0 0
      %6732 = vmatpush2.bf16.msra.mxu0 0
      %6733 = vmatprep.subr.bf16.mxu0 0
      %6734 = vmatpush2.bf16.msra.mxu0 0
      %6735 = vmatprep.subr.bf16.mxu0 0
      %6736 = vmatpush2.bf16.msra.mxu0 0
      %6737 = vmatprep.mubr.bf16.mxu0 0
      %6738 = vmatmul.mubr.bf16.gmra.mxu0 %v6703
      %v6739 = vpop.f32.mrf.mxu0
      %v6740 = vadd.f32 0.0, %v6739
      %v6741 = vpop.f32.mrf.mxu0
      %v6742 = vpop.f32.mrf.mxu0
      %v6743 = vadd.f32 0.0, %v6742
      %v6744 = vpop.f32.mrf.mxu0
      %6745 = vdwg.mxu0
      %v6746 = vpack.c.bf16 %v6635, %v6634
      %v6751 = vunpack.c.l.b16 %v6680
      %v6752 = vunpack.c.l.b16 %v6681
      %v6753 = vunpack.c.l.b16 %v6682
      %v6754 = vunpack.c.l.b16 %v6683
      %v6755 = vpack.c.b16 %v6752, %v6751
      %v6756 = vpack.c.b16 %v6754, %v6753
      %v6760 = vsel %vm738, %v6746, 0
      %6762 = vmatprep.subr.bf16.mxu0 0
      %6763 = vmatpush1.bf16.msra.mxu0 0
      %6764 = vmatprep.subr.bf16.mxu0 0
      %6765 = vmatpush1.bf16.msra.mxu0 0
      %6766 = vmatprep.subr.bf16.mxu0 0
      %6767 = vmatpush1.bf16.msra.mxu0 0
      %6768 = vmatprep.subr.bf16.mxu0 0
      %6769 = vmatpush1.bf16.msra.mxu0 0
      %6770 = vmatprep.subr.bf16.mxu0 0
      %6771 = vmatpush1.bf16.msra.mxu0 0
      %6772 = vmatprep.subr.bf16.mxu0 0
      %6773 = vmatpush1.bf16.msra.mxu0 0
      %6774 = vmatprep.subr.bf16.mxu0 0
      %6775 = vmatpush1.bf16.msra.mxu0 %v6756
      %6776 = vmatprep.subr.bf16.mxu0 0
      %6777 = vmatpush1.bf16.msra.mxu0 %v6755
      %6778 = vmatprep.subr.bf16.mxu0 0
      %6779 = vmatpush2.bf16.msra.mxu0 0
      %6780 = vmatprep.subr.bf16.mxu0 0
      %6781 = vmatpush2.bf16.msra.mxu0 0
      %6782 = vmatprep.subr.bf16.mxu0 0
      %6783 = vmatpush2.bf16.msra.mxu0 0
      %6784 = vmatprep.subr.bf16.mxu0 0
      %6785 = vmatpush2.bf16.msra.mxu0 0
      %6786 = vmatprep.subr.bf16.mxu0 0
      %6787 = vmatpush2.bf16.msra.mxu0 0
      %6788 = vmatprep.subr.bf16.mxu0 0
      %6789 = vmatpush2.bf16.msra.mxu0 0
      %6790 = vmatprep.subr.bf16.mxu0 0
      %6791 = vmatpush2.bf16.msra.mxu0 0
      %6792 = vmatprep.subr.bf16.mxu0 0
      %6793 = vmatpush2.bf16.msra.mxu0 0
      %6794 = vmatprep.mubr.bf16.mxu0 0
      %6795 = vmatmul.mubr.bf16.gmra.mxu0 %v6760
      %v6796 = vpop.f32.mrf.mxu0
      %v6797 = vadd.f32 0.0, %v6796
      %v6798 = vpop.f32.mrf.mxu0
      %v6799 = vpop.f32.mrf.mxu0
      %v6800 = vadd.f32 0.0, %v6799
      %v6801 = vpop.f32.mrf.mxu0
      %6802 = vdwg.mxu0
      %v6804 = vsel %vm901, %v6740, 0
      %v6807 = vsel %vm901, %v6743, 0
      %v6810 = vsel %vm901, %v6797, 0
      %v6813 = vsel %vm901, %v6800, 0
      %6815 = vmatprep.subr.mxu0 0.0
      %6816 = vmatpush1.xpose.msra.mxu0 0.0
      %6817 = vmatprep.subr.mxu0 0.0
      %6818 = vmatpush1.xpose.msra.mxu0 0.0
      %6819 = vmatprep.subr.mxu0 0.0
      %6820 = vmatpush1.xpose.msra.mxu0 0.0
      %6821 = vmatprep.subr.mxu0 0.0
      %6822 = vmatpush1.xpose.msra.mxu0 0.0
      %6823 = vmatprep.subr.mxu0 0.0
      %6824 = vmatpush1.xpose.msra.mxu0 0.0
      %6825 = vmatprep.subr.mxu0 0.0
      %6826 = vmatpush1.xpose.msra.mxu0 0.0
      %6827 = vmatprep.subr.mxu0 0.0
      %6828 = vmatpush1.xpose.msra.mxu0 0.0
      %6829 = vmatprep.subr.mxu0 0.0
      %6830 = vmatpush1.xpose.msra.mxu0 0.0
      %6831 = vmatprep.subr.mxu0 0.0
      %6832 = vmatpush1.xpose.msra.mxu0 0.0
      %6833 = vmatprep.subr.mxu0 0.0
      %6834 = vmatpush1.xpose.msra.mxu0 0.0
      %6835 = vmatprep.subr.mxu0 0.0
      %6836 = vmatpush1.xpose.msra.mxu0 0.0
      %6837 = vmatprep.subr.mxu0 0.0
      %6838 = vmatpush1.xpose.msra.mxu0 0.0
      %6839 = vmatprep.subr.mxu0 0.0
      %6840 = vmatpush1.xpose.msra.mxu0 0.0
      %6841 = vmatprep.subr.mxu0 0.0
      %6842 = vmatpush1.xpose.msra.mxu0 0.0
      %6843 = vmatprep.subr.mxu0 0.0
      %6844 = vmatpush1.xpose.msra.mxu0 %v6813
      %6845 = vmatprep.subr.mxu0 0.0
      %6846 = vmatpush1.xpose.msra.mxu0 %v6810
      %6847 = vmatprep.subr.mxu0 0.0
      %6848 = vmatpush2.xpose.msra.mxu0 0.0
      %6849 = vmatprep.subr.mxu0 0.0
      %6850 = vmatpush2.xpose.msra.mxu0 0.0
      %6851 = vmatprep.subr.mxu0 0.0
      %6852 = vmatpush2.xpose.msra.mxu0 0.0
      %6853 = vmatprep.subr.mxu0 0.0
      %6854 = vmatpush2.xpose.msra.mxu0 0.0
      %6855 = vmatprep.subr.mxu0 0.0
      %6856 = vmatpush2.xpose.msra.mxu0 0.0
      %6857 = vmatprep.subr.mxu0 0.0
      %6858 = vmatpush2.xpose.msra.mxu0 0.0
      %6859 = vmatprep.subr.mxu0 0.0
      %6860 = vmatpush2.xpose.msra.mxu0 0.0
      %6861 = vmatprep.subr.mxu0 0.0
      %6862 = vmatpush2.xpose.msra.mxu0 0.0
      %6863 = vmatprep.subr.mxu0 0.0
      %6864 = vmatpush2.xpose.msra.mxu0 0.0
      %6865 = vmatprep.subr.mxu0 0.0
      %6866 = vmatpush2.xpose.msra.mxu0 0.0
      %6867 = vmatprep.subr.mxu0 0.0
      %6868 = vmatpush2.xpose.msra.mxu0 0.0
      %6869 = vmatprep.subr.mxu0 0.0
      %6870 = vmatpush2.xpose.msra.mxu0 0.0
      %6871 = vmatprep.subr.mxu0 0.0
      %6872 = vmatpush2.xpose.msra.mxu0 0.0
      %6873 = vmatprep.subr.mxu0 0.0
      %6874 = vmatpush2.xpose.msra.mxu0 0.0
      %6875 = vmatprep.subr.mxu0 0.0
      %6876 = vmatpush2.xpose.msra.mxu0 0.0
      %6877 = vmatprep.subr.mxu0 0.0
      %6878 = vmatpush2.xpose.msra.mxu0 0.0
      %6879 = vmatprep.mubr.f32.mxu0 0.0
      %6880 = vmatmul.mubr.f32.gmra.mxu0 %v6804
      %v6881 = vpop.f32.mrf.mxu0
      %v6882 = vadd.f32 0.0, %v6881
      %v6883 = vpop.f32.mrf.mxu0
      %6884 = vmatprep.mubr.f32.mxu0 0.0
      %6885 = vmatmul.mubr.f32.gmra.mxu0 %v6807
      %v6886 = vpop.f32.mrf.mxu0
      %v6887 = vadd.f32 0.0, %v6886
      %v6888 = vpop.f32.mrf.mxu0
      %6889 = vdwg.mxu0
      %v6890 = vmul.f32 %v6882, 0.35355338
      %v6891 = vmul.f32 %v6887, 0.35355338
      %v6892 = vsel %vm987, %v6890, -inf
      %6893 = vmax.xlane.f32.xlu0 %v6892
      %v6894 = vpop.xlane.xlu0 %6893
      %v6895 = vsel %vm991, %v6891, -inf
      %6896 = vmax.xlane.f32.xlu0 %v6895
      %v6897 = vpop.xlane.xlu0 %6896
      %v6898 = vsub.f32 %v6890, %v6894
      %v6899 = vsub.f32 %v6891, %v6897
      %v6900 = vmul.f32 %v6898, 1.442695
      %v6901 = vpow.pop %v6900
      %v6902 = vmul.f32 %v6899, 1.442695
      %v6903 = vpow.pop %v6902
      %v6904 = vsel %vm987, %v6901, 0.0
      %6905 = vadd.xlane.f32.xlu0 %v6904
      %v6906 = vpop.xlane.xlu0 %6905
      %v6907 = vsel %vm991, %v6903, 0.0
      %6908 = vadd.xlane.f32.xlu0 %v6907
      %v6909 = vpop.xlane.xlu0 %6908
      %v6910 = vrcp.pop %v6906
      %v6911 = vrcp.pop %v6909
      %v6912 = vmul.f32 %v6901, %v6910
      %v6913 = vmul.f32 %v6903, %v6911
      %6914 = vrot.lane.b32.xlu0 %v6797, 96
      %v6915 = vpop.permute.xlu0 %6914
      %6916 = vrot.lane.b32.xlu0 %v6800, 96
      %v6917 = vpop.permute.xlu0 %6916
      %v6920 = vsel %vm987, %v6912, 0
      %v6923 = vsel %vm987, %v6913, 0
      %v6925 = vsel %vm785, %v6917, 0
      %6927 = vmatprep.subr.mxu0 0.0
      %6928 = vmatpush1.msra.mxu0 0.0
      %6929 = vmatprep.subr.mxu0 0.0
      %6930 = vmatpush1.msra.mxu0 0.0
      %6931 = vmatprep.subr.mxu0 0.0
      %6932 = vmatpush1.msra.mxu0 0.0
      %6933 = vmatprep.subr.mxu0 0.0
      %6934 = vmatpush1.msra.mxu0 0.0
      %6935 = vmatprep.subr.mxu0 0.0
      %6936 = vmatpush1.msra.mxu0 0.0
      %6937 = vmatprep.subr.mxu0 0.0
      %6938 = vmatpush1.msra.mxu0 0.0
      %6939 = vmatprep.subr.mxu0 0.0
      %6940 = vmatpush1.msra.mxu0 0.0
      %6941 = vmatprep.subr.mxu0 0.0
      %6942 = vmatpush1.msra.mxu0 0.0
      %6943 = vmatprep.subr.mxu0 0.0
      %6944 = vmatpush1.msra.mxu0 0.0
      %6945 = vmatprep.subr.mxu0 0.0
      %6946 = vmatpush1.msra.mxu0 0.0
      %6947 = vmatprep.subr.mxu0 0.0
      %6948 = vmatpush1.msra.mxu0 0.0
      %6949 = vmatprep.subr.mxu0 0.0
      %6950 = vmatpush1.msra.mxu0 0.0
      %6951 = vmatprep.subr.mxu0 0.0
      %6952 = vmatpush1.msra.mxu0 0.0
      %6953 = vmatprep.subr.mxu0 0.0
      %6954 = vmatpush1.msra.mxu0 0.0
      %6955 = vmatprep.subr.mxu0 0.0
      %6956 = vmatpush1.msra.mxu0 %v6925
      %6957 = vmatprep.subr.mxu0 0.0
      %6958 = vmatpush1.msra.mxu0 %v6915
      %6959 = vmatprep.subr.mxu0 0.0
      %6960 = vmatpush2.msra.mxu0 0.0
      %6961 = vmatprep.subr.mxu0 0.0
      %6962 = vmatpush2.msra.mxu0 0.0
      %6963 = vmatprep.subr.mxu0 0.0
      %6964 = vmatpush2.msra.mxu0 0.0
      %6965 = vmatprep.subr.mxu0 0.0
      %6966 = vmatpush2.msra.mxu0 0.0
      %6967 = vmatprep.subr.mxu0 0.0
      %6968 = vmatpush2.msra.mxu0 0.0
      %6969 = vmatprep.subr.mxu0 0.0
      %6970 = vmatpush2.msra.mxu0 0.0
      %6971 = vmatprep.subr.mxu0 0.0
      %6972 = vmatpush2.msra.mxu0 0.0
      %6973 = vmatprep.subr.mxu0 0.0
      %6974 = vmatpush2.msra.mxu0 0.0
      %6975 = vmatprep.subr.mxu0 0.0
      %6976 = vmatpush2.msra.mxu0 0.0
      %6977 = vmatprep.subr.mxu0 0.0
      %6978 = vmatpush2.msra.mxu0 0.0
      %6979 = vmatprep.subr.mxu0 0.0
      %6980 = vmatpush2.msra.mxu0 0.0
      %6981 = vmatprep.subr.mxu0 0.0
      %6982 = vmatpush2.msra.mxu0 0.0
      %6983 = vmatprep.subr.mxu0 0.0
      %6984 = vmatpush2.msra.mxu0 0.0
      %6985 = vmatprep.subr.mxu0 0.0
      %6986 = vmatpush2.msra.mxu0 0.0
      %6987 = vmatprep.subr.mxu0 0.0
      %6988 = vmatpush2.msra.mxu0 0.0
      %6989 = vmatprep.subr.mxu0 0.0
      %6990 = vmatpush2.msra.mxu0 0.0
      %6991 = vmatprep.mubr.f32.mxu0 0.0
      %6992 = vmatmul.mubr.f32.gmra.mxu0 %v6920
      %v6993 = vpop.f32.mrf.mxu0
      %v6994 = vadd.f32 0.0, %v6993
      %v6995 = vpop.f32.mrf.mxu0
      %6996 = vmatprep.mubr.f32.mxu0 0.0
      %6997 = vmatmul.mubr.f32.gmra.mxu0 %v6923
      %v6998 = vpop.f32.mrf.mxu0
      %v6999 = vadd.f32 0.0, %v6998
      %v7000 = vpop.f32.mrf.mxu0
      %7001 = vdwg.mxu0
      %7002 = vrot.lane.b32.xlu0 %v6740, 120
      %v7003 = vpop.permute.xlu0 %7002
      %7004 = vrot.lane.b32.xlu0 %v6743, 120
      %v7005 = vpop.permute.xlu0 %7004
      %7006 = vrot.lane.b32.xlu0 %v6797, 120
      %v7007 = vpop.permute.xlu0 %7006
      %7008 = vrot.lane.b32.xlu0 %v6800, 120
      %v7009 = vpop.permute.xlu0 %7008
      %v7010 = vsel %vm901, %v7003, 0
      %v7012 = vsel %vm901, %v7005, 0
      %v7014 = vsel %vm901, %v7007, 0
      %v7016 = vsel %vm901, %v7009, 0
      %7018 = vmatprep.subr.mxu0 0.0
      %7019 = vmatpush1.xpose.msra.mxu0 0.0
      %7020 = vmatprep.subr.mxu0 0.0
      %7021 = vmatpush1.xpose.msra.mxu0 0.0
      %7022 = vmatprep.subr.mxu0 0.0
      %7023 = vmatpush1.xpose.msra.mxu0 0.0
      %7024 = vmatprep.subr.mxu0 0.0
      %7025 = vmatpush1.xpose.msra.mxu0 0.0
      %7026 = vmatprep.subr.mxu0 0.0
      %7027 = vmatpush1.xpose.msra.mxu0 0.0
      %7028 = vmatprep.subr.mxu0 0.0
      %7029 = vmatpush1.xpose.msra.mxu0 0.0
      %7030 = vmatprep.subr.mxu0 0.0
      %7031 = vmatpush1.xpose.msra.mxu0 0.0
      %7032 = vmatprep.subr.mxu0 0.0
      %7033 = vmatpush1.xpose.msra.mxu0 0.0
      %7034 = vmatprep.subr.mxu0 0.0
      %7035 = vmatpush1.xpose.msra.mxu0 0.0
      %7036 = vmatprep.subr.mxu0 0.0
      %7037 = vmatpush1.xpose.msra.mxu0 0.0
      %7038 = vmatprep.subr.mxu0 0.0
      %7039 = vmatpush1.xpose.msra.mxu0 0.0
      %7040 = vmatprep.subr.mxu0 0.0
      %7041 = vmatpush1.xpose.msra.mxu0 0.0
      %7042 = vmatprep.subr.mxu0 0.0
      %7043 = vmatpush1.xpose.msra.mxu0 0.0
      %7044 = vmatprep.subr.mxu0 0.0
      %7045 = vmatpush1.xpose.msra.mxu0 0.0
      %7046 = vmatprep.subr.mxu0 0.0
      %7047 = vmatpush1.xpose.msra.mxu0 %v7016
      %7048 = vmatprep.subr.mxu0 0.0
      %7049 = vmatpush1.xpose.msra.mxu0 %v7014
      %7050 = vmatprep.subr.mxu0 0.0
      %7051 = vmatpush2.xpose.msra.mxu0 0.0
      %7052 = vmatprep.subr.mxu0 0.0
      %7053 = vmatpush2.xpose.msra.mxu0 0.0
      %7054 = vmatprep.subr.mxu0 0.0
      %7055 = vmatpush2.xpose.msra.mxu0 0.0
      %7056 = vmatprep.subr.mxu0 0.0
      %7057 = vmatpush2.xpose.msra.mxu0 0.0
      %7058 = vmatprep.subr.mxu0 0.0
      %7059 = vmatpush2.xpose.msra.mxu0 0.0
      %7060 = vmatprep.subr.mxu0 0.0
      %7061 = vmatpush2.xpose.msra.mxu0 0.0
      %7062 = vmatprep.subr.mxu0 0.0
      %7063 = vmatpush2.xpose.msra.mxu0 0.0
      %7064 = vmatprep.subr.mxu0 0.0
      %7065 = vmatpush2.xpose.msra.mxu0 0.0
      %7066 = vmatprep.subr.mxu0 0.0
      %7067 = vmatpush2.xpose.msra.mxu0 0.0
      %7068 = vmatprep.subr.mxu0 0.0
      %7069 = vmatpush2.xpose.msra.mxu0 0.0
      %7070 = vmatprep.subr.mxu0 0.0
      %7071 = vmatpush2.xpose.msra.mxu0 0.0
      %7072 = vmatprep.subr.mxu0 0.0
      %7073 = vmatpush2.xpose.msra.mxu0 0.0
      %7074 = vmatprep.subr.mxu0 0.0
      %7075 = vmatpush2.xpose.msra.mxu0 0.0
      %7076 = vmatprep.subr.mxu0 0.0
      %7077 = vmatpush2.xpose.msra.mxu0 0.0
      %7078 = vmatprep.subr.mxu0 0.0
      %7079 = vmatpush2.xpose.msra.mxu0 0.0
      %7080 = vmatprep.subr.mxu0 0.0
      %7081 = vmatpush2.xpose.msra.mxu0 0.0
      %7082 = vmatprep.mubr.f32.mxu0 0.0
      %7083 = vmatmul.mubr.f32.gmra.mxu0 %v7010
      %v7084 = vpop.f32.mrf.mxu0
      %v7085 = vadd.f32 0.0, %v7084
      %v7086 = vpop.f32.mrf.mxu0
      %7087 = vmatprep.mubr.f32.mxu0 0.0
      %7088 = vmatmul.mubr.f32.gmra.mxu0 %v7012
      %v7089 = vpop.f32.mrf.mxu0
      %v7090 = vadd.f32 0.0, %v7089
      %v7091 = vpop.f32.mrf.mxu0
      %7092 = vdwg.mxu0
      %v7093 = vmul.f32 %v7085, 0.35355338
      %v7094 = vmul.f32 %v7090, 0.35355338
      %v7095 = vsel %vm987, %v7093, -inf
      %7096 = vmax.xlane.f32.xlu0 %v7095
      %v7097 = vpop.xlane.xlu0 %7096
      %v7098 = vsel %vm991, %v7094, -inf
      %7099 = vmax.xlane.f32.xlu0 %v7098
      %v7100 = vpop.xlane.xlu0 %7099
      %v7101 = vsub.f32 %v7093, %v7097
      %v7102 = vsub.f32 %v7094, %v7100
      %v7103 = vmul.f32 %v7101, 1.442695
      %v7104 = vpow.pop %v7103
      %v7105 = vmul.f32 %v7102, 1.442695
      %v7106 = vpow.pop %v7105
      %v7107 = vsel %vm987, %v7104, 0.0
      %7108 = vadd.xlane.f32.xlu0 %v7107
      %v7109 = vpop.xlane.xlu0 %7108
      %v7110 = vsel %vm991, %v7106, 0.0
      %7111 = vadd.xlane.f32.xlu0 %v7110
      %v7112 = vpop.xlane.xlu0 %7111
      %v7113 = vrcp.pop %v7109
      %v7114 = vrcp.pop %v7112
      %v7115 = vmul.f32 %v7104, %v7113
      %v7116 = vmul.f32 %v7106, %v7114
      %7117 = vrot.lane.b32.xlu0 %v6797, 88
      %v7118 = vpop.permute.xlu0 %7117
      %7119 = vrot.lane.b32.xlu0 %v6800, 88
      %v7120 = vpop.permute.xlu0 %7119
      %v7123 = vsel %vm987, %v7115, 0
      %v7126 = vsel %vm987, %v7116, 0
      %v7128 = vsel %vm785, %v7120, 0
      %7130 = vmatprep.subr.mxu0 0.0
      %7131 = vmatpush1.msra.mxu0 0.0
      %7132 = vmatprep.subr.mxu0 0.0
      %7133 = vmatpush1.msra.mxu0 0.0
      %7134 = vmatprep.subr.mxu0 0.0
      %7135 = vmatpush1.msra.mxu0 0.0
      %7136 = vmatprep.subr.mxu0 0.0
      %7137 = vmatpush1.msra.mxu0 0.0
      %7138 = vmatprep.subr.mxu0 0.0
      %7139 = vmatpush1.msra.mxu0 0.0
      %7140 = vmatprep.subr.mxu0 0.0
      %7141 = vmatpush1.msra.mxu0 0.0
      %7142 = vmatprep.subr.mxu0 0.0
      %7143 = vmatpush1.msra.mxu0 0.0
      %7144 = vmatprep.subr.mxu0 0.0
      %7145 = vmatpush1.msra.mxu0 0.0
      %7146 = vmatprep.subr.mxu0 0.0
      %7147 = vmatpush1.msra.mxu0 0.0
      %7148 = vmatprep.subr.mxu0 0.0
      %7149 = vmatpush1.msra.mxu0 0.0
      %7150 = vmatprep.subr.mxu0 0.0
      %7151 = vmatpush1.msra.mxu0 0.0
      %7152 = vmatprep.subr.mxu0 0.0
      %7153 = vmatpush1.msra.mxu0 0.0
      %7154 = vmatprep.subr.mxu0 0.0
      %7155 = vmatpush1.msra.mxu0 0.0
      %7156 = vmatprep.subr.mxu0 0.0
      %7157 = vmatpush1.msra.mxu0 0.0
      %7158 = vmatprep.subr.mxu0 0.0
      %7159 = vmatpush1.msra.mxu0 %v7128
      %7160 = vmatprep.subr.mxu0 0.0
      %7161 = vmatpush1.msra.mxu0 %v7118
      %7162 = vmatprep.subr.mxu0 0.0
      %7163 = vmatpush2.msra.mxu0 0.0
      %7164 = vmatprep.subr.mxu0 0.0
      %7165 = vmatpush2.msra.mxu0 0.0
      %7166 = vmatprep.subr.mxu0 0.0
      %7167 = vmatpush2.msra.mxu0 0.0
      %7168 = vmatprep.subr.mxu0 0.0
      %7169 = vmatpush2.msra.mxu0 0.0
      %7170 = vmatprep.subr.mxu0 0.0
      %7171 = vmatpush2.msra.mxu0 0.0
      %7172 = vmatprep.subr.mxu0 0.0
      %7173 = vmatpush2.msra.mxu0 0.0
      %7174 = vmatprep.subr.mxu0 0.0
      %7175 = vmatpush2.msra.mxu0 0.0
      %7176 = vmatprep.subr.mxu0 0.0
      %7177 = vmatpush2.msra.mxu0 0.0
      %7178 = vmatprep.subr.mxu0 0.0
      %7179 = vmatpush2.msra.mxu0 0.0
      %7180 = vmatprep.subr.mxu0 0.0
      %7181 = vmatpush2.msra.mxu0 0.0
      %7182 = vmatprep.subr.mxu0 0.0
      %7183 = vmatpush2.msra.mxu0 0.0
      %7184 = vmatprep.subr.mxu0 0.0
      %7185 = vmatpush2.msra.mxu0 0.0
      %7186 = vmatprep.subr.mxu0 0.0
      %7187 = vmatpush2.msra.mxu0 0.0
      %7188 = vmatprep.subr.mxu0 0.0
      %7189 = vmatpush2.msra.mxu0 0.0
      %7190 = vmatprep.subr.mxu0 0.0
      %7191 = vmatpush2.msra.mxu0 0.0
      %7192 = vmatprep.subr.mxu0 0.0
      %7193 = vmatpush2.msra.mxu0 0.0
      %7194 = vmatprep.mubr.f32.mxu0 0.0
      %7195 = vmatmul.mubr.f32.gmra.mxu0 %v7123
      %v7196 = vpop.f32.mrf.mxu0
      %v7197 = vadd.f32 0.0, %v7196
      %v7198 = vpop.f32.mrf.mxu0
      %7199 = vmatprep.mubr.f32.mxu0 0.0
      %7200 = vmatmul.mubr.f32.gmra.mxu0 %v7126
      %v7201 = vpop.f32.mrf.mxu0
      %v7202 = vadd.f32 0.0, %v7201
      %v7203 = vpop.f32.mrf.mxu0
      %7204 = vdwg.mxu0
      %7205 = vrot.lane.b32.xlu0 %v6740, 112
      %v7206 = vpop.permute.xlu0 %7205
      %7207 = vrot.lane.b32.xlu0 %v6743, 112
      %v7208 = vpop.permute.xlu0 %7207
      %7209 = vrot.lane.b32.xlu0 %v6797, 112
      %v7210 = vpop.permute.xlu0 %7209
      %7211 = vrot.lane.b32.xlu0 %v6800, 112
      %v7212 = vpop.permute.xlu0 %7211
      %v7213 = vsel %vm901, %v7206, 0
      %v7215 = vsel %vm901, %v7208, 0
      %v7217 = vsel %vm901, %v7210, 0
      %v7219 = vsel %vm901, %v7212, 0
      %7221 = vmatprep.subr.mxu0 0.0
      %7222 = vmatpush1.xpose.msra.mxu0 0.0
      %7223 = vmatprep.subr.mxu0 0.0
      %7224 = vmatpush1.xpose.msra.mxu0 0.0
      %7225 = vmatprep.subr.mxu0 0.0
      %7226 = vmatpush1.xpose.msra.mxu0 0.0
      %7227 = vmatprep.subr.mxu0 0.0
      %7228 = vmatpush1.xpose.msra.mxu0 0.0
      %7229 = vmatprep.subr.mxu0 0.0
      %7230 = vmatpush1.xpose.msra.mxu0 0.0
      %7231 = vmatprep.subr.mxu0 0.0
      %7232 = vmatpush1.xpose.msra.mxu0 0.0
      %7233 = vmatprep.subr.mxu0 0.0
      %7234 = vmatpush1.xpose.msra.mxu0 0.0
      %7235 = vmatprep.subr.mxu0 0.0
      %7236 = vmatpush1.xpose.msra.mxu0 0.0
      %7237 = vmatprep.subr.mxu0 0.0
      %7238 = vmatpush1.xpose.msra.mxu0 0.0
      %7239 = vmatprep.subr.mxu0 0.0
      %7240 = vmatpush1.xpose.msra.mxu0 0.0
      %7241 = vmatprep.subr.mxu0 0.0
      %7242 = vmatpush1.xpose.msra.mxu0 0.0
      %7243 = vmatprep.subr.mxu0 0.0
      %7244 = vmatpush1.xpose.msra.mxu0 0.0
      %7245 = vmatprep.subr.mxu0 0.0
      %7246 = vmatpush1.xpose.msra.mxu0 0.0
      %7247 = vmatprep.subr.mxu0 0.0
      %7248 = vmatpush1.xpose.msra.mxu0 0.0
      %7249 = vmatprep.subr.mxu0 0.0
      %7250 = vmatpush1.xpose.msra.mxu0 %v7219
      %7251 = vmatprep.subr.mxu0 0.0
      %7252 = vmatpush1.xpose.msra.mxu0 %v7217
      %7253 = vmatprep.subr.mxu0 0.0
      %7254 = vmatpush2.xpose.msra.mxu0 0.0
      %7255 = vmatprep.subr.mxu0 0.0
      %7256 = vmatpush2.xpose.msra.mxu0 0.0
      %7257 = vmatprep.subr.mxu0 0.0
      %7258 = vmatpush2.xpose.msra.mxu0 0.0
      %7259 = vmatprep.subr.mxu0 0.0
      %7260 = vmatpush2.xpose.msra.mxu0 0.0
      %7261 = vmatprep.subr.mxu0 0.0
      %7262 = vmatpush2.xpose.msra.mxu0 0.0
      %7263 = vmatprep.subr.mxu0 0.0
      %7264 = vmatpush2.xpose.msra.mxu0 0.0
      %7265 = vmatprep.subr.mxu0 0.0
      %7266 = vmatpush2.xpose.msra.mxu0 0.0
      %7267 = vmatprep.subr.mxu0 0.0
      %7268 = vmatpush2.xpose.msra.mxu0 0.0
      %7269 = vmatprep.subr.mxu0 0.0
      %7270 = vmatpush2.xpose.msra.mxu0 0.0
      %7271 = vmatprep.subr.mxu0 0.0
      %7272 = vmatpush2.xpose.msra.mxu0 0.0
      %7273 = vmatprep.subr.mxu0 0.0
      %7274 = vmatpush2.xpose.msra.mxu0 0.0
      %7275 = vmatprep.subr.mxu0 0.0
      %7276 = vmatpush2.xpose.msra.mxu0 0.0
      %7277 = vmatprep.subr.mxu0 0.0
      %7278 = vmatpush2.xpose.msra.mxu0 0.0
      %7279 = vmatprep.subr.mxu0 0.0
      %7280 = vmatpush2.xpose.msra.mxu0 0.0
      %7281 = vmatprep.subr.mxu0 0.0
      %7282 = vmatpush2.xpose.msra.mxu0 0.0
      %7283 = vmatprep.subr.mxu0 0.0
      %7284 = vmatpush2.xpose.msra.mxu0 0.0
      %7285 = vmatprep.mubr.f32.mxu0 0.0
      %7286 = vmatmul.mubr.f32.gmra.mxu0 %v7213
      %v7287 = vpop.f32.mrf.mxu0
      %v7288 = vadd.f32 0.0, %v7287
      %v7289 = vpop.f32.mrf.mxu0
      %7290 = vmatprep.mubr.f32.mxu0 0.0
      %7291 = vmatmul.mubr.f32.gmra.mxu0 %v7215
      %v7292 = vpop.f32.mrf.mxu0
      %v7293 = vadd.f32 0.0, %v7292
      %v7294 = vpop.f32.mrf.mxu0
      %7295 = vdwg.mxu0
      %v7296 = vmul.f32 %v7288, 0.35355338
      %v7297 = vmul.f32 %v7293, 0.35355338
      %v7298 = vsel %vm987, %v7296, -inf
      %7299 = vmax.xlane.f32.xlu0 %v7298
      %v7300 = vpop.xlane.xlu0 %7299
      %v7301 = vsel %vm991, %v7297, -inf
      %7302 = vmax.xlane.f32.xlu0 %v7301
      %v7303 = vpop.xlane.xlu0 %7302
      %v7304 = vsub.f32 %v7296, %v7300
      %v7305 = vsub.f32 %v7297, %v7303
      %v7306 = vmul.f32 %v7304, 1.442695
      %v7307 = vpow.pop %v7306
      %v7308 = vmul.f32 %v7305, 1.442695
      %v7309 = vpow.pop %v7308
      %v7310 = vsel %vm987, %v7307, 0.0
      %7311 = vadd.xlane.f32.xlu0 %v7310
      %v7312 = vpop.xlane.xlu0 %7311
      %v7313 = vsel %vm991, %v7309, 0.0
      %7314 = vadd.xlane.f32.xlu0 %v7313
      %v7315 = vpop.xlane.xlu0 %7314
      %v7316 = vrcp.pop %v7312
      %v7317 = vrcp.pop %v7315
      %v7318 = vmul.f32 %v7307, %v7316
      %v7319 = vmul.f32 %v7309, %v7317
      %7320 = vrot.lane.b32.xlu0 %v6797, 80
      %v7321 = vpop.permute.xlu0 %7320
      %7322 = vrot.lane.b32.xlu0 %v6800, 80
      %v7323 = vpop.permute.xlu0 %7322
      %v7326 = vsel %vm987, %v7318, 0
      %v7329 = vsel %vm987, %v7319, 0
      %v7331 = vsel %vm785, %v7323, 0
      %7333 = vmatprep.subr.mxu0 0.0
      %7334 = vmatpush1.msra.mxu0 0.0
      %7335 = vmatprep.subr.mxu0 0.0
      %7336 = vmatpush1.msra.mxu0 0.0
      %7337 = vmatprep.subr.mxu0 0.0
      %7338 = vmatpush1.msra.mxu0 0.0
      %7339 = vmatprep.subr.mxu0 0.0
      %7340 = vmatpush1.msra.mxu0 0.0
      %7341 = vmatprep.subr.mxu0 0.0
      %7342 = vmatpush1.msra.mxu0 0.0
      %7343 = vmatprep.subr.mxu0 0.0
      %7344 = vmatpush1.msra.mxu0 0.0
      %7345 = vmatprep.subr.mxu0 0.0
      %7346 = vmatpush1.msra.mxu0 0.0
      %7347 = vmatprep.subr.mxu0 0.0
      %7348 = vmatpush1.msra.mxu0 0.0
      %7349 = vmatprep.subr.mxu0 0.0
      %7350 = vmatpush1.msra.mxu0 0.0
      %7351 = vmatprep.subr.mxu0 0.0
      %7352 = vmatpush1.msra.mxu0 0.0
      %7353 = vmatprep.subr.mxu0 0.0
      %7354 = vmatpush1.msra.mxu0 0.0
      %7355 = vmatprep.subr.mxu0 0.0
      %7356 = vmatpush1.msra.mxu0 0.0
      %7357 = vmatprep.subr.mxu0 0.0
      %7358 = vmatpush1.msra.mxu0 0.0
      %7359 = vmatprep.subr.mxu0 0.0
      %7360 = vmatpush1.msra.mxu0 0.0
      %7361 = vmatprep.subr.mxu0 0.0
      %7362 = vmatpush1.msra.mxu0 %v7331
      %7363 = vmatprep.subr.mxu0 0.0
      %7364 = vmatpush1.msra.mxu0 %v7321
      %7365 = vmatprep.subr.mxu0 0.0
      %7366 = vmatpush2.msra.mxu0 0.0
      %7367 = vmatprep.subr.mxu0 0.0
      %7368 = vmatpush2.msra.mxu0 0.0
      %7369 = vmatprep.subr.mxu0 0.0
      %7370 = vmatpush2.msra.mxu0 0.0
      %7371 = vmatprep.subr.mxu0 0.0
      %7372 = vmatpush2.msra.mxu0 0.0
      %7373 = vmatprep.subr.mxu0 0.0
      %7374 = vmatpush2.msra.mxu0 0.0
      %7375 = vmatprep.subr.mxu0 0.0
      %7376 = vmatpush2.msra.mxu0 0.0
      %7377 = vmatprep.subr.mxu0 0.0
      %7378 = vmatpush2.msra.mxu0 0.0
      %7379 = vmatprep.subr.mxu0 0.0
      %7380 = vmatpush2.msra.mxu0 0.0
      %7381 = vmatprep.subr.mxu0 0.0
      %7382 = vmatpush2.msra.mxu0 0.0
      %7383 = vmatprep.subr.mxu0 0.0
      %7384 = vmatpush2.msra.mxu0 0.0
      %7385 = vmatprep.subr.mxu0 0.0
      %7386 = vmatpush2.msra.mxu0 0.0
      %7387 = vmatprep.subr.mxu0 0.0
      %7388 = vmatpush2.msra.mxu0 0.0
      %7389 = vmatprep.subr.mxu0 0.0
      %7390 = vmatpush2.msra.mxu0 0.0
      %7391 = vmatprep.subr.mxu0 0.0
      %7392 = vmatpush2.msra.mxu0 0.0
      %7393 = vmatprep.subr.mxu0 0.0
      %7394 = vmatpush2.msra.mxu0 0.0
      %7395 = vmatprep.subr.mxu0 0.0
      %7396 = vmatpush2.msra.mxu0 0.0
      %7397 = vmatprep.mubr.f32.mxu0 0.0
      %7398 = vmatmul.mubr.f32.gmra.mxu0 %v7326
      %v7399 = vpop.f32.mrf.mxu0
      %v7400 = vadd.f32 0.0, %v7399
      %v7401 = vpop.f32.mrf.mxu0
      %7402 = vmatprep.mubr.f32.mxu0 0.0
      %7403 = vmatmul.mubr.f32.gmra.mxu0 %v7329
      %v7404 = vpop.f32.mrf.mxu0
      %v7405 = vadd.f32 0.0, %v7404
      %v7406 = vpop.f32.mrf.mxu0
      %7407 = vdwg.mxu0
      %7408 = vrot.lane.b32.xlu0 %v6740, 104
      %v7409 = vpop.permute.xlu0 %7408
      %7410 = vrot.lane.b32.xlu0 %v6743, 104
      %v7411 = vpop.permute.xlu0 %7410
      %7412 = vrot.lane.b32.xlu0 %v6797, 104
      %v7413 = vpop.permute.xlu0 %7412
      %7414 = vrot.lane.b32.xlu0 %v6800, 104
      %v7415 = vpop.permute.xlu0 %7414
      %v7416 = vsel %vm901, %v7409, 0
      %v7418 = vsel %vm901, %v7411, 0
      %v7420 = vsel %vm901, %v7413, 0
      %v7422 = vsel %vm901, %v7415, 0
      %7424 = vmatprep.subr.mxu0 0.0
      %7425 = vmatpush1.xpose.msra.mxu0 0.0
      %7426 = vmatprep.subr.mxu0 0.0
      %7427 = vmatpush1.xpose.msra.mxu0 0.0
      %7428 = vmatprep.subr.mxu0 0.0
      %7429 = vmatpush1.xpose.msra.mxu0 0.0
      %7430 = vmatprep.subr.mxu0 0.0
      %7431 = vmatpush1.xpose.msra.mxu0 0.0
      %7432 = vmatprep.subr.mxu0 0.0
      %7433 = vmatpush1.xpose.msra.mxu0 0.0
      %7434 = vmatprep.subr.mxu0 0.0
      %7435 = vmatpush1.xpose.msra.mxu0 0.0
      %7436 = vmatprep.subr.mxu0 0.0
      %7437 = vmatpush1.xpose.msra.mxu0 0.0
      %7438 = vmatprep.subr.mxu0 0.0
      %7439 = vmatpush1.xpose.msra.mxu0 0.0
      %7440 = vmatprep.subr.mxu0 0.0
      %7441 = vmatpush1.xpose.msra.mxu0 0.0
      %7442 = vmatprep.subr.mxu0 0.0
      %7443 = vmatpush1.xpose.msra.mxu0 0.0
      %7444 = vmatprep.subr.mxu0 0.0
      %7445 = vmatpush1.xpose.msra.mxu0 0.0
      %7446 = vmatprep.subr.mxu0 0.0
      %7447 = vmatpush1.xpose.msra.mxu0 0.0
      %7448 = vmatprep.subr.mxu0 0.0
      %7449 = vmatpush1.xpose.msra.mxu0 0.0
      %7450 = vmatprep.subr.mxu0 0.0
      %7451 = vmatpush1.xpose.msra.mxu0 0.0
      %7452 = vmatprep.subr.mxu0 0.0
      %7453 = vmatpush1.xpose.msra.mxu0 %v7422
      %7454 = vmatprep.subr.mxu0 0.0
      %7455 = vmatpush1.xpose.msra.mxu0 %v7420
      %7456 = vmatprep.subr.mxu0 0.0
      %7457 = vmatpush2.xpose.msra.mxu0 0.0
      %7458 = vmatprep.subr.mxu0 0.0
      %7459 = vmatpush2.xpose.msra.mxu0 0.0
      %7460 = vmatprep.subr.mxu0 0.0
      %7461 = vmatpush2.xpose.msra.mxu0 0.0
      %7462 = vmatprep.subr.mxu0 0.0
      %7463 = vmatpush2.xpose.msra.mxu0 0.0
      %7464 = vmatprep.subr.mxu0 0.0
      %7465 = vmatpush2.xpose.msra.mxu0 0.0
      %7466 = vmatprep.subr.mxu0 0.0
      %7467 = vmatpush2.xpose.msra.mxu0 0.0
      %7468 = vmatprep.subr.mxu0 0.0
      %7469 = vmatpush2.xpose.msra.mxu0 0.0
      %7470 = vmatprep.subr.mxu0 0.0
      %7471 = vmatpush2.xpose.msra.mxu0 0.0
      %7472 = vmatprep.subr.mxu0 0.0
      %7473 = vmatpush2.xpose.msra.mxu0 0.0
      %7474 = vmatprep.subr.mxu0 0.0
      %7475 = vmatpush2.xpose.msra.mxu0 0.0
      %7476 = vmatprep.subr.mxu0 0.0
      %7477 = vmatpush2.xpose.msra.mxu0 0.0
      %7478 = vmatprep.subr.mxu0 0.0
      %7479 = vmatpush2.xpose.msra.mxu0 0.0
      %7480 = vmatprep.subr.mxu0 0.0
      %7481 = vmatpush2.xpose.msra.mxu0 0.0
      %7482 = vmatprep.subr.mxu0 0.0
      %7483 = vmatpush2.xpose.msra.mxu0 0.0
      %7484 = vmatprep.subr.mxu0 0.0
      %7485 = vmatpush2.xpose.msra.mxu0 0.0
      %7486 = vmatprep.subr.mxu0 0.0
      %7487 = vmatpush2.xpose.msra.mxu0 0.0
      %7488 = vmatprep.mubr.f32.mxu0 0.0
      %7489 = vmatmul.mubr.f32.gmra.mxu0 %v7416
      %v7490 = vpop.f32.mrf.mxu0
      %v7491 = vadd.f32 0.0, %v7490
      %v7492 = vpop.f32.mrf.mxu0
      %7493 = vmatprep.mubr.f32.mxu0 0.0
      %7494 = vmatmul.mubr.f32.gmra.mxu0 %v7418
      %v7495 = vpop.f32.mrf.mxu0
      %v7496 = vadd.f32 0.0, %v7495
      %v7497 = vpop.f32.mrf.mxu0
      %7498 = vdwg.mxu0
      %v7499 = vmul.f32 %v7491, 0.35355338
      %v7500 = vmul.f32 %v7496, 0.35355338
      %v7501 = vsel %vm987, %v7499, -inf
      %7502 = vmax.xlane.f32.xlu0 %v7501
      %v7503 = vpop.xlane.xlu0 %7502
      %v7504 = vsel %vm991, %v7500, -inf
      %7505 = vmax.xlane.f32.xlu0 %v7504
      %v7506 = vpop.xlane.xlu0 %7505
      %v7507 = vsub.f32 %v7499, %v7503
      %v7508 = vsub.f32 %v7500, %v7506
      %v7509 = vmul.f32 %v7507, 1.442695
      %v7510 = vpow.pop %v7509
      %v7511 = vmul.f32 %v7508, 1.442695
      %v7512 = vpow.pop %v7511
      %v7513 = vsel %vm987, %v7510, 0.0
      %7514 = vadd.xlane.f32.xlu0 %v7513
      %v7515 = vpop.xlane.xlu0 %7514
      %v7516 = vsel %vm991, %v7512, 0.0
      %7517 = vadd.xlane.f32.xlu0 %v7516
      %v7518 = vpop.xlane.xlu0 %7517
      %v7519 = vrcp.pop %v7515
      %v7520 = vrcp.pop %v7518
      %v7521 = vmul.f32 %v7510, %v7519
      %v7522 = vmul.f32 %v7512, %v7520
      %7523 = vrot.lane.b32.xlu0 %v6797, 72
      %v7524 = vpop.permute.xlu0 %7523
      %7525 = vrot.lane.b32.xlu0 %v6800, 72
      %v7526 = vpop.permute.xlu0 %7525
      %v7529 = vsel %vm987, %v7521, 0
      %v7532 = vsel %vm987, %v7522, 0
      %v7534 = vsel %vm785, %v7526, 0
      %7536 = vmatprep.subr.mxu0 0.0
      %7537 = vmatpush1.msra.mxu0 0.0
      %7538 = vmatprep.subr.mxu0 0.0
      %7539 = vmatpush1.msra.mxu0 0.0
      %7540 = vmatprep.subr.mxu0 0.0
      %7541 = vmatpush1.msra.mxu0 0.0
      %7542 = vmatprep.subr.mxu0 0.0
      %7543 = vmatpush1.msra.mxu0 0.0
      %7544 = vmatprep.subr.mxu0 0.0
      %7545 = vmatpush1.msra.mxu0 0.0
      %7546 = vmatprep.subr.mxu0 0.0
      %7547 = vmatpush1.msra.mxu0 0.0
      %7548 = vmatprep.subr.mxu0 0.0
      %7549 = vmatpush1.msra.mxu0 0.0
      %7550 = vmatprep.subr.mxu0 0.0
      %7551 = vmatpush1.msra.mxu0 0.0
      %7552 = vmatprep.subr.mxu0 0.0
      %7553 = vmatpush1.msra.mxu0 0.0
      %7554 = vmatprep.subr.mxu0 0.0
      %7555 = vmatpush1.msra.mxu0 0.0
      %7556 = vmatprep.subr.mxu0 0.0
      %7557 = vmatpush1.msra.mxu0 0.0
      %7558 = vmatprep.subr.mxu0 0.0
      %7559 = vmatpush1.msra.mxu0 0.0
      %7560 = vmatprep.subr.mxu0 0.0
      %7561 = vmatpush1.msra.mxu0 0.0
      %7562 = vmatprep.subr.mxu0 0.0
      %7563 = vmatpush1.msra.mxu0 0.0
      %7564 = vmatprep.subr.mxu0 0.0
      %7565 = vmatpush1.msra.mxu0 %v7534
      %7566 = vmatprep.subr.mxu0 0.0
      %7567 = vmatpush1.msra.mxu0 %v7524
      %7568 = vmatprep.subr.mxu0 0.0
      %7569 = vmatpush2.msra.mxu0 0.0
      %7570 = vmatprep.subr.mxu0 0.0
      %7571 = vmatpush2.msra.mxu0 0.0
      %7572 = vmatprep.subr.mxu0 0.0
      %7573 = vmatpush2.msra.mxu0 0.0
      %7574 = vmatprep.subr.mxu0 0.0
      %7575 = vmatpush2.msra.mxu0 0.0
      %7576 = vmatprep.subr.mxu0 0.0
      %7577 = vmatpush2.msra.mxu0 0.0
      %7578 = vmatprep.subr.mxu0 0.0
      %7579 = vmatpush2.msra.mxu0 0.0
      %7580 = vmatprep.subr.mxu0 0.0
      %7581 = vmatpush2.msra.mxu0 0.0
      %7582 = vmatprep.subr.mxu0 0.0
      %7583 = vmatpush2.msra.mxu0 0.0
      %7584 = vmatprep.subr.mxu0 0.0
      %7585 = vmatpush2.msra.mxu0 0.0
      %7586 = vmatprep.subr.mxu0 0.0
      %7587 = vmatpush2.msra.mxu0 0.0
      %7588 = vmatprep.subr.mxu0 0.0
      %7589 = vmatpush2.msra.mxu0 0.0
      %7590 = vmatprep.subr.mxu0 0.0
      %7591 = vmatpush2.msra.mxu0 0.0
      %7592 = vmatprep.subr.mxu0 0.0
      %7593 = vmatpush2.msra.mxu0 0.0
      %7594 = vmatprep.subr.mxu0 0.0
      %7595 = vmatpush2.msra.mxu0 0.0
      %7596 = vmatprep.subr.mxu0 0.0
      %7597 = vmatpush2.msra.mxu0 0.0
      %7598 = vmatprep.subr.mxu0 0.0
      %7599 = vmatpush2.msra.mxu0 0.0
      %7600 = vmatprep.mubr.f32.mxu0 0.0
      %7601 = vmatmul.mubr.f32.gmra.mxu0 %v7529
      %v7602 = vpop.f32.mrf.mxu0
      %v7603 = vadd.f32 0.0, %v7602
      %v7604 = vpop.f32.mrf.mxu0
      %7605 = vmatprep.mubr.f32.mxu0 0.0
      %7606 = vmatmul.mubr.f32.gmra.mxu0 %v7532
      %v7607 = vpop.f32.mrf.mxu0
      %v7608 = vadd.f32 0.0, %v7607
      %v7609 = vpop.f32.mrf.mxu0
      %7610 = vdwg.mxu0
      %7613 = vrot.lane.b32.xlu0 %v7197, 8
      %v7614 = vpop.permute.xlu0 %7613
      %7615 = vrot.lane.b32.xlu0 %v7202, 8
      %v7616 = vpop.permute.xlu0 %7615
      %7621 = vrot.lane.b32.xlu0 %v7400, 16
      %v7622 = vpop.permute.xlu0 %7621
      %7623 = vrot.lane.b32.xlu0 %v7405, 16
      %v7624 = vpop.permute.xlu0 %7623
      %7629 = vrot.lane.b32.xlu0 %v7603, 24
      %v7630 = vpop.permute.xlu0 %7629
      %7631 = vrot.lane.b32.xlu0 %v7608, 24
      %v7632 = vpop.permute.xlu0 %7631
      %v7635 = vsel %vm901, %v6994, %v7614
      %v7636 = vsel %vm901, %v6999, %v7616
      %v7637 = vsel %vm1734, %v7635, %v7622
      %v7638 = vsel %vm1734, %v7636, %v7624
      %v7639 = vsel %vm1737, %v7637, %v7630
      %v7640 = vsel %vm1737, %v7638, %v7632
      %v7641 = vpack.c.bf16 %v7640, %v7639
      %v7642 = vlaneseq
      %v7643 = vshrl.u32 %v7642, 7
      %v7644 = vsub.s32 1, %v7643
      %v7645 = vrot.slane %v5615, %v7644
      %v7650 = vunpack.c.l.b16 %v6685
      %v7651 = vunpack.c.l.b16 %v6686
      %v7652 = vunpack.c.l.b16 %v6687
      %v7653 = vunpack.c.l.b16 %v6688
      %v7654 = vpack.c.b16 %v7651, %v7650
      %v7655 = vpack.c.b16 %v7653, %v7652
      %v7659 = vsel %vm738, %v7641, 0
      %7661 = vmatprep.subr.bf16.mxu0 0
      %7662 = vmatpush1.bf16.msra.mxu0 0
      %7663 = vmatprep.subr.bf16.mxu0 0
      %7664 = vmatpush1.bf16.msra.mxu0 0
      %7665 = vmatprep.subr.bf16.mxu0 0
      %7666 = vmatpush1.bf16.msra.mxu0 0
      %7667 = vmatprep.subr.bf16.mxu0 0
      %7668 = vmatpush1.bf16.msra.mxu0 0
      %7669 = vmatprep.subr.bf16.mxu0 0
      %7670 = vmatpush1.bf16.msra.mxu0 0
      %7671 = vmatprep.subr.bf16.mxu0 0
      %7672 = vmatpush1.bf16.msra.mxu0 0
      %7673 = vmatprep.subr.bf16.mxu0 0
      %7674 = vmatpush1.bf16.msra.mxu0 %v7655
      %7675 = vmatprep.subr.bf16.mxu0 0
      %7676 = vmatpush1.bf16.msra.mxu0 %v7654
      %7677 = vmatprep.subr.bf16.mxu0 0
      %7678 = vmatpush2.bf16.msra.mxu0 0
      %7679 = vmatprep.subr.bf16.mxu0 0
      %7680 = vmatpush2.bf16.msra.mxu0 0
      %7681 = vmatprep.subr.bf16.mxu0 0
      %7682 = vmatpush2.bf16.msra.mxu0 0
      %7683 = vmatprep.subr.bf16.mxu0 0
      %7684 = vmatpush2.bf16.msra.mxu0 0
      %7685 = vmatprep.subr.bf16.mxu0 0
      %7686 = vmatpush2.bf16.msra.mxu0 0
      %7687 = vmatprep.subr.bf16.mxu0 0
      %7688 = vmatpush2.bf16.msra.mxu0 0
      %7689 = vmatprep.subr.bf16.mxu0 0
      %7690 = vmatpush2.bf16.msra.mxu0 0
      %7691 = vmatprep.subr.bf16.mxu0 0
      %7692 = vmatpush2.bf16.msra.mxu0 0
      %7693 = vmatprep.mubr.bf16.mxu0 0
      %7694 = vmatmul.mubr.bf16.gmra.mxu0 %v7659
      %v7695 = vpop.f32.mrf.mxu0
      %v7696 = vadd.f32 %v7645, %v7695
      %v7697 = vpop.f32.mrf.mxu0
      %v7698 = vpop.f32.mrf.mxu0
      %v7699 = vadd.f32 %v7645, %v7698
      %v7700 = vpop.f32.mrf.mxu0
      %7701 = vdwg.mxu0
      %v7702 = vadd.f32 %v6622, %v7696
      %v7703 = vadd.f32 %v6623, %v7699
      %v7704 = vsel %vm738, %v7702, 0.0
      %7705 = vadd.xlane.f32.xlu0 %v7704
      %v7706 = vpop.xlane.xlu0 %7705
      %v7707 = vsel %vm793, %v7703, 0.0
      %7708 = vadd.xlane.f32.xlu0 %v7707
      %v7709 = vpop.xlane.xlu0 %7708
      %v7710 = vmul.f32 %v7706, %v797
      %v7711 = vmul.f32 %v7709, %v797
      %v7712 = vsub.f32 %v7702, %v7710
      %v7713 = vsub.f32 %v7703, %v7711
      %v7714 = vmul.f32 %v7712, %v7712
      %v7715 = vmul.f32 %v7713, %v7713
      %v7716 = vsel %vm738, %v7714, 0.0
      %7717 = vadd.xlane.f32.xlu0 %v7716
      %v7718 = vpop.xlane.xlu0 %7717
      %v7719 = vsel %vm793, %v7715, 0.0
      %7720 = vadd.xlane.f32.xlu0 %v7719
      %v7721 = vpop.xlane.xlu0 %7720
      %v7722 = vmul.f32 %v7718, %v797
      %v7723 = vmul.f32 %v7721, %v797
      %v7724 = vadd.f32 %v7722, 1e-05
      %v7725 = vadd.f32 %v7723, 1e-05
      %v7726 = vrsqrt.pop %v7724
      %v7727 = vrsqrt.pop %v7725
      %v7728 = vmul.f32 %v7712, %v7726
      %v7729 = vmul.f32 %v7713, %v7727
      %v7730 = vlaneseq
      %v7731 = vshrl.u32 %v7730, 7
      %v7732 = vsub.s32 6, %v7731
      %v7733 = vrot.slane %v5614, %v7732
      %v7734 = vmul.f32 %v7728, %v7733
      %v7735 = vmul.f32 %v7729, %v7733
      %v7736 = vlaneseq
      %v7737 = vshrl.u32 %v7736, 7
      %v7738 = vsub.s32 7, %v7737
      %v7739 = vrot.slane %v5614, %v7738
      %v7740 = vadd.f32 %v7734, %v7739
      %v7741 = vadd.f32 %v7735, %v7739
      %s7742 = scalar_lea.vmem %s18, 16
      %v7743 = vld [vmem:[%s7742] sm:$0xf]
      %v7744 = vld [vmem:[%s7742 + $0x4] sm:$0xf]
      %v7745 = vld [vmem:[%s7742 + $0x8] sm:$0xf]
      %v7746 = vld [vmem:[%s7742 + $0xc] sm:$0xf]
      %s7747 = scalar_lea.vmem %s21, 1
      %v7748 = vld [vmem:[%s7747] sm:$0x1]
      %s7749 = scalar_lea.vmem %s19, 64
      %v7750 = vld [vmem:[%s7749] sm:$0xf]
      %v7751 = vld [vmem:[%s7749 + $0x4] sm:$0xf]
      %v7752 = vld [vmem:[%s7749 + $0x8] sm:$0xf]
      %v7753 = vld [vmem:[%s7749 + $0xc] sm:$0xf]
      %v7754 = vld [vmem:[%s7749 + $0x10] sm:$0xf]
      %v7755 = vld [vmem:[%s7749 + $0x14] sm:$0xf]
      %v7756 = vld [vmem:[%s7749 + $0x18] sm:$0xf]
      %v7757 = vld [vmem:[%s7749 + $0x1c] sm:$0xf]
      %v7758 = vld [vmem:[%s7749 + $0x20] sm:$0xf]
      %v7759 = vld [vmem:[%s7749 + $0x24] sm:$0xf]
      %v7760 = vld [vmem:[%s7749 + $0x28] sm:$0xf]
      %v7761 = vld [vmem:[%s7749 + $0x2c] sm:$0xf]
      %v7762 = vld [vmem:[%s7749 + $0x30] sm:$0xf]
      %v7763 = vld [vmem:[%s7749 + $0x34] sm:$0xf]
      %v7764 = vld [vmem:[%s7749 + $0x38] sm:$0xf]
      %v7765 = vld [vmem:[%s7749 + $0x3c] sm:$0xf]
      %v7766 = vpack.c.bf16 %v7741, %v7740
      %v7768 = vlaneseq
      %v7769 = vshrl.u32 %v7768, 7
      %v7770 = vsub.s32 0, %v7769
      %v7771 = vrot.slane %v7748, %v7770
      %v7777 = vunpack.c.l.b16 %v7743
      %v7778 = vunpack.c.l.b16 %v7744
      %v7779 = vunpack.c.l.b16 %v7745
      %v7780 = vunpack.c.l.b16 %v7746
      %v7781 = vpack.c.b16 %v7778, %v7777
      %v7782 = vpack.c.b16 %v7780, %v7779
      %v7786 = vsel %vm738, %v7766, 0
      %7788 = vmatprep.subr.bf16.mxu0 0
      %7789 = vmatpush1.bf16.msra.mxu0 0
      %7790 = vmatprep.subr.bf16.mxu0 0
      %7791 = vmatpush1.bf16.msra.mxu0 0
      %7792 = vmatprep.subr.bf16.mxu0 0
      %7793 = vmatpush1.bf16.msra.mxu0 0
      %7794 = vmatprep.subr.bf16.mxu0 0
      %7795 = vmatpush1.bf16.msra.mxu0 0
      %7796 = vmatprep.subr.bf16.mxu0 0
      %7797 = vmatpush1.bf16.msra.mxu0 0
      %7798 = vmatprep.subr.bf16.mxu0 0
      %7799 = vmatpush1.bf16.msra.mxu0 0
      %7800 = vmatprep.subr.bf16.mxu0 0
      %7801 = vmatpush1.bf16.msra.mxu0 %v7782
      %7802 = vmatprep.subr.bf16.mxu0 0
      %7803 = vmatpush1.bf16.msra.mxu0 %v7781
      %7804 = vmatprep.subr.bf16.mxu0 0
      %7805 = vmatpush2.bf16.msra.mxu0 0
      %7806 = vmatprep.subr.bf16.mxu0 0
      %7807 = vmatpush2.bf16.msra.mxu0 0
      %7808 = vmatprep.subr.bf16.mxu0 0
      %7809 = vmatpush2.bf16.msra.mxu0 0
      %7810 = vmatprep.subr.bf16.mxu0 0
      %7811 = vmatpush2.bf16.msra.mxu0 0
      %7812 = vmatprep.subr.bf16.mxu0 0
      %7813 = vmatpush2.bf16.msra.mxu0 0
      %7814 = vmatprep.subr.bf16.mxu0 0
      %7815 = vmatpush2.bf16.msra.mxu0 0
      %7816 = vmatprep.subr.bf16.mxu0 0
      %7817 = vmatpush2.bf16.msra.mxu0 0
      %7818 = vmatprep.subr.bf16.mxu0 0
      %7819 = vmatpush2.bf16.msra.mxu0 0
      %7820 = vmatprep.mubr.bf16.mxu0 0
      %7821 = vmatmul.mubr.bf16.gmra.mxu0 %v7786
      %v7822 = vpop.f32.mrf.mxu0
      %v7823 = vadd.f32 %v7771, %v7822
      %v7824 = vpop.f32.mrf.mxu0
      %v7825 = vpop.f32.mrf.mxu0
      %v7826 = vadd.f32 %v7771, %v7825
      %v7827 = vpop.f32.mrf.mxu0
      %7828 = vdwg.mxu0
      %v7829 = vmul.f32 %v7823, 0.5
      %v7830 = vmul.f32 %v7826, 0.5
      %v7831 = vmul.f32 %v7823, 0.70710677
      %v7832 = vmul.f32 %v7826, 0.70710677
      %v7833 = verf.f32.pop %v7831
      %v7834 = verf.f32.pop %v7832
      %v7835 = vadd.f32 %v7833, 1.0
      %v7836 = vadd.f32 %v7834, 1.0
      %v7837 = vmul.f32 %v7829, %v7835
      %v7838 = vmul.f32 %v7830, %v7836
      %v7839 = vpack.c.bf16 %v7838, %v7837
      %v7840 = vlaneseq
      %v7841 = vshrl.u32 %v7840, 7
      %v7842 = vsub.s32 2, %v7841
      %v7843 = vrot.slane %v5615, %v7842
      %v7860 = vunpack.c.l.b16 %v7750
      %v7861 = vunpack.c.l.b16 %v7751
      %v7862 = vunpack.c.l.b16 %v7752
      %v7863 = vunpack.c.l.b16 %v7753
      %v7864 = vunpack.c.l.b16 %v7754
      %v7865 = vunpack.c.l.b16 %v7755
      %v7866 = vunpack.c.l.b16 %v7756
      %v7867 = vunpack.c.l.b16 %v7757
      %v7868 = vunpack.c.l.b16 %v7758
      %v7869 = vunpack.c.l.b16 %v7759
      %v7870 = vunpack.c.l.b16 %v7760
      %v7871 = vunpack.c.l.b16 %v7761
      %v7872 = vunpack.c.l.b16 %v7762
      %v7873 = vunpack.c.l.b16 %v7763
      %v7874 = vunpack.c.l.b16 %v7764
      %v7875 = vunpack.c.l.b16 %v7765
      %v7876 = vpack.c.b16 %v7861, %v7860
      %v7877 = vpack.c.b16 %v7863, %v7862
      %v7878 = vpack.c.b16 %v7865, %v7864
      %v7879 = vpack.c.b16 %v7867, %v7866
      %v7880 = vpack.c.b16 %v7869, %v7868
      %v7881 = vpack.c.b16 %v7871, %v7870
      %v7882 = vpack.c.b16 %v7873, %v7872
      %v7883 = vpack.c.b16 %v7875, %v7874
      %7892 = vmatprep.subr.bf16.mxu0 0
      %7893 = vmatpush1.bf16.msra.mxu0 %v7883
      %7894 = vmatprep.subr.bf16.mxu0 0
      %7895 = vmatpush1.bf16.msra.mxu0 %v7882
      %7896 = vmatprep.subr.bf16.mxu0 0
      %7897 = vmatpush1.bf16.msra.mxu0 %v7881
      %7898 = vmatprep.subr.bf16.mxu0 0
      %7899 = vmatpush1.bf16.msra.mxu0 %v7880
      %7900 = vmatprep.subr.bf16.mxu0 0
      %7901 = vmatpush1.bf16.msra.mxu0 %v7879
      %7902 = vmatprep.subr.bf16.mxu0 0
      %7903 = vmatpush1.bf16.msra.mxu0 %v7878
      %7904 = vmatprep.subr.bf16.mxu0 0
      %7905 = vmatpush1.bf16.msra.mxu0 %v7877
      %7906 = vmatprep.subr.bf16.mxu0 0
      %7907 = vmatpush1.bf16.msra.mxu0 %v7876
      %7908 = vmatprep.subr.bf16.mxu0 0
      %7909 = vmatpush2.bf16.msra.mxu0 0
      %7910 = vmatprep.subr.bf16.mxu0 0
      %7911 = vmatpush2.bf16.msra.mxu0 0
      %7912 = vmatprep.subr.bf16.mxu0 0
      %7913 = vmatpush2.bf16.msra.mxu0 0
      %7914 = vmatprep.subr.bf16.mxu0 0
      %7915 = vmatpush2.bf16.msra.mxu0 0
      %7916 = vmatprep.subr.bf16.mxu0 0
      %7917 = vmatpush2.bf16.msra.mxu0 0
      %7918 = vmatprep.subr.bf16.mxu0 0
      %7919 = vmatpush2.bf16.msra.mxu0 0
      %7920 = vmatprep.subr.bf16.mxu0 0
      %7921 = vmatpush2.bf16.msra.mxu0 0
      %7922 = vmatprep.subr.bf16.mxu0 0
      %7923 = vmatpush2.bf16.msra.mxu0 0
      %7924 = vmatprep.mubr.bf16.mxu0 0
      %7925 = vmatmul.mubr.bf16.gmra.mxu0 %v7839
      %v7926 = vpop.f32.mrf.mxu0
      %v7927 = vadd.f32 %v7843, %v7926
      %v7928 = vpop.f32.mrf.mxu0
      %v7929 = vpop.f32.mrf.mxu0
      %v7930 = vadd.f32 %v7843, %v7929
      %v7931 = vpop.f32.mrf.mxu0
      %7932 = vdwg.mxu0
      %v7933 = vadd.f32 %v7702, %v7927
      %v7934 = vadd.f32 %v7703, %v7930
      %v7935 = vpack.c.bf16 %v7934, %v7933
      %v7936 = vld [vmem:[%s22] sm:$0xf]
      %v7937 = vld [vmem:[%s22 + $0x4] sm:$0xf]
      %v7938 = vld [vmem:[%s22 + $0x8] sm:$0xf]
      %v7939 = vld [vmem:[%s22 + $0xc] sm:$0xf]
      %v7944 = vunpack.c.l.b16 %v7936
      %v7945 = vunpack.c.l.b16 %v7937
      %v7946 = vunpack.c.l.b16 %v7938
      %v7947 = vunpack.c.l.b16 %v7939
      %v7948 = vpack.c.b16 %v7945, %v7944
      %v7949 = vpack.c.b16 %v7947, %v7946
      %v7953 = vsel %vm738, %v7935, 0
      %7955 = vmatprep.subr.bf16.mxu0 0
      %7956 = vmatpush1.bf16.msra.mxu0 0
      %7957 = vmatprep.subr.bf16.mxu0 0
      %7958 = vmatpush1.bf16.msra.mxu0 0
      %7959 = vmatprep.subr.bf16.mxu0 0
      %7960 = vmatpush1.bf16.msra.mxu0 0
      %7961 = vmatprep.subr.bf16.mxu0 0
      %7962 = vmatpush1.bf16.msra.mxu0 0
      %7963 = vmatprep.subr.bf16.mxu0 0
      %7964 = vmatpush1.bf16.msra.mxu0 0
      %7965 = vmatprep.subr.bf16.mxu0 0
      %7966 = vmatpush1.bf16.msra.mxu0 0
      %7967 = vmatprep.subr.bf16.mxu0 0
      %7968 = vmatpush1.bf16.msra.mxu0 %v7949
      %7969 = vmatprep.subr.bf16.mxu0 0
      %7970 = vmatpush1.bf16.msra.mxu0 %v7948
      %7971 = vmatprep.subr.bf16.mxu0 0
      %7972 = vmatpush2.bf16.msra.mxu0 0
      %7973 = vmatprep.subr.bf16.mxu0 0
      %7974 = vmatpush2.bf16.msra.mxu0 0
      %7975 = vmatprep.subr.bf16.mxu0 0
      %7976 = vmatpush2.bf16.msra.mxu0 0
      %7977 = vmatprep.subr.bf16.mxu0 0
      %7978 = vmatpush2.bf16.msra.mxu0 0
      %7979 = vmatprep.subr.bf16.mxu0 0
      %7980 = vmatpush2.bf16.msra.mxu0 0
      %7981 = vmatprep.subr.bf16.mxu0 0
      %7982 = vmatpush2.bf16.msra.mxu0 0
      %7983 = vmatprep.subr.bf16.mxu0 0
      %7984 = vmatpush2.bf16.msra.mxu0 0
      %7985 = vmatprep.subr.bf16.mxu0 0
      %7986 = vmatpush2.bf16.msra.mxu0 0
      %7987 = vmatprep.mubr.bf16.mxu0 0
      %7988 = vmatmul.mubr.bf16.gmra.mxu0 %v7953
      %v7989 = vpop.f32.mrf.mxu0
      %v7990 = vadd.f32 0.0, %v7989
      %v7991 = vpop.f32.mrf.mxu0
      %v7992 = vpop.f32.mrf.mxu0
      %v7993 = vadd.f32 0.0, %v7992
      %v7994 = vpop.f32.mrf.mxu0
      %7995 = vdwg.mxu0
      %7996 = vst [vmem:[%s709] sm:$0xff] %v7990
      %7997 = vst [vmem:[%s709 + $0x8] sm:$0x1] %v7993
      %p7998 = scmp.lt.s32.totalorder %s35, 1
      %s7999 = scalar_select %p7998, %s35, 1
      %s8000 = smul.addr %s7999, 2
      %s8001 = smul.addr %s8000, 8
      %s8002 = scalar_lea.vmem %s23, %s8001
      // Predicated region
      $region109: #{full_transformer_forward.1} parent=107 // pred_check
        %p8003 = pneg %p527
      $region110: #{full_transformer_forward.1} parent=107 // pred_check_branch
        %8005 = sbr.rel (%p8003) target = $region112
      $region111: #{full_transformer_forward.1} parent=107 // pred_region
        _
      $region112: #{full_transformer_forward.1} parent=107 // pred_fallthru
        _
    $region108: #{full_transformer_forward.1} parent=5 // pred_fallthru
      _
    %p8006 = scmp.le.s32.totalorder 2, %s30
    // Predicated region
    $region113: #{full_transformer_forward.1} parent=5 // pred_check
      %p8007 = pneg %p8006
    $region114: #{full_transformer_forward.1} parent=5 // pred_check_branch
      %8009 = sbr.rel (%p8007) target = $region116
    $region115: #{full_transformer_forward.1} parent=5 // pred_region
      %s8010 = ssub.s32 %s30, 2
      // Predicated region
      $region117: #{full_transformer_forward.1} parent=115 // pred_check
        %p8011 = pneg %p533
      $region118: #{full_transformer_forward.1} parent=115 // pred_check_branch
        %8013 = sbr.rel (%p8011) target = $region120
      $region119: #{full_transformer_forward.1} parent=115 // pred_region
        %p8014 = scmp.lt.s32.totalorder %s36, 1
        %s8015 = scalar_select %p8014, %s36, 1
        %s8016 = smul.addr %s8015, 2
        %s8017 = smul.addr %s8016, 8
        %s8018 = scalar_lea.vmem %s23, %s8017
      $region120: #{full_transformer_forward.1} parent=115 // pred_fallthru
        _
    $region116: #{full_transformer_forward.1} parent=5 // pred_fallthru
      _
  $region6: #{full_transformer_forward.1} parent=0 // loop_footer
    %s34 = sadd.s32 1, %s30
  $region7: #{full_transformer_forward.1} parent=0 // loop_footer_branch
    %29 = sbr.rel target = $region3
  $region8: #{full_transformer_forward.1} parent=0 // loop_exit
    _

</llo_original>
